<compile_context>
chip_gen: v6e
topology: v6e:2x2x1
jax: 0.10.0
libtpu: 0.0.40
codegen_flags: <defaults>
</compile_context>

<pallas_src>
import math

import jax
import jax.numpy as jnp
from jax import lax
from jax.experimental import pallas as pl
from jax.experimental.pallas import tpu as pltpu

H = W = 14                 # spatial size implied by fc1 in_features = 32*14*14 + 32
PIX = H * W                # 196 flattened pixels per image, p = h*14 + w (lane axis)
PAD = 16                   # lane guard on each side of a compute region (max |tap off| = 15)
TAP_OFFS = [(ky - 1) * W + (kx - 1) for ky in range(3) for kx in range(3)]  # t = ky*3 + kx


def _build_tap_masks(nb):
    """Block-wide {0,1} bf16 tap-validity masks.

    mask2: (9, 1, nb*196)       -- conv2 compute lanes (tight packing, lane = b*196 + p)
    mask1: (9, 1, nb*196 + 32)  -- conv1 compute lanes (same, shifted by PAD; ends zero)
    Tap t is valid at pixel p iff the source pixel (h+ky-1, w+kx-1) lies inside the 14x14
    image.  Because any row-wrap / cross-sample / guard-lane read corresponds to an
    out-of-image source, these masks also kill all cross-sample contamination.
    """
    p = jnp.arange(PIX)
    hh, ww = p // W, p % W
    rows = []
    for ky in range(3):
        for kx in range(3):
            rows.append((hh + ky - 1 >= 0) & (hh + ky - 1 < H) &
                        (ww + kx - 1 >= 0) & (ww + kx - 1 < W))
    m = jnp.stack(rows).astype(jnp.bfloat16)                  # (9, 196)
    m_blk = jnp.tile(m, (1, nb))                              # (9, nb*196)
    mask2 = m_blk[:, None, :]                                 # (9, 1, wc)
    mask1 = jnp.pad(m_blk, ((0, 0), (PAD, PAD)))[:, None, :]  # (9, 1, wc + 32)
    return mask1, mask2


# ----------------------------------------------------------------------------
# Kernel 1: conv1 -> ReLU -> conv2 -> ReLU for a block of NB samples.
#   x_ref : (2, wc+64)  bf16   NB samples packed tightly (196 lanes each), 32-lane zero
#                              guard on each end of the block.
#   m1_ref: (9, 1, wc+32) bf16 conv1 tap masks   m2_ref: (9, 1, wc) bf16 conv2 tap masks
#   w1_ref: (16, 18) bf16  (column = t*2 + cin)   b1_ref: (16, 1) f32
#   w2_ref: (32, 144) bf16 (column = t*16 + cin)  b2_ref: (32, 1) f32
#   o_ref : (NB, 32, 196) bf16  conv2 output, (c, h, w) order per sample.
# ----------------------------------------------------------------------------
def _conv_kernel(x_ref, m1_ref, m2_ref, w1_ref, b1_ref, w2_ref, b2_ref, o_ref):
    f32, bf16 = jnp.float32, jnp.bfloat16
    w1w = m1_ref.shape[2]          # conv1 compute width = nb*196 + 32
    wc = m2_ref.shape[2]           # conv2 compute width = nb*196

    # conv1 + ReLU: one (16,18)@(18,w1w) MXU matmul against a masked im2col slab.
    slab1 = jnp.concatenate(
        [x_ref[:, PAD + off:PAD + off + w1w] * m1_ref[t]
         for t, off in enumerate(TAP_OFFS)], axis=0)                        # (18, w1w) bf16
    h1 = jnp.maximum(
        jnp.dot(w1_ref[...], slab1, preferred_element_type=f32) + b1_ref[...],
        0.0).astype(bf16)                                                   # (16, w1w)
    # Guard lanes of h1 hold relu(bias) junk; every read of them is masked below.

    # conv2 + ReLU: one (32,144)@(144,wc) MXU matmul.
    slab2 = jnp.concatenate(
        [h1[:, PAD + off:PAD + off + wc] * m2_ref[t]
         for t, off in enumerate(TAP_OFFS)], axis=0)                        # (144, wc) bf16
    h2 = jnp.maximum(
        jnp.dot(w2_ref[...], slab2, preferred_element_type=f32) + b2_ref[...],
        0.0).astype(bf16)                                                   # (32, wc)

    # Per-sample (c, h, w)-ordered stores so the head's x.view(N,-1) is a free reshape.
    nb = o_ref.shape[0]
    for b in range(nb):
        o_ref[b, :, :] = h2[:, b * PIX:(b + 1) * PIX]


def conv_stage(xin, mask1, mask2, params, *, nb, n_pad):
    nblocks = n_pad // nb
    wc = nb * PIX
    cost = pl.CostEstimate(
        flops=2 * (16 * 18 + 32 * 144) * PIX * n_pad,
        transcendentals=0,
        bytes_accessed=(2 * PIX + 32 * PIX) * 2 * n_pad + (16 * 18 + 32 * 144) * 2)
    return pl.pallas_call(
        _conv_kernel,
        out_shape=jax.ShapeDtypeStruct((n_pad, 32, PIX), jnp.bfloat16),
        grid=(nblocks,),
        in_specs=[
            pl.BlockSpec((None, 2, wc + 4 * PAD), lambda i: (i, 0, 0)),   # x block
            pl.BlockSpec((9, 1, wc + 2 * PAD), lambda i: (0, 0, 0)),      # conv1 masks
            pl.BlockSpec((9, 1, wc), lambda i: (0, 0, 0)),                # conv2 masks
            pl.BlockSpec((16, 18), lambda i: (0, 0)),                     # conv1_w
            pl.BlockSpec((16, 1), lambda i: (0, 0)),                      # conv1_b
            pl.BlockSpec((32, 144), lambda i: (0, 0)),                    # conv2_w
            pl.BlockSpec((32, 1), lambda i: (0, 0)),                      # conv2_b
        ],
        out_specs=pl.BlockSpec((nb, 32, PIX), lambda i: (i, 0, 0)),
        compiler_params=pltpu.CompilerParams(dimension_semantics=("parallel",)),
        cost_estimate=cost,
    )(xin, mask1, mask2, params["conv1_w"], params["conv1_b"],
      params["conv2_w"], params["conv2_b"])


# ----------------------------------------------------------------------------
# Kernel 2: path MLP + fc1 (concat folded into two accumulated matmuls) + fc2 + softmax,
# row-tiled over the batch; weights use constant index maps (VMEM-resident).
# ----------------------------------------------------------------------------
def _head_kernel(xf_ref, y_ref, wp1_ref, bp1_ref, wp2_ref, bp2_ref,
                 wf1x_ref, wf1y_ref, bf1_ref, wf2_ref, bf2_ref, o_ref):
    bf16, f32 = jnp.bfloat16, jnp.float32

    # path MLP
    y = y_ref[...].astype(bf16)                                            # (T,128)
    p1 = jnp.maximum(jnp.dot(y, wp1_ref[...], preferred_element_type=f32)
                     + bp1_ref[...], 0.0)                                  # (T,128) f32
    p2 = jnp.maximum(jnp.dot(p1.astype(bf16), wp2_ref[...],
                             preferred_element_type=f32) + bp2_ref[...], 0.0)   # (T,32)

    # fc1 over cat(x_flat, path): two accumulated matmuls, no concat tensor
    h = jnp.dot(xf_ref[...], wf1x_ref[...], preferred_element_type=f32)
    h = h + jnp.dot(p2.astype(bf16), wf1y_ref[...], preferred_element_type=f32)
    h = jnp.maximum(h + bf1_ref[...], 0.0)                                 # (T,128) f32

    # fc2 + softmax(dim=1); exact divide (review correctness note)
    logits = jnp.dot(h.astype(bf16), wf2_ref[...],
                     preferred_element_type=f32) + bf2_ref[...]            # (T,3) f32
    m = jnp.max(logits, axis=-1, keepdims=True)
    e = jnp.exp(logits - m)
    o_ref[...] = (e / jnp.sum(e, axis=-1, keepdims=True)).astype(o_ref.dtype)


def head_stage(x_flat, y, params, *, tn, n_pad):
    nblocks = n_pad // tn
    fc1_in = 32 * PIX + 32
    cost = pl.CostEstimate(
        flops=2 * (128 * 128 + 128 * 32 + 32 * PIX * 128 + 32 * 128 + 128 * 3) * n_pad,
        transcendentals=3 * n_pad,
        bytes_accessed=(32 * PIX * 2 + 128 * 4 + 3 * 4) * n_pad
                       + (128 * 128 + 128 * 32 + fc1_in * 128 + 128 * 3) * 2)
    return pl.pallas_call(
        _head_kernel,
        out_shape=jax.ShapeDtypeStruct((n_pad, 3), jnp.float32),
        grid=(nblocks,),
        in_specs=[
            pl.BlockSpec((tn, 32 * PIX), lambda i: (i, 0)),   # x_flat (row-tiled)
            pl.BlockSpec((tn, 128), lambda i: (i, 0)),        # y      (row-tiled)
            pl.BlockSpec((128, 128), lambda i: (0, 0)),       # path_fc1_w (resident)
            pl.BlockSpec((1, 128), lambda i: (0, 0)),
            pl.BlockSpec((128, 32), lambda i: (0, 0)),
            pl.BlockSpec((1, 32), lambda i: (0, 0)),
            pl.BlockSpec((32 * PIX, 128), lambda i: (0, 0)),  # fc1_wx (resident)
            pl.BlockSpec((32, 128), lambda i: (0, 0)),        # fc1_wy
            pl.BlockSpec((1, 128), lambda i: (0, 0)),
            pl.BlockSpec((128, 3), lambda i: (0, 0)),
            pl.BlockSpec((1, 3), lambda i: (0, 0)),
        ],
        out_specs=pl.BlockSpec((tn, 3), lambda i: (i, 0)),
        compiler_params=pltpu.CompilerParams(dimension_semantics=("parallel",)),
        cost_estimate=cost,
    )(x_flat, y, params["path_fc1_w"], params["path_fc1_b"],
      params["path_fc2_w"], params["path_fc2_b"],
      params["fc1_wx"], params["fc1_wy"], params["fc1_b"],
      params["fc2_w"], params["fc2_b"])


# ----------------------------------------------------------------------------
# Parameters (PyTorch-default-like uniform init).  Matmul weights stored bf16, biases f32.
# Conv weights stored as (Cout, 9*Cin) with column index t*Cin + cin, t = ky*3 + kx.
# fc1 weight is pre-split: conv rows (torch (c,h,w) order) and path rows.
# ----------------------------------------------------------------------------
def init_params(key):
    def uinit(k, shape, fan_in, dtype=jnp.bfloat16):
        bound = 1.0 / math.sqrt(fan_in)
        return jax.random.uniform(k, shape, jnp.float32, -bound, bound).astype(dtype)

    ks = jax.random.split(key, 13)
    fc1_in = 32 * PIX + 32
    p = {}
    p["conv1_w"] = uinit(ks[0], (16, 18), 2 * 9)
    p["conv1_b"] = uinit(ks[1], (16, 1), 2 * 9, jnp.float32)
    p["conv2_w"] = uinit(ks[2], (32, 144), 16 * 9)
    p["conv2_b"] = uinit(ks[3], (32, 1), 16 * 9, jnp.float32)
    p["path_fc1_w"] = uinit(ks[4], (128, 128), 128)
    p["path_fc1_b"] = uinit(ks[5], (1, 128), 128, jnp.float32)
    p["path_fc2_w"] = uinit(ks[6], (128, 32), 128)
    p["path_fc2_b"] = uinit(ks[7], (1, 32), 128, jnp.float32)
    p["fc1_wx"] = uinit(ks[8], (32 * PIX, 128), fc1_in)   # conv part, (c,h,w) row order
    p["fc1_wy"] = uinit(ks[9], (32, 128), fc1_in)         # path part
    p["fc1_b"] = uinit(ks[10], (1, 128), fc1_in, jnp.float32)
    p["fc2_w"] = uinit(ks[11], (128, 3), 128)
    p["fc2_b"] = uinit(ks[12], (1, 3), 128, jnp.float32)
    return p


# ----------------------------------------------------------------------------
# Forward pass (mirrors Qnet.forward).  batch_block=32 keeps the conv block's im2col slab
# (144, 32*196) bf16 + double-buffered I/O at ~5 MB of VMEM -> safe under the scoped-VMEM
# defaults on v5e/v6e/v7x while giving ~115 MFLOP per grid step (>> 0.35 us step overhead).
# ----------------------------------------------------------------------------
def qnet_forward(params, x_nchw, y, *, batch_block=32):
    n = x_nchw.shape[0]
    nb = min(batch_block, n)
    n_pad = -(-n // nb) * nb
    nblocks = n_pad // nb
    wc = nb * PIX

    xq = x_nchw.astype(jnp.bfloat16).reshape(n, 2, PIX)
    yq = y.astype(jnp.float32)
    if n_pad != n:
        xq = jnp.pad(xq, ((0, n_pad - n), (0, 0), (0, 0)))
        yq = jnp.pad(yq, ((0, n_pad - n), (0, 0)))

    # Pack NB samples tightly along the lane axis per block, plus a 32-lane zero guard
    # on each end of the block (tiny input, cheap XLA glue): (nblocks, 2, nb*196 + 64).
    xb = (xq.reshape(nblocks, nb, 2, PIX)
            .transpose(0, 2, 1, 3)
            .reshape(nblocks, 2, wc))
    xin = jnp.pad(xb, ((0, 0), (0, 0), (2 * PAD, 2 * PAD)))

    mask1, mask2 = _build_tap_masks(nb)

    h2 = conv_stage(xin, mask1, mask2, params, nb=nb, n_pad=n_pad)   # (n_pad,32,196) bf16
    x_flat = h2.reshape(n_pad, 32 * PIX)          # == torch x.view(N,-1) ordering (free)
    probs = head_stage(x_flat, yq, params, tn=nb, n_pad=n_pad)       # (n_pad, 3) f32
    return probs[:n]


# ----------------------------------------------------------------------------
# Pure-JAX reference (f32, lax.conv) for a numerical sanity check.
# ----------------------------------------------------------------------------
def qnet_reference(params, x_nchw, y):
    f32 = jnp.float32
    xq = x_nchw.astype(jnp.bfloat16).astype(f32)      # match the kernel's input quant
    w1 = params["conv1_w"].astype(f32).reshape(16, 3, 3, 2).transpose(0, 3, 1, 2)
    w2 = params["conv2_w"].astype(f32).reshape(32, 3, 3, 16).transpose(0, 3, 1, 2)
    dn1 = lax.conv_dimension_numbers(xq.shape, w1.shape, ("NCHW", "OIHW", "NCHW"))
    h = lax.conv_general_dilated(xq, w1, (1, 1), ((1, 1), (1, 1)), dimension_numbers=dn1)
    h = jnp.maximum(h + params["conv1_b"].astype(f32).reshape(1, 16, 1, 1), 0.0)
    dn2 = lax.conv_dimension_numbers(h.shape, w2.shape, ("NCHW", "OIHW", "NCHW"))
    h = lax.conv_general_dilated(h, w2, (1, 1), ((1, 1), (1, 1)), dimension_numbers=dn2)
    h = jnp.maximum(h + params["conv2_b"].astype(f32).reshape(1, 32, 1, 1), 0.0)
    x_flat = h.reshape(h.shape[0], -1)
    p1 = jnp.maximum(y @ params["path_fc1_w"].astype(f32)
                     + params["path_fc1_b"].astype(f32), 0.0)
    p2 = jnp.maximum(p1 @ params["path_fc2_w"].astype(f32)
                     + params["path_fc2_b"].astype(f32), 0.0)
    hh = jnp.maximum(x_flat @ params["fc1_wx"].astype(f32)
                     + p2 @ params["fc1_wy"].astype(f32)
                     + params["fc1_b"].astype(f32), 0.0)
    logits = hh @ params["fc2_w"].astype(f32) + params["fc2_b"].astype(f32)
    return jax.nn.softmax(logits, axis=1)


if __name__ == "__main__":
    key = jax.random.PRNGKey(0)
    k_params, k_x, k_y = jax.random.split(key, 3)

    params = init_params(k_params)
    x = jax.random.normal(k_x, (2, 2, H, W), dtype=jnp.float32)   # NCHW like PyTorch
    y = jax.random.normal(k_y, (2, 128), dtype=jnp.float32)

    fwd = jax.jit(qnet_forward)
    out = jax.block_until_ready(fwd(params, x, y))

    assert out.shape == (2, 3), out.shape
    assert bool(jnp.all(jnp.isfinite(out)))
    row_sums = jnp.sum(out, axis=1)
    assert bool(jnp.all(jnp.abs(row_sums - 1.0) < 1e-3)), row_sums

    # cross-check against a pure-JAX f32 reference (generous tol: bf16 matmul path)
    ref = qnet_reference(params, x, y)
    max_err = float(jnp.max(jnp.abs(out - ref)))
    assert max_err < 2e-2, (max_err, out, ref)

    print("KERNEL_OK")
</pallas_src>

<mosaic_0001>
module attributes {stable_mosaic.version = 11 : i64} {
  func.func @_conv_kernel(%arg0: i32, %arg1: memref<1x2x456xbf16, #tpu.memory_space<vmem>>, %arg2: memref<9x1x424xbf16, #tpu.memory_space<vmem>>, %arg3: memref<9x1x392xbf16, #tpu.memory_space<vmem>>, %arg4: memref<16x18xbf16, #tpu.memory_space<vmem>>, %arg5: memref<16x1xf32, #tpu.memory_space<vmem>>, %arg6: memref<32x144xbf16, #tpu.memory_space<vmem>>, %arg7: memref<32x1xf32, #tpu.memory_space<vmem>>, %arg8: memref<2x32x196xbf16, #tpu.memory_space<vmem>>) attributes {dimension_semantics = [#tpu.dimension_semantics<parallel>], iteration_bounds = array<i64: 1>, scalar_prefetch = 0 : i64, scratch_operands = 0 : i64, tpu.core_type = #tpu.core_type<tc>, window_params = [{transform_indices = @transform_0, window_bounds = array<i64: 1, 2, 456>}, {pipeline_mode = #tpu.pipeline_mode<synchronous>, transform_indices = @transform_1, window_bounds = array<i64: 9, 1, 424>}, {pipeline_mode = #tpu.pipeline_mode<synchronous>, transform_indices = @transform_2, window_bounds = array<i64: 9, 1, 392>}, {pipeline_mode = #tpu.pipeline_mode<synchronous>, transform_indices = @transform_3, window_bounds = array<i64: 16, 18>}, {pipeline_mode = #tpu.pipeline_mode<synchronous>, transform_indices = @transform_4, window_bounds = array<i64: 16, 1>}, {pipeline_mode = #tpu.pipeline_mode<synchronous>, transform_indices = @transform_5, window_bounds = array<i64: 32, 144>}, {pipeline_mode = #tpu.pipeline_mode<synchronous>, transform_indices = @transform_6, window_bounds = array<i64: 32, 1>}, {transform_indices = @transform_7, window_bounds = array<i64: 2, 32, 196>}]} {
    %c0 = arith.constant 0 : index
    %c0_0 = arith.constant 0 : index
    %c1 = arith.constant 1 : index
    %0 = vector.load %arg1[%c0, %c0_0, %c1] : memref<1x2x456xbf16, #tpu.memory_space<vmem>>, vector<1x2x424xbf16>
    %1 = vector.shape_cast %0 : vector<1x2x424xbf16> to vector<2x424xbf16>
    %c0_1 = arith.constant 0 : index
    %c0_2 = arith.constant 0 : index
    %c0_3 = arith.constant 0 : index
    %2 = vector.load %arg2[%c0_1, %c0_2, %c0_3] : memref<9x1x424xbf16, #tpu.memory_space<vmem>>, vector<1x1x424xbf16>
    %3 = vector.shape_cast %2 : vector<1x1x424xbf16> to vector<1x424xbf16>
    %4 = vector.broadcast %3 : vector<1x424xbf16> to vector<2x424xbf16>
    %5 = arith.mulf %1, %4 : vector<2x424xbf16>
    %c0_4 = arith.constant 0 : index
    %c0_5 = arith.constant 0 : index
    %c2 = arith.constant 2 : index
    %6 = vector.load %arg1[%c0_4, %c0_5, %c2] : memref<1x2x456xbf16, #tpu.memory_space<vmem>>, vector<1x2x424xbf16>
    %7 = vector.shape_cast %6 : vector<1x2x424xbf16> to vector<2x424xbf16>
    %c1_6 = arith.constant 1 : index
    %c0_7 = arith.constant 0 : index
    %c0_8 = arith.constant 0 : index
    %8 = vector.load %arg2[%c1_6, %c0_7, %c0_8] : memref<9x1x424xbf16, #tpu.memory_space<vmem>>, vector<1x1x424xbf16>
    %9 = vector.shape_cast %8 : vector<1x1x424xbf16> to vector<1x424xbf16>
    %10 = vector.broadcast %9 : vector<1x424xbf16> to vector<2x424xbf16>
    %11 = arith.mulf %7, %10 : vector<2x424xbf16>
    %c0_9 = arith.constant 0 : index
    %c0_10 = arith.constant 0 : index
    %c3 = arith.constant 3 : index
    %12 = vector.load %arg1[%c0_9, %c0_10, %c3] : memref<1x2x456xbf16, #tpu.memory_space<vmem>>, vector<1x2x424xbf16>
    %13 = vector.shape_cast %12 : vector<1x2x424xbf16> to vector<2x424xbf16>
    %c2_11 = arith.constant 2 : index
    %c0_12 = arith.constant 0 : index
    %c0_13 = arith.constant 0 : index
    %14 = vector.load %arg2[%c2_11, %c0_12, %c0_13] : memref<9x1x424xbf16, #tpu.memory_space<vmem>>, vector<1x1x424xbf16>
    %15 = vector.shape_cast %14 : vector<1x1x424xbf16> to vector<1x424xbf16>
    %16 = vector.broadcast %15 : vector<1x424xbf16> to vector<2x424xbf16>
    %17 = arith.mulf %13, %16 : vector<2x424xbf16>
    %c0_14 = arith.constant 0 : index
    %c0_15 = arith.constant 0 : index
    %c15 = arith.constant 15 : index
    %18 = vector.load %arg1[%c0_14, %c0_15, %c15] : memref<1x2x456xbf16, #tpu.memory_space<vmem>>, vector<1x2x424xbf16>
    %19 = vector.shape_cast %18 : vector<1x2x424xbf16> to vector<2x424xbf16>
    %c3_16 = arith.constant 3 : index
    %c0_17 = arith.constant 0 : index
    %c0_18 = arith.constant 0 : index
    %20 = vector.load %arg2[%c3_16, %c0_17, %c0_18] : memref<9x1x424xbf16, #tpu.memory_space<vmem>>, vector<1x1x424xbf16>
    %21 = vector.shape_cast %20 : vector<1x1x424xbf16> to vector<1x424xbf16>
    %22 = vector.broadcast %21 : vector<1x424xbf16> to vector<2x424xbf16>
    %23 = arith.mulf %19, %22 : vector<2x424xbf16>
    %c0_19 = arith.constant 0 : index
    %c0_20 = arith.constant 0 : index
    %c16 = arith.constant 16 : index
    %24 = vector.load %arg1[%c0_19, %c0_20, %c16] : memref<1x2x456xbf16, #tpu.memory_space<vmem>>, vector<1x2x424xbf16>
    %25 = vector.shape_cast %24 : vector<1x2x424xbf16> to vector<2x424xbf16>
    %c4 = arith.constant 4 : index
    %c0_21 = arith.constant 0 : index
    %c0_22 = arith.constant 0 : index
    %26 = vector.load %arg2[%c4, %c0_21, %c0_22] : memref<9x1x424xbf16, #tpu.memory_space<vmem>>, vector<1x1x424xbf16>
    %27 = vector.shape_cast %26 : vector<1x1x424xbf16> to vector<1x424xbf16>
    %28 = vector.broadcast %27 : vector<1x424xbf16> to vector<2x424xbf16>
    %29 = arith.mulf %25, %28 : vector<2x424xbf16>
    %c0_23 = arith.constant 0 : index
    %c0_24 = arith.constant 0 : index
    %c17 = arith.constant 17 : index
    %30 = vector.load %arg1[%c0_23, %c0_24, %c17] : memref<1x2x456xbf16, #tpu.memory_space<vmem>>, vector<1x2x424xbf16>
    %31 = vector.shape_cast %30 : vector<1x2x424xbf16> to vector<2x424xbf16>
    %c5 = arith.constant 5 : index
    %c0_25 = arith.constant 0 : index
    %c0_26 = arith.constant 0 : index
    %32 = vector.load %arg2[%c5, %c0_25, %c0_26] : memref<9x1x424xbf16, #tpu.memory_space<vmem>>, vector<1x1x424xbf16>
    %33 = vector.shape_cast %32 : vector<1x1x424xbf16> to vector<1x424xbf16>
    %34 = vector.broadcast %33 : vector<1x424xbf16> to vector<2x424xbf16>
    %35 = arith.mulf %31, %34 : vector<2x424xbf16>
    %c0_27 = arith.constant 0 : index
    %c0_28 = arith.constant 0 : index
    %c29 = arith.constant 29 : index
    %36 = vector.load %arg1[%c0_27, %c0_28, %c29] : memref<1x2x456xbf16, #tpu.memory_space<vmem>>, vector<1x2x424xbf16>
    %37 = vector.shape_cast %36 : vector<1x2x424xbf16> to vector<2x424xbf16>
    %c6 = arith.constant 6 : index
    %c0_29 = arith.constant 0 : index
    %c0_30 = arith.constant 0 : index
    %38 = vector.load %arg2[%c6, %c0_29, %c0_30] : memref<9x1x424xbf16, #tpu.memory_space<vmem>>, vector<1x1x424xbf16>
    %39 = vector.shape_cast %38 : vector<1x1x424xbf16> to vector<1x424xbf16>
    %40 = vector.broadcast %39 : vector<1x424xbf16> to vector<2x424xbf16>
    %41 = arith.mulf %37, %40 : vector<2x424xbf16>
    %c0_31 = arith.constant 0 : index
    %c0_32 = arith.constant 0 : index
    %c30 = arith.constant 30 : index
    %42 = vector.load %arg1[%c0_31, %c0_32, %c30] : memref<1x2x456xbf16, #tpu.memory_space<vmem>>, vector<1x2x424xbf16>
    %43 = vector.shape_cast %42 : vector<1x2x424xbf16> to vector<2x424xbf16>
    %c7 = arith.constant 7 : index
    %c0_33 = arith.constant 0 : index
    %c0_34 = arith.constant 0 : index
    %44 = vector.load %arg2[%c7, %c0_33, %c0_34] : memref<9x1x424xbf16, #tpu.memory_space<vmem>>, vector<1x1x424xbf16>
    %45 = vector.shape_cast %44 : vector<1x1x424xbf16> to vector<1x424xbf16>
    %46 = vector.broadcast %45 : vector<1x424xbf16> to vector<2x424xbf16>
    %47 = arith.mulf %43, %46 : vector<2x424xbf16>
    %c0_35 = arith.constant 0 : index
    %c0_36 = arith.constant 0 : index
    %c31 = arith.constant 31 : index
    %48 = vector.load %arg1[%c0_35, %c0_36, %c31] : memref<1x2x456xbf16, #tpu.memory_space<vmem>>, vector<1x2x424xbf16>
    %49 = vector.shape_cast %48 : vector<1x2x424xbf16> to vector<2x424xbf16>
    %c8 = arith.constant 8 : index
    %c0_37 = arith.constant 0 : index
    %c0_38 = arith.constant 0 : index
    %50 = vector.load %arg2[%c8, %c0_37, %c0_38] : memref<9x1x424xbf16, #tpu.memory_space<vmem>>, vector<1x1x424xbf16>
    %51 = vector.shape_cast %50 : vector<1x1x424xbf16> to vector<1x424xbf16>
    %52 = vector.broadcast %51 : vector<1x424xbf16> to vector<2x424xbf16>
    %53 = arith.mulf %49, %52 : vector<2x424xbf16>
    %54 = tpu.concatenate %5, %11, %17, %23, %29, %35, %41, %47, %53 in 0 : vector<2x424xbf16>, vector<2x424xbf16>, vector<2x424xbf16>, vector<2x424xbf16>, vector<2x424xbf16>, vector<2x424xbf16>, vector<2x424xbf16>, vector<2x424xbf16>, vector<2x424xbf16> -> vector<18x424xbf16>
    %c0_39 = arith.constant 0 : index
    %c0_40 = arith.constant 0 : index
    %55 = vector.load %arg4[%c0_39, %c0_40] : memref<16x18xbf16, #tpu.memory_space<vmem>>, vector<16x18xbf16>
    %cst = arith.constant dense<0.000000e+00> : vector<16x424xf32>
    %56 = tpu.matmul %55, %54, %cst {dimension_numbers = #tpu.dot_dimension_numbers<[1], [0], [0], [1], [0, 0, 1, 1], [], []>} : vector<16x18xbf16>, vector<18x424xbf16>, vector<16x424xf32> -> vector<16x424xf32>
    %c0_41 = arith.constant 0 : index
    %c0_42 = arith.constant 0 : index
    %57 = vector.load %arg5[%c0_41, %c0_42] : memref<16x1xf32, #tpu.memory_space<vmem>>, vector<16x1xf32>
    %58 = vector.broadcast %57 : vector<16x1xf32> to vector<16x424xf32>
    %59 = arith.addf %56, %58 : vector<16x424xf32>
    %cst_43 = arith.constant 0.000000e+00 : f32
    %60 = vector.broadcast %cst_43 : f32 to vector<16x424xf32>
    %61 = arith.maximumf %59, %60 : vector<16x424xf32>
    %62 = arith.truncf %61 : vector<16x424xf32> to vector<16x424xbf16>
    %63 = vector.extract_strided_slice %62 {offsets = [0, 1], sizes = [16, 392], strides = [1, 1]} : vector<16x424xbf16> to vector<16x392xbf16>
    %c0_44 = arith.constant 0 : index
    %c0_45 = arith.constant 0 : index
    %c0_46 = arith.constant 0 : index
    %64 = vector.load %arg3[%c0_44, %c0_45, %c0_46] : memref<9x1x392xbf16, #tpu.memory_space<vmem>>, vector<1x1x392xbf16>
    %65 = vector.shape_cast %64 : vector<1x1x392xbf16> to vector<1x392xbf16>
    %66 = vector.broadcast %65 : vector<1x392xbf16> to vector<16x392xbf16>
    %67 = arith.mulf %63, %66 : vector<16x392xbf16>
    %68 = vector.extract_strided_slice %62 {offsets = [0, 2], sizes = [16, 392], strides = [1, 1]} : vector<16x424xbf16> to vector<16x392xbf16>
    %c1_47 = arith.constant 1 : index
    %c0_48 = arith.constant 0 : index
    %c0_49 = arith.constant 0 : index
    %69 = vector.load %arg3[%c1_47, %c0_48, %c0_49] : memref<9x1x392xbf16, #tpu.memory_space<vmem>>, vector<1x1x392xbf16>
    %70 = vector.shape_cast %69 : vector<1x1x392xbf16> to vector<1x392xbf16>
    %71 = vector.broadcast %70 : vector<1x392xbf16> to vector<16x392xbf16>
    %72 = arith.mulf %68, %71 : vector<16x392xbf16>
    %73 = vector.extract_strided_slice %62 {offsets = [0, 3], sizes = [16, 392], strides = [1, 1]} : vector<16x424xbf16> to vector<16x392xbf16>
    %c2_50 = arith.constant 2 : index
    %c0_51 = arith.constant 0 : index
    %c0_52 = arith.constant 0 : index
    %74 = vector.load %arg3[%c2_50, %c0_51, %c0_52] : memref<9x1x392xbf16, #tpu.memory_space<vmem>>, vector<1x1x392xbf16>
    %75 = vector.shape_cast %74 : vector<1x1x392xbf16> to vector<1x392xbf16>
    %76 = vector.broadcast %75 : vector<1x392xbf16> to vector<16x392xbf16>
    %77 = arith.mulf %73, %76 : vector<16x392xbf16>
    %78 = vector.extract_strided_slice %62 {offsets = [0, 15], sizes = [16, 392], strides = [1, 1]} : vector<16x424xbf16> to vector<16x392xbf16>
    %c3_53 = arith.constant 3 : index
    %c0_54 = arith.constant 0 : index
    %c0_55 = arith.constant 0 : index
    %79 = vector.load %arg3[%c3_53, %c0_54, %c0_55] : memref<9x1x392xbf16, #tpu.memory_space<vmem>>, vector<1x1x392xbf16>
    %80 = vector.shape_cast %79 : vector<1x1x392xbf16> to vector<1x392xbf16>
    %81 = vector.broadcast %80 : vector<1x392xbf16> to vector<16x392xbf16>
    %82 = arith.mulf %78, %81 : vector<16x392xbf16>
    %83 = vector.extract_strided_slice %62 {offsets = [0, 16], sizes = [16, 392], strides = [1, 1]} : vector<16x424xbf16> to vector<16x392xbf16>
    %c4_56 = arith.constant 4 : index
    %c0_57 = arith.constant 0 : index
    %c0_58 = arith.constant 0 : index
    %84 = vector.load %arg3[%c4_56, %c0_57, %c0_58] : memref<9x1x392xbf16, #tpu.memory_space<vmem>>, vector<1x1x392xbf16>
    %85 = vector.shape_cast %84 : vector<1x1x392xbf16> to vector<1x392xbf16>
    %86 = vector.broadcast %85 : vector<1x392xbf16> to vector<16x392xbf16>
    %87 = arith.mulf %83, %86 : vector<16x392xbf16>
    %88 = vector.extract_strided_slice %62 {offsets = [0, 17], sizes = [16, 392], strides = [1, 1]} : vector<16x424xbf16> to vector<16x392xbf16>
    %c5_59 = arith.constant 5 : index
    %c0_60 = arith.constant 0 : index
    %c0_61 = arith.constant 0 : index
    %89 = vector.load %arg3[%c5_59, %c0_60, %c0_61] : memref<9x1x392xbf16, #tpu.memory_space<vmem>>, vector<1x1x392xbf16>
    %90 = vector.shape_cast %89 : vector<1x1x392xbf16> to vector<1x392xbf16>
    %91 = vector.broadcast %90 : vector<1x392xbf16> to vector<16x392xbf16>
    %92 = arith.mulf %88, %91 : vector<16x392xbf16>
    %93 = vector.extract_strided_slice %62 {offsets = [0, 29], sizes = [16, 392], strides = [1, 1]} : vector<16x424xbf16> to vector<16x392xbf16>
    %c6_62 = arith.constant 6 : index
    %c0_63 = arith.constant 0 : index
    %c0_64 = arith.constant 0 : index
    %94 = vector.load %arg3[%c6_62, %c0_63, %c0_64] : memref<9x1x392xbf16, #tpu.memory_space<vmem>>, vector<1x1x392xbf16>
    %95 = vector.shape_cast %94 : vector<1x1x392xbf16> to vector<1x392xbf16>
    %96 = vector.broadcast %95 : vector<1x392xbf16> to vector<16x392xbf16>
    %97 = arith.mulf %93, %96 : vector<16x392xbf16>
    %98 = vector.extract_strided_slice %62 {offsets = [0, 30], sizes = [16, 392], strides = [1, 1]} : vector<16x424xbf16> to vector<16x392xbf16>
    %c7_65 = arith.constant 7 : index
    %c0_66 = arith.constant 0 : index
    %c0_67 = arith.constant 0 : index
    %99 = vector.load %arg3[%c7_65, %c0_66, %c0_67] : memref<9x1x392xbf16, #tpu.memory_space<vmem>>, vector<1x1x392xbf16>
    %100 = vector.shape_cast %99 : vector<1x1x392xbf16> to vector<1x392xbf16>
    %101 = vector.broadcast %100 : vector<1x392xbf16> to vector<16x392xbf16>
    %102 = arith.mulf %98, %101 : vector<16x392xbf16>
    %103 = vector.extract_strided_slice %62 {offsets = [0, 31], sizes = [16, 392], strides = [1, 1]} : vector<16x424xbf16> to vector<16x392xbf16>
    %c8_68 = arith.constant 8 : index
    %c0_69 = arith.constant 0 : index
    %c0_70 = arith.constant 0 : index
    %104 = vector.load %arg3[%c8_68, %c0_69, %c0_70] : memref<9x1x392xbf16, #tpu.memory_space<vmem>>, vector<1x1x392xbf16>
    %105 = vector.shape_cast %104 : vector<1x1x392xbf16> to vector<1x392xbf16>
    %106 = vector.broadcast %105 : vector<1x392xbf16> to vector<16x392xbf16>
    %107 = arith.mulf %103, %106 : vector<16x392xbf16>
    %108 = tpu.concatenate %67, %72, %77, %82, %87, %92, %97, %102, %107 in 0 : vector<16x392xbf16>, vector<16x392xbf16>, vector<16x392xbf16>, vector<16x392xbf16>, vector<16x392xbf16>, vector<16x392xbf16>, vector<16x392xbf16>, vector<16x392xbf16>, vector<16x392xbf16> -> vector<144x392xbf16>
    %c0_71 = arith.constant 0 : index
    %c0_72 = arith.constant 0 : index
    %109 = vector.load %arg6[%c0_71, %c0_72] : memref<32x144xbf16, #tpu.memory_space<vmem>>, vector<32x144xbf16>
    %cst_73 = arith.constant dense<0.000000e+00> : vector<32x392xf32>
    %110 = tpu.matmul %109, %108, %cst_73 {dimension_numbers = #tpu.dot_dimension_numbers<[1], [0], [0], [1], [0, 0, 1, 1], [], []>} : vector<32x144xbf16>, vector<144x392xbf16>, vector<32x392xf32> -> vector<32x392xf32>
    %c0_74 = arith.constant 0 : index
    %c0_75 = arith.constant 0 : index
    %111 = vector.load %arg7[%c0_74, %c0_75] : memref<32x1xf32, #tpu.memory_space<vmem>>, vector<32x1xf32>
    %112 = vector.broadcast %111 : vector<32x1xf32> to vector<32x392xf32>
    %113 = arith.addf %110, %112 : vector<32x392xf32>
    %cst_76 = arith.constant 0.000000e+00 : f32
    %114 = vector.broadcast %cst_76 : f32 to vector<32x392xf32>
    %115 = arith.maximumf %113, %114 : vector<32x392xf32>
    %116 = arith.truncf %115 : vector<32x392xf32> to vector<32x392xbf16>
    %117 = vector.extract_strided_slice %116 {offsets = [0, 0], sizes = [32, 196], strides = [1, 1]} : vector<32x392xbf16> to vector<32x196xbf16>
    %c0_77 = arith.constant 0 : index
    %c0_78 = arith.constant 0 : index
    %c0_79 = arith.constant 0 : index
    %118 = vector.load %arg8[%c0_77, %c0_78, %c0_79] : memref<2x32x196xbf16, #tpu.memory_space<vmem>>, vector<1x32x196xbf16>
    %119 = vector.shape_cast %118 : vector<1x32x196xbf16> to vector<32x196xbf16>
    %120 = vector.shape_cast %117 : vector<32x196xbf16> to vector<1x32x196xbf16>
    tpu.vector_store %arg8[%c0_77, %c0_78, %c0_79], %120 {strides = array<i32>} : memref<2x32x196xbf16, #tpu.memory_space<vmem>>, vector<1x32x196xbf16>,
    %121 = vector.extract_strided_slice %116 {offsets = [0, 196], sizes = [32, 196], strides = [1, 1]} : vector<32x392xbf16> to vector<32x196xbf16>
    %c1_80 = arith.constant 1 : index
    %c0_81 = arith.constant 0 : index
    %c0_82 = arith.constant 0 : index
    %122 = vector.load %arg8[%c1_80, %c0_81, %c0_82] : memref<2x32x196xbf16, #tpu.memory_space<vmem>>, vector<1x32x196xbf16>
    %123 = vector.shape_cast %122 : vector<1x32x196xbf16> to vector<32x196xbf16>
    %124 = vector.shape_cast %121 : vector<32x196xbf16> to vector<1x32x196xbf16>
    tpu.vector_store %arg8[%c1_80, %c0_81, %c0_82], %124 {strides = array<i32>} : memref<2x32x196xbf16, #tpu.memory_space<vmem>>, vector<1x32x196xbf16>,
    return
  }
  func.func @transform_0(%arg0: i32) -> (i32, i32, i32) {
    %c0_i32 = arith.constant 0 : i32
    %c0_i32_0 = arith.constant 0 : i32
    %c0_i32_1 = arith.constant 0 : i32
    return %arg0, %c0_i32, %c0_i32_0 : i32, i32, i32
  }
  func.func @transform_1(%arg0: i32) -> (i32, i32, i32) {
    %c0_i32 = arith.constant 0 : i32
    %c0_i32_0 = arith.constant 0 : i32
    %c0_i32_1 = arith.constant 0 : i32
    %c0_i32_2 = arith.constant 0 : i32
    return %c0_i32, %c0_i32_0, %c0_i32_1 : i32, i32, i32
  }
  func.func @transform_2(%arg0: i32) -> (i32, i32, i32) {
    %c0_i32 = arith.constant 0 : i32
    %c0_i32_0 = arith.constant 0 : i32
    %c0_i32_1 = arith.constant 0 : i32
    %c0_i32_2 = arith.constant 0 : i32
    return %c0_i32, %c0_i32_0, %c0_i32_1 : i32, i32, i32
  }
  func.func @transform_3(%arg0: i32) -> (i32, i32) {
    %c0_i32 = arith.constant 0 : i32
    %c0_i32_0 = arith.constant 0 : i32
    %c0_i32_1 = arith.constant 0 : i32
    return %c0_i32, %c0_i32_0 : i32, i32
  }
  func.func @transform_4(%arg0: i32) -> (i32, i32) {
    %c0_i32 = arith.constant 0 : i32
    %c0_i32_0 = arith.constant 0 : i32
    %c0_i32_1 = arith.constant 0 : i32
    return %c0_i32, %c0_i32_0 : i32, i32
  }
  func.func @transform_5(%arg0: i32) -> (i32, i32) {
    %c0_i32 = arith.constant 0 : i32
    %c0_i32_0 = arith.constant 0 : i32
    %c0_i32_1 = arith.constant 0 : i32
    return %c0_i32, %c0_i32_0 : i32, i32
  }
  func.func @transform_6(%arg0: i32) -> (i32, i32) {
    %c0_i32 = arith.constant 0 : i32
    %c0_i32_0 = arith.constant 0 : i32
    %c0_i32_1 = arith.constant 0 : i32
    return %c0_i32, %c0_i32_0 : i32, i32
  }
  func.func @transform_7(%arg0: i32) -> (i32, i32, i32) {
    %c0_i32 = arith.constant 0 : i32
    %c0_i32_0 = arith.constant 0 : i32
    %c0_i32_1 = arith.constant 0 : i32
    return %arg0, %c0_i32, %c0_i32_0 : i32, i32, i32
  }
}

module attributes {stable_mosaic.version = 11 : i64} {
  func.func @_head_kernel(%arg0: i32, %arg1: memref<2x6272xbf16, #tpu.memory_space<vmem>>, %arg2: memref<2x128xf32, #tpu.memory_space<vmem>>, %arg3: memref<128x128xbf16, #tpu.memory_space<vmem>>, %arg4: memref<1x128xf32, #tpu.memory_space<vmem>>, %arg5: memref<128x32xbf16, #tpu.memory_space<vmem>>, %arg6: memref<1x32xf32, #tpu.memory_space<vmem>>, %arg7: memref<6272x128xbf16, #tpu.memory_space<vmem>>, %arg8: memref<32x128xbf16, #tpu.memory_space<vmem>>, %arg9: memref<1x128xf32, #tpu.memory_space<vmem>>, %arg10: memref<128x3xbf16, #tpu.memory_space<vmem>>, %arg11: memref<1x3xf32, #tpu.memory_space<vmem>>, %arg12: memref<2x3xf32, #tpu.memory_space<vmem>>) attributes {dimension_semantics = [#tpu.dimension_semantics<parallel>], iteration_bounds = array<i64: 1>, scalar_prefetch = 0 : i64, scratch_operands = 0 : i64, tpu.core_type = #tpu.core_type<tc>, window_params = [{transform_indices = @transform_0, window_bounds = array<i64: 2, 6272>}, {transform_indices = @transform_1, window_bounds = array<i64: 2, 128>}, {pipeline_mode = #tpu.pipeline_mode<synchronous>, transform_indices = @transform_2, window_bounds = array<i64: 128, 128>}, {pipeline_mode = #tpu.pipeline_mode<synchronous>, transform_indices = @transform_3, window_bounds = array<i64: 1, 128>}, {pipeline_mode = #tpu.pipeline_mode<synchronous>, transform_indices = @transform_4, window_bounds = array<i64: 128, 32>}, {pipeline_mode = #tpu.pipeline_mode<synchronous>, transform_indices = @transform_5, window_bounds = array<i64: 1, 32>}, {pipeline_mode = #tpu.pipeline_mode<synchronous>, transform_indices = @transform_6, window_bounds = array<i64: 6272, 128>}, {pipeline_mode = #tpu.pipeline_mode<synchronous>, transform_indices = @transform_7, window_bounds = array<i64: 32, 128>}, {pipeline_mode = #tpu.pipeline_mode<synchronous>, transform_indices = @transform_8, window_bounds = array<i64: 1, 128>}, {pipeline_mode = #tpu.pipeline_mode<synchronous>, transform_indices = @transform_9, window_bounds = array<i64: 128, 3>}, {pipeline_mode = #tpu.pipeline_mode<synchronous>, transform_indices = @transform_10, window_bounds = array<i64: 1, 3>}, {transform_indices = @transform_11, window_bounds = array<i64: 2, 3>}]} {
    %c0 = arith.constant 0 : index
    %c0_0 = arith.constant 0 : index
    %0 = vector.load %arg2[%c0, %c0_0] : memref<2x128xf32, #tpu.memory_space<vmem>>, vector<2x128xf32>
    %1 = arith.truncf %0 : vector<2x128xf32> to vector<2x128xbf16>
    %c0_1 = arith.constant 0 : index
    %c0_2 = arith.constant 0 : index
    %2 = vector.load %arg3[%c0_1, %c0_2] : memref<128x128xbf16, #tpu.memory_space<vmem>>, vector<128x128xbf16>
    %cst = arith.constant dense<0.000000e+00> : vector<2x128xf32>
    %3 = tpu.matmul %1, %2, %cst {dimension_numbers = #tpu.dot_dimension_numbers<[1], [0], [0], [1], [0, 0, 1, 1], [], []>} : vector<2x128xbf16>, vector<128x128xbf16>, vector<2x128xf32> -> vector<2x128xf32>
    %c0_3 = arith.constant 0 : index
    %c0_4 = arith.constant 0 : index
    %4 = vector.load %arg4[%c0_3, %c0_4] : memref<1x128xf32, #tpu.memory_space<vmem>>, vector<1x128xf32>
    %5 = vector.broadcast %4 : vector<1x128xf32> to vector<2x128xf32>
    %6 = arith.addf %3, %5 : vector<2x128xf32>
    %cst_5 = arith.constant 0.000000e+00 : f32
    %7 = vector.broadcast %cst_5 : f32 to vector<2x128xf32>
    %8 = arith.maximumf %6, %7 : vector<2x128xf32>
    %9 = arith.truncf %8 : vector<2x128xf32> to vector<2x128xbf16>
    %c0_6 = arith.constant 0 : index
    %c0_7 = arith.constant 0 : index
    %10 = vector.load %arg5[%c0_6, %c0_7] : memref<128x32xbf16, #tpu.memory_space<vmem>>, vector<128x32xbf16>
    %cst_8 = arith.constant dense<0.000000e+00> : vector<2x32xf32>
    %11 = tpu.matmul %9, %10, %cst_8 {dimension_numbers = #tpu.dot_dimension_numbers<[1], [0], [0], [1], [0, 0, 1, 1], [], []>} : vector<2x128xbf16>, vector<128x32xbf16>, vector<2x32xf32> -> vector<2x32xf32>
    %c0_9 = arith.constant 0 : index
    %c0_10 = arith.constant 0 : index
    %12 = vector.load %arg6[%c0_9, %c0_10] : memref<1x32xf32, #tpu.memory_space<vmem>>, vector<1x32xf32>
    %13 = vector.broadcast %12 : vector<1x32xf32> to vector<2x32xf32>
    %14 = arith.addf %11, %13 : vector<2x32xf32>
    %cst_11 = arith.constant 0.000000e+00 : f32
    %15 = vector.broadcast %cst_11 : f32 to vector<2x32xf32>
    %16 = arith.maximumf %14, %15 : vector<2x32xf32>
    %c0_12 = arith.constant 0 : index
    %c0_13 = arith.constant 0 : index
    %17 = vector.load %arg1[%c0_12, %c0_13] : memref<2x6272xbf16, #tpu.memory_space<vmem>>, vector<2x6272xbf16>
    %c0_14 = arith.constant 0 : index
    %c0_15 = arith.constant 0 : index
    %18 = vector.load %arg7[%c0_14, %c0_15] : memref<6272x128xbf16, #tpu.memory_space<vmem>>, vector<6272x128xbf16>
    %cst_16 = arith.constant dense<0.000000e+00> : vector<2x128xf32>
    %19 = tpu.matmul %17, %18, %cst_16 {dimension_numbers = #tpu.dot_dimension_numbers<[1], [0], [0], [1], [0, 0, 1, 1], [], []>} : vector<2x6272xbf16>, vector<6272x128xbf16>, vector<2x128xf32> -> vector<2x128xf32>
    %20 = arith.truncf %16 : vector<2x32xf32> to vector<2x32xbf16>
    %c0_17 = arith.constant 0 : index
    %c0_18 = arith.constant 0 : index
    %21 = vector.load %arg8[%c0_17, %c0_18] : memref<32x128xbf16, #tpu.memory_space<vmem>>, vector<32x128xbf16>
    %cst_19 = arith.constant dense<0.000000e+00> : vector<2x128xf32>
    %22 = tpu.matmul %20, %21, %cst_19 {dimension_numbers = #tpu.dot_dimension_numbers<[1], [0], [0], [1], [0, 0, 1, 1], [], []>} : vector<2x32xbf16>, vector<32x128xbf16>, vector<2x128xf32> -> vector<2x128xf32>
    %23 = arith.addf %19, %22 : vector<2x128xf32>
    %c0_20 = arith.constant 0 : index
    %c0_21 = arith.constant 0 : index
    %24 = vector.load %arg9[%c0_20, %c0_21] : memref<1x128xf32, #tpu.memory_space<vmem>>, vector<1x128xf32>
    %25 = vector.broadcast %24 : vector<1x128xf32> to vector<2x128xf32>
    %26 = arith.addf %23, %25 : vector<2x128xf32>
    %cst_22 = arith.constant 0.000000e+00 : f32
    %27 = vector.broadcast %cst_22 : f32 to vector<2x128xf32>
    %28 = arith.maximumf %26, %27 : vector<2x128xf32>
    %29 = arith.truncf %28 : vector<2x128xf32> to vector<2x128xbf16>
    %c0_23 = arith.constant 0 : index
    %c0_24 = arith.constant 0 : index
    %30 = vector.load %arg10[%c0_23, %c0_24] : memref<128x3xbf16, #tpu.memory_space<vmem>>, vector<128x3xbf16>
    %cst_25 = arith.constant dense<0.000000e+00> : vector<2x3xf32>
    %31 = tpu.matmul %29, %30, %cst_25 {dimension_numbers = #tpu.dot_dimension_numbers<[1], [0], [0], [1], [0, 0, 1, 1], [], []>} : vector<2x128xbf16>, vector<128x3xbf16>, vector<2x3xf32> -> vector<2x3xf32>
    %c0_26 = arith.constant 0 : index
    %c0_27 = arith.constant 0 : index
    %32 = vector.load %arg11[%c0_26, %c0_27] : memref<1x3xf32, #tpu.memory_space<vmem>>, vector<1x3xf32>
    %33 = vector.broadcast %32 : vector<1x3xf32> to vector<2x3xf32>
    %34 = arith.addf %31, %33 : vector<2x3xf32>
    %cst_28 = arith.constant dense<0xFF800000> : vector<2xf32>
    %35 = vector.multi_reduction <maximumf>, %34, %cst_28 [1] : vector<2x3xf32> to vector<2xf32>
    %36 = vector.shape_cast %35 : vector<2xf32> to vector<2x1xf32>
    %37 = vector.broadcast %36 : vector<2x1xf32> to vector<2x3xf32>
    %38 = arith.subf %34, %37 : vector<2x3xf32>
    %39 = math.exp %38 : vector<2x3xf32>
    %cst_29 = arith.constant dense<0.000000e+00> : vector<2xf32>
    %40 = vector.multi_reduction <add>, %39, %cst_29 [1] : vector<2x3xf32> to vector<2xf32>
    %41 = vector.shape_cast %40 : vector<2xf32> to vector<2x1xf32>
    %42 = vector.broadcast %41 : vector<2x1xf32> to vector<2x3xf32>
    %43 = arith.divf %39, %42 : vector<2x3xf32>
    %c0_30 = arith.constant 0 : index
    %c0_31 = arith.constant 0 : index
    %44 = vector.load %arg12[%c0_30, %c0_31] : memref<2x3xf32, #tpu.memory_space<vmem>>, vector<2x3xf32>
    tpu.vector_store %arg12[%c0_30, %c0_31], %43 {strides = array<i32>} : memref<2x3xf32, #tpu.memory_space<vmem>>, vector<2x3xf32>,
    return
  }
  func.func @transform_0(%arg0: i32) -> (i32, i32) {
    %c0_i32 = arith.constant 0 : i32
    %c0_i32_0 = arith.constant 0 : i32
    return %arg0, %c0_i32 : i32, i32
  }
  func.func @transform_1(%arg0: i32) -> (i32, i32) {
    %c0_i32 = arith.constant 0 : i32
    %c0_i32_0 = arith.constant 0 : i32
    return %arg0, %c0_i32 : i32, i32
  }
  func.func @transform_2(%arg0: i32) -> (i32, i32) {
    %c0_i32 = arith.constant 0 : i32
    %c0_i32_0 = arith.constant 0 : i32
    %c0_i32_1 = arith.constant 0 : i32
    return %c0_i32, %c0_i32_0 : i32, i32
  }
  func.func @transform_3(%arg0: i32) -> (i32, i32) {
    %c0_i32 = arith.constant 0 : i32
    %c0_i32_0 = arith.constant 0 : i32
    %c0_i32_1 = arith.constant 0 : i32
    return %c0_i32, %c0_i32_0 : i32, i32
  }
  func.func @transform_4(%arg0: i32) -> (i32, i32) {
    %c0_i32 = arith.constant 0 : i32
    %c0_i32_0 = arith.constant 0 : i32
    %c0_i32_1 = arith.constant 0 : i32
    return %c0_i32, %c0_i32_0 : i32, i32
  }
  func.func @transform_5(%arg0: i32) -> (i32, i32) {
    %c0_i32 = arith.constant 0 : i32
    %c0_i32_0 = arith.constant 0 : i32
    %c0_i32_1 = arith.constant 0 : i32
    return %c0_i32, %c0_i32_0 : i32, i32
  }
  func.func @transform_6(%arg0: i32) -> (i32, i32) {
    %c0_i32 = arith.constant 0 : i32
    %c0_i32_0 = arith.constant 0 : i32
    %c0_i32_1 = arith.constant 0 : i32
    return %c0_i32, %c0_i32_0 : i32, i32
  }
  func.func @transform_7(%arg0: i32) -> (i32, i32) {
    %c0_i32 = arith.constant 0 : i32
    %c0_i32_0 = arith.constant 0 : i32
    %c0_i32_1 = arith.constant 0 : i32
    return %c0_i32, %c0_i32_0 : i32, i32
  }
  func.func @transform_8(%arg0: i32) -> (i32, i32) {
    %c0_i32 = arith.constant 0 : i32
    %c0_i32_0 = arith.constant 0 : i32
    %c0_i32_1 = arith.constant 0 : i32
    return %c0_i32, %c0_i32_0 : i32, i32
  }
  func.func @transform_9(%arg0: i32) -> (i32, i32) {
    %c0_i32 = arith.constant 0 : i32
    %c0_i32_0 = arith.constant 0 : i32
    %c0_i32_1 = arith.constant 0 : i32
    return %c0_i32, %c0_i32_0 : i32, i32
  }
  func.func @transform_10(%arg0: i32) -> (i32, i32) {
    %c0_i32 = arith.constant 0 : i32
    %c0_i32_0 = arith.constant 0 : i32
    %c0_i32_1 = arith.constant 0 : i32
    return %c0_i32, %c0_i32_0 : i32, i32
  }
  func.func @transform_11(%arg0: i32) -> (i32, i32) {
    %c0_i32 = arith.constant 0 : i32
    %c0_i32_0 = arith.constant 0 : i32
    return %arg0, %c0_i32 : i32, i32
  }
}

</mosaic_0001>

<llo_original>
// kernel: tile.10
$region0: #{tile.10}
  %s0 = inlined_call_operand.vmem [shape: bf16[9,2,196], index: 0, kind: input, shape index: {}]
  %s1 = inlined_call_operand.vmem [shape: bf16[9,392], index: 1, kind: output, shape index: {}]
  $region1: #{tile.10} parent=0
    #allocation0 [shape = 'u8[32768]{0}', space=vmem, size = 0x8000, scoped, tag = 'scoped mem for output reshape']
    #allocation1 [shape = 'u8[73728]{0}', space=vmem, size = 0x12000, scoped, tag = 'scoped mem for input reshape']
    %s3 = smul.u32 1, 2
    %s4 = sshll.u32 1, %s3
    %s5 = ssub.s32 %s4, 1
    %s6 = smul.addr 1, 17
    %s7 = scalar_lea.vmem %s0, %s6
    %s8 = sshrl.u32 %s5, 1
    %s9 = sor.u32 %s5, %s8
    %s10 = sand.u32 %s9, 85
    %s11 = sshrl.u32 %s10, 1
    %s12 = sor.u32 %s10, %s11
    %s13 = sand.u32 51, %s12
    %s14 = sshrl.u32 %s13, 2
    %s15 = sor.u32 %s13, %s14
    %s16 = sand.u32 15, %s15
    %v17 = vld [vmem:[%s7] sm:%s16]
    %v18 = vunpack.c.l.bf16 %v17
    %v19 = vunpack.c.h.bf16 %v17
    %s20 = scalar_lea.vmem [#allocation1], 136
    %21 = vst [vmem:[%s20] sm:%s5] %v18
    %s22 = smul.addr 1, 16
    %s23 = scalar_lea.vmem %s0, %s22
    %s24 = sshrl.u32 %s5, 1
    %s25 = sor.u32 %s5, %s24
    %s26 = sand.u32 %s25, 85
    %s27 = sshrl.u32 %s26, 1
    %s28 = sor.u32 %s26, %s27
    %s29 = sand.u32 51, %s28
    %s30 = sshrl.u32 %s29, 2
    %s31 = sor.u32 %s29, %s30
    %s32 = sand.u32 15, %s31
    %v33 = vld [vmem:[%s23] sm:%s32]
    %v34 = vunpack.c.l.bf16 %v33
    %v35 = vunpack.c.h.bf16 %v33
    %s36 = scalar_lea.vmem [#allocation1], 128
    %37 = vst [vmem:[%s36] sm:%s5] %v34
    %s38 = smul.addr 1, 15
    %s39 = scalar_lea.vmem %s0, %s38
    %s40 = sshrl.u32 %s5, 1
    %s41 = sor.u32 %s5, %s40
    %s42 = sand.u32 %s41, 85
    %s43 = sshrl.u32 %s42, 1
    %s44 = sor.u32 %s42, %s43
    %s45 = sand.u32 51, %s44
    %s46 = sshrl.u32 %s45, 2
    %s47 = sor.u32 %s45, %s46
    %s48 = sand.u32 15, %s47
    %v49 = vld [vmem:[%s39] sm:%s48]
    %v50 = vunpack.c.l.bf16 %v49
    %v51 = vunpack.c.h.bf16 %v49
    %s52 = scalar_lea.vmem [#allocation1], 120
    %53 = vst [vmem:[%s52] sm:%s5] %v50
    %s54 = smul.addr 1, 14
    %s55 = scalar_lea.vmem %s0, %s54
    %s56 = sshrl.u32 %s5, 1
    %s57 = sor.u32 %s5, %s56
    %s58 = sand.u32 %s57, 85
    %s59 = sshrl.u32 %s58, 1
    %s60 = sor.u32 %s58, %s59
    %s61 = sand.u32 51, %s60
    %s62 = sshrl.u32 %s61, 2
    %s63 = sor.u32 %s61, %s62
    %s64 = sand.u32 15, %s63
    %v65 = vld [vmem:[%s55] sm:%s64]
    %v66 = vunpack.c.l.bf16 %v65
    %v67 = vunpack.c.h.bf16 %v65
    %s68 = scalar_lea.vmem [#allocation1], 112
    %69 = vst [vmem:[%s68] sm:%s5] %v66
    %s70 = smul.addr 1, 13
    %s71 = scalar_lea.vmem %s0, %s70
    %s72 = sshrl.u32 %s5, 1
    %s73 = sor.u32 %s5, %s72
    %s74 = sand.u32 %s73, 85
    %s75 = sshrl.u32 %s74, 1
    %s76 = sor.u32 %s74, %s75
    %s77 = sand.u32 51, %s76
    %s78 = sshrl.u32 %s77, 2
    %s79 = sor.u32 %s77, %s78
    %s80 = sand.u32 15, %s79
    %v81 = vld [vmem:[%s71] sm:%s80]
    %v82 = vunpack.c.l.bf16 %v81
    %v83 = vunpack.c.h.bf16 %v81
    %s84 = scalar_lea.vmem [#allocation1], 104
    %85 = vst [vmem:[%s84] sm:%s5] %v82
    %s86 = smul.addr 1, 12
    %s87 = scalar_lea.vmem %s0, %s86
    %s88 = sshrl.u32 %s5, 1
    %s89 = sor.u32 %s5, %s88
    %s90 = sand.u32 %s89, 85
    %s91 = sshrl.u32 %s90, 1
    %s92 = sor.u32 %s90, %s91
    %s93 = sand.u32 51, %s92
    %s94 = sshrl.u32 %s93, 2
    %s95 = sor.u32 %s93, %s94
    %s96 = sand.u32 15, %s95
    %v97 = vld [vmem:[%s87] sm:%s96]
    %v98 = vunpack.c.l.bf16 %v97
    %v99 = vunpack.c.h.bf16 %v97
    %s100 = scalar_lea.vmem [#allocation1], 96
    %101 = vst [vmem:[%s100] sm:%s5] %v98
    %s102 = smul.addr 1, 11
    %s103 = scalar_lea.vmem %s0, %s102
    %s104 = sshrl.u32 %s5, 1
    %s105 = sor.u32 %s5, %s104
    %s106 = sand.u32 %s105, 85
    %s107 = sshrl.u32 %s106, 1
    %s108 = sor.u32 %s106, %s107
    %s109 = sand.u32 51, %s108
    %s110 = sshrl.u32 %s109, 2
    %s111 = sor.u32 %s109, %s110
    %s112 = sand.u32 15, %s111
    %v113 = vld [vmem:[%s103] sm:%s112]
    %v114 = vunpack.c.l.bf16 %v113
    %v115 = vunpack.c.h.bf16 %v113
    %s116 = scalar_lea.vmem [#allocation1], 88
    %117 = vst [vmem:[%s116] sm:%s5] %v114
    %s118 = smul.addr 1, 10
    %s119 = scalar_lea.vmem %s0, %s118
    %s120 = sshrl.u32 %s5, 1
    %s121 = sor.u32 %s5, %s120
    %s122 = sand.u32 %s121, 85
    %s123 = sshrl.u32 %s122, 1
    %s124 = sor.u32 %s122, %s123
    %s125 = sand.u32 51, %s124
    %s126 = sshrl.u32 %s125, 2
    %s127 = sor.u32 %s125, %s126
    %s128 = sand.u32 15, %s127
    %v129 = vld [vmem:[%s119] sm:%s128]
    %v130 = vunpack.c.l.bf16 %v129
    %v131 = vunpack.c.h.bf16 %v129
    %s132 = scalar_lea.vmem [#allocation1], 80
    %133 = vst [vmem:[%s132] sm:%s5] %v130
    %s134 = smul.addr 1, 9
    %s135 = scalar_lea.vmem %s0, %s134
    %s136 = sshrl.u32 %s5, 1
    %s137 = sor.u32 %s5, %s136
    %s138 = sand.u32 %s137, 85
    %s139 = sshrl.u32 %s138, 1
    %s140 = sor.u32 %s138, %s139
    %s141 = sand.u32 51, %s140
    %s142 = sshrl.u32 %s141, 2
    %s143 = sor.u32 %s141, %s142
    %s144 = sand.u32 15, %s143
    %v145 = vld [vmem:[%s135] sm:%s144]
    %v146 = vunpack.c.l.bf16 %v145
    %v147 = vunpack.c.h.bf16 %v145
    %s148 = scalar_lea.vmem [#allocation1], 72
    %149 = vst [vmem:[%s148] sm:%s5] %v146
    %s150 = smul.addr 1, 8
    %s151 = scalar_lea.vmem %s0, %s150
    %s152 = sshrl.u32 %s5, 1
    %s153 = sor.u32 %s5, %s152
    %s154 = sand.u32 %s153, 85
    %s155 = sshrl.u32 %s154, 1
    %s156 = sor.u32 %s154, %s155
    %s157 = sand.u32 51, %s156
    %s158 = sshrl.u32 %s157, 2
    %s159 = sor.u32 %s157, %s158
    %s160 = sand.u32 15, %s159
    %v161 = vld [vmem:[%s151] sm:%s160]
    %v162 = vunpack.c.l.bf16 %v161
    %v163 = vunpack.c.h.bf16 %v161
    %s164 = scalar_lea.vmem [#allocation1], 64
    %165 = vst [vmem:[%s164] sm:%s5] %v162
    %s166 = smul.addr 1, 7
    %s167 = scalar_lea.vmem %s0, %s166
    %s168 = sshrl.u32 %s5, 1
    %s169 = sor.u32 %s5, %s168
    %s170 = sand.u32 %s169, 85
    %s171 = sshrl.u32 %s170, 1
    %s172 = sor.u32 %s170, %s171
    %s173 = sand.u32 51, %s172
    %s174 = sshrl.u32 %s173, 2
    %s175 = sor.u32 %s173, %s174
    %s176 = sand.u32 15, %s175
    %v177 = vld [vmem:[%s167] sm:%s176]
    %v178 = vunpack.c.l.bf16 %v177
    %v179 = vunpack.c.h.bf16 %v177
    %s180 = scalar_lea.vmem [#allocation1], 56
    %181 = vst [vmem:[%s180] sm:%s5] %v178
    %s182 = smul.addr 1, 6
    %s183 = scalar_lea.vmem %s0, %s182
    %s184 = sshrl.u32 %s5, 1
    %s185 = sor.u32 %s5, %s184
    %s186 = sand.u32 %s185, 85
    %s187 = sshrl.u32 %s186, 1
    %s188 = sor.u32 %s186, %s187
    %s189 = sand.u32 51, %s188
    %s190 = sshrl.u32 %s189, 2
    %s191 = sor.u32 %s189, %s190
    %s192 = sand.u32 15, %s191
    %v193 = vld [vmem:[%s183] sm:%s192]
    %v194 = vunpack.c.l.bf16 %v193
    %v195 = vunpack.c.h.bf16 %v193
    %s196 = scalar_lea.vmem [#allocation1], 48
    %197 = vst [vmem:[%s196] sm:%s5] %v194
    %s198 = smul.addr 1, 5
    %s199 = scalar_lea.vmem %s0, %s198
    %s200 = sshrl.u32 %s5, 1
    %s201 = sor.u32 %s5, %s200
    %s202 = sand.u32 %s201, 85
    %s203 = sshrl.u32 %s202, 1
    %s204 = sor.u32 %s202, %s203
    %s205 = sand.u32 51, %s204
    %s206 = sshrl.u32 %s205, 2
    %s207 = sor.u32 %s205, %s206
    %s208 = sand.u32 15, %s207
    %v209 = vld [vmem:[%s199] sm:%s208]
    %v210 = vunpack.c.l.bf16 %v209
    %v211 = vunpack.c.h.bf16 %v209
    %s212 = scalar_lea.vmem [#allocation1], 40
    %213 = vst [vmem:[%s212] sm:%s5] %v210
    %s214 = smul.addr 1, 4
    %s215 = scalar_lea.vmem %s0, %s214
    %s216 = sshrl.u32 %s5, 1
    %s217 = sor.u32 %s5, %s216
    %s218 = sand.u32 %s217, 85
    %s219 = sshrl.u32 %s218, 1
    %s220 = sor.u32 %s218, %s219
    %s221 = sand.u32 51, %s220
    %s222 = sshrl.u32 %s221, 2
    %s223 = sor.u32 %s221, %s222
    %s224 = sand.u32 15, %s223
    %v225 = vld [vmem:[%s215] sm:%s224]
    %v226 = vunpack.c.l.bf16 %v225
    %v227 = vunpack.c.h.bf16 %v225
    %s228 = scalar_lea.vmem [#allocation1], 32
    %229 = vst [vmem:[%s228] sm:%s5] %v226
    %s230 = smul.addr 1, 3
    %s231 = scalar_lea.vmem %s0, %s230
    %s232 = sshrl.u32 %s5, 1
    %s233 = sor.u32 %s5, %s232
    %s234 = sand.u32 %s233, 85
    %s235 = sshrl.u32 %s234, 1
    %s236 = sor.u32 %s234, %s235
    %s237 = sand.u32 51, %s236
    %s238 = sshrl.u32 %s237, 2
    %s239 = sor.u32 %s237, %s238
    %s240 = sand.u32 15, %s239
    %v241 = vld [vmem:[%s231] sm:%s240]
    %v242 = vunpack.c.l.bf16 %v241
    %v243 = vunpack.c.h.bf16 %v241
    %s244 = scalar_lea.vmem [#allocation1], 24
    %245 = vst [vmem:[%s244] sm:%s5] %v242
    %s246 = smul.addr 1, 2
    %s247 = scalar_lea.vmem %s0, %s246
    %s248 = sshrl.u32 %s5, 1
    %s249 = sor.u32 %s5, %s248
    %s250 = sand.u32 %s249, 85
    %s251 = sshrl.u32 %s250, 1
    %s252 = sor.u32 %s250, %s251
    %s253 = sand.u32 51, %s252
    %s254 = sshrl.u32 %s253, 2
    %s255 = sor.u32 %s253, %s254
    %s256 = sand.u32 15, %s255
    %v257 = vld [vmem:[%s247] sm:%s256]
    %v258 = vunpack.c.l.bf16 %v257
    %v259 = vunpack.c.h.bf16 %v257
    %s260 = scalar_lea.vmem [#allocation1], 16
    %261 = vst [vmem:[%s260] sm:%s5] %v258
    %s262 = scalar_lea.vmem %s0, 1
    %s263 = sshrl.u32 %s5, 1
    %s264 = sor.u32 %s5, %s263
    %s265 = sand.u32 %s264, 85
    %s266 = sshrl.u32 %s265, 1
    %s267 = sor.u32 %s265, %s266
    %s268 = sand.u32 51, %s267
    %s269 = sshrl.u32 %s268, 2
    %s270 = sor.u32 %s268, %s269
    %s271 = sand.u32 15, %s270
    %v272 = vld [vmem:[%s262] sm:%s271]
    %v273 = vunpack.c.l.bf16 %v272
    %v274 = vunpack.c.h.bf16 %v272
    %s275 = scalar_lea.vmem [#allocation1], 8
    %276 = vst [vmem:[%s275] sm:%s5] %v273
    %s277 = sshrl.u32 %s5, 1
    %s278 = sor.u32 %s5, %s277
    %s279 = sand.u32 %s278, 85
    %s280 = sshrl.u32 %s279, 1
    %s281 = sor.u32 %s279, %s280
    %s282 = sand.u32 51, %s281
    %s283 = sshrl.u32 %s282, 2
    %s284 = sor.u32 %s282, %s283
    %s285 = sand.u32 15, %s284
    %v286 = vld [vmem:[%s0] sm:%s285]
    %v287 = vunpack.c.l.bf16 %v286
    %v288 = vunpack.c.h.bf16 %v286
    %289 = vst [vmem:[#allocation1] sm:%s5] %v287
    %s290 = scalar_lea.vmem [#allocation1], 8
    %s291 = smov 3
    %v292 = vld [vmem:[%s290] ss:$16 sm:%s291]
    %s293 = scalar_lea.vmem [#allocation1], 8
    %s294 = smov 12
    %v295 = vld [vmem:[%s293] ss:$16 sm:%s294]
    %vm296 = vcmask 1043458
    %v297 = vsel %vm296, %v295, %v292
    %s298 = scalar_lea.vmem [#allocation1], 8
    %s299 = smov 48
    %v300 = vld [vmem:[%s298] ss:$16 sm:%s299]
    %vm301 = vcmask 1045508
    %v302 = vsel %vm301, %v300, %v297
    %s303 = scalar_lea.vmem [#allocation1], 8
    %s304 = smov 192
    %v305 = vld [vmem:[%s303] ss:$16 sm:%s304]
    %vm306 = vcmask 1047558
    %v307 = vsel %vm306, %v305, %v302
    %vm308 = vcmask 556032
    %s309 = scalar_lea.vmem [#allocation0], 8
    %310 = vst.msk [vmem:[%s309] sm:$0xff] %vm308, %v307
    %s311 = scalar_lea.vmem [#allocation1], 136
    %v312 = vld [vmem:[%s311] sm:$0x1]
    %vm313 = vcmask 556032
    %s314 = scalar_lea.vmem [#allocation0], 40
    %315 = vst.msk [vmem:[%s314] sm:$0x1] %vm313, %v312
    %s316 = smov 3
    %v317 = vld [vmem:[#allocation1] ss:$16 sm:%s316]
    %s318 = smov 12
    %v319 = vld [vmem:[#allocation1] ss:$16 sm:%s318]
    %vm320 = vcmask 1043458
    %v321 = vsel %vm320, %v319, %v317
    %s322 = smov 48
    %v323 = vld [vmem:[#allocation1] ss:$16 sm:%s322]
    %vm324 = vcmask 1045508
    %v325 = vsel %vm324, %v323, %v321
    %s326 = smov 192
    %v327 = vld [vmem:[#allocation1] ss:$16 sm:%s326]
    %vm328 = vcmask 1047558
    %v329 = vsel %vm328, %v327, %v325
    %330 = vst [vmem:[#allocation0] sm:$0xff] %v329
    %s331 = scalar_lea.vmem [#allocation1], 128
    %v332 = vld [vmem:[%s331] sm:$0x1]
    %s333 = scalar_lea.vmem [#allocation0], 32
    %334 = vst [vmem:[%s333] sm:$0x1] %v332
    %s335 = scalar_lea.vmem [#allocation1], 9
    %s336 = smov 3
    %v337 = vld [vmem:[%s335] ss:$16 sm:%s336]
    %s338 = scalar_lea.vmem [#allocation1], 9
    %s339 = smov 12
    %v340 = vld [vmem:[%s338] ss:$16 sm:%s339]
    %vm341 = vcmask 1043458
    %v342 = vsel %vm341, %v340, %v337
    %s343 = scalar_lea.vmem [#allocation1], 9
    %s344 = smov 48
    %v345 = vld [vmem:[%s343] ss:$16 sm:%s344]
    %vm346 = vcmask 1045508
    %v347 = vsel %vm346, %v345, %v342
    %s348 = scalar_lea.vmem [#allocation1], 9
    %s349 = smov 192
    %v350 = vld [vmem:[%s348] ss:$16 sm:%s349]
    %vm351 = vcmask 1047558
    %v352 = vsel %vm351, %v350, %v347
    %s353 = scalar_lea.vmem [#allocation1], 1
    %s354 = smov 3
    %v355 = vld [vmem:[%s353] ss:$16 sm:%s354]
    %s356 = scalar_lea.vmem [#allocation1], 1
    %s357 = smov 12
    %v358 = vld [vmem:[%s356] ss:$16 sm:%s357]
    %vm359 = vcmask 1043458
    %v360 = vsel %vm359, %v358, %v355
    %s361 = scalar_lea.vmem [#allocation1], 1
    %s362 = smov 48
    %v363 = vld [vmem:[%s361] ss:$16 sm:%s362]
    %vm364 = vcmask 1045508
    %v365 = vsel %vm364, %v363, %v360
    %s366 = scalar_lea.vmem [#allocation1], 1
    %s367 = smov 192
    %v368 = vld [vmem:[%s366] ss:$16 sm:%s367]
    %vm369 = vcmask 1047558
    %v370 = vsel %vm369, %v368, %v365
    %vm371 = vcmask 490496
    %v372 = vsel %vm371, %v370, %v352
    %373 = vrot.lane.b32.xlu0 %v372, 68
    %v374 = vpop.permute.xlu0 %373
    %vm375 = vcmask 64512
    %s376 = scalar_lea.vmem [#allocation0], 24
    %377 = vst.msk [vmem:[%s376] sm:$0xff] %vm375, %v374
    %vm378 = vcmask 1048096
    %s379 = scalar_lea.vmem [#allocation0], 8
    %380 = vst.msk [vmem:[%s379] sm:$0xff] %vm378, %v374
    %s381 = scalar_lea.vmem [#allocation1], 137
    %v382 = vld [vmem:[%s381] sm:$0x1]
    %s383 = scalar_lea.vmem [#allocation1], 129
    %s384 = smov 3
    %v385 = vld [vmem:[%s383] ss:$-120 sm:%s384]
    %s386 = scalar_lea.vmem [#allocation1], 4294967289
    %s387 = smov 12
    %v388 = vld [vmem:[%s386] ss:$16 sm:%s387]
    %vm389 = vcmask 1043458
    %v390 = vsel %vm389, %v388, %v385
    %s391 = scalar_lea.vmem [#allocation1], 4294967289
    %s392 = smov 48
    %v393 = vld [vmem:[%s391] ss:$16 sm:%s392]
    %vm394 = vcmask 1045508
    %v395 = vsel %vm394, %v393, %v390
    %s396 = scalar_lea.vmem [#allocation1], 4294967289
    %s397 = smov 192
    %v398 = vld [vmem:[%s396] ss:$16 sm:%s397]
    %vm399 = vcmask 1047558
    %v400 = vsel %vm399, %v398, %v395
    %vm401 = vcmask 490496
    %v402 = vsel %vm401, %v400, %v382
    %403 = vrot.lane.b32.xlu0 %v402, 68
    %v404 = vpop.permute.xlu0 %403
    %vm405 = vcmask 64512
    %s406 = scalar_lea.vmem [#allocation0], 56
    %407 = vst.msk [vmem:[%s406] sm:$0x1] %vm405, %v404
    %vm408 = vcmask 1048096
    %s409 = scalar_lea.vmem [#allocation0], 40
    %410 = vst.msk [vmem:[%s409] ss:$-24 sm:$0x3] %vm408, %v404
    %s411 = scalar_lea.vmem [#allocation0], 15
    %412 = vst.msk [vmem:[%s411] sm:$0xfc] %vm408, %v404
    %s413 = scalar_lea.vmem [#allocation1], 1
    %s414 = smov 3
    %v415 = vld [vmem:[%s413] ss:$16 sm:%s414]
    %s416 = scalar_lea.vmem [#allocation1], 1
    %s417 = smov 12
    %v418 = vld [vmem:[%s416] ss:$16 sm:%s417]
    %vm419 = vcmask 1043458
    %v420 = vsel %vm419, %v418, %v415
    %s421 = scalar_lea.vmem [#allocation1], 1
    %s422 = smov 48
    %v423 = vld [vmem:[%s421] ss:$16 sm:%s422]
    %vm424 = vcmask 1045508
    %v425 = vsel %vm424, %v423, %v420
    %s426 = scalar_lea.vmem [#allocation1], 1
    %s427 = smov 192
    %v428 = vld [vmem:[%s426] ss:$16 sm:%s427]
    %vm429 = vcmask 1047558
    %v430 = vsel %vm429, %v428, %v425
    %s431 = scalar_lea.vmem [#allocation1], 137
    %s432 = smov 3
    %v433 = vld [vmem:[%s431] ss:$-16 sm:%s432]
    %vm434 = vcmask 490496
    %v435 = vsel %vm434, %v433, %v430
    %436 = vrot.lane.b32.xlu0 %v435, 68
    %v437 = vpop.permute.xlu0 %436
    %vm438 = vcmask 556032
    %s439 = scalar_lea.vmem [#allocation0], 16
    %440 = vst.msk [vmem:[%s439] sm:$0xff] %vm438, %v437
    %vm441 = vcmask 1048096
    %s442 = scalar_lea.vmem [#allocation0], 48
    %443 = vst.msk [vmem:[%s442] ss:$-25 sm:$0x3] %vm441, %v437
    %s444 = scalar_lea.vmem [#allocation1], 129
    %v445 = vld [vmem:[%s444] sm:$0x1]
    %446 = vrot.lane.b32.xlu0 %v445, 68
    %v447 = vpop.permute.xlu0 %446
    %vm448 = vcmask 556032
    %s449 = scalar_lea.vmem [#allocation0], 48
    %450 = vst.msk [vmem:[%s449] sm:$0x1] %vm448, %v447
    %s452 = smul.u32 4, 2
    %s453 = sshll.u32 1, %s452
    %s454 = ssub.s32 %s453, 1
    %s455 = sshrl.u32 %s452, 1
    %v456 = vld [vmem:[#allocation0] sm:%s454]
    %v457 = vpack.c.bf16 0.0, %v456
    %s458 = sshll.u32 1, %s455
    %s459 = ssub.s32 %s458, 1
    %460 = vst [vmem:[%s1] sm:%s459] %v457
    %s461 = scalar_lea.vmem [#allocation0], 8
    %v462 = vld [vmem:[%s461] sm:%s454]
    %v463 = vpack.c.bf16 0.0, %v462
    %s464 = sshll.u32 1, %s455
    %s465 = ssub.s32 %s464, 1
    %s466 = scalar_lea.vmem %s1, 4
    %467 = vst [vmem:[%s466] sm:%s465] %v463
    %s468 = scalar_lea.vmem [#allocation0], 16
    %v469 = vld [vmem:[%s468] sm:%s454]
    %v470 = vpack.c.bf16 0.0, %v469
    %s471 = sshll.u32 1, %s455
    %s472 = ssub.s32 %s471, 1
    %s473 = smul.addr 4, 2
    %s474 = scalar_lea.vmem %s1, %s473
    %475 = vst [vmem:[%s474] sm:%s472] %v470
    %s476 = scalar_lea.vmem [#allocation0], 24
    %v477 = vld [vmem:[%s476] sm:%s454]
    %v478 = vpack.c.bf16 0.0, %v477
    %s479 = sshll.u32 1, %s455
    %s480 = ssub.s32 %s479, 1
    %s481 = smul.addr 4, 3
    %s482 = scalar_lea.vmem %s1, %s481
    %483 = vst [vmem:[%s482] sm:%s480] %v478
    %s484 = scalar_lea.vmem [#allocation0], 32
    %v485 = vld [vmem:[%s484] sm:%s454]
    %v486 = vpack.c.bf16 0.0, %v485
    %s487 = sshll.u32 1, %s455
    %s488 = ssub.s32 %s487, 1
    %s489 = smul.addr 4, 4
    %s490 = scalar_lea.vmem %s1, %s489
    %491 = vst [vmem:[%s490] sm:%s488] %v486
    %s492 = scalar_lea.vmem [#allocation0], 40
    %v493 = vld [vmem:[%s492] sm:%s454]
    %v494 = vpack.c.bf16 0.0, %v493
    %s495 = sshll.u32 1, %s455
    %s496 = ssub.s32 %s495, 1
    %s497 = smul.addr 4, 5
    %s498 = scalar_lea.vmem %s1, %s497
    %499 = vst [vmem:[%s498] sm:%s496] %v494
    %s500 = scalar_lea.vmem [#allocation0], 48
    %v501 = vld [vmem:[%s500] sm:%s454]
    %v502 = vpack.c.bf16 0.0, %v501
    %s503 = sshll.u32 1, %s455
    %s504 = ssub.s32 %s503, 1
    %s505 = smul.addr 4, 6
    %s506 = scalar_lea.vmem %s1, %s505
    %507 = vst [vmem:[%s506] sm:%s504] %v502
    %s508 = scalar_lea.vmem [#allocation0], 56
    %v509 = vld [vmem:[%s508] sm:%s454]
    %v510 = vpack.c.bf16 0.0, %v509
    %s511 = sshll.u32 1, %s455
    %s512 = ssub.s32 %s511, 1
    %s513 = smul.addr 4, 7
    %s514 = scalar_lea.vmem %s1, %s513
    %515 = vst [vmem:[%s514] sm:%s512] %v510

// kernel: qnet_forward.2
$region0: #{qnet_forward.2}
  #allocation0 [shape = 'u32[]', space=smem, size = 0x4, offset = 0x4, fixed_abs, tag = 'smem constant byte address 0x4 - core index']
  #allocation1 [shape = 'u32[144,128]{1,0:T(1,128)}', space=vmem, size = 0x12000, scoped, tag = 'internal scratch']
  %s0 = inlined_call_operand.vmem [shape: bf16[1,2,456], index: 0, kind: input, shape index: {}]
  %s1 = inlined_call_operand.vmem [shape: bf16[9,1,424], index: 1, kind: input, shape index: {}]
  %s2 = inlined_call_operand.vmem [shape: bf16[9,1,392], index: 2, kind: input, shape index: {}]
  %s3 = inlined_call_operand.hbm [shape: bf16[16,18], index: 3, kind: input, shape index: {}]
  %s4 = inlined_call_operand.vmem [shape: f32[16,1], index: 4, kind: input, shape index: {}]
  %s5 = inlined_call_operand.hbm [shape: bf16[32,144], index: 5, kind: input, shape index: {}]
  %s6 = inlined_call_operand.vmem [shape: f32[32,1], index: 6, kind: input, shape index: {}]
  %s7 = inlined_call_operand.vmem [shape: bf16[2,32,196], index: 7, kind: output, shape index: {}]
  %s8 = sld [smem:[#allocation0]]
  $region46: #{qnet_forward.2} parent=0
    _
  %s10 = ssub.s32 1, %s8
  %s11 = scalar_select 0, %s10, %s8
  $region1: #{qnet_forward.2} parent=0
    #allocation2 [shape = 'u8[4096]{0}', space=vmem, size = 0x1000, scoped, tag = 'input window, operand 3, single buffered']
    #allocation3 [shape = 's32[1]{0}', space=sflag, size = 0x4, scoped, tag = 'scoped memory for qnet_forward.2']
    #allocation4 [shape = 'u8[16384]{0}', space=vmem, size = 0x4000, scoped, tag = 'input window, operand 5, single buffered']
    #allocation5 [shape = 's32[1]{0}', space=sflag, size = 0x4, scoped, tag = 'scoped memory for qnet_forward.2']
    %12 = vsyncpa [#allocation3], 0
    %13 = vsyncpa [#allocation5], 0
    // Predicated region
    $region2: #{qnet_forward.2} parent=1 // pred_check
      _
    $region3: #{qnet_forward.2} parent=1 // pred_check_branch
      %15 = sbr.rel (0) target = $region5
    $region4: #{qnet_forward.2} parent=1 // pred_region
      _
    $region5: #{qnet_forward.2} parent=1 // pred_fallthru
      _
    // Predicated region
    $region6: #{qnet_forward.2} parent=1 // pred_check
      _
    $region7: #{qnet_forward.2} parent=1 // pred_check_branch
      %17 = sbr.rel (0) target = $region9
    $region8: #{qnet_forward.2} parent=1 // pred_region
      _
    $region9: #{qnet_forward.2} parent=1 // pred_fallthru
      _
    // Predicated region
    $region10: #{qnet_forward.2} parent=1 // pred_check
      _
    $region11: #{qnet_forward.2} parent=1 // pred_check_branch
      %19 = sbr.rel (0) target = $region13
    $region12: #{qnet_forward.2} parent=1 // pred_region
      _
    $region13: #{qnet_forward.2} parent=1 // pred_fallthru
      _
    // Predicated region
    $region14: #{qnet_forward.2} parent=1 // pred_check
      _
    $region15: #{qnet_forward.2} parent=1 // pred_check_branch
      %21 = sbr.rel (0) target = $region17
    $region16: #{qnet_forward.2} parent=1 // pred_region
      %s23 = ssub.s32 128, 128
      %24 = vsyncadd [#allocation3], %s23
      %s25 = sshll.u32 [#allocation2], 4
      %s26 = int_to_ptr.vmem [resolvable:$true] %s25
      %31 = dma.hbm_to_vmem [thread:$0]  %s3, 128, %s26, [#allocation3], 64, 64, 4
    $region17: #{qnet_forward.2} parent=1 // pred_fallthru
      _
    // Predicated region
    $region18: #{qnet_forward.2} parent=1 // pred_check
      _
    $region19: #{qnet_forward.2} parent=1 // pred_check_branch
      %33 = sbr.rel (0) target = $region21
    $region20: #{qnet_forward.2} parent=1 // pred_region
      _
    $region21: #{qnet_forward.2} parent=1 // pred_fallthru
      _
    // Predicated region
    $region22: #{qnet_forward.2} parent=1 // pred_check
      _
    $region23: #{qnet_forward.2} parent=1 // pred_check_branch
      %35 = sbr.rel (0) target = $region25
    $region24: #{qnet_forward.2} parent=1 // pred_region
      %s37 = ssub.s32 512, 512
      %38 = vsyncadd [#allocation5], %s37
      %s39 = sshll.u32 [#allocation4], 4
      %s40 = int_to_ptr.vmem [resolvable:$true] %s39
      %45 = dma.hbm_to_vmem [thread:$0]  %s5, 512, %s40, [#allocation5], 128, 128, 8
    $region25: #{qnet_forward.2} parent=1 // pred_fallthru
      _
    // Predicated region
    $region26: #{qnet_forward.2} parent=1 // pred_check
      _
    $region27: #{qnet_forward.2} parent=1 // pred_check_branch
      %47 = sbr.rel (0) target = $region29
    $region28: #{qnet_forward.2} parent=1 // pred_region
      _
    $region29: #{qnet_forward.2} parent=1 // pred_fallthru
      _
    // Predicated region
    $region30: #{qnet_forward.2} parent=1 // pred_check
      _
    $region31: #{qnet_forward.2} parent=1 // pred_check_branch
      %49 = sbr.rel (0) target = $region33
    $region32: #{qnet_forward.2} parent=1 // pred_region
      %50 = dma.done [#allocation3], 128
    $region33: #{qnet_forward.2} parent=1 // pred_fallthru
      _
    // Predicated region
    $region34: #{qnet_forward.2} parent=1 // pred_check
      _
    $region35: #{qnet_forward.2} parent=1 // pred_check_branch
      %52 = sbr.rel (0) target = $region37
    $region36: #{qnet_forward.2} parent=1 // pred_region
      %53 = dma.done [#allocation5], 512
    $region37: #{qnet_forward.2} parent=1 // pred_fallthru
      _
    %v55 = vld [vmem:[%s0] sm:$0xf]
    %v56 = vld [vmem:[%s1] sm:$0xf]
    %v59 = vunpack.c.l.s4 1966171168
    %v60 = vunpack.c.0.s8 %v59
    %v61 = vlaneseq
    %v62 = vshrl.u32 %v61, 7
    %v63 = vsub.s32 %v60, %v62
    %v64 = vrot.slane %v56, %v63
    %v65 = vcombine.high %v64, %v64
    %v67 = vunpack.c.l.s4 1966171168
    %v68 = vunpack.c.0.s8 %v67
    %v69 = vlaneseq
    %v70 = vshrl.u32 %v69, 7
    %v71 = vsub.s32 %v68, %v70
    %v72 = vrot.slane %v64, %v71
    %v74 = vunpack.c.l.s4 1966171168
    %v75 = vunpack.c.0.s8 %v74
    %v76 = vlaneseq
    %v77 = vshrl.u32 %v76, 7
    %v78 = vsub.s32 %v75, %v77
    %v79 = vrot.slane %v65, %v78
    %v80 = vcombine.high %v72, %v72
    %v81 = vcombine.high %v79, %v79
    %v83 = vpack.i.b16 %v72, %v72
    %v85 = vlaneseq
    %v86 = vshrl.u32 %v85, 7
    %v87 = vsub.s32 0, %v86
    %v88 = vrot.slane %v83, %v87
    %v90 = vpack.i.b16 %v79, %v79
    %v92 = vlaneseq
    %v93 = vshrl.u32 %v92, 7
    %v94 = vsub.s32 0, %v93
    %v95 = vrot.slane %v90, %v94
    %v97 = vpack.i.b16 %v80, %v80
    %v99 = vlaneseq
    %v100 = vshrl.u32 %v99, 7
    %v101 = vsub.s32 0, %v100
    %v102 = vrot.slane %v97, %v101
    %v104 = vpack.i.b16 %v81, %v81
    %v106 = vlaneseq
    %v107 = vshrl.u32 %v106, 7
    %v108 = vsub.s32 0, %v107
    %v109 = vrot.slane %v104, %v108
    %v114 = vcombine.low %v88, %v95
    %v115 = vcombine.low %v102, %v109
    %v117 = vunpack.c.l.s4 1966171168
    %v118 = vunpack.c.0.s8 %v117
    %v119 = vlaneseq
    %v120 = vshrl.u32 %v119, 7
    %v121 = vsub.s32 %v118, %v120
    %v122 = vrot.slane %v114, %v121
    %v124 = vunpack.c.l.s4 1966171168
    %v125 = vunpack.c.0.s8 %v124
    %v126 = vlaneseq
    %v127 = vshrl.u32 %v126, 7
    %v128 = vsub.s32 %v125, %v127
    %v129 = vrot.slane %v115, %v128
    %v130 = vcombine.low %v122, %v129
    %v132 = vunpack.c.l.s4 1966171168
    %v133 = vunpack.c.0.s8 %v132
    %v134 = vlaneseq
    %v135 = vshrl.u32 %v134, 7
    %v136 = vsub.s32 %v133, %v135
    %v137 = vrot.slane %v130, %v136
    %138 = vrot.lane.b32.xlu0 %v137, 1
    %v139 = vpop.permute.xlu0 %138
    %v140 = vrot.slane %v139, 7
    %vm141 = vcmask 7168
    %v142 = vsel %vm141, %v140, %v139
    %v144 = vmul.bf16 %v55, %v142
    %s145 = scalar_lea.vmem %s1, 4
    %v146 = vld [vmem:[%s145] sm:$0xf]
    %v149 = vunpack.c.l.s4 1966171168
    %v150 = vunpack.c.0.s8 %v149
    %v151 = vlaneseq
    %v152 = vshrl.u32 %v151, 7
    %v153 = vsub.s32 %v150, %v152
    %v154 = vrot.slane %v146, %v153
    %v155 = vcombine.high %v154, %v154
    %v157 = vunpack.c.l.s4 1966171168
    %v158 = vunpack.c.0.s8 %v157
    %v159 = vlaneseq
    %v160 = vshrl.u32 %v159, 7
    %v161 = vsub.s32 %v158, %v160
    %v162 = vrot.slane %v154, %v161
    %v164 = vunpack.c.l.s4 1966171168
    %v165 = vunpack.c.0.s8 %v164
    %v166 = vlaneseq
    %v167 = vshrl.u32 %v166, 7
    %v168 = vsub.s32 %v165, %v167
    %v169 = vrot.slane %v155, %v168
    %v170 = vcombine.high %v162, %v162
    %v171 = vcombine.high %v169, %v169
    %v173 = vpack.i.b16 %v162, %v162
    %v175 = vlaneseq
    %v176 = vshrl.u32 %v175, 7
    %v177 = vsub.s32 0, %v176
    %v178 = vrot.slane %v173, %v177
    %v180 = vpack.i.b16 %v169, %v169
    %v182 = vlaneseq
    %v183 = vshrl.u32 %v182, 7
    %v184 = vsub.s32 0, %v183
    %v185 = vrot.slane %v180, %v184
    %v187 = vpack.i.b16 %v170, %v170
    %v189 = vlaneseq
    %v190 = vshrl.u32 %v189, 7
    %v191 = vsub.s32 0, %v190
    %v192 = vrot.slane %v187, %v191
    %v194 = vpack.i.b16 %v171, %v171
    %v196 = vlaneseq
    %v197 = vshrl.u32 %v196, 7
    %v198 = vsub.s32 0, %v197
    %v199 = vrot.slane %v194, %v198
    %v204 = vcombine.low %v178, %v185
    %v205 = vcombine.low %v192, %v199
    %v207 = vunpack.c.l.s4 1966171168
    %v208 = vunpack.c.0.s8 %v207
    %v209 = vlaneseq
    %v210 = vshrl.u32 %v209, 7
    %v211 = vsub.s32 %v208, %v210
    %v212 = vrot.slane %v204, %v211
    %v214 = vunpack.c.l.s4 1966171168
    %v215 = vunpack.c.0.s8 %v214
    %v216 = vlaneseq
    %v217 = vshrl.u32 %v216, 7
    %v218 = vsub.s32 %v215, %v217
    %v219 = vrot.slane %v205, %v218
    %v220 = vcombine.low %v212, %v219
    %v222 = vunpack.c.l.s4 1966171168
    %v223 = vunpack.c.0.s8 %v222
    %v224 = vlaneseq
    %v225 = vshrl.u32 %v224, 7
    %v226 = vsub.s32 %v223, %v225
    %v227 = vrot.slane %v220, %v226
    %228 = vrot.lane.b32.xlu0 %v227, 2
    %v229 = vpop.permute.xlu0 %228
    %v230 = vrot.slane %v229, 7
    %vm231 = vcmask 15360
    %v232 = vsel %vm231, %v230, %v229
    %v234 = vmul.bf16 %v55, %v232
    %s235 = scalar_lea.vmem %s1, 8
    %v236 = vld [vmem:[%s235] sm:$0xf]
    %v239 = vunpack.c.l.s4 1966171168
    %v240 = vunpack.c.0.s8 %v239
    %v241 = vlaneseq
    %v242 = vshrl.u32 %v241, 7
    %v243 = vsub.s32 %v240, %v242
    %v244 = vrot.slane %v236, %v243
    %v245 = vcombine.high %v244, %v244
    %v247 = vunpack.c.l.s4 1966171168
    %v248 = vunpack.c.0.s8 %v247
    %v249 = vlaneseq
    %v250 = vshrl.u32 %v249, 7
    %v251 = vsub.s32 %v248, %v250
    %v252 = vrot.slane %v244, %v251
    %v254 = vunpack.c.l.s4 1966171168
    %v255 = vunpack.c.0.s8 %v254
    %v256 = vlaneseq
    %v257 = vshrl.u32 %v256, 7
    %v258 = vsub.s32 %v255, %v257
    %v259 = vrot.slane %v245, %v258
    %v260 = vcombine.high %v252, %v252
    %v261 = vcombine.high %v259, %v259
    %v263 = vpack.i.b16 %v252, %v252
    %v265 = vlaneseq
    %v266 = vshrl.u32 %v265, 7
    %v267 = vsub.s32 0, %v266
    %v268 = vrot.slane %v263, %v267
    %v270 = vpack.i.b16 %v259, %v259
    %v272 = vlaneseq
    %v273 = vshrl.u32 %v272, 7
    %v274 = vsub.s32 0, %v273
    %v275 = vrot.slane %v270, %v274
    %v277 = vpack.i.b16 %v260, %v260
    %v279 = vlaneseq
    %v280 = vshrl.u32 %v279, 7
    %v281 = vsub.s32 0, %v280
    %v282 = vrot.slane %v277, %v281
    %v284 = vpack.i.b16 %v261, %v261
    %v286 = vlaneseq
    %v287 = vshrl.u32 %v286, 7
    %v288 = vsub.s32 0, %v287
    %v289 = vrot.slane %v284, %v288
    %v294 = vcombine.low %v268, %v275
    %v295 = vcombine.low %v282, %v289
    %v297 = vunpack.c.l.s4 1966171168
    %v298 = vunpack.c.0.s8 %v297
    %v299 = vlaneseq
    %v300 = vshrl.u32 %v299, 7
    %v301 = vsub.s32 %v298, %v300
    %v302 = vrot.slane %v294, %v301
    %v304 = vunpack.c.l.s4 1966171168
    %v305 = vunpack.c.0.s8 %v304
    %v306 = vlaneseq
    %v307 = vshrl.u32 %v306, 7
    %v308 = vsub.s32 %v305, %v307
    %v309 = vrot.slane %v295, %v308
    %v310 = vcombine.low %v302, %v309
    %v312 = vunpack.c.l.s4 1966171168
    %v313 = vunpack.c.0.s8 %v312
    %v314 = vlaneseq
    %v315 = vshrl.u32 %v314, 7
    %v316 = vsub.s32 %v313, %v315
    %v317 = vrot.slane %v310, %v316
    %318 = vrot.lane.b32.xlu0 %v317, 3
    %v319 = vpop.permute.xlu0 %318
    %v320 = vrot.slane %v319, 7
    %vm321 = vcmask 23552
    %v322 = vsel %vm321, %v320, %v319
    %v324 = vmul.bf16 %v55, %v322
    %s325 = scalar_lea.vmem %s1, 12
    %v326 = vld [vmem:[%s325] sm:$0xf]
    %v329 = vunpack.c.l.s4 1966171168
    %v330 = vunpack.c.0.s8 %v329
    %v331 = vlaneseq
    %v332 = vshrl.u32 %v331, 7
    %v333 = vsub.s32 %v330, %v332
    %v334 = vrot.slane %v326, %v333
    %v335 = vcombine.high %v334, %v334
    %v337 = vunpack.c.l.s4 1966171168
    %v338 = vunpack.c.0.s8 %v337
    %v339 = vlaneseq
    %v340 = vshrl.u32 %v339, 7
    %v341 = vsub.s32 %v338, %v340
    %v342 = vrot.slane %v334, %v341
    %v344 = vunpack.c.l.s4 1966171168
    %v345 = vunpack.c.0.s8 %v344
    %v346 = vlaneseq
    %v347 = vshrl.u32 %v346, 7
    %v348 = vsub.s32 %v345, %v347
    %v349 = vrot.slane %v335, %v348
    %v350 = vcombine.high %v342, %v342
    %v351 = vcombine.high %v349, %v349
    %v353 = vpack.i.b16 %v342, %v342
    %v355 = vlaneseq
    %v356 = vshrl.u32 %v355, 7
    %v357 = vsub.s32 0, %v356
    %v358 = vrot.slane %v353, %v357
    %v360 = vpack.i.b16 %v349, %v349
    %v362 = vlaneseq
    %v363 = vshrl.u32 %v362, 7
    %v364 = vsub.s32 0, %v363
    %v365 = vrot.slane %v360, %v364
    %v367 = vpack.i.b16 %v350, %v350
    %v369 = vlaneseq
    %v370 = vshrl.u32 %v369, 7
    %v371 = vsub.s32 0, %v370
    %v372 = vrot.slane %v367, %v371
    %v374 = vpack.i.b16 %v351, %v351
    %v376 = vlaneseq
    %v377 = vshrl.u32 %v376, 7
    %v378 = vsub.s32 0, %v377
    %v379 = vrot.slane %v374, %v378
    %v384 = vcombine.low %v358, %v365
    %v385 = vcombine.low %v372, %v379
    %v387 = vunpack.c.l.s4 1966171168
    %v388 = vunpack.c.0.s8 %v387
    %v389 = vlaneseq
    %v390 = vshrl.u32 %v389, 7
    %v391 = vsub.s32 %v388, %v390
    %v392 = vrot.slane %v384, %v391
    %v394 = vunpack.c.l.s4 1966171168
    %v395 = vunpack.c.0.s8 %v394
    %v396 = vlaneseq
    %v397 = vshrl.u32 %v396, 7
    %v398 = vsub.s32 %v395, %v397
    %v399 = vrot.slane %v385, %v398
    %v400 = vcombine.low %v392, %v399
    %v402 = vunpack.c.l.s4 1966171168
    %v403 = vunpack.c.0.s8 %v402
    %v404 = vlaneseq
    %v405 = vshrl.u32 %v404, 7
    %v406 = vsub.s32 %v403, %v405
    %v407 = vrot.slane %v400, %v406
    %408 = vrot.lane.b32.xlu0 %v407, 15
    %v409 = vpop.permute.xlu0 %408
    %v410 = vrot.slane %v409, 7
    %vm411 = vcmask 121856
    %v412 = vsel %vm411, %v410, %v409
    %v414 = vmul.bf16 %v55, %v412
    %s415 = scalar_lea.vmem %s1, 16
    %v416 = vld [vmem:[%s415] sm:$0xf]
    %v419 = vunpack.c.l.s4 1966171168
    %v420 = vunpack.c.0.s8 %v419
    %v421 = vlaneseq
    %v422 = vshrl.u32 %v421, 7
    %v423 = vsub.s32 %v420, %v422
    %v424 = vrot.slane %v416, %v423
    %v425 = vcombine.high %v424, %v424
    %v427 = vunpack.c.l.s4 1966171168
    %v428 = vunpack.c.0.s8 %v427
    %v429 = vlaneseq
    %v430 = vshrl.u32 %v429, 7
    %v431 = vsub.s32 %v428, %v430
    %v432 = vrot.slane %v424, %v431
    %v434 = vunpack.c.l.s4 1966171168
    %v435 = vunpack.c.0.s8 %v434
    %v436 = vlaneseq
    %v437 = vshrl.u32 %v436, 7
    %v438 = vsub.s32 %v435, %v437
    %v439 = vrot.slane %v425, %v438
    %v440 = vcombine.high %v432, %v432
    %v441 = vcombine.high %v439, %v439
    %v443 = vpack.i.b16 %v432, %v432
    %v445 = vlaneseq
    %v446 = vshrl.u32 %v445, 7
    %v447 = vsub.s32 0, %v446
    %v448 = vrot.slane %v443, %v447
    %v450 = vpack.i.b16 %v439, %v439
    %v452 = vlaneseq
    %v453 = vshrl.u32 %v452, 7
    %v454 = vsub.s32 0, %v453
    %v455 = vrot.slane %v450, %v454
    %v457 = vpack.i.b16 %v440, %v440
    %v459 = vlaneseq
    %v460 = vshrl.u32 %v459, 7
    %v461 = vsub.s32 0, %v460
    %v462 = vrot.slane %v457, %v461
    %v464 = vpack.i.b16 %v441, %v441
    %v466 = vlaneseq
    %v467 = vshrl.u32 %v466, 7
    %v468 = vsub.s32 0, %v467
    %v469 = vrot.slane %v464, %v468
    %v474 = vcombine.low %v448, %v455
    %v475 = vcombine.low %v462, %v469
    %v477 = vunpack.c.l.s4 1966171168
    %v478 = vunpack.c.0.s8 %v477
    %v479 = vlaneseq
    %v480 = vshrl.u32 %v479, 7
    %v481 = vsub.s32 %v478, %v480
    %v482 = vrot.slane %v474, %v481
    %v484 = vunpack.c.l.s4 1966171168
    %v485 = vunpack.c.0.s8 %v484
    %v486 = vlaneseq
    %v487 = vshrl.u32 %v486, 7
    %v488 = vsub.s32 %v485, %v487
    %v489 = vrot.slane %v475, %v488
    %v490 = vcombine.low %v482, %v489
    %v492 = vunpack.c.l.s4 1966171168
    %v493 = vunpack.c.0.s8 %v492
    %v494 = vlaneseq
    %v495 = vshrl.u32 %v494, 7
    %v496 = vsub.s32 %v493, %v495
    %v497 = vrot.slane %v490, %v496
    %498 = vrot.lane.b32.xlu0 %v497, 16
    %v499 = vpop.permute.xlu0 %498
    %v500 = vrot.slane %v499, 7
    %vm501 = vcmask 130048
    %v502 = vsel %vm501, %v500, %v499
    %v504 = vmul.bf16 %v55, %v502
    %s505 = scalar_lea.vmem %s1, 20
    %v506 = vld [vmem:[%s505] sm:$0xf]
    %v509 = vunpack.c.l.s4 1966171168
    %v510 = vunpack.c.0.s8 %v509
    %v511 = vlaneseq
    %v512 = vshrl.u32 %v511, 7
    %v513 = vsub.s32 %v510, %v512
    %v514 = vrot.slane %v506, %v513
    %v515 = vcombine.high %v514, %v514
    %v517 = vunpack.c.l.s4 1966171168
    %v518 = vunpack.c.0.s8 %v517
    %v519 = vlaneseq
    %v520 = vshrl.u32 %v519, 7
    %v521 = vsub.s32 %v518, %v520
    %v522 = vrot.slane %v514, %v521
    %v524 = vunpack.c.l.s4 1966171168
    %v525 = vunpack.c.0.s8 %v524
    %v526 = vlaneseq
    %v527 = vshrl.u32 %v526, 7
    %v528 = vsub.s32 %v525, %v527
    %v529 = vrot.slane %v515, %v528
    %v530 = vcombine.high %v522, %v522
    %v531 = vcombine.high %v529, %v529
    %v533 = vpack.i.b16 %v522, %v522
    %v535 = vlaneseq
    %v536 = vshrl.u32 %v535, 7
    %v537 = vsub.s32 0, %v536
    %v538 = vrot.slane %v533, %v537
    %v540 = vpack.i.b16 %v529, %v529
    %v542 = vlaneseq
    %v543 = vshrl.u32 %v542, 7
    %v544 = vsub.s32 0, %v543
    %v545 = vrot.slane %v540, %v544
    %v547 = vpack.i.b16 %v530, %v530
    %v549 = vlaneseq
    %v550 = vshrl.u32 %v549, 7
    %v551 = vsub.s32 0, %v550
    %v552 = vrot.slane %v547, %v551
    %v554 = vpack.i.b16 %v531, %v531
    %v556 = vlaneseq
    %v557 = vshrl.u32 %v556, 7
    %v558 = vsub.s32 0, %v557
    %v559 = vrot.slane %v554, %v558
    %v564 = vcombine.low %v538, %v545
    %v565 = vcombine.low %v552, %v559
    %v567 = vunpack.c.l.s4 1966171168
    %v568 = vunpack.c.0.s8 %v567
    %v569 = vlaneseq
    %v570 = vshrl.u32 %v569, 7
    %v571 = vsub.s32 %v568, %v570
    %v572 = vrot.slane %v564, %v571
    %v574 = vunpack.c.l.s4 1966171168
    %v575 = vunpack.c.0.s8 %v574
    %v576 = vlaneseq
    %v577 = vshrl.u32 %v576, 7
    %v578 = vsub.s32 %v575, %v577
    %v579 = vrot.slane %v565, %v578
    %v580 = vcombine.low %v572, %v579
    %v582 = vunpack.c.l.s4 1966171168
    %v583 = vunpack.c.0.s8 %v582
    %v584 = vlaneseq
    %v585 = vshrl.u32 %v584, 7
    %v586 = vsub.s32 %v583, %v585
    %v587 = vrot.slane %v580, %v586
    %588 = vrot.lane.b32.xlu0 %v587, 17
    %v589 = vpop.permute.xlu0 %588
    %v590 = vrot.slane %v589, 7
    %vm591 = vcmask 138240
    %v592 = vsel %vm591, %v590, %v589
    %v594 = vmul.bf16 %v55, %v592
    %s595 = scalar_lea.vmem %s1, 24
    %v596 = vld [vmem:[%s595] sm:$0xf]
    %v599 = vunpack.c.l.s4 1966171168
    %v600 = vunpack.c.0.s8 %v599
    %v601 = vlaneseq
    %v602 = vshrl.u32 %v601, 7
    %v603 = vsub.s32 %v600, %v602
    %v604 = vrot.slane %v596, %v603
    %v605 = vcombine.high %v604, %v604
    %v607 = vunpack.c.l.s4 1966171168
    %v608 = vunpack.c.0.s8 %v607
    %v609 = vlaneseq
    %v610 = vshrl.u32 %v609, 7
    %v611 = vsub.s32 %v608, %v610
    %v612 = vrot.slane %v604, %v611
    %v614 = vunpack.c.l.s4 1966171168
    %v615 = vunpack.c.0.s8 %v614
    %v616 = vlaneseq
    %v617 = vshrl.u32 %v616, 7
    %v618 = vsub.s32 %v615, %v617
    %v619 = vrot.slane %v605, %v618
    %v620 = vcombine.high %v612, %v612
    %v621 = vcombine.high %v619, %v619
    %v623 = vpack.i.b16 %v612, %v612
    %v625 = vlaneseq
    %v626 = vshrl.u32 %v625, 7
    %v627 = vsub.s32 0, %v626
    %v628 = vrot.slane %v623, %v627
    %v630 = vpack.i.b16 %v619, %v619
    %v632 = vlaneseq
    %v633 = vshrl.u32 %v632, 7
    %v634 = vsub.s32 0, %v633
    %v635 = vrot.slane %v630, %v634
    %v637 = vpack.i.b16 %v620, %v620
    %v639 = vlaneseq
    %v640 = vshrl.u32 %v639, 7
    %v641 = vsub.s32 0, %v640
    %v642 = vrot.slane %v637, %v641
    %v644 = vpack.i.b16 %v621, %v621
    %v646 = vlaneseq
    %v647 = vshrl.u32 %v646, 7
    %v648 = vsub.s32 0, %v647
    %v649 = vrot.slane %v644, %v648
    %v654 = vcombine.low %v628, %v635
    %v655 = vcombine.low %v642, %v649
    %v657 = vunpack.c.l.s4 1966171168
    %v658 = vunpack.c.0.s8 %v657
    %v659 = vlaneseq
    %v660 = vshrl.u32 %v659, 7
    %v661 = vsub.s32 %v658, %v660
    %v662 = vrot.slane %v654, %v661
    %v664 = vunpack.c.l.s4 1966171168
    %v665 = vunpack.c.0.s8 %v664
    %v666 = vlaneseq
    %v667 = vshrl.u32 %v666, 7
    %v668 = vsub.s32 %v665, %v667
    %v669 = vrot.slane %v655, %v668
    %v670 = vcombine.low %v662, %v669
    %v672 = vunpack.c.l.s4 1966171168
    %v673 = vunpack.c.0.s8 %v672
    %v674 = vlaneseq
    %v675 = vshrl.u32 %v674, 7
    %v676 = vsub.s32 %v673, %v675
    %v677 = vrot.slane %v670, %v676
    %678 = vrot.lane.b32.xlu0 %v677, 29
    %v679 = vpop.permute.xlu0 %678
    %v680 = vrot.slane %v679, 7
    %vm681 = vcmask 236544
    %v682 = vsel %vm681, %v680, %v679
    %v684 = vmul.bf16 %v55, %v682
    %s685 = scalar_lea.vmem %s1, 28
    %v686 = vld [vmem:[%s685] sm:$0xf]
    %v689 = vunpack.c.l.s4 1966171168
    %v690 = vunpack.c.0.s8 %v689
    %v691 = vlaneseq
    %v692 = vshrl.u32 %v691, 7
    %v693 = vsub.s32 %v690, %v692
    %v694 = vrot.slane %v686, %v693
    %v695 = vcombine.high %v694, %v694
    %v697 = vunpack.c.l.s4 1966171168
    %v698 = vunpack.c.0.s8 %v697
    %v699 = vlaneseq
    %v700 = vshrl.u32 %v699, 7
    %v701 = vsub.s32 %v698, %v700
    %v702 = vrot.slane %v694, %v701
    %v704 = vunpack.c.l.s4 1966171168
    %v705 = vunpack.c.0.s8 %v704
    %v706 = vlaneseq
    %v707 = vshrl.u32 %v706, 7
    %v708 = vsub.s32 %v705, %v707
    %v709 = vrot.slane %v695, %v708
    %v710 = vcombine.high %v702, %v702
    %v711 = vcombine.high %v709, %v709
    %v713 = vpack.i.b16 %v702, %v702
    %v715 = vlaneseq
    %v716 = vshrl.u32 %v715, 7
    %v717 = vsub.s32 0, %v716
    %v718 = vrot.slane %v713, %v717
    %v720 = vpack.i.b16 %v709, %v709
    %v722 = vlaneseq
    %v723 = vshrl.u32 %v722, 7
    %v724 = vsub.s32 0, %v723
    %v725 = vrot.slane %v720, %v724
    %v727 = vpack.i.b16 %v710, %v710
    %v729 = vlaneseq
    %v730 = vshrl.u32 %v729, 7
    %v731 = vsub.s32 0, %v730
    %v732 = vrot.slane %v727, %v731
    %v734 = vpack.i.b16 %v711, %v711
    %v736 = vlaneseq
    %v737 = vshrl.u32 %v736, 7
    %v738 = vsub.s32 0, %v737
    %v739 = vrot.slane %v734, %v738
    %v744 = vcombine.low %v718, %v725
    %v745 = vcombine.low %v732, %v739
    %v747 = vunpack.c.l.s4 1966171168
    %v748 = vunpack.c.0.s8 %v747
    %v749 = vlaneseq
    %v750 = vshrl.u32 %v749, 7
    %v751 = vsub.s32 %v748, %v750
    %v752 = vrot.slane %v744, %v751
    %v754 = vunpack.c.l.s4 1966171168
    %v755 = vunpack.c.0.s8 %v754
    %v756 = vlaneseq
    %v757 = vshrl.u32 %v756, 7
    %v758 = vsub.s32 %v755, %v757
    %v759 = vrot.slane %v745, %v758
    %v760 = vcombine.low %v752, %v759
    %v762 = vunpack.c.l.s4 1966171168
    %v763 = vunpack.c.0.s8 %v762
    %v764 = vlaneseq
    %v765 = vshrl.u32 %v764, 7
    %v766 = vsub.s32 %v763, %v765
    %v767 = vrot.slane %v760, %v766
    %768 = vrot.lane.b32.xlu0 %v767, 30
    %v769 = vpop.permute.xlu0 %768
    %v770 = vrot.slane %v769, 7
    %vm771 = vcmask 244736
    %v772 = vsel %vm771, %v770, %v769
    %v774 = vmul.bf16 %v55, %v772
    %s775 = scalar_lea.vmem %s1, 32
    %v776 = vld [vmem:[%s775] sm:$0xf]
    %v779 = vunpack.c.l.s4 1966171168
    %v780 = vunpack.c.0.s8 %v779
    %v781 = vlaneseq
    %v782 = vshrl.u32 %v781, 7
    %v783 = vsub.s32 %v780, %v782
    %v784 = vrot.slane %v776, %v783
    %v785 = vcombine.high %v784, %v784
    %v787 = vunpack.c.l.s4 1966171168
    %v788 = vunpack.c.0.s8 %v787
    %v789 = vlaneseq
    %v790 = vshrl.u32 %v789, 7
    %v791 = vsub.s32 %v788, %v790
    %v792 = vrot.slane %v784, %v791
    %v794 = vunpack.c.l.s4 1966171168
    %v795 = vunpack.c.0.s8 %v794
    %v796 = vlaneseq
    %v797 = vshrl.u32 %v796, 7
    %v798 = vsub.s32 %v795, %v797
    %v799 = vrot.slane %v785, %v798
    %v800 = vcombine.high %v792, %v792
    %v801 = vcombine.high %v799, %v799
    %v803 = vpack.i.b16 %v792, %v792
    %v805 = vlaneseq
    %v806 = vshrl.u32 %v805, 7
    %v807 = vsub.s32 0, %v806
    %v808 = vrot.slane %v803, %v807
    %v810 = vpack.i.b16 %v799, %v799
    %v812 = vlaneseq
    %v813 = vshrl.u32 %v812, 7
    %v814 = vsub.s32 0, %v813
    %v815 = vrot.slane %v810, %v814
    %v817 = vpack.i.b16 %v800, %v800
    %v819 = vlaneseq
    %v820 = vshrl.u32 %v819, 7
    %v821 = vsub.s32 0, %v820
    %v822 = vrot.slane %v817, %v821
    %v824 = vpack.i.b16 %v801, %v801
    %v826 = vlaneseq
    %v827 = vshrl.u32 %v826, 7
    %v828 = vsub.s32 0, %v827
    %v829 = vrot.slane %v824, %v828
    %v834 = vcombine.low %v808, %v815
    %v835 = vcombine.low %v822, %v829
    %v837 = vunpack.c.l.s4 1966171168
    %v838 = vunpack.c.0.s8 %v837
    %v839 = vlaneseq
    %v840 = vshrl.u32 %v839, 7
    %v841 = vsub.s32 %v838, %v840
    %v842 = vrot.slane %v834, %v841
    %v844 = vunpack.c.l.s4 1966171168
    %v845 = vunpack.c.0.s8 %v844
    %v846 = vlaneseq
    %v847 = vshrl.u32 %v846, 7
    %v848 = vsub.s32 %v845, %v847
    %v849 = vrot.slane %v835, %v848
    %v850 = vcombine.low %v842, %v849
    %v852 = vunpack.c.l.s4 1966171168
    %v853 = vunpack.c.0.s8 %v852
    %v854 = vlaneseq
    %v855 = vshrl.u32 %v854, 7
    %v856 = vsub.s32 %v853, %v855
    %v857 = vrot.slane %v850, %v856
    %858 = vrot.lane.b32.xlu0 %v857, 31
    %v859 = vpop.permute.xlu0 %858
    %v860 = vrot.slane %v859, 7
    %vm861 = vcmask 252928
    %v862 = vsel %vm861, %v860, %v859
    %v864 = vmul.bf16 %v55, %v862
    %v867 = vunpack.c.l.s4 1966171168
    %v868 = vunpack.c.0.s8 %v867
    %v869 = vlaneseq
    %v870 = vshrl.u32 %v869, 7
    %v871 = vsub.s32 %v868, %v870
    %v872 = vrot.slane %v144, %v871
    %v873 = vcombine.high %v872, %v872
    %v875 = vunpack.c.l.s4 1966171168
    %v876 = vunpack.c.0.s8 %v875
    %v877 = vlaneseq
    %v878 = vshrl.u32 %v877, 7
    %v879 = vsub.s32 %v876, %v878
    %v880 = vrot.slane %v872, %v879
    %v882 = vunpack.c.l.s4 1966171168
    %v883 = vunpack.c.0.s8 %v882
    %v884 = vlaneseq
    %v885 = vshrl.u32 %v884, 7
    %v886 = vsub.s32 %v883, %v885
    %v887 = vrot.slane %v873, %v886
    %v888 = vcombine.high %v880, %v880
    %v889 = vcombine.high %v887, %v887
    %v891 = vcombine.low %v234, %v234
    %v893 = vunpack.c.l.s4 1966171168
    %v894 = vunpack.c.0.s8 %v893
    %v895 = vlaneseq
    %v896 = vshrl.u32 %v895, 7
    %v897 = vsub.s32 %v894, %v896
    %v898 = vrot.slane %v891, %v897
    %v899 = vcombine.high %v898, %v898
    %v901 = vunpack.c.l.s4 1966171168
    %v902 = vunpack.c.0.s8 %v901
    %v903 = vlaneseq
    %v904 = vshrl.u32 %v903, 7
    %v905 = vsub.s32 %v902, %v904
    %v906 = vrot.slane %v898, %v905
    %v908 = vunpack.c.l.s4 1966171168
    %v909 = vunpack.c.0.s8 %v908
    %v910 = vlaneseq
    %v911 = vshrl.u32 %v910, 7
    %v912 = vsub.s32 %v909, %v911
    %v913 = vrot.slane %v899, %v912
    %v914 = vcombine.high %v906, %v906
    %v915 = vcombine.high %v913, %v913
    %916 = vrot.lane.b32.xlu0 %v906, 127
    %v917 = vpop.permute.xlu0 %916
    %918 = vrot.lane.b32.xlu0 %v913, 127
    %v919 = vpop.permute.xlu0 %918
    %920 = vrot.lane.b32.xlu0 %v914, 127
    %v921 = vpop.permute.xlu0 %920
    %922 = vrot.lane.b32.xlu0 %v915, 127
    %v923 = vpop.permute.xlu0 %922
    %vm924 = vcmask 1039360
    %v925 = vsel %vm924, %v917, %v919
    %v926 = vsel %vm924, %v919, %v921
    %v927 = vsel %vm924, %v921, %v923
    %v930 = vunpack.c.l.s4 1966171168
    %v931 = vunpack.c.0.s8 %v930
    %v932 = vlaneseq
    %v933 = vshrl.u32 %v932, 7
    %v934 = vsub.s32 %v931, %v933
    %v935 = vrot.slane %v324, %v934
    %v936 = vcombine.low %v935, %v935
    %v938 = vunpack.c.l.s4 1966171168
    %v939 = vunpack.c.0.s8 %v938
    %v940 = vlaneseq
    %v941 = vshrl.u32 %v940, 7
    %v942 = vsub.s32 %v939, %v941
    %v943 = vrot.slane %v936, %v942
    %v945 = vunpack.c.l.s4 1966171168
    %v946 = vunpack.c.0.s8 %v945
    %v947 = vlaneseq
    %v948 = vshrl.u32 %v947, 7
    %v949 = vsub.s32 %v946, %v948
    %v950 = vrot.slane %v935, %v949
    %v951 = vcombine.high %v943, %v943
    %v952 = vcombine.high %v950, %v950
    %953 = vrot.lane.b32.xlu0 %v943, 126
    %v954 = vpop.permute.xlu0 %953
    %955 = vrot.lane.b32.xlu0 %v950, 126
    %v956 = vpop.permute.xlu0 %955
    %957 = vrot.lane.b32.xlu0 %v951, 126
    %v958 = vpop.permute.xlu0 %957
    %959 = vrot.lane.b32.xlu0 %v952, 126
    %v960 = vpop.permute.xlu0 %959
    %vm961 = vcmask 1031168
    %v962 = vsel %vm961, %v954, %v956
    %v963 = vsel %vm961, %v956, %v958
    %v964 = vsel %vm961, %v958, %v960
    %v966 = vcombine.low %v414, %v414
    %v968 = vunpack.c.l.s4 1966171168
    %v969 = vunpack.c.0.s8 %v968
    %v970 = vlaneseq
    %v971 = vshrl.u32 %v970, 7
    %v972 = vsub.s32 %v969, %v971
    %v973 = vrot.slane %v966, %v972
    %v974 = vcombine.low %v973, %v973
    %v976 = vunpack.c.l.s4 1966171168
    %v977 = vunpack.c.0.s8 %v976
    %v978 = vlaneseq
    %v979 = vshrl.u32 %v978, 7
    %v980 = vsub.s32 %v977, %v979
    %v981 = vrot.slane %v974, %v980
    %v983 = vunpack.c.l.s4 1966171168
    %v984 = vunpack.c.0.s8 %v983
    %v985 = vlaneseq
    %v986 = vshrl.u32 %v985, 7
    %v987 = vsub.s32 %v984, %v986
    %v988 = vrot.slane %v973, %v987
    %v989 = vcombine.high %v981, %v981
    %v990 = vcombine.high %v988, %v988
    %991 = vrot.lane.b32.xlu0 %v981, 114
    %v992 = vpop.permute.xlu0 %991
    %993 = vrot.lane.b32.xlu0 %v988, 114
    %v994 = vpop.permute.xlu0 %993
    %995 = vrot.lane.b32.xlu0 %v989, 114
    %v996 = vpop.permute.xlu0 %995
    %997 = vrot.lane.b32.xlu0 %v990, 114
    %v998 = vpop.permute.xlu0 %997
    %vm999 = vcmask 932864
    %v1000 = vsel %vm999, %v992, %v994
    %v1001 = vsel %vm999, %v994, %v996
    %v1002 = vsel %vm999, %v996, %v998
    %v1005 = vunpack.c.l.s4 1966171168
    %v1006 = vunpack.c.0.s8 %v1005
    %v1007 = vlaneseq
    %v1008 = vshrl.u32 %v1007, 7
    %v1009 = vsub.s32 %v1006, %v1008
    %v1010 = vrot.slane %v504, %v1009
    %v1011 = vcombine.high %v1010, %v1010
    %v1013 = vunpack.c.l.s4 1966171168
    %v1014 = vunpack.c.0.s8 %v1013
    %v1015 = vlaneseq
    %v1016 = vshrl.u32 %v1015, 7
    %v1017 = vsub.s32 %v1014, %v1016
    %v1018 = vrot.slane %v1010, %v1017
    %v1020 = vunpack.c.l.s4 1966171168
    %v1021 = vunpack.c.0.s8 %v1020
    %v1022 = vlaneseq
    %v1023 = vshrl.u32 %v1022, 7
    %v1024 = vsub.s32 %v1021, %v1023
    %v1025 = vrot.slane %v1011, %v1024
    %v1026 = vcombine.low %v1018, %v1018
    %v1027 = vcombine.low %v1025, %v1025
    %1028 = vrot.lane.b32.xlu0 %v1026, 113
    %v1029 = vpop.permute.xlu0 %1028
    %1030 = vrot.lane.b32.xlu0 %v1027, 113
    %v1031 = vpop.permute.xlu0 %1030
    %1032 = vrot.lane.b32.xlu0 %v1018, 113
    %v1033 = vpop.permute.xlu0 %1032
    %1034 = vrot.lane.b32.xlu0 %v1025, 113
    %v1035 = vpop.permute.xlu0 %1034
    %vm1036 = vcmask 924672
    %v1037 = vsel %vm1036, %v1029, %v1031
    %v1038 = vsel %vm1036, %v1031, %v1033
    %v1039 = vsel %vm1036, %v1033, %v1035
    %v1041 = vcombine.low %v594, %v594
    %v1043 = vunpack.c.l.s4 1966171168
    %v1044 = vunpack.c.0.s8 %v1043
    %v1045 = vlaneseq
    %v1046 = vshrl.u32 %v1045, 7
    %v1047 = vsub.s32 %v1044, %v1046
    %v1048 = vrot.slane %v1041, %v1047
    %v1049 = vcombine.high %v1048, %v1048
    %v1051 = vunpack.c.l.s4 1966171168
    %v1052 = vunpack.c.0.s8 %v1051
    %v1053 = vlaneseq
    %v1054 = vshrl.u32 %v1053, 7
    %v1055 = vsub.s32 %v1052, %v1054
    %v1056 = vrot.slane %v1048, %v1055
    %v1058 = vunpack.c.l.s4 1966171168
    %v1059 = vunpack.c.0.s8 %v1058
    %v1060 = vlaneseq
    %v1061 = vshrl.u32 %v1060, 7
    %v1062 = vsub.s32 %v1059, %v1061
    %v1063 = vrot.slane %v1049, %v1062
    %v1064 = vcombine.low %v1056, %v1056
    %v1065 = vcombine.low %v1063, %v1063
    %1066 = vrot.lane.b32.xlu0 %v1064, 112
    %v1067 = vpop.permute.xlu0 %1066
    %1068 = vrot.lane.b32.xlu0 %v1065, 112
    %v1069 = vpop.permute.xlu0 %1068
    %1070 = vrot.lane.b32.xlu0 %v1056, 112
    %v1071 = vpop.permute.xlu0 %1070
    %1072 = vrot.lane.b32.xlu0 %v1063, 112
    %v1073 = vpop.permute.xlu0 %1072
    %vm1074 = vcmask 916480
    %v1075 = vsel %vm1074, %v1067, %v1069
    %v1076 = vsel %vm1074, %v1069, %v1071
    %v1077 = vsel %vm1074, %v1071, %v1073
    %v1080 = vunpack.c.l.s4 1966171168
    %v1081 = vunpack.c.0.s8 %v1080
    %v1082 = vlaneseq
    %v1083 = vshrl.u32 %v1082, 7
    %v1084 = vsub.s32 %v1081, %v1083
    %v1085 = vrot.slane %v684, %v1084
    %v1086 = vcombine.low %v1085, %v1085
    %v1088 = vunpack.c.l.s4 1966171168
    %v1089 = vunpack.c.0.s8 %v1088
    %v1090 = vlaneseq
    %v1091 = vshrl.u32 %v1090, 7
    %v1092 = vsub.s32 %v1089, %v1091
    %v1093 = vrot.slane %v1086, %v1092
    %v1095 = vunpack.c.l.s4 1966171168
    %v1096 = vunpack.c.0.s8 %v1095
    %v1097 = vlaneseq
    %v1098 = vshrl.u32 %v1097, 7
    %v1099 = vsub.s32 %v1096, %v1098
    %v1100 = vrot.slane %v1085, %v1099
    %v1101 = vcombine.low %v1093, %v1093
    %v1102 = vcombine.low %v1100, %v1100
    %1103 = vrot.lane.b32.xlu0 %v1101, 100
    %v1104 = vpop.permute.xlu0 %1103
    %1105 = vrot.lane.b32.xlu0 %v1102, 100
    %v1106 = vpop.permute.xlu0 %1105
    %1107 = vrot.lane.b32.xlu0 %v1093, 100
    %v1108 = vpop.permute.xlu0 %1107
    %1109 = vrot.lane.b32.xlu0 %v1100, 100
    %v1110 = vpop.permute.xlu0 %1109
    %vm1111 = vcmask 818176
    %v1112 = vsel %vm1111, %v1104, %v1106
    %v1113 = vsel %vm1111, %v1106, %v1108
    %v1114 = vsel %vm1111, %v1108, %v1110
    %v1116 = vcombine.low %v774, %v774
    %v1118 = vunpack.c.l.s4 1966171168
    %v1119 = vunpack.c.0.s8 %v1118
    %v1120 = vlaneseq
    %v1121 = vshrl.u32 %v1120, 7
    %v1122 = vsub.s32 %v1119, %v1121
    %v1123 = vrot.slane %v1116, %v1122
    %v1124 = vcombine.low %v1123, %v1123
    %v1126 = vunpack.c.l.s4 1966171168
    %v1127 = vunpack.c.0.s8 %v1126
    %v1128 = vlaneseq
    %v1129 = vshrl.u32 %v1128, 7
    %v1130 = vsub.s32 %v1127, %v1129
    %v1131 = vrot.slane %v1124, %v1130
    %v1133 = vunpack.c.l.s4 1966171168
    %v1134 = vunpack.c.0.s8 %v1133
    %v1135 = vlaneseq
    %v1136 = vshrl.u32 %v1135, 7
    %v1137 = vsub.s32 %v1134, %v1136
    %v1138 = vrot.slane %v1123, %v1137
    %v1139 = vcombine.low %v1131, %v1131
    %v1140 = vcombine.low %v1138, %v1138
    %1141 = vrot.lane.b32.xlu0 %v1139, 99
    %v1142 = vpop.permute.xlu0 %1141
    %1143 = vrot.lane.b32.xlu0 %v1140, 99
    %v1144 = vpop.permute.xlu0 %1143
    %1145 = vrot.lane.b32.xlu0 %v1131, 99
    %v1146 = vpop.permute.xlu0 %1145
    %1147 = vrot.lane.b32.xlu0 %v1138, 99
    %v1148 = vpop.permute.xlu0 %1147
    %vm1149 = vcmask 809984
    %v1150 = vsel %vm1149, %v1142, %v1144
    %v1151 = vsel %vm1149, %v1144, %v1146
    %v1152 = vsel %vm1149, %v1146, %v1148
    %v1155 = vunpack.c.l.s4 1966171168
    %v1156 = vunpack.c.0.s8 %v1155
    %v1157 = vlaneseq
    %v1158 = vshrl.u32 %v1157, 7
    %v1159 = vsub.s32 %v1156, %v1158
    %v1160 = vrot.slane %v864, %v1159
    %v1161 = vcombine.high %v1160, %v1160
    %v1163 = vunpack.c.l.s4 1966171168
    %v1164 = vunpack.c.0.s8 %v1163
    %v1165 = vlaneseq
    %v1166 = vshrl.u32 %v1165, 7
    %v1167 = vsub.s32 %v1164, %v1166
    %v1168 = vrot.slane %v1160, %v1167
    %v1170 = vunpack.c.l.s4 1966171168
    %v1171 = vunpack.c.0.s8 %v1170
    %v1172 = vlaneseq
    %v1173 = vshrl.u32 %v1172, 7
    %v1174 = vsub.s32 %v1171, %v1173
    %v1175 = vrot.slane %v1161, %v1174
    %v1176 = vcombine.high %v1168, %v1168
    %v1177 = vcombine.high %v1175, %v1175
    %1178 = vrot.lane.b32.xlu0 %v1168, 98
    %v1179 = vpop.permute.xlu0 %1178
    %1180 = vrot.lane.b32.xlu0 %v1175, 98
    %v1181 = vpop.permute.xlu0 %1180
    %1182 = vrot.lane.b32.xlu0 %v1176, 98
    %v1183 = vpop.permute.xlu0 %1182
    %1184 = vrot.lane.b32.xlu0 %v1177, 98
    %v1185 = vpop.permute.xlu0 %1184
    %vm1186 = vcmask 801792
    %v1187 = vsel %vm1186, %v1179, %v1181
    %v1188 = vsel %vm1186, %v1181, %v1183
    %v1189 = vsel %vm1186, %v1183, %v1185
    %vm1190 = vcmask 1040384
    %v1193 = vsel %vm1190, %v880, %v925
    %v1196 = vsel %vm1190, %v887, %v926
    %v1199 = vsel %vm1190, %v888, %v927
    %v1202 = vsel %vm1190, %v889, %v923
    %vm1203 = vcmask 1041408
    %v1205 = vsel %vm1203, %v1193, %v962
    %v1207 = vsel %vm1203, %v1196, %v963
    %v1209 = vsel %vm1203, %v1199, %v964
    %v1211 = vsel %vm1203, %v1202, %v960
    %vm1212 = vcmask 1042432
    %v1214 = vsel %vm1212, %v1205, %v1000
    %v1216 = vsel %vm1212, %v1207, %v1001
    %v1218 = vsel %vm1212, %v1209, %v1002
    %v1220 = vsel %vm1212, %v1211, %v998
    %vm1221 = vcmask 1043456
    %v1223 = vsel %vm1221, %v1214, %v1037
    %v1225 = vsel %vm1221, %v1216, %v1038
    %v1227 = vsel %vm1221, %v1218, %v1039
    %v1229 = vsel %vm1221, %v1220, %v1035
    %vm1230 = vcmask 1044480
    %v1232 = vsel %vm1230, %v1223, %v1075
    %v1234 = vsel %vm1230, %v1225, %v1076
    %v1236 = vsel %vm1230, %v1227, %v1077
    %v1238 = vsel %vm1230, %v1229, %v1073
    %vm1239 = vcmask 1045504
    %v1241 = vsel %vm1239, %v1232, %v1112
    %v1243 = vsel %vm1239, %v1234, %v1113
    %v1245 = vsel %vm1239, %v1236, %v1114
    %v1247 = vsel %vm1239, %v1238, %v1110
    %vm1248 = vcmask 1046528
    %v1250 = vsel %vm1248, %v1241, %v1150
    %v1252 = vsel %vm1248, %v1243, %v1151
    %v1254 = vsel %vm1248, %v1245, %v1152
    %v1256 = vsel %vm1248, %v1247, %v1148
    %v1257 = vld [vmem:[#allocation2] sm:$0xf]
    %v1258 = vld [vmem:[#allocation2 + $0x4] sm:$0xf]
    %v1259 = vld [vmem:[%s4] sm:$0xff]
    %v1260 = vld [vmem:[%s4 + $0x8] sm:$0xff]
    %1262 = vset.pattern.permute.xlu0 0
    %1263 = vperm.xlu0 %1262, %v1259
    %v1264 = vpop.permute.xlu0 %1263
    %1267 = vset.pattern.permute.xlu0 0
    %1268 = vperm.xlu0 %1267, %v1260
    %v1269 = vpop.permute.xlu0 %1268
    %v1273 = vunpack.c.l.b16 %v1257
    %v1274 = vunpack.c.l.b16 %v1258
    %v1275 = vpack.c.b16 %v1274, %v1273
    %1280 = vrot.lane.b32.xlu0 %v1250, 127
    %v1281 = vpop.permute.xlu0 %1280
    %1282 = vrot.lane.b32.xlu0 %v1252, 127
    %v1283 = vpop.permute.xlu0 %1282
    %1284 = vrot.lane.b32.xlu0 %v1254, 127
    %v1285 = vpop.permute.xlu0 %1284
    %1286 = vrot.lane.b32.xlu0 %v1256, 127
    %v1287 = vpop.permute.xlu0 %1286
    %1288 = vrot.lane.b32.xlu0 %v1187, 127
    %v1289 = vpop.permute.xlu0 %1288
    %1290 = vrot.lane.b32.xlu0 %v1188, 127
    %v1291 = vpop.permute.xlu0 %1290
    %1292 = vrot.lane.b32.xlu0 %v1189, 127
    %v1293 = vpop.permute.xlu0 %1292
    %1294 = vrot.lane.b32.xlu0 %v1185, 127
    %v1295 = vpop.permute.xlu0 %1294
    %v1296 = vsel %vm924, %v1281, %v1283
    %v1297 = vsel %vm924, %v1283, %v1285
    %v1298 = vsel %vm924, %v1285, %v1287
    %v1299 = vsel %vm924, %v1289, %v1291
    %v1300 = vsel %vm924, %v1291, %v1293
    %v1301 = vsel %vm924, %v1293, %v1295
    %vm1306 = vcmask 146432
    %v1308 = vsel %vm1306, %v1275, 0
    %v1311 = vsel %vm1190, %v1299, 0
    %v1314 = vsel %vm1190, %v1300, 0
    %v1317 = vsel %vm1190, %v1301, 0
    %v1320 = vsel %vm1190, %v1295, 0
    %1322 = vmatprep.subr.bf16.mxu0 0
    %1323 = vmatpush1.bf16.msra.mxu0 0
    %1324 = vmatprep.subr.bf16.mxu0 0
    %1325 = vmatpush1.bf16.msra.mxu0 0
    %1326 = vmatprep.subr.bf16.mxu0 0
    %1327 = vmatpush1.bf16.msra.mxu0 0
    %1328 = vmatprep.subr.bf16.mxu0 0
    %1329 = vmatpush1.bf16.msra.mxu0 0
    %1330 = vmatprep.subr.bf16.mxu0 0
    %1331 = vmatpush1.bf16.msra.mxu0 0
    %1332 = vmatprep.subr.bf16.mxu0 0
    %1333 = vmatpush1.bf16.msra.mxu0 0
    %1334 = vmatprep.subr.bf16.mxu0 %v1314
    %1335 = vmatpush1.bf16.msra.mxu0 %v1311
    %1336 = vmatprep.subr.bf16.mxu0 %v1297
    %1337 = vmatpush1.bf16.msra.mxu0 %v1296
    %1338 = vmatprep.subr.bf16.mxu0 0
    %1339 = vmatpush2.bf16.msra.mxu0 0
    %1340 = vmatprep.subr.bf16.mxu0 0
    %1341 = vmatpush2.bf16.msra.mxu0 0
    %1342 = vmatprep.subr.bf16.mxu0 0
    %1343 = vmatpush2.bf16.msra.mxu0 0
    %1344 = vmatprep.subr.bf16.mxu0 0
    %1345 = vmatpush2.bf16.msra.mxu0 0
    %1346 = vmatprep.subr.bf16.mxu0 0
    %1347 = vmatpush2.bf16.msra.mxu0 0
    %1348 = vmatprep.subr.bf16.mxu0 0
    %1349 = vmatpush2.bf16.msra.mxu0 0
    %1350 = vmatprep.subr.bf16.mxu0 0
    %1351 = vmatpush2.bf16.msra.mxu0 0
    %1352 = vmatprep.subr.bf16.mxu0 0
    %1353 = vmatpush2.bf16.msra.mxu0 0
    %1354 = vmatprep.mubr.bf16.mxu0 0
    %1355 = vmatmul.mubr.bf16.gmra.mxu0 %v1308
    %v1356 = vpop.f32.mrf.mxu0
    %v1357 = vadd.f32 %v1264, %v1356
    %v1358 = vpop.f32.mrf.mxu0
    %v1359 = vadd.f32 %v1264, %v1358
    %v1360 = vpop.f32.mrf.mxu0
    %v1361 = vadd.f32 %v1269, %v1360
    %v1362 = vpop.f32.mrf.mxu0
    %v1363 = vadd.f32 %v1269, %v1362
    %1364 = vdwg.mxu0
    %1365 = vmatprep.subr.bf16.mxu0 0
    %1366 = vmatpush1.bf16.msra.mxu0 0
    %1367 = vmatprep.subr.bf16.mxu0 0
    %1368 = vmatpush1.bf16.msra.mxu0 0
    %1369 = vmatprep.subr.bf16.mxu0 0
    %1370 = vmatpush1.bf16.msra.mxu0 0
    %1371 = vmatprep.subr.bf16.mxu0 0
    %1372 = vmatpush1.bf16.msra.mxu0 0
    %1373 = vmatprep.subr.bf16.mxu0 0
    %1374 = vmatpush1.bf16.msra.mxu0 0
    %1375 = vmatprep.subr.bf16.mxu0 0
    %1376 = vmatpush1.bf16.msra.mxu0 0
    %1377 = vmatprep.subr.bf16.mxu0 %v1320
    %1378 = vmatpush1.bf16.msra.mxu0 %v1317
    %1379 = vmatprep.subr.bf16.mxu0 %v1287
    %1380 = vmatpush1.bf16.msra.mxu0 %v1298
    %1381 = vmatprep.subr.bf16.mxu0 0
    %1382 = vmatpush2.bf16.msra.mxu0 0
    %1383 = vmatprep.subr.bf16.mxu0 0
    %1384 = vmatpush2.bf16.msra.mxu0 0
    %1385 = vmatprep.subr.bf16.mxu0 0
    %1386 = vmatpush2.bf16.msra.mxu0 0
    %1387 = vmatprep.subr.bf16.mxu0 0
    %1388 = vmatpush2.bf16.msra.mxu0 0
    %1389 = vmatprep.subr.bf16.mxu0 0
    %1390 = vmatpush2.bf16.msra.mxu0 0
    %1391 = vmatprep.subr.bf16.mxu0 0
    %1392 = vmatpush2.bf16.msra.mxu0 0
    %1393 = vmatprep.subr.bf16.mxu0 0
    %1394 = vmatpush2.bf16.msra.mxu0 0
    %1395 = vmatprep.subr.bf16.mxu0 0
    %1396 = vmatpush2.bf16.msra.mxu0 0
    %1397 = vmatprep.mubr.bf16.mxu0 0
    %1398 = vmatmul.mubr.bf16.gmra.mxu0 %v1308
    %v1399 = vpop.f32.mrf.mxu0
    %v1400 = vadd.f32 %v1264, %v1399
    %v1401 = vpop.f32.mrf.mxu0
    %v1402 = vadd.f32 %v1264, %v1401
    %v1403 = vpop.f32.mrf.mxu0
    %v1404 = vadd.f32 %v1269, %v1403
    %v1405 = vpop.f32.mrf.mxu0
    %v1406 = vadd.f32 %v1269, %v1405
    %1407 = vdwg.mxu0
    %v1408 = vmax.f32 %v1357, 0.0
    %v1409 = vmax.f32 %v1359, 0.0
    %v1410 = vmax.f32 %v1400, 0.0
    %v1411 = vmax.f32 %v1402, 0.0
    %v1412 = vmax.f32 %v1361, 0.0
    %v1413 = vmax.f32 %v1363, 0.0
    %v1414 = vmax.f32 %v1404, 0.0
    %v1415 = vmax.f32 %v1406, 0.0
    %v1416 = vpack.c.bf16 %v1412, %v1408
    %v1417 = vpack.c.bf16 %v1413, %v1409
    %v1418 = vpack.c.bf16 %v1414, %v1410
    %v1419 = vpack.c.bf16 %v1415, %v1411
    %v1420 = vld [vmem:[%s2] sm:$0xf]
    %v1423 = vunpack.c.l.s4 1966171168
    %v1424 = vunpack.c.0.s8 %v1423
    %v1425 = vlaneseq
    %v1426 = vshrl.u32 %v1425, 7
    %v1427 = vsub.s32 %v1424, %v1426
    %v1428 = vrot.slane %v1420, %v1427
    %v1429 = vcombine.high %v1428, %v1428
    %v1431 = vunpack.c.l.s4 1966171168
    %v1432 = vunpack.c.0.s8 %v1431
    %v1433 = vlaneseq
    %v1434 = vshrl.u32 %v1433, 7
    %v1435 = vsub.s32 %v1432, %v1434
    %v1436 = vrot.slane %v1428, %v1435
    %v1438 = vunpack.c.l.s4 1966171168
    %v1439 = vunpack.c.0.s8 %v1438
    %v1440 = vlaneseq
    %v1441 = vshrl.u32 %v1440, 7
    %v1442 = vsub.s32 %v1439, %v1441
    %v1443 = vrot.slane %v1429, %v1442
    %v1444 = vcombine.high %v1436, %v1436
    %v1445 = vcombine.high %v1443, %v1443
    %v1447 = vpack.i.b16 %v1436, %v1436
    %v1449 = vlaneseq
    %v1450 = vshrl.u32 %v1449, 7
    %v1451 = vsub.s32 0, %v1450
    %v1452 = vrot.slane %v1447, %v1451
    %v1454 = vpack.i.b16 %v1443, %v1443
    %v1456 = vlaneseq
    %v1457 = vshrl.u32 %v1456, 7
    %v1458 = vsub.s32 0, %v1457
    %v1459 = vrot.slane %v1454, %v1458
    %v1461 = vpack.i.b16 %v1444, %v1444
    %v1463 = vlaneseq
    %v1464 = vshrl.u32 %v1463, 7
    %v1465 = vsub.s32 0, %v1464
    %v1466 = vrot.slane %v1461, %v1465
    %v1468 = vpack.i.b16 %v1445, %v1445
    %v1470 = vlaneseq
    %v1471 = vshrl.u32 %v1470, 7
    %v1472 = vsub.s32 0, %v1471
    %v1473 = vrot.slane %v1468, %v1472
    %1478 = vrot.lane.b32.xlu0 %v1452, 1
    %v1479 = vpop.permute.xlu0 %1478
    %1480 = vrot.lane.b32.xlu0 %v1459, 1
    %v1481 = vpop.permute.xlu0 %1480
    %1482 = vrot.lane.b32.xlu0 %v1466, 1
    %v1483 = vpop.permute.xlu0 %1482
    %1484 = vrot.lane.b32.xlu0 %v1473, 1
    %v1485 = vpop.permute.xlu0 %1484
    %v1486 = vsel %vm141, %v1479, %v1481
    %v1487 = vsel %vm141, %v1481, %v1483
    %v1488 = vsel %vm141, %v1483, %v1485
    %v1493 = vmul.bf16 %v1416, %v1479
    %v1494 = vmul.bf16 %v1417, %v1486
    %v1495 = vmul.bf16 %v1418, %v1487
    %v1496 = vmul.bf16 %v1419, %v1488
    %s1497 = scalar_lea.vmem %s2, 4
    %v1498 = vld [vmem:[%s1497] sm:$0xf]
    %v1501 = vunpack.c.l.s4 1966171168
    %v1502 = vunpack.c.0.s8 %v1501
    %v1503 = vlaneseq
    %v1504 = vshrl.u32 %v1503, 7
    %v1505 = vsub.s32 %v1502, %v1504
    %v1506 = vrot.slane %v1498, %v1505
    %v1507 = vcombine.high %v1506, %v1506
    %v1509 = vunpack.c.l.s4 1966171168
    %v1510 = vunpack.c.0.s8 %v1509
    %v1511 = vlaneseq
    %v1512 = vshrl.u32 %v1511, 7
    %v1513 = vsub.s32 %v1510, %v1512
    %v1514 = vrot.slane %v1506, %v1513
    %v1516 = vunpack.c.l.s4 1966171168
    %v1517 = vunpack.c.0.s8 %v1516
    %v1518 = vlaneseq
    %v1519 = vshrl.u32 %v1518, 7
    %v1520 = vsub.s32 %v1517, %v1519
    %v1521 = vrot.slane %v1507, %v1520
    %v1522 = vcombine.high %v1514, %v1514
    %v1523 = vcombine.high %v1521, %v1521
    %v1525 = vpack.i.b16 %v1514, %v1514
    %v1527 = vlaneseq
    %v1528 = vshrl.u32 %v1527, 7
    %v1529 = vsub.s32 0, %v1528
    %v1530 = vrot.slane %v1525, %v1529
    %v1532 = vpack.i.b16 %v1521, %v1521
    %v1534 = vlaneseq
    %v1535 = vshrl.u32 %v1534, 7
    %v1536 = vsub.s32 0, %v1535
    %v1537 = vrot.slane %v1532, %v1536
    %v1539 = vpack.i.b16 %v1522, %v1522
    %v1541 = vlaneseq
    %v1542 = vshrl.u32 %v1541, 7
    %v1543 = vsub.s32 0, %v1542
    %v1544 = vrot.slane %v1539, %v1543
    %v1546 = vpack.i.b16 %v1523, %v1523
    %v1548 = vlaneseq
    %v1549 = vshrl.u32 %v1548, 7
    %v1550 = vsub.s32 0, %v1549
    %v1551 = vrot.slane %v1546, %v1550
    %1556 = vrot.lane.b32.xlu0 %v1530, 2
    %v1557 = vpop.permute.xlu0 %1556
    %1558 = vrot.lane.b32.xlu0 %v1537, 2
    %v1559 = vpop.permute.xlu0 %1558
    %1560 = vrot.lane.b32.xlu0 %v1544, 2
    %v1561 = vpop.permute.xlu0 %1560
    %1562 = vrot.lane.b32.xlu0 %v1551, 2
    %v1563 = vpop.permute.xlu0 %1562
    %v1564 = vsel %vm231, %v1557, %v1559
    %v1565 = vsel %vm231, %v1559, %v1561
    %v1566 = vsel %vm231, %v1561, %v1563
    %v1571 = vmul.bf16 %v1416, %v1557
    %v1572 = vmul.bf16 %v1417, %v1564
    %v1573 = vmul.bf16 %v1418, %v1565
    %v1574 = vmul.bf16 %v1419, %v1566
    %s1575 = scalar_lea.vmem %s2, 8
    %v1576 = vld [vmem:[%s1575] sm:$0xf]
    %v1579 = vunpack.c.l.s4 1966171168
    %v1580 = vunpack.c.0.s8 %v1579
    %v1581 = vlaneseq
    %v1582 = vshrl.u32 %v1581, 7
    %v1583 = vsub.s32 %v1580, %v1582
    %v1584 = vrot.slane %v1576, %v1583
    %v1585 = vcombine.high %v1584, %v1584
    %v1587 = vunpack.c.l.s4 1966171168
    %v1588 = vunpack.c.0.s8 %v1587
    %v1589 = vlaneseq
    %v1590 = vshrl.u32 %v1589, 7
    %v1591 = vsub.s32 %v1588, %v1590
    %v1592 = vrot.slane %v1584, %v1591
    %v1594 = vunpack.c.l.s4 1966171168
    %v1595 = vunpack.c.0.s8 %v1594
    %v1596 = vlaneseq
    %v1597 = vshrl.u32 %v1596, 7
    %v1598 = vsub.s32 %v1595, %v1597
    %v1599 = vrot.slane %v1585, %v1598
    %v1600 = vcombine.high %v1592, %v1592
    %v1601 = vcombine.high %v1599, %v1599
    %v1603 = vpack.i.b16 %v1592, %v1592
    %v1605 = vlaneseq
    %v1606 = vshrl.u32 %v1605, 7
    %v1607 = vsub.s32 0, %v1606
    %v1608 = vrot.slane %v1603, %v1607
    %v1610 = vpack.i.b16 %v1599, %v1599
    %v1612 = vlaneseq
    %v1613 = vshrl.u32 %v1612, 7
    %v1614 = vsub.s32 0, %v1613
    %v1615 = vrot.slane %v1610, %v1614
    %v1617 = vpack.i.b16 %v1600, %v1600
    %v1619 = vlaneseq
    %v1620 = vshrl.u32 %v1619, 7
    %v1621 = vsub.s32 0, %v1620
    %v1622 = vrot.slane %v1617, %v1621
    %v1624 = vpack.i.b16 %v1601, %v1601
    %v1626 = vlaneseq
    %v1627 = vshrl.u32 %v1626, 7
    %v1628 = vsub.s32 0, %v1627
    %v1629 = vrot.slane %v1624, %v1628
    %1634 = vrot.lane.b32.xlu0 %v1608, 3
    %v1635 = vpop.permute.xlu0 %1634
    %1636 = vrot.lane.b32.xlu0 %v1615, 3
    %v1637 = vpop.permute.xlu0 %1636
    %1638 = vrot.lane.b32.xlu0 %v1622, 3
    %v1639 = vpop.permute.xlu0 %1638
    %1640 = vrot.lane.b32.xlu0 %v1629, 3
    %v1641 = vpop.permute.xlu0 %1640
    %v1642 = vsel %vm321, %v1635, %v1637
    %v1643 = vsel %vm321, %v1637, %v1639
    %v1644 = vsel %vm321, %v1639, %v1641
    %v1649 = vmul.bf16 %v1416, %v1635
    %v1650 = vmul.bf16 %v1417, %v1642
    %v1651 = vmul.bf16 %v1418, %v1643
    %v1652 = vmul.bf16 %v1419, %v1644
    %s1653 = scalar_lea.vmem %s2, 12
    %v1654 = vld [vmem:[%s1653] sm:$0xf]
    %v1657 = vunpack.c.l.s4 1966171168
    %v1658 = vunpack.c.0.s8 %v1657
    %v1659 = vlaneseq
    %v1660 = vshrl.u32 %v1659, 7
    %v1661 = vsub.s32 %v1658, %v1660
    %v1662 = vrot.slane %v1654, %v1661
    %v1663 = vcombine.high %v1662, %v1662
    %v1665 = vunpack.c.l.s4 1966171168
    %v1666 = vunpack.c.0.s8 %v1665
    %v1667 = vlaneseq
    %v1668 = vshrl.u32 %v1667, 7
    %v1669 = vsub.s32 %v1666, %v1668
    %v1670 = vrot.slane %v1662, %v1669
    %v1672 = vunpack.c.l.s4 1966171168
    %v1673 = vunpack.c.0.s8 %v1672
    %v1674 = vlaneseq
    %v1675 = vshrl.u32 %v1674, 7
    %v1676 = vsub.s32 %v1673, %v1675
    %v1677 = vrot.slane %v1663, %v1676
    %v1678 = vcombine.high %v1670, %v1670
    %v1679 = vcombine.high %v1677, %v1677
    %v1681 = vpack.i.b16 %v1670, %v1670
    %v1683 = vlaneseq
    %v1684 = vshrl.u32 %v1683, 7
    %v1685 = vsub.s32 0, %v1684
    %v1686 = vrot.slane %v1681, %v1685
    %v1688 = vpack.i.b16 %v1677, %v1677
    %v1690 = vlaneseq
    %v1691 = vshrl.u32 %v1690, 7
    %v1692 = vsub.s32 0, %v1691
    %v1693 = vrot.slane %v1688, %v1692
    %v1695 = vpack.i.b16 %v1678, %v1678
    %v1697 = vlaneseq
    %v1698 = vshrl.u32 %v1697, 7
    %v1699 = vsub.s32 0, %v1698
    %v1700 = vrot.slane %v1695, %v1699
    %v1702 = vpack.i.b16 %v1679, %v1679
    %v1704 = vlaneseq
    %v1705 = vshrl.u32 %v1704, 7
    %v1706 = vsub.s32 0, %v1705
    %v1707 = vrot.slane %v1702, %v1706
    %1712 = vrot.lane.b32.xlu0 %v1686, 15
    %v1713 = vpop.permute.xlu0 %1712
    %1714 = vrot.lane.b32.xlu0 %v1693, 15
    %v1715 = vpop.permute.xlu0 %1714
    %1716 = vrot.lane.b32.xlu0 %v1700, 15
    %v1717 = vpop.permute.xlu0 %1716
    %1718 = vrot.lane.b32.xlu0 %v1707, 15
    %v1719 = vpop.permute.xlu0 %1718
    %v1720 = vsel %vm411, %v1713, %v1715
    %v1721 = vsel %vm411, %v1715, %v1717
    %v1722 = vsel %vm411, %v1717, %v1719
    %v1727 = vmul.bf16 %v1416, %v1713
    %v1728 = vmul.bf16 %v1417, %v1720
    %v1729 = vmul.bf16 %v1418, %v1721
    %v1730 = vmul.bf16 %v1419, %v1722
    %s1731 = scalar_lea.vmem %s2, 16
    %v1732 = vld [vmem:[%s1731] sm:$0xf]
    %v1735 = vunpack.c.l.s4 1966171168
    %v1736 = vunpack.c.0.s8 %v1735
    %v1737 = vlaneseq
    %v1738 = vshrl.u32 %v1737, 7
    %v1739 = vsub.s32 %v1736, %v1738
    %v1740 = vrot.slane %v1732, %v1739
    %v1741 = vcombine.high %v1740, %v1740
    %v1743 = vunpack.c.l.s4 1966171168
    %v1744 = vunpack.c.0.s8 %v1743
    %v1745 = vlaneseq
    %v1746 = vshrl.u32 %v1745, 7
    %v1747 = vsub.s32 %v1744, %v1746
    %v1748 = vrot.slane %v1740, %v1747
    %v1750 = vunpack.c.l.s4 1966171168
    %v1751 = vunpack.c.0.s8 %v1750
    %v1752 = vlaneseq
    %v1753 = vshrl.u32 %v1752, 7
    %v1754 = vsub.s32 %v1751, %v1753
    %v1755 = vrot.slane %v1741, %v1754
    %v1756 = vcombine.high %v1748, %v1748
    %v1757 = vcombine.high %v1755, %v1755
    %v1759 = vpack.i.b16 %v1748, %v1748
    %v1761 = vlaneseq
    %v1762 = vshrl.u32 %v1761, 7
    %v1763 = vsub.s32 0, %v1762
    %v1764 = vrot.slane %v1759, %v1763
    %v1766 = vpack.i.b16 %v1755, %v1755
    %v1768 = vlaneseq
    %v1769 = vshrl.u32 %v1768, 7
    %v1770 = vsub.s32 0, %v1769
    %v1771 = vrot.slane %v1766, %v1770
    %v1773 = vpack.i.b16 %v1756, %v1756
    %v1775 = vlaneseq
    %v1776 = vshrl.u32 %v1775, 7
    %v1777 = vsub.s32 0, %v1776
    %v1778 = vrot.slane %v1773, %v1777
    %v1780 = vpack.i.b16 %v1757, %v1757
    %v1782 = vlaneseq
    %v1783 = vshrl.u32 %v1782, 7
    %v1784 = vsub.s32 0, %v1783
    %v1785 = vrot.slane %v1780, %v1784
    %1790 = vrot.lane.b32.xlu0 %v1764, 16
    %v1791 = vpop.permute.xlu0 %1790
    %1792 = vrot.lane.b32.xlu0 %v1771, 16
    %v1793 = vpop.permute.xlu0 %1792
    %1794 = vrot.lane.b32.xlu0 %v1778, 16
    %v1795 = vpop.permute.xlu0 %1794
    %1796 = vrot.lane.b32.xlu0 %v1785, 16
    %v1797 = vpop.permute.xlu0 %1796
    %v1798 = vsel %vm501, %v1791, %v1793
    %v1799 = vsel %vm501, %v1793, %v1795
    %v1800 = vsel %vm501, %v1795, %v1797
    %v1805 = vmul.bf16 %v1416, %v1791
    %v1806 = vmul.bf16 %v1417, %v1798
    %v1807 = vmul.bf16 %v1418, %v1799
    %v1808 = vmul.bf16 %v1419, %v1800
    %s1809 = scalar_lea.vmem %s2, 20
    %v1810 = vld [vmem:[%s1809] sm:$0xf]
    %v1813 = vunpack.c.l.s4 1966171168
    %v1814 = vunpack.c.0.s8 %v1813
    %v1815 = vlaneseq
    %v1816 = vshrl.u32 %v1815, 7
    %v1817 = vsub.s32 %v1814, %v1816
    %v1818 = vrot.slane %v1810, %v1817
    %v1819 = vcombine.high %v1818, %v1818
    %v1821 = vunpack.c.l.s4 1966171168
    %v1822 = vunpack.c.0.s8 %v1821
    %v1823 = vlaneseq
    %v1824 = vshrl.u32 %v1823, 7
    %v1825 = vsub.s32 %v1822, %v1824
    %v1826 = vrot.slane %v1818, %v1825
    %v1828 = vunpack.c.l.s4 1966171168
    %v1829 = vunpack.c.0.s8 %v1828
    %v1830 = vlaneseq
    %v1831 = vshrl.u32 %v1830, 7
    %v1832 = vsub.s32 %v1829, %v1831
    %v1833 = vrot.slane %v1819, %v1832
    %v1834 = vcombine.high %v1826, %v1826
    %v1835 = vcombine.high %v1833, %v1833
    %v1837 = vpack.i.b16 %v1826, %v1826
    %v1839 = vlaneseq
    %v1840 = vshrl.u32 %v1839, 7
    %v1841 = vsub.s32 0, %v1840
    %v1842 = vrot.slane %v1837, %v1841
    %v1844 = vpack.i.b16 %v1833, %v1833
    %v1846 = vlaneseq
    %v1847 = vshrl.u32 %v1846, 7
    %v1848 = vsub.s32 0, %v1847
    %v1849 = vrot.slane %v1844, %v1848
    %v1851 = vpack.i.b16 %v1834, %v1834
    %v1853 = vlaneseq
    %v1854 = vshrl.u32 %v1853, 7
    %v1855 = vsub.s32 0, %v1854
    %v1856 = vrot.slane %v1851, %v1855
    %v1858 = vpack.i.b16 %v1835, %v1835
    %v1860 = vlaneseq
    %v1861 = vshrl.u32 %v1860, 7
    %v1862 = vsub.s32 0, %v1861
    %v1863 = vrot.slane %v1858, %v1862
    %1868 = vrot.lane.b32.xlu0 %v1842, 17
    %v1869 = vpop.permute.xlu0 %1868
    %1870 = vrot.lane.b32.xlu0 %v1849, 17
    %v1871 = vpop.permute.xlu0 %1870
    %1872 = vrot.lane.b32.xlu0 %v1856, 17
    %v1873 = vpop.permute.xlu0 %1872
    %1874 = vrot.lane.b32.xlu0 %v1863, 17
    %v1875 = vpop.permute.xlu0 %1874
    %v1876 = vsel %vm591, %v1869, %v1871
    %v1877 = vsel %vm591, %v1871, %v1873
    %v1878 = vsel %vm591, %v1873, %v1875
    %v1883 = vmul.bf16 %v1416, %v1869
    %v1884 = vmul.bf16 %v1417, %v1876
    %v1885 = vmul.bf16 %v1418, %v1877
    %v1886 = vmul.bf16 %v1419, %v1878
    %s1887 = scalar_lea.vmem %s2, 24
    %v1888 = vld [vmem:[%s1887] sm:$0xf]
    %v1891 = vunpack.c.l.s4 1966171168
    %v1892 = vunpack.c.0.s8 %v1891
    %v1893 = vlaneseq
    %v1894 = vshrl.u32 %v1893, 7
    %v1895 = vsub.s32 %v1892, %v1894
    %v1896 = vrot.slane %v1888, %v1895
    %v1897 = vcombine.high %v1896, %v1896
    %v1899 = vunpack.c.l.s4 1966171168
    %v1900 = vunpack.c.0.s8 %v1899
    %v1901 = vlaneseq
    %v1902 = vshrl.u32 %v1901, 7
    %v1903 = vsub.s32 %v1900, %v1902
    %v1904 = vrot.slane %v1896, %v1903
    %v1906 = vunpack.c.l.s4 1966171168
    %v1907 = vunpack.c.0.s8 %v1906
    %v1908 = vlaneseq
    %v1909 = vshrl.u32 %v1908, 7
    %v1910 = vsub.s32 %v1907, %v1909
    %v1911 = vrot.slane %v1897, %v1910
    %v1912 = vcombine.high %v1904, %v1904
    %v1913 = vcombine.high %v1911, %v1911
    %v1915 = vpack.i.b16 %v1904, %v1904
    %v1917 = vlaneseq
    %v1918 = vshrl.u32 %v1917, 7
    %v1919 = vsub.s32 0, %v1918
    %v1920 = vrot.slane %v1915, %v1919
    %v1922 = vpack.i.b16 %v1911, %v1911
    %v1924 = vlaneseq
    %v1925 = vshrl.u32 %v1924, 7
    %v1926 = vsub.s32 0, %v1925
    %v1927 = vrot.slane %v1922, %v1926
    %v1929 = vpack.i.b16 %v1912, %v1912
    %v1931 = vlaneseq
    %v1932 = vshrl.u32 %v1931, 7
    %v1933 = vsub.s32 0, %v1932
    %v1934 = vrot.slane %v1929, %v1933
    %v1936 = vpack.i.b16 %v1913, %v1913
    %v1938 = vlaneseq
    %v1939 = vshrl.u32 %v1938, 7
    %v1940 = vsub.s32 0, %v1939
    %v1941 = vrot.slane %v1936, %v1940
    %1946 = vrot.lane.b32.xlu0 %v1920, 29
    %v1947 = vpop.permute.xlu0 %1946
    %1948 = vrot.lane.b32.xlu0 %v1927, 29
    %v1949 = vpop.permute.xlu0 %1948
    %1950 = vrot.lane.b32.xlu0 %v1934, 29
    %v1951 = vpop.permute.xlu0 %1950
    %1952 = vrot.lane.b32.xlu0 %v1941, 29
    %v1953 = vpop.permute.xlu0 %1952
    %v1954 = vsel %vm681, %v1947, %v1949
    %v1955 = vsel %vm681, %v1949, %v1951
    %v1956 = vsel %vm681, %v1951, %v1953
    %v1961 = vmul.bf16 %v1416, %v1947
    %v1962 = vmul.bf16 %v1417, %v1954
    %v1963 = vmul.bf16 %v1418, %v1955
    %v1964 = vmul.bf16 %v1419, %v1956
    %s1965 = scalar_lea.vmem %s2, 28
    %v1966 = vld [vmem:[%s1965] sm:$0xf]
    %v1969 = vunpack.c.l.s4 1966171168
    %v1970 = vunpack.c.0.s8 %v1969
    %v1971 = vlaneseq
    %v1972 = vshrl.u32 %v1971, 7
    %v1973 = vsub.s32 %v1970, %v1972
    %v1974 = vrot.slane %v1966, %v1973
    %v1975 = vcombine.high %v1974, %v1974
    %v1977 = vunpack.c.l.s4 1966171168
    %v1978 = vunpack.c.0.s8 %v1977
    %v1979 = vlaneseq
    %v1980 = vshrl.u32 %v1979, 7
    %v1981 = vsub.s32 %v1978, %v1980
    %v1982 = vrot.slane %v1974, %v1981
    %v1984 = vunpack.c.l.s4 1966171168
    %v1985 = vunpack.c.0.s8 %v1984
    %v1986 = vlaneseq
    %v1987 = vshrl.u32 %v1986, 7
    %v1988 = vsub.s32 %v1985, %v1987
    %v1989 = vrot.slane %v1975, %v1988
    %v1990 = vcombine.high %v1982, %v1982
    %v1991 = vcombine.high %v1989, %v1989
    %v1993 = vpack.i.b16 %v1982, %v1982
    %v1995 = vlaneseq
    %v1996 = vshrl.u32 %v1995, 7
    %v1997 = vsub.s32 0, %v1996
    %v1998 = vrot.slane %v1993, %v1997
    %v2000 = vpack.i.b16 %v1989, %v1989
    %v2002 = vlaneseq
    %v2003 = vshrl.u32 %v2002, 7
    %v2004 = vsub.s32 0, %v2003
    %v2005 = vrot.slane %v2000, %v2004
    %v2007 = vpack.i.b16 %v1990, %v1990
    %v2009 = vlaneseq
    %v2010 = vshrl.u32 %v2009, 7
    %v2011 = vsub.s32 0, %v2010
    %v2012 = vrot.slane %v2007, %v2011
    %v2014 = vpack.i.b16 %v1991, %v1991
    %v2016 = vlaneseq
    %v2017 = vshrl.u32 %v2016, 7
    %v2018 = vsub.s32 0, %v2017
    %v2019 = vrot.slane %v2014, %v2018
    %2024 = vrot.lane.b32.xlu0 %v1998, 30
    %v2025 = vpop.permute.xlu0 %2024
    %2026 = vrot.lane.b32.xlu0 %v2005, 30
    %v2027 = vpop.permute.xlu0 %2026
    %2028 = vrot.lane.b32.xlu0 %v2012, 30
    %v2029 = vpop.permute.xlu0 %2028
    %2030 = vrot.lane.b32.xlu0 %v2019, 30
    %v2031 = vpop.permute.xlu0 %2030
    %v2032 = vsel %vm771, %v2025, %v2027
    %v2033 = vsel %vm771, %v2027, %v2029
    %v2034 = vsel %vm771, %v2029, %v2031
    %v2039 = vmul.bf16 %v1416, %v2025
    %v2040 = vmul.bf16 %v1417, %v2032
    %v2041 = vmul.bf16 %v1418, %v2033
    %v2042 = vmul.bf16 %v1419, %v2034
    %s2043 = scalar_lea.vmem %s2, 32
    %v2044 = vld [vmem:[%s2043] sm:$0xf]
    %v2047 = vunpack.c.l.s4 1966171168
    %v2048 = vunpack.c.0.s8 %v2047
    %v2049 = vlaneseq
    %v2050 = vshrl.u32 %v2049, 7
    %v2051 = vsub.s32 %v2048, %v2050
    %v2052 = vrot.slane %v2044, %v2051
    %v2053 = vcombine.high %v2052, %v2052
    %v2055 = vunpack.c.l.s4 1966171168
    %v2056 = vunpack.c.0.s8 %v2055
    %v2057 = vlaneseq
    %v2058 = vshrl.u32 %v2057, 7
    %v2059 = vsub.s32 %v2056, %v2058
    %v2060 = vrot.slane %v2052, %v2059
    %v2062 = vunpack.c.l.s4 1966171168
    %v2063 = vunpack.c.0.s8 %v2062
    %v2064 = vlaneseq
    %v2065 = vshrl.u32 %v2064, 7
    %v2066 = vsub.s32 %v2063, %v2065
    %v2067 = vrot.slane %v2053, %v2066
    %v2068 = vcombine.high %v2060, %v2060
    %v2069 = vcombine.high %v2067, %v2067
    %v2071 = vpack.i.b16 %v2060, %v2060
    %v2073 = vlaneseq
    %v2074 = vshrl.u32 %v2073, 7
    %v2075 = vsub.s32 0, %v2074
    %v2076 = vrot.slane %v2071, %v2075
    %v2078 = vpack.i.b16 %v2067, %v2067
    %v2080 = vlaneseq
    %v2081 = vshrl.u32 %v2080, 7
    %v2082 = vsub.s32 0, %v2081
    %v2083 = vrot.slane %v2078, %v2082
    %v2085 = vpack.i.b16 %v2068, %v2068
    %v2087 = vlaneseq
    %v2088 = vshrl.u32 %v2087, 7
    %v2089 = vsub.s32 0, %v2088
    %v2090 = vrot.slane %v2085, %v2089
    %v2092 = vpack.i.b16 %v2069, %v2069
    %v2094 = vlaneseq
    %v2095 = vshrl.u32 %v2094, 7
    %v2096 = vsub.s32 0, %v2095
    %v2097 = vrot.slane %v2092, %v2096
    %2102 = vrot.lane.b32.xlu0 %v2076, 31
    %v2103 = vpop.permute.xlu0 %2102
    %2104 = vrot.lane.b32.xlu0 %v2083, 31
    %v2105 = vpop.permute.xlu0 %2104
    %2106 = vrot.lane.b32.xlu0 %v2090, 31
    %v2107 = vpop.permute.xlu0 %2106
    %2108 = vrot.lane.b32.xlu0 %v2097, 31
    %v2109 = vpop.permute.xlu0 %2108
    %v2110 = vsel %vm861, %v2103, %v2105
    %v2111 = vsel %vm861, %v2105, %v2107
    %v2112 = vsel %vm861, %v2107, %v2109
    %v2117 = vmul.bf16 %v1416, %v2103
    %v2118 = vmul.bf16 %v1417, %v2110
    %v2119 = vmul.bf16 %v1418, %v2111
    %v2120 = vmul.bf16 %v1419, %v2112
    %2125 = vrot.lane.b32.xlu0 %v1571, 127
    %v2126 = vpop.permute.xlu0 %2125
    %2127 = vrot.lane.b32.xlu0 %v1572, 127
    %v2128 = vpop.permute.xlu0 %2127
    %2129 = vrot.lane.b32.xlu0 %v1573, 127
    %v2130 = vpop.permute.xlu0 %2129
    %2131 = vrot.lane.b32.xlu0 %v1574, 127
    %v2132 = vpop.permute.xlu0 %2131
    %v2133 = vsel %vm924, %v2126, %v2128
    %v2134 = vsel %vm924, %v2128, %v2130
    %v2135 = vsel %vm924, %v2130, %v2132
    %2140 = vrot.lane.b32.xlu0 %v1649, 126
    %v2141 = vpop.permute.xlu0 %2140
    %2142 = vrot.lane.b32.xlu0 %v1650, 126
    %v2143 = vpop.permute.xlu0 %2142
    %2144 = vrot.lane.b32.xlu0 %v1651, 126
    %v2145 = vpop.permute.xlu0 %2144
    %2146 = vrot.lane.b32.xlu0 %v1652, 126
    %v2147 = vpop.permute.xlu0 %2146
    %v2148 = vsel %vm961, %v2141, %v2143
    %v2149 = vsel %vm961, %v2143, %v2145
    %v2150 = vsel %vm961, %v2145, %v2147
    %2155 = vrot.lane.b32.xlu0 %v1727, 114
    %v2156 = vpop.permute.xlu0 %2155
    %2157 = vrot.lane.b32.xlu0 %v1728, 114
    %v2158 = vpop.permute.xlu0 %2157
    %2159 = vrot.lane.b32.xlu0 %v1729, 114
    %v2160 = vpop.permute.xlu0 %2159
    %2161 = vrot.lane.b32.xlu0 %v1730, 114
    %v2162 = vpop.permute.xlu0 %2161
    %v2163 = vsel %vm999, %v2156, %v2158
    %v2164 = vsel %vm999, %v2158, %v2160
    %v2165 = vsel %vm999, %v2160, %v2162
    %2170 = vrot.lane.b32.xlu0 %v1805, 113
    %v2171 = vpop.permute.xlu0 %2170
    %2172 = vrot.lane.b32.xlu0 %v1806, 113
    %v2173 = vpop.permute.xlu0 %2172
    %2174 = vrot.lane.b32.xlu0 %v1807, 113
    %v2175 = vpop.permute.xlu0 %2174
    %2176 = vrot.lane.b32.xlu0 %v1808, 113
    %v2177 = vpop.permute.xlu0 %2176
    %v2178 = vsel %vm1036, %v2171, %v2173
    %v2179 = vsel %vm1036, %v2173, %v2175
    %v2180 = vsel %vm1036, %v2175, %v2177
    %2185 = vrot.lane.b32.xlu0 %v1883, 112
    %v2186 = vpop.permute.xlu0 %2185
    %2187 = vrot.lane.b32.xlu0 %v1884, 112
    %v2188 = vpop.permute.xlu0 %2187
    %2189 = vrot.lane.b32.xlu0 %v1885, 112
    %v2190 = vpop.permute.xlu0 %2189
    %2191 = vrot.lane.b32.xlu0 %v1886, 112
    %v2192 = vpop.permute.xlu0 %2191
    %v2193 = vsel %vm1074, %v2186, %v2188
    %v2194 = vsel %vm1074, %v2188, %v2190
    %v2195 = vsel %vm1074, %v2190, %v2192
    %2200 = vrot.lane.b32.xlu0 %v1961, 100
    %v2201 = vpop.permute.xlu0 %2200
    %2202 = vrot.lane.b32.xlu0 %v1962, 100
    %v2203 = vpop.permute.xlu0 %2202
    %2204 = vrot.lane.b32.xlu0 %v1963, 100
    %v2205 = vpop.permute.xlu0 %2204
    %2206 = vrot.lane.b32.xlu0 %v1964, 100
    %v2207 = vpop.permute.xlu0 %2206
    %v2208 = vsel %vm1111, %v2201, %v2203
    %v2209 = vsel %vm1111, %v2203, %v2205
    %v2210 = vsel %vm1111, %v2205, %v2207
    %2215 = vrot.lane.b32.xlu0 %v2039, 99
    %v2216 = vpop.permute.xlu0 %2215
    %2217 = vrot.lane.b32.xlu0 %v2040, 99
    %v2218 = vpop.permute.xlu0 %2217
    %2219 = vrot.lane.b32.xlu0 %v2041, 99
    %v2220 = vpop.permute.xlu0 %2219
    %2221 = vrot.lane.b32.xlu0 %v2042, 99
    %v2222 = vpop.permute.xlu0 %2221
    %v2223 = vsel %vm1149, %v2216, %v2218
    %v2224 = vsel %vm1149, %v2218, %v2220
    %v2225 = vsel %vm1149, %v2220, %v2222
    %2230 = vrot.lane.b32.xlu0 %v2117, 98
    %v2231 = vpop.permute.xlu0 %2230
    %2232 = vrot.lane.b32.xlu0 %v2118, 98
    %v2233 = vpop.permute.xlu0 %2232
    %2234 = vrot.lane.b32.xlu0 %v2119, 98
    %v2235 = vpop.permute.xlu0 %2234
    %2236 = vrot.lane.b32.xlu0 %v2120, 98
    %v2237 = vpop.permute.xlu0 %2236
    %v2238 = vsel %vm1186, %v2231, %v2233
    %v2239 = vsel %vm1186, %v2233, %v2235
    %v2240 = vsel %vm1186, %v2235, %v2237
    %v2241 = vld [vmem:[#allocation4] sm:$0xff]
    %v2242 = vld [vmem:[#allocation4 + $0x8] sm:$0xff]
    %v2243 = vld [vmem:[#allocation4 + $0x10] sm:$0xff]
    %v2244 = vld [vmem:[#allocation4 + $0x18] sm:$0xff]
    %v2245 = vld [vmem:[%s6] sm:$0xff]
    %v2246 = vld [vmem:[%s6 + $0x8] sm:$0xff]
    %v2247 = vld [vmem:[%s6 + $0x10] sm:$0xff]
    %v2248 = vld [vmem:[%s6 + $0x18] sm:$0xff]
    %2250 = vset.pattern.permute.xlu0 0
    %2251 = vperm.xlu0 %2250, %v2245
    %v2252 = vpop.permute.xlu0 %2251
    %2255 = vset.pattern.permute.xlu0 0
    %2256 = vperm.xlu0 %2255, %v2246
    %v2257 = vpop.permute.xlu0 %2256
    %2260 = vset.pattern.permute.xlu0 0
    %2261 = vperm.xlu0 %2260, %v2247
    %v2262 = vpop.permute.xlu0 %2261
    %2265 = vset.pattern.permute.xlu0 0
    %2266 = vperm.xlu0 %2265, %v2248
    %v2267 = vpop.permute.xlu0 %2266
    %v2273 = vunpack.c.l.b16 %v2241
    %v2274 = vunpack.c.h.b16 %v2241
    %v2275 = vunpack.c.l.b16 %v2242
    %v2276 = vunpack.c.h.b16 %v2242
    %v2277 = vunpack.c.l.b16 %v2243
    %v2278 = vunpack.c.h.b16 %v2243
    %v2279 = vunpack.c.l.b16 %v2244
    %v2280 = vunpack.c.h.b16 %v2244
    %v2281 = vpack.c.b16 %v2275, %v2273
    %v2282 = vpack.c.b16 %v2276, %v2274
    %v2283 = vpack.c.b16 %v2279, %v2277
    %v2284 = vpack.c.b16 %v2280, %v2278
    %2291 = vrot.lane.b32.xlu0 %v1493, 127
    %v2292 = vpop.permute.xlu0 %2291
    %2293 = vrot.lane.b32.xlu0 %v1494, 127
    %v2294 = vpop.permute.xlu0 %2293
    %2295 = vrot.lane.b32.xlu0 %v1495, 127
    %v2296 = vpop.permute.xlu0 %2295
    %2297 = vrot.lane.b32.xlu0 %v1496, 127
    %v2298 = vpop.permute.xlu0 %2297
    %2299 = vrot.lane.b32.xlu0 %v2133, 127
    %v2300 = vpop.permute.xlu0 %2299
    %2301 = vrot.lane.b32.xlu0 %v2134, 127
    %v2302 = vpop.permute.xlu0 %2301
    %2303 = vrot.lane.b32.xlu0 %v2135, 127
    %v2304 = vpop.permute.xlu0 %2303
    %2305 = vrot.lane.b32.xlu0 %v2132, 127
    %v2306 = vpop.permute.xlu0 %2305
    %2307 = vrot.lane.b32.xlu0 %v2148, 127
    %v2308 = vpop.permute.xlu0 %2307
    %2309 = vrot.lane.b32.xlu0 %v2149, 127
    %v2310 = vpop.permute.xlu0 %2309
    %2311 = vrot.lane.b32.xlu0 %v2150, 127
    %v2312 = vpop.permute.xlu0 %2311
    %2313 = vrot.lane.b32.xlu0 %v2147, 127
    %v2314 = vpop.permute.xlu0 %2313
    %2315 = vrot.lane.b32.xlu0 %v2163, 127
    %v2316 = vpop.permute.xlu0 %2315
    %2317 = vrot.lane.b32.xlu0 %v2164, 127
    %v2318 = vpop.permute.xlu0 %2317
    %2319 = vrot.lane.b32.xlu0 %v2165, 127
    %v2320 = vpop.permute.xlu0 %2319
    %2321 = vrot.lane.b32.xlu0 %v2162, 127
    %v2322 = vpop.permute.xlu0 %2321
    %2323 = vrot.lane.b32.xlu0 %v2178, 127
    %v2324 = vpop.permute.xlu0 %2323
    %2325 = vrot.lane.b32.xlu0 %v2179, 127
    %v2326 = vpop.permute.xlu0 %2325
    %2327 = vrot.lane.b32.xlu0 %v2180, 127
    %v2328 = vpop.permute.xlu0 %2327
    %2329 = vrot.lane.b32.xlu0 %v2177, 127
    %v2330 = vpop.permute.xlu0 %2329
    %2331 = vrot.lane.b32.xlu0 %v2193, 127
    %v2332 = vpop.permute.xlu0 %2331
    %2333 = vrot.lane.b32.xlu0 %v2194, 127
    %v2334 = vpop.permute.xlu0 %2333
    %2335 = vrot.lane.b32.xlu0 %v2195, 127
    %v2336 = vpop.permute.xlu0 %2335
    %2337 = vrot.lane.b32.xlu0 %v2192, 127
    %v2338 = vpop.permute.xlu0 %2337
    %2339 = vrot.lane.b32.xlu0 %v2208, 127
    %v2340 = vpop.permute.xlu0 %2339
    %2341 = vrot.lane.b32.xlu0 %v2209, 127
    %v2342 = vpop.permute.xlu0 %2341
    %2343 = vrot.lane.b32.xlu0 %v2210, 127
    %v2344 = vpop.permute.xlu0 %2343
    %2345 = vrot.lane.b32.xlu0 %v2207, 127
    %v2346 = vpop.permute.xlu0 %2345
    %2347 = vrot.lane.b32.xlu0 %v2223, 127
    %v2348 = vpop.permute.xlu0 %2347
    %2349 = vrot.lane.b32.xlu0 %v2224, 127
    %v2350 = vpop.permute.xlu0 %2349
    %2351 = vrot.lane.b32.xlu0 %v2225, 127
    %v2352 = vpop.permute.xlu0 %2351
    %2353 = vrot.lane.b32.xlu0 %v2222, 127
    %v2354 = vpop.permute.xlu0 %2353
    %2355 = vrot.lane.b32.xlu0 %v2238, 127
    %v2356 = vpop.permute.xlu0 %2355
    %2357 = vrot.lane.b32.xlu0 %v2239, 127
    %v2358 = vpop.permute.xlu0 %2357
    %2359 = vrot.lane.b32.xlu0 %v2240, 127
    %v2360 = vpop.permute.xlu0 %2359
    %2361 = vrot.lane.b32.xlu0 %v2237, 127
    %v2362 = vpop.permute.xlu0 %2361
    %v2363 = vsel %vm924, %v2292, %v2294
    %v2364 = vsel %vm924, %v2294, %v2296
    %v2365 = vsel %vm924, %v2296, %v2298
    %v2366 = vsel %vm924, %v2300, %v2302
    %v2367 = vsel %vm924, %v2302, %v2304
    %v2368 = vsel %vm924, %v2304, %v2306
    %v2369 = vsel %vm924, %v2308, %v2310
    %v2370 = vsel %vm924, %v2310, %v2312
    %v2371 = vsel %vm924, %v2312, %v2314
    %v2372 = vsel %vm924, %v2316, %v2318
    %v2373 = vsel %vm924, %v2318, %v2320
    %v2374 = vsel %vm924, %v2320, %v2322
    %v2375 = vsel %vm924, %v2324, %v2326
    %v2376 = vsel %vm924, %v2326, %v2328
    %v2377 = vsel %vm924, %v2328, %v2330
    %v2378 = vsel %vm924, %v2332, %v2334
    %v2379 = vsel %vm924, %v2334, %v2336
    %v2380 = vsel %vm924, %v2336, %v2338
    %v2381 = vsel %vm924, %v2340, %v2342
    %v2382 = vsel %vm924, %v2342, %v2344
    %v2383 = vsel %vm924, %v2344, %v2346
    %v2384 = vsel %vm924, %v2348, %v2350
    %v2385 = vsel %vm924, %v2350, %v2352
    %v2386 = vsel %vm924, %v2352, %v2354
    %v2387 = vsel %vm924, %v2356, %v2358
    %v2388 = vsel %vm924, %v2358, %v2360
    %v2389 = vsel %vm924, %v2360, %v2362
    %vm2426 = vcmask 130048
    %v2428 = vsel %vm2426, %v2282, 0
    %v2431 = vsel %vm2426, %v2284, 0
    %2433 = vmatprep.subr.bf16.mxu0 %v2385
    %2434 = vmatpush1.bf16.msra.mxu0 %v2384
    %2435 = vmatprep.subr.bf16.mxu0 %v2382
    %2436 = vmatpush1.bf16.msra.mxu0 %v2381
    %2437 = vmatprep.subr.bf16.mxu0 %v2379
    %2438 = vmatpush1.bf16.msra.mxu0 %v2378
    %2439 = vmatprep.subr.bf16.mxu0 %v2376
    %2440 = vmatpush1.bf16.msra.mxu0 %v2375
    %2441 = vmatprep.subr.bf16.mxu0 %v2373
    %2442 = vmatpush1.bf16.msra.mxu0 %v2372
    %2443 = vmatprep.subr.bf16.mxu0 %v2370
    %2444 = vmatpush1.bf16.msra.mxu0 %v2369
    %2445 = vmatprep.subr.bf16.mxu0 %v2367
    %2446 = vmatpush1.bf16.msra.mxu0 %v2366
    %2447 = vmatprep.subr.bf16.mxu0 %v2364
    %2448 = vmatpush1.bf16.msra.mxu0 %v2363
    %2449 = vmatprep.subr.bf16.mxu0 0
    %2450 = vmatpush2.bf16.msra.mxu0 0
    %2451 = vmatprep.subr.bf16.mxu0 0
    %2452 = vmatpush2.bf16.msra.mxu0 0
    %2453 = vmatprep.subr.bf16.mxu0 0
    %2454 = vmatpush2.bf16.msra.mxu0 0
    %2455 = vmatprep.subr.bf16.mxu0 0
    %2456 = vmatpush2.bf16.msra.mxu0 0
    %2457 = vmatprep.subr.bf16.mxu0 0
    %2458 = vmatpush2.bf16.msra.mxu0 0
    %2459 = vmatprep.subr.bf16.mxu0 0
    %2460 = vmatpush2.bf16.msra.mxu0 0
    %2461 = vmatprep.subr.bf16.mxu0 0
    %2462 = vmatpush2.bf16.msra.mxu0 0
    %2463 = vmatprep.subr.bf16.mxu0 %v2388
    %2464 = vmatpush2.bf16.msra.mxu0 %v2387
    %2465 = vmatprep.mubr.bf16.mxu0 %v2428
    %2466 = vmatmul.mubr.bf16.gmra.mxu0 %v2281
    %v2467 = vpop.f32.mrf.mxu0
    %v2468 = vadd.f32 %v2252, %v2467
    %v2469 = vpop.f32.mrf.mxu0
    %v2470 = vadd.f32 %v2252, %v2469
    %v2471 = vpop.f32.mrf.mxu0
    %v2472 = vadd.f32 %v2257, %v2471
    %v2473 = vpop.f32.mrf.mxu0
    %v2474 = vadd.f32 %v2257, %v2473
    %2475 = vmatprep.mubr.bf16.mxu0 %v2431
    %2476 = vmatmul.mubr.bf16.gmra.mxu0 %v2283
    %v2477 = vpop.f32.mrf.mxu0
    %v2478 = vadd.f32 %v2262, %v2477
    %v2479 = vpop.f32.mrf.mxu0
    %v2480 = vadd.f32 %v2262, %v2479
    %v2481 = vpop.f32.mrf.mxu0
    %v2482 = vadd.f32 %v2267, %v2481
    %v2483 = vpop.f32.mrf.mxu0
    %v2484 = vadd.f32 %v2267, %v2483
    %2485 = vdwg.mxu0
    %2486 = vmatprep.subr.bf16.mxu0 %v2354
    %2487 = vmatpush1.bf16.msra.mxu0 %v2386
    %2488 = vmatprep.subr.bf16.mxu0 %v2346
    %2489 = vmatpush1.bf16.msra.mxu0 %v2383
    %2490 = vmatprep.subr.bf16.mxu0 %v2338
    %2491 = vmatpush1.bf16.msra.mxu0 %v2380
    %2492 = vmatprep.subr.bf16.mxu0 %v2330
    %2493 = vmatpush1.bf16.msra.mxu0 %v2377
    %2494 = vmatprep.subr.bf16.mxu0 %v2322
    %2495 = vmatpush1.bf16.msra.mxu0 %v2374
    %2496 = vmatprep.subr.bf16.mxu0 %v2314
    %2497 = vmatpush1.bf16.msra.mxu0 %v2371
    %2498 = vmatprep.subr.bf16.mxu0 %v2306
    %2499 = vmatpush1.bf16.msra.mxu0 %v2368
    %2500 = vmatprep.subr.bf16.mxu0 %v2298
    %2501 = vmatpush1.bf16.msra.mxu0 %v2365
    %2502 = vmatprep.subr.bf16.mxu0 0
    %2503 = vmatpush2.bf16.msra.mxu0 0
    %2504 = vmatprep.subr.bf16.mxu0 0
    %2505 = vmatpush2.bf16.msra.mxu0 0
    %2506 = vmatprep.subr.bf16.mxu0 0
    %2507 = vmatpush2.bf16.msra.mxu0 0
    %2508 = vmatprep.subr.bf16.mxu0 0
    %2509 = vmatpush2.bf16.msra.mxu0 0
    %2510 = vmatprep.subr.bf16.mxu0 0
    %2511 = vmatpush2.bf16.msra.mxu0 0
    %2512 = vmatprep.subr.bf16.mxu0 0
    %2513 = vmatpush2.bf16.msra.mxu0 0
    %2514 = vmatprep.subr.bf16.mxu0 0
    %2515 = vmatpush2.bf16.msra.mxu0 0
    %2516 = vmatprep.subr.bf16.mxu0 %v2362
    %2517 = vmatpush2.bf16.msra.mxu0 %v2389
    %2518 = vmatprep.mubr.bf16.mxu0 %v2428
    %2519 = vmatmul.mubr.bf16.gmra.mxu0 %v2281
    %v2520 = vpop.f32.mrf.mxu0
    %v2521 = vadd.f32 %v2252, %v2520
    %v2522 = vpop.f32.mrf.mxu0
    %v2523 = vadd.f32 %v2252, %v2522
    %v2524 = vpop.f32.mrf.mxu0
    %v2525 = vadd.f32 %v2257, %v2524
    %v2526 = vpop.f32.mrf.mxu0
    %v2527 = vadd.f32 %v2257, %v2526
    %2528 = vmatprep.mubr.bf16.mxu0 %v2431
    %2529 = vmatmul.mubr.bf16.gmra.mxu0 %v2283
    %v2530 = vpop.f32.mrf.mxu0
    %v2531 = vadd.f32 %v2262, %v2530
    %v2532 = vpop.f32.mrf.mxu0
    %v2533 = vadd.f32 %v2262, %v2532
    %v2534 = vpop.f32.mrf.mxu0
    %v2535 = vadd.f32 %v2267, %v2534
    %v2536 = vpop.f32.mrf.mxu0
    %v2537 = vadd.f32 %v2267, %v2536
    %2538 = vdwg.mxu0
    %v2539 = vmax.f32 %v2468, 0.0
    %v2540 = vmax.f32 %v2470, 0.0
    %v2541 = vmax.f32 %v2521, 0.0
    %v2542 = vmax.f32 %v2523, 0.0
    %v2543 = vmax.f32 %v2472, 0.0
    %v2544 = vmax.f32 %v2474, 0.0
    %v2545 = vmax.f32 %v2525, 0.0
    %v2546 = vmax.f32 %v2527, 0.0
    %v2547 = vmax.f32 %v2478, 0.0
    %v2548 = vmax.f32 %v2480, 0.0
    %v2549 = vmax.f32 %v2531, 0.0
    %v2550 = vmax.f32 %v2533, 0.0
    %v2551 = vmax.f32 %v2482, 0.0
    %v2552 = vmax.f32 %v2484, 0.0
    %v2553 = vmax.f32 %v2535, 0.0
    %v2554 = vmax.f32 %v2537, 0.0
    %v2555 = vpack.c.bf16 %v2543, %v2539
    %v2556 = vpack.c.bf16 %v2544, %v2540
    %v2557 = vpack.c.bf16 %v2545, %v2541
    %v2558 = vpack.c.bf16 %v2546, %v2542
    %v2559 = vpack.c.bf16 %v2551, %v2547
    %v2560 = vpack.c.bf16 %v2552, %v2548
    %v2561 = vpack.c.bf16 %v2553, %v2549
    %v2562 = vpack.c.bf16 %v2554, %v2550
    %v2567 = vunpack.c.l.b16 %v2555
    %v2568 = vunpack.c.l.b16 %v2556
    %v2569 = vunpack.c.h.b16 %v2555
    %v2570 = vunpack.c.h.b16 %v2556
    %v2571 = vunpack.c.l.b16 %v2559
    %v2572 = vunpack.c.l.b16 %v2560
    %v2573 = vunpack.c.h.b16 %v2559
    %v2574 = vunpack.c.h.b16 %v2560
    %v2575 = vpack.c.b16 %v2568, %v2567
    %v2576 = vpack.c.b16 %v2570, %v2569
    %v2577 = vpack.c.b16 %v2572, %v2571
    %v2578 = vpack.c.b16 %v2574, %v2573
    %vm2583 = vcmask 556036
    %vm2584 = vmor %vm2583, %vm1221
    %2585 = vst.msk [vmem:[%s7] sm:$0xff] %vm2584, %v2575
    %2586 = vst.msk [vmem:[%s7 + $0x8] sm:$0xff] %vm2584, %v2576
    %2587 = vst.msk [vmem:[%s7 + $0x10] sm:$0xff] %vm2584, %v2577
    %2588 = vst.msk [vmem:[%s7 + $0x18] sm:$0xff] %vm2584, %v2578
    %v2593 = vunpack.c.l.b16 %v2557
    %v2594 = vunpack.c.l.b16 %v2558
    %v2595 = vunpack.c.h.b16 %v2557
    %v2596 = vunpack.c.h.b16 %v2558
    %v2597 = vunpack.c.l.b16 %v2561
    %v2598 = vunpack.c.l.b16 %v2562
    %v2599 = vunpack.c.h.b16 %v2561
    %v2600 = vunpack.c.h.b16 %v2562
    %v2601 = vpack.c.b16 %v2593, %v2568
    %v2602 = vpack.c.b16 %v2594, %v2594
    %v2603 = vpack.c.b16 %v2595, %v2570
    %v2604 = vpack.c.b16 %v2596, %v2596
    %v2605 = vpack.c.b16 %v2597, %v2572
    %v2606 = vpack.c.b16 %v2598, %v2598
    %v2607 = vpack.c.b16 %v2599, %v2574
    %v2608 = vpack.c.b16 %v2600, %v2600
    %2609 = vrot.lane.b32.xlu0 %v2601, 60
    %v2610 = vpop.permute.xlu0 %2609
    %2611 = vrot.lane.b32.xlu0 %v2602, 60
    %v2612 = vpop.permute.xlu0 %2611
    %2613 = vrot.lane.b32.xlu0 %v2603, 60
    %v2614 = vpop.permute.xlu0 %2613
    %2615 = vrot.lane.b32.xlu0 %v2604, 60
    %v2616 = vpop.permute.xlu0 %2615
    %2617 = vrot.lane.b32.xlu0 %v2605, 60
    %v2618 = vpop.permute.xlu0 %2617
    %2619 = vrot.lane.b32.xlu0 %v2606, 60
    %v2620 = vpop.permute.xlu0 %2619
    %2621 = vrot.lane.b32.xlu0 %v2607, 60
    %v2622 = vpop.permute.xlu0 %2621
    %2623 = vrot.lane.b32.xlu0 %v2608, 60
    %v2624 = vpop.permute.xlu0 %2623
    %v2625 = vrot.slane %v2610, 4
    %v2626 = vrot.slane %v2612, 4
    %v2627 = vrot.slane %v2614, 4
    %v2628 = vrot.slane %v2616, 4
    %v2629 = vrot.slane %v2618, 4
    %v2630 = vrot.slane %v2620, 4
    %v2631 = vrot.slane %v2622, 4
    %v2632 = vrot.slane %v2624, 4
    %vm2633 = vcmask 1043456
    %v2634 = vsel %vm2633, %v2625, %v2626
    %vm2635 = vcmask 490496
    %v2636 = vsel %vm2635, %v2610, %v2634
    %v2637 = vsel %vm2633, %v2627, %v2628
    %v2638 = vsel %vm2635, %v2614, %v2637
    %v2639 = vsel %vm2633, %v2629, %v2630
    %v2640 = vsel %vm2635, %v2618, %v2639
    %v2641 = vsel %vm2633, %v2631, %v2632
    %v2642 = vsel %vm2635, %v2622, %v2641
    %s2647 = scalar_lea.vmem %s7, 32
    %2648 = vst.msk [vmem:[%s2647] sm:$0xff] %vm2584, %v2636
    %2649 = vst.msk [vmem:[%s2647 + $0x8] sm:$0xff] %vm2584, %v2638
    %2650 = vst.msk [vmem:[%s2647 + $0x10] sm:$0xff] %vm2584, %v2640
    %2651 = vst.msk [vmem:[%s2647 + $0x18] sm:$0xff] %vm2584, %v2642
    // Predicated region
    $region38: #{qnet_forward.2} parent=1 // pred_check
      _
    $region39: #{qnet_forward.2} parent=1 // pred_check_branch
      %2653 = sbr.rel (0) target = $region41
    $region40: #{qnet_forward.2} parent=1 // pred_region
      _
    $region41: #{qnet_forward.2} parent=1 // pred_fallthru
      _
    // Predicated region
    $region42: #{qnet_forward.2} parent=1 // pred_check
      _
    $region43: #{qnet_forward.2} parent=1 // pred_check_branch
      %2655 = sbr.rel (0) target = $region45
    $region44: #{qnet_forward.2} parent=1 // pred_region
      _
    $region45: #{qnet_forward.2} parent=1 // pred_fallthru
      _
    %2656 = vsyncpa [#allocation3], 1
    %2657 = vsyncpa [#allocation5], 1

// kernel: qnet_forward.3
$region0: #{qnet_forward.3}
  #allocation0 [shape = 'u32[]', space=smem, size = 0x4, offset = 0x4, fixed_abs, tag = 'smem constant byte address 0x4 - core index']
  #allocation1 [shape = 'u32[144,128]{1,0:T(1,128)}', space=vmem, size = 0x12000, scoped, tag = 'internal scratch']
  %s0 = inlined_call_operand.vmem [shape: bf16[2,6272], index: 0, kind: input, shape index: {}]
  %s1 = inlined_call_operand.hbm [shape: f32[2,128], index: 1, kind: input, shape index: {}]
  %s2 = inlined_call_operand.hbm [shape: bf16[128,128], index: 2, kind: input, shape index: {}]
  %s3 = inlined_call_operand.hbm [shape: f32[1,128], index: 3, kind: input, shape index: {}]
  %s4 = inlined_call_operand.vmem [shape: bf16[128,32], index: 4, kind: input, shape index: {}]
  %s5 = inlined_call_operand.hbm [shape: f32[1,32], index: 5, kind: input, shape index: {}]
  %s6 = inlined_call_operand.hbm [shape: bf16[6272,128], index: 6, kind: input, shape index: {}]
  %s7 = inlined_call_operand.hbm [shape: bf16[32,128], index: 7, kind: input, shape index: {}]
  %s8 = inlined_call_operand.hbm [shape: f32[1,128], index: 8, kind: input, shape index: {}]
  %s9 = inlined_call_operand.vmem [shape: bf16[128,3], index: 9, kind: input, shape index: {}]
  %s10 = inlined_call_operand.hbm [shape: f32[1,3], index: 10, kind: input, shape index: {}]
  %s11 = inlined_call_operand.hbm [shape: f32[2,3], index: 11, kind: output, shape index: {}]
  %s12 = sld [smem:[#allocation0]]
  $region86: #{qnet_forward.3} parent=0
    _
  %s14 = ssub.s32 1, %s12
  %s15 = scalar_select 0, %s14, %s12
  $region1: #{qnet_forward.3} parent=0
    #allocation2 [shape = 'u8[1024]{0}', space=vmem, size = 0x400, scoped, tag = 'input window, operand 1, single buffered']
    #allocation3 [shape = 's32[1]{0}', space=sflag, size = 0x4, scoped, tag = 'scoped memory for qnet_forward.3']
    #allocation4 [shape = 's32[1]{0}', space=sflag, size = 0x4, scoped, tag = 'scoped memory for qnet_forward.3']
    #allocation5 [shape = 'u8[32768]{0}', space=vmem, size = 0x8000, scoped, tag = 'input window, operand 2, single buffered']
    #allocation6 [shape = 's32[1]{0}', space=sflag, size = 0x4, scoped, tag = 'scoped memory for qnet_forward.3']
    #allocation7 [shape = 'u8[512]{0}', space=vmem, size = 0x400, scoped, tag = 'input window, operand 3, single buffered']
    #allocation8 [shape = 'u8[512]{0}', space=vmem, size = 0x400, scoped, tag = 'input window, operand 5, single buffered']
    #allocation9 [shape = 's32[1]{0}', space=sflag, size = 0x4, scoped, tag = 'scoped memory for qnet_forward.3']
    #allocation10 [shape = 'u8[1605632]{0}', space=vmem, size = 0x188000, scoped, tag = 'input window, operand 6, single buffered']
    #allocation11 [shape = 'u8[8192]{0}', space=vmem, size = 0x2000, scoped, tag = 'input window, operand 7, single buffered']
    #allocation12 [shape = 's32[1]{0}', space=sflag, size = 0x4, scoped, tag = 'scoped memory for qnet_forward.3']
    #allocation13 [shape = 'u8[512]{0}', space=vmem, size = 0x400, scoped, tag = 'input window, operand 8, single buffered']
    #allocation14 [shape = 'u8[512]{0}', space=vmem, size = 0x400, scoped, tag = 'input window, operand 10, single buffered']
    #allocation15 [shape = 's32[1]{0}', space=sflag, size = 0x4, scoped, tag = 'scoped memory for qnet_forward.3']
    #allocation16 [shape = 'u8[1024]{0}', space=vmem, size = 0x400, scoped, tag = 'output window, operand 0, single buffered']
    %16 = vsyncpa [#allocation3], 0
    %17 = vsyncpa [#allocation6], 0
    %18 = vsyncpa [#allocation9], 0
    %19 = vsyncpa [#allocation12], 0
    %20 = vsyncpa [#allocation15], 0
    %21 = vsyncpa [#allocation4], 0
    // Predicated region
    $region2: #{qnet_forward.3} parent=1 // pred_check
      _
    $region3: #{qnet_forward.3} parent=1 // pred_check_branch
      %23 = sbr.rel (0) target = $region5
    $region4: #{qnet_forward.3} parent=1 // pred_region
      _
    $region5: #{qnet_forward.3} parent=1 // pred_fallthru
      _
    // Predicated region
    $region6: #{qnet_forward.3} parent=1 // pred_check
      _
    $region7: #{qnet_forward.3} parent=1 // pred_check_branch
      %25 = sbr.rel (0) target = $region9
    $region8: #{qnet_forward.3} parent=1 // pred_region
      %s27 = ssub.s32 32, 32
      %28 = vsyncadd [#allocation3], %s27
      %s30 = sshll.u32 [#allocation2], 4
      %s31 = int_to_ptr.vmem [resolvable:$true] %s30
      %33 = dma.hbm_to_vmem [thread:$0]  %s1, 32, %s31, [#allocation3]
    $region9: #{qnet_forward.3} parent=1 // pred_fallthru
      _
    // Predicated region
    $region10: #{qnet_forward.3} parent=1 // pred_check
      _
    $region11: #{qnet_forward.3} parent=1 // pred_check_branch
      %35 = sbr.rel (0) target = $region13
    $region12: #{qnet_forward.3} parent=1 // pred_region
      %s37 = ssub.s32 1024, 1024
      %38 = vsyncadd [#allocation6], %s37
      %s39 = sshll.u32 [#allocation5], 4
      %s40 = int_to_ptr.vmem [resolvable:$true] %s39
      %45 = dma.hbm_to_vmem [thread:$0]  %s2, 1024, %s40, [#allocation6], 64, 64, 4
    $region13: #{qnet_forward.3} parent=1 // pred_fallthru
      _
    // Predicated region
    $region14: #{qnet_forward.3} parent=1 // pred_check
      _
    $region15: #{qnet_forward.3} parent=1 // pred_check_branch
      %47 = sbr.rel (0) target = $region17
    $region16: #{qnet_forward.3} parent=1 // pred_region
      %s49 = ssub.s32 16, 16
      %50 = vsyncadd [#allocation6], %s49
      %s52 = sshll.u32 [#allocation7], 4
      %s53 = int_to_ptr.vmem [resolvable:$true] %s52
      %55 = dma.hbm_to_vmem [thread:$0]  %s3, 16, %s53, [#allocation6]
    $region17: #{qnet_forward.3} parent=1 // pred_fallthru
      _
    // Predicated region
    $region18: #{qnet_forward.3} parent=1 // pred_check
      _
    $region19: #{qnet_forward.3} parent=1 // pred_check_branch
      %57 = sbr.rel (0) target = $region21
    $region20: #{qnet_forward.3} parent=1 // pred_region
      _
    $region21: #{qnet_forward.3} parent=1 // pred_fallthru
      _
    // Predicated region
    $region22: #{qnet_forward.3} parent=1 // pred_check
      _
    $region23: #{qnet_forward.3} parent=1 // pred_check_branch
      %59 = sbr.rel (0) target = $region25
    $region24: #{qnet_forward.3} parent=1 // pred_region
      %s61 = ssub.s32 16, 16
      %62 = vsyncadd [#allocation9], %s61
      %s64 = sshll.u32 [#allocation8], 4
      %s65 = int_to_ptr.vmem [resolvable:$true] %s64
      %67 = dma.hbm_to_vmem [thread:$0]  %s5, 16, %s65, [#allocation9]
    $region25: #{qnet_forward.3} parent=1 // pred_fallthru
      _
    // Predicated region
    $region26: #{qnet_forward.3} parent=1 // pred_check
      _
    $region27: #{qnet_forward.3} parent=1 // pred_check_branch
      %69 = sbr.rel (0) target = $region29
    $region28: #{qnet_forward.3} parent=1 // pred_region
      %s71 = ssub.s32 50176, 50176
      %72 = vsyncadd [#allocation9], %s71
      %s73 = sshll.u32 [#allocation10], 4
      %s74 = int_to_ptr.vmem [resolvable:$true] %s73
      %79 = dma.hbm_to_vmem [thread:$0]  %s6, 50176, %s74, [#allocation9], 64, 64, 4
    $region29: #{qnet_forward.3} parent=1 // pred_fallthru
      _
    // Predicated region
    $region30: #{qnet_forward.3} parent=1 // pred_check
      _
    $region31: #{qnet_forward.3} parent=1 // pred_check_branch
      %81 = sbr.rel (0) target = $region33
    $region32: #{qnet_forward.3} parent=1 // pred_region
      %s83 = ssub.s32 256, 256
      %84 = vsyncadd [#allocation12], %s83
      %s85 = sshll.u32 [#allocation11], 4
      %s86 = int_to_ptr.vmem [resolvable:$true] %s85
      %91 = dma.hbm_to_vmem [thread:$0]  %s7, 256, %s86, [#allocation12], 64, 64, 4
    $region33: #{qnet_forward.3} parent=1 // pred_fallthru
      _
    // Predicated region
    $region34: #{qnet_forward.3} parent=1 // pred_check
      _
    $region35: #{qnet_forward.3} parent=1 // pred_check_branch
      %93 = sbr.rel (0) target = $region37
    $region36: #{qnet_forward.3} parent=1 // pred_region
      %s95 = ssub.s32 16, 16
      %96 = vsyncadd [#allocation12], %s95
      %s98 = sshll.u32 [#allocation13], 4
      %s99 = int_to_ptr.vmem [resolvable:$true] %s98
      %101 = dma.hbm_to_vmem [thread:$0]  %s8, 16, %s99, [#allocation12]
    $region37: #{qnet_forward.3} parent=1 // pred_fallthru
      _
    // Predicated region
    $region38: #{qnet_forward.3} parent=1 // pred_check
      _
    $region39: #{qnet_forward.3} parent=1 // pred_check_branch
      %103 = sbr.rel (0) target = $region41
    $region40: #{qnet_forward.3} parent=1 // pred_region
      _
    $region41: #{qnet_forward.3} parent=1 // pred_fallthru
      _
    // Predicated region
    $region42: #{qnet_forward.3} parent=1 // pred_check
      _
    $region43: #{qnet_forward.3} parent=1 // pred_check_branch
      %105 = sbr.rel (0) target = $region45
    $region44: #{qnet_forward.3} parent=1 // pred_region
      %s107 = ssub.s32 16, 16
      %108 = vsyncadd [#allocation15], %s107
      %s110 = sshll.u32 [#allocation14], 4
      %s111 = int_to_ptr.vmem [resolvable:$true] %s110
      %113 = dma.hbm_to_vmem [thread:$0]  %s10, 16, %s111, [#allocation15]
    $region45: #{qnet_forward.3} parent=1 // pred_fallthru
      _
    // Predicated region
    $region46: #{qnet_forward.3} parent=1 // pred_check
      _
    $region47: #{qnet_forward.3} parent=1 // pred_check_branch
      %115 = sbr.rel (0) target = $region49
    $region48: #{qnet_forward.3} parent=1 // pred_region
      %116 = dma.done [#allocation3], 32
    $region49: #{qnet_forward.3} parent=1 // pred_fallthru
      _
    // Predicated region
    $region50: #{qnet_forward.3} parent=1 // pred_check
      _
    $region51: #{qnet_forward.3} parent=1 // pred_check_branch
      %118 = sbr.rel (0) target = $region53
    $region52: #{qnet_forward.3} parent=1 // pred_region
      %119 = dma.done [#allocation6], 1024
    $region53: #{qnet_forward.3} parent=1 // pred_fallthru
      _
    // Predicated region
    $region54: #{qnet_forward.3} parent=1 // pred_check
      _
    $region55: #{qnet_forward.3} parent=1 // pred_check_branch
      %121 = sbr.rel (0) target = $region57
    $region56: #{qnet_forward.3} parent=1 // pred_region
      %122 = dma.done [#allocation6], 16
    $region57: #{qnet_forward.3} parent=1 // pred_fallthru
      _
    // Predicated region
    $region58: #{qnet_forward.3} parent=1 // pred_check
      _
    $region59: #{qnet_forward.3} parent=1 // pred_check_branch
      %124 = sbr.rel (0) target = $region61
    $region60: #{qnet_forward.3} parent=1 // pred_region
      %125 = dma.done [#allocation9], 16
    $region61: #{qnet_forward.3} parent=1 // pred_fallthru
      _
    // Predicated region
    $region62: #{qnet_forward.3} parent=1 // pred_check
      _
    $region63: #{qnet_forward.3} parent=1 // pred_check_branch
      %127 = sbr.rel (0) target = $region65
    $region64: #{qnet_forward.3} parent=1 // pred_region
      %128 = dma.done [#allocation9], 50176
    $region65: #{qnet_forward.3} parent=1 // pred_fallthru
      _
    // Predicated region
    $region66: #{qnet_forward.3} parent=1 // pred_check
      _
    $region67: #{qnet_forward.3} parent=1 // pred_check_branch
      %130 = sbr.rel (0) target = $region69
    $region68: #{qnet_forward.3} parent=1 // pred_region
      %131 = dma.done [#allocation12], 256
    $region69: #{qnet_forward.3} parent=1 // pred_fallthru
      _
    // Predicated region
    $region70: #{qnet_forward.3} parent=1 // pred_check
      _
    $region71: #{qnet_forward.3} parent=1 // pred_check_branch
      %133 = sbr.rel (0) target = $region73
    $region72: #{qnet_forward.3} parent=1 // pred_region
      %134 = dma.done [#allocation12], 16
    $region73: #{qnet_forward.3} parent=1 // pred_fallthru
      _
    // Predicated region
    $region74: #{qnet_forward.3} parent=1 // pred_check
      _
    $region75: #{qnet_forward.3} parent=1 // pred_check_branch
      %136 = sbr.rel (0) target = $region77
    $region76: #{qnet_forward.3} parent=1 // pred_region
      %137 = dma.done [#allocation15], 16
    $region77: #{qnet_forward.3} parent=1 // pred_fallthru
      _
    %v139 = vld [vmem:[#allocation2] sm:$0x3]
    %v140 = vpack.c.bf16 %v139, %v139
    %v141 = vld [vmem:[#allocation5] sm:$0xf]
    %v142 = vld [vmem:[#allocation5 + $0x4] sm:$0xf]
    %v143 = vld [vmem:[#allocation5 + $0x8] sm:$0xf]
    %v144 = vld [vmem:[#allocation5 + $0xc] sm:$0xf]
    %v145 = vld [vmem:[#allocation5 + $0x10] sm:$0xf]
    %v146 = vld [vmem:[#allocation5 + $0x14] sm:$0xf]
    %v147 = vld [vmem:[#allocation5 + $0x18] sm:$0xf]
    %v148 = vld [vmem:[#allocation5 + $0x1c] sm:$0xf]
    %v149 = vld [vmem:[#allocation5 + $0x20] sm:$0xf]
    %v150 = vld [vmem:[#allocation5 + $0x24] sm:$0xf]
    %v151 = vld [vmem:[#allocation5 + $0x28] sm:$0xf]
    %v152 = vld [vmem:[#allocation5 + $0x2c] sm:$0xf]
    %v153 = vld [vmem:[#allocation5 + $0x30] sm:$0xf]
    %v154 = vld [vmem:[#allocation5 + $0x34] sm:$0xf]
    %v155 = vld [vmem:[#allocation5 + $0x38] sm:$0xf]
    %v156 = vld [vmem:[#allocation5 + $0x3c] sm:$0xf]
    %v157 = vld [vmem:[#allocation7] sm:$0x1]
    %v159 = vlaneseq
    %v160 = vshrl.u32 %v159, 7
    %v161 = vsub.s32 0, %v160
    %v162 = vrot.slane %v157, %v161
    %v180 = vunpack.c.l.b16 %v141
    %v181 = vunpack.c.l.b16 %v142
    %v182 = vunpack.c.l.b16 %v143
    %v183 = vunpack.c.l.b16 %v144
    %v184 = vunpack.c.l.b16 %v145
    %v185 = vunpack.c.l.b16 %v146
    %v186 = vunpack.c.l.b16 %v147
    %v187 = vunpack.c.l.b16 %v148
    %v188 = vunpack.c.l.b16 %v149
    %v189 = vunpack.c.l.b16 %v150
    %v190 = vunpack.c.l.b16 %v151
    %v191 = vunpack.c.l.b16 %v152
    %v192 = vunpack.c.l.b16 %v153
    %v193 = vunpack.c.l.b16 %v154
    %v194 = vunpack.c.l.b16 %v155
    %v195 = vunpack.c.l.b16 %v156
    %v196 = vpack.c.b16 %v181, %v180
    %v197 = vpack.c.b16 %v183, %v182
    %v198 = vpack.c.b16 %v185, %v184
    %v199 = vpack.c.b16 %v187, %v186
    %v200 = vpack.c.b16 %v189, %v188
    %v201 = vpack.c.b16 %v191, %v190
    %v202 = vpack.c.b16 %v193, %v192
    %v203 = vpack.c.b16 %v195, %v194
    %212 = vmatprep.subr.bf16.mxu0 0
    %213 = vmatpush1.bf16.msra.mxu0 %v203
    %214 = vmatprep.subr.bf16.mxu0 0
    %215 = vmatpush1.bf16.msra.mxu0 %v202
    %216 = vmatprep.subr.bf16.mxu0 0
    %217 = vmatpush1.bf16.msra.mxu0 %v201
    %218 = vmatprep.subr.bf16.mxu0 0
    %219 = vmatpush1.bf16.msra.mxu0 %v200
    %220 = vmatprep.subr.bf16.mxu0 0
    %221 = vmatpush1.bf16.msra.mxu0 %v199
    %222 = vmatprep.subr.bf16.mxu0 0
    %223 = vmatpush1.bf16.msra.mxu0 %v198
    %224 = vmatprep.subr.bf16.mxu0 0
    %225 = vmatpush1.bf16.msra.mxu0 %v197
    %226 = vmatprep.subr.bf16.mxu0 0
    %227 = vmatpush1.bf16.msra.mxu0 %v196
    %228 = vmatprep.subr.bf16.mxu0 0
    %229 = vmatpush2.bf16.msra.mxu0 0
    %230 = vmatprep.subr.bf16.mxu0 0
    %231 = vmatpush2.bf16.msra.mxu0 0
    %232 = vmatprep.subr.bf16.mxu0 0
    %233 = vmatpush2.bf16.msra.mxu0 0
    %234 = vmatprep.subr.bf16.mxu0 0
    %235 = vmatpush2.bf16.msra.mxu0 0
    %236 = vmatprep.subr.bf16.mxu0 0
    %237 = vmatpush2.bf16.msra.mxu0 0
    %238 = vmatprep.subr.bf16.mxu0 0
    %239 = vmatpush2.bf16.msra.mxu0 0
    %240 = vmatprep.subr.bf16.mxu0 0
    %241 = vmatpush2.bf16.msra.mxu0 0
    %242 = vmatprep.subr.bf16.mxu0 0
    %243 = vmatpush2.bf16.msra.mxu0 0
    %244 = vmatprep.mubr.bf16.mxu0 0
    %245 = vmatmul.mubr.bf16.gmra.mxu0 %v140
    %v246 = vpop.f32.mrf.mxu0
    %v247 = vadd.f32 %v162, %v246
    %v248 = vpop.f32.mrf.mxu0
    %v249 = vpop.f32.mrf.mxu0
    %v250 = vpop.f32.mrf.mxu0
    %251 = vdwg.mxu0
    %v252 = vmax.f32 %v247, 0.0
    %v253 = vpack.c.bf16 %v252, %v252
    %v254 = vld [vmem:[%s4] sm:$0xf]
    %v255 = vld [vmem:[%s4 + $0x4] sm:$0xf]
    %v256 = vld [vmem:[%s4 + $0x8] sm:$0xf]
    %v257 = vld [vmem:[%s4 + $0xc] sm:$0xf]
    %v258 = vld [vmem:[%s4 + $0x10] sm:$0xf]
    %v259 = vld [vmem:[%s4 + $0x14] sm:$0xf]
    %v260 = vld [vmem:[%s4 + $0x18] sm:$0xf]
    %v261 = vld [vmem:[%s4 + $0x1c] sm:$0xf]
    %v262 = vld [vmem:[%s4 + $0x20] sm:$0xf]
    %v263 = vld [vmem:[%s4 + $0x24] sm:$0xf]
    %v264 = vld [vmem:[%s4 + $0x28] sm:$0xf]
    %v265 = vld [vmem:[%s4 + $0x2c] sm:$0xf]
    %v266 = vld [vmem:[%s4 + $0x30] sm:$0xf]
    %v267 = vld [vmem:[%s4 + $0x34] sm:$0xf]
    %v268 = vld [vmem:[%s4 + $0x38] sm:$0xf]
    %v269 = vld [vmem:[%s4 + $0x3c] sm:$0xf]
    %v270 = vld [vmem:[#allocation8] sm:$0x1]
    %v272 = vlaneseq
    %v273 = vshrl.u32 %v272, 7
    %v274 = vsub.s32 0, %v273
    %v275 = vrot.slane %v270, %v274
    %v293 = vunpack.c.l.b16 %v254
    %v294 = vunpack.c.l.b16 %v255
    %v295 = vunpack.c.l.b16 %v256
    %v296 = vunpack.c.l.b16 %v257
    %v297 = vunpack.c.l.b16 %v258
    %v298 = vunpack.c.l.b16 %v259
    %v299 = vunpack.c.l.b16 %v260
    %v300 = vunpack.c.l.b16 %v261
    %v301 = vunpack.c.l.b16 %v262
    %v302 = vunpack.c.l.b16 %v263
    %v303 = vunpack.c.l.b16 %v264
    %v304 = vunpack.c.l.b16 %v265
    %v305 = vunpack.c.l.b16 %v266
    %v306 = vunpack.c.l.b16 %v267
    %v307 = vunpack.c.l.b16 %v268
    %v308 = vunpack.c.l.b16 %v269
    %v309 = vpack.c.b16 %v294, %v293
    %v310 = vpack.c.b16 %v296, %v295
    %v311 = vpack.c.b16 %v298, %v297
    %v312 = vpack.c.b16 %v300, %v299
    %v313 = vpack.c.b16 %v302, %v301
    %v314 = vpack.c.b16 %v304, %v303
    %v315 = vpack.c.b16 %v306, %v305
    %v316 = vpack.c.b16 %v308, %v307
    %325 = vmatprep.subr.bf16.mxu0 0
    %326 = vmatpush1.bf16.msra.mxu0 %v316
    %327 = vmatprep.subr.bf16.mxu0 0
    %328 = vmatpush1.bf16.msra.mxu0 %v315
    %329 = vmatprep.subr.bf16.mxu0 0
    %330 = vmatpush1.bf16.msra.mxu0 %v314
    %331 = vmatprep.subr.bf16.mxu0 0
    %332 = vmatpush1.bf16.msra.mxu0 %v313
    %333 = vmatprep.subr.bf16.mxu0 0
    %334 = vmatpush1.bf16.msra.mxu0 %v312
    %335 = vmatprep.subr.bf16.mxu0 0
    %336 = vmatpush1.bf16.msra.mxu0 %v311
    %337 = vmatprep.subr.bf16.mxu0 0
    %338 = vmatpush1.bf16.msra.mxu0 %v310
    %339 = vmatprep.subr.bf16.mxu0 0
    %340 = vmatpush1.bf16.msra.mxu0 %v309
    %341 = vmatprep.subr.bf16.mxu0 0
    %342 = vmatpush2.bf16.msra.mxu0 0
    %343 = vmatprep.subr.bf16.mxu0 0
    %344 = vmatpush2.bf16.msra.mxu0 0
    %345 = vmatprep.subr.bf16.mxu0 0
    %346 = vmatpush2.bf16.msra.mxu0 0
    %347 = vmatprep.subr.bf16.mxu0 0
    %348 = vmatpush2.bf16.msra.mxu0 0
    %349 = vmatprep.subr.bf16.mxu0 0
    %350 = vmatpush2.bf16.msra.mxu0 0
    %351 = vmatprep.subr.bf16.mxu0 0
    %352 = vmatpush2.bf16.msra.mxu0 0
    %353 = vmatprep.subr.bf16.mxu0 0
    %354 = vmatpush2.bf16.msra.mxu0 0
    %355 = vmatprep.subr.bf16.mxu0 0
    %356 = vmatpush2.bf16.msra.mxu0 0
    %357 = vmatprep.mubr.bf16.mxu0 0
    %358 = vmatmul.mubr.bf16.gmra.mxu0 %v253
    %v359 = vpop.f32.mrf.mxu0
    %v360 = vadd.f32 %v275, %v359
    %v361 = vpop.f32.mrf.mxu0
    %v362 = vpop.f32.mrf.mxu0
    %v363 = vpop.f32.mrf.mxu0
    %364 = vdwg.mxu0
    %v365 = vmax.f32 %v360, 0.0
    %v366 = vld [vmem:[%s0] sm:$0xff]
    %v367 = vld [vmem:[%s0 + $0x8] sm:$0xff]
    %v368 = vld [vmem:[%s0 + $0x10] sm:$0xff]
    %v369 = vld [vmem:[%s0 + $0x18] sm:$0xff]
    %v370 = vld [vmem:[%s0 + $0x20] sm:$0xff]
    %v371 = vld [vmem:[%s0 + $0x28] sm:$0xff]
    %v372 = vld [vmem:[%s0 + $0x30] sm:$0x1]
    %v373 = vld [vmem:[#allocation10] sm:$0xf]
    %v374 = vld [vmem:[#allocation10 + $0x4] sm:$0xf]
    %v375 = vld [vmem:[#allocation10 + $0x8] sm:$0xf]
    %v376 = vld [vmem:[#allocation10 + $0xc] sm:$0xf]
    %v377 = vld [vmem:[#allocation10 + $0x10] sm:$0xf]
    %v378 = vld [vmem:[#allocation10 + $0x14] sm:$0xf]
    %v379 = vld [vmem:[#allocation10 + $0x18] sm:$0xf]
    %v380 = vld [vmem:[#allocation10 + $0x1c] sm:$0xf]
    %v381 = vld [vmem:[#allocation10 + $0x20] sm:$0xf]
    %v382 = vld [vmem:[#allocation10 + $0x24] sm:$0xf]
    %v383 = vld [vmem:[#allocation10 + $0x28] sm:$0xf]
    %v384 = vld [vmem:[#allocation10 + $0x2c] sm:$0xf]
    %v385 = vld [vmem:[#allocation10 + $0x30] sm:$0xf]
    %v386 = vld [vmem:[#allocation10 + $0x34] sm:$0xf]
    %v387 = vld [vmem:[#allocation10 + $0x38] sm:$0xf]
    %v388 = vld [vmem:[#allocation10 + $0x3c] sm:$0xf]
    %v389 = vld [vmem:[#allocation10 + $0x40] sm:$0xf]
    %v390 = vld [vmem:[#allocation10 + $0x44] sm:$0xf]
    %v391 = vld [vmem:[#allocation10 + $0x48] sm:$0xf]
    %v392 = vld [vmem:[#allocation10 + $0x4c] sm:$0xf]
    %v393 = vld [vmem:[#allocation10 + $0x50] sm:$0xf]
    %v394 = vld [vmem:[#allocation10 + $0x54] sm:$0xf]
    %v395 = vld [vmem:[#allocation10 + $0x58] sm:$0xf]
    %v396 = vld [vmem:[#allocation10 + $0x5c] sm:$0xf]
    %v397 = vld [vmem:[#allocation10 + $0x60] sm:$0xf]
    %v398 = vld [vmem:[#allocation10 + $0x64] sm:$0xf]
    %v399 = vld [vmem:[#allocation10 + $0x68] sm:$0xf]
    %v400 = vld [vmem:[#allocation10 + $0x6c] sm:$0xf]
    %v401 = vld [vmem:[#allocation10 + $0x70] sm:$0xf]
    %v402 = vld [vmem:[#allocation10 + $0x74] sm:$0xf]
    %v403 = vld [vmem:[#allocation10 + $0x78] sm:$0xf]
    %v404 = vld [vmem:[#allocation10 + $0x7c] sm:$0xf]
    %v405 = vld [vmem:[#allocation10 + $0x80] sm:$0xf]
    %v406 = vld [vmem:[#allocation10 + $0x84] sm:$0xf]
    %v407 = vld [vmem:[#allocation10 + $0x88] sm:$0xf]
    %v408 = vld [vmem:[#allocation10 + $0x8c] sm:$0xf]
    %v409 = vld [vmem:[#allocation10 + $0x90] sm:$0xf]
    %v410 = vld [vmem:[#allocation10 + $0x94] sm:$0xf]
    %v411 = vld [vmem:[#allocation10 + $0x98] sm:$0xf]
    %v412 = vld [vmem:[#allocation10 + $0x9c] sm:$0xf]
    %v413 = vld [vmem:[#allocation10 + $0xa0] sm:$0xf]
    %v414 = vld [vmem:[#allocation10 + $0xa4] sm:$0xf]
    %v415 = vld [vmem:[#allocation10 + $0xa8] sm:$0xf]
    %v416 = vld [vmem:[#allocation10 + $0xac] sm:$0xf]
    %v417 = vld [vmem:[#allocation10 + $0xb0] sm:$0xf]
    %v418 = vld [vmem:[#allocation10 + $0xb4] sm:$0xf]
    %v419 = vld [vmem:[#allocation10 + $0xb8] sm:$0xf]
    %v420 = vld [vmem:[#allocation10 + $0xbc] sm:$0xf]
    %v421 = vld [vmem:[#allocation10 + $0xc0] sm:$0xf]
    %v422 = vld [vmem:[#allocation10 + $0xc4] sm:$0xf]
    %v423 = vld [vmem:[#allocation10 + $0xc8] sm:$0xf]
    %v424 = vld [vmem:[#allocation10 + $0xcc] sm:$0xf]
    %v425 = vld [vmem:[#allocation10 + $0xd0] sm:$0xf]
    %v426 = vld [vmem:[#allocation10 + $0xd4] sm:$0xf]
    %v427 = vld [vmem:[#allocation10 + $0xd8] sm:$0xf]
    %v428 = vld [vmem:[#allocation10 + $0xdc] sm:$0xf]
    %v429 = vld [vmem:[#allocation10 + $0xe0] sm:$0xf]
    %v430 = vld [vmem:[#allocation10 + $0xe4] sm:$0xf]
    %v431 = vld [vmem:[#allocation10 + $0xe8] sm:$0xf]
    %v432 = vld [vmem:[#allocation10 + $0xec] sm:$0xf]
    %v433 = vld [vmem:[#allocation10 + $0xf0] sm:$0xf]
    %v434 = vld [vmem:[#allocation10 + $0xf4] sm:$0xf]
    %v435 = vld [vmem:[#allocation10 + $0xf8] sm:$0xf]
    %v436 = vld [vmem:[#allocation10 + $0xfc] sm:$0xf]
    %v437 = vld [vmem:[#allocation10 + $0x100] sm:$0xf]
    %v438 = vld [vmem:[#allocation10 + $0x104] sm:$0xf]
    %v439 = vld [vmem:[#allocation10 + $0x108] sm:$0xf]
    %v440 = vld [vmem:[#allocation10 + $0x10c] sm:$0xf]
    %v441 = vld [vmem:[#allocation10 + $0x110] sm:$0xf]
    %v442 = vld [vmem:[#allocation10 + $0x114] sm:$0xf]
    %v443 = vld [vmem:[#allocation10 + $0x118] sm:$0xf]
    %v444 = vld [vmem:[#allocation10 + $0x11c] sm:$0xf]
    %v445 = vld [vmem:[#allocation10 + $0x120] sm:$0xf]
    %v446 = vld [vmem:[#allocation10 + $0x124] sm:$0xf]
    %v447 = vld [vmem:[#allocation10 + $0x128] sm:$0xf]
    %v448 = vld [vmem:[#allocation10 + $0x12c] sm:$0xf]
    %v449 = vld [vmem:[#allocation10 + $0x130] sm:$0xf]
    %v450 = vld [vmem:[#allocation10 + $0x134] sm:$0xf]
    %v451 = vld [vmem:[#allocation10 + $0x138] sm:$0xf]
    %v452 = vld [vmem:[#allocation10 + $0x13c] sm:$0xf]
    %v453 = vld [vmem:[#allocation10 + $0x140] sm:$0xf]
    %v454 = vld [vmem:[#allocation10 + $0x144] sm:$0xf]
    %v455 = vld [vmem:[#allocation10 + $0x148] sm:$0xf]
    %v456 = vld [vmem:[#allocation10 + $0x14c] sm:$0xf]
    %v457 = vld [vmem:[#allocation10 + $0x150] sm:$0xf]
    %v458 = vld [vmem:[#allocation10 + $0x154] sm:$0xf]
    %v459 = vld [vmem:[#allocation10 + $0x158] sm:$0xf]
    %v460 = vld [vmem:[#allocation10 + $0x15c] sm:$0xf]
    %v461 = vld [vmem:[#allocation10 + $0x160] sm:$0xf]
    %v462 = vld [vmem:[#allocation10 + $0x164] sm:$0xf]
    %v463 = vld [vmem:[#allocation10 + $0x168] sm:$0xf]
    %v464 = vld [vmem:[#allocation10 + $0x16c] sm:$0xf]
    %v465 = vld [vmem:[#allocation10 + $0x170] sm:$0xf]
    %v466 = vld [vmem:[#allocation10 + $0x174] sm:$0xf]
    %v467 = vld [vmem:[#allocation10 + $0x178] sm:$0xf]
    %v468 = vld [vmem:[#allocation10 + $0x17c] sm:$0xf]
    %v469 = vld [vmem:[#allocation10 + $0x180] sm:$0xf]
    %v470 = vld [vmem:[#allocation10 + $0x184] sm:$0xf]
    %v471 = vld [vmem:[#allocation10 + $0x188] sm:$0xf]
    %v472 = vld [vmem:[#allocation10 + $0x18c] sm:$0xf]
    %v473 = vld [vmem:[#allocation10 + $0x190] sm:$0xf]
    %v474 = vld [vmem:[#allocation10 + $0x194] sm:$0xf]
    %v475 = vld [vmem:[#allocation10 + $0x198] sm:$0xf]
    %v476 = vld [vmem:[#allocation10 + $0x19c] sm:$0xf]
    %v477 = vld [vmem:[#allocation10 + $0x1a0] sm:$0xf]
    %v478 = vld [vmem:[#allocation10 + $0x1a4] sm:$0xf]
    %v479 = vld [vmem:[#allocation10 + $0x1a8] sm:$0xf]
    %v480 = vld [vmem:[#allocation10 + $0x1ac] sm:$0xf]
    %v481 = vld [vmem:[#allocation10 + $0x1b0] sm:$0xf]
    %v482 = vld [vmem:[#allocation10 + $0x1b4] sm:$0xf]
    %v483 = vld [vmem:[#allocation10 + $0x1b8] sm:$0xf]
    %v484 = vld [vmem:[#allocation10 + $0x1bc] sm:$0xf]
    %v485 = vld [vmem:[#allocation10 + $0x1c0] sm:$0xf]
    %v486 = vld [vmem:[#allocation10 + $0x1c4] sm:$0xf]
    %v487 = vld [vmem:[#allocation10 + $0x1c8] sm:$0xf]
    %v488 = vld [vmem:[#allocation10 + $0x1cc] sm:$0xf]
    %v489 = vld [vmem:[#allocation10 + $0x1d0] sm:$0xf]
    %v490 = vld [vmem:[#allocation10 + $0x1d4] sm:$0xf]
    %v491 = vld [vmem:[#allocation10 + $0x1d8] sm:$0xf]
    %v492 = vld [vmem:[#allocation10 + $0x1dc] sm:$0xf]
    %v493 = vld [vmem:[#allocation10 + $0x1e0] sm:$0xf]
    %v494 = vld [vmem:[#allocation10 + $0x1e4] sm:$0xf]
    %v495 = vld [vmem:[#allocation10 + $0x1e8] sm:$0xf]
    %v496 = vld [vmem:[#allocation10 + $0x1ec] sm:$0xf]
    %v497 = vld [vmem:[#allocation10 + $0x1f0] sm:$0xf]
    %v498 = vld [vmem:[#allocation10 + $0x1f4] sm:$0xf]
    %v499 = vld [vmem:[#allocation10 + $0x1f8] sm:$0xf]
    %v500 = vld [vmem:[#allocation10 + $0x1fc] sm:$0xf]
    %v501 = vld [vmem:[#allocation10 + $0x200] sm:$0xf]
    %v502 = vld [vmem:[#allocation10 + $0x204] sm:$0xf]
    %v503 = vld [vmem:[#allocation10 + $0x208] sm:$0xf]
    %v504 = vld [vmem:[#allocation10 + $0x20c] sm:$0xf]
    %v505 = vld [vmem:[#allocation10 + $0x210] sm:$0xf]
    %v506 = vld [vmem:[#allocation10 + $0x214] sm:$0xf]
    %v507 = vld [vmem:[#allocation10 + $0x218] sm:$0xf]
    %v508 = vld [vmem:[#allocation10 + $0x21c] sm:$0xf]
    %v509 = vld [vmem:[#allocation10 + $0x220] sm:$0xf]
    %v510 = vld [vmem:[#allocation10 + $0x224] sm:$0xf]
    %v511 = vld [vmem:[#allocation10 + $0x228] sm:$0xf]
    %v512 = vld [vmem:[#allocation10 + $0x22c] sm:$0xf]
    %v513 = vld [vmem:[#allocation10 + $0x230] sm:$0xf]
    %v514 = vld [vmem:[#allocation10 + $0x234] sm:$0xf]
    %v515 = vld [vmem:[#allocation10 + $0x238] sm:$0xf]
    %v516 = vld [vmem:[#allocation10 + $0x23c] sm:$0xf]
    %v517 = vld [vmem:[#allocation10 + $0x240] sm:$0xf]
    %v518 = vld [vmem:[#allocation10 + $0x244] sm:$0xf]
    %v519 = vld [vmem:[#allocation10 + $0x248] sm:$0xf]
    %v520 = vld [vmem:[#allocation10 + $0x24c] sm:$0xf]
    %v521 = vld [vmem:[#allocation10 + $0x250] sm:$0xf]
    %v522 = vld [vmem:[#allocation10 + $0x254] sm:$0xf]
    %v523 = vld [vmem:[#allocation10 + $0x258] sm:$0xf]
    %v524 = vld [vmem:[#allocation10 + $0x25c] sm:$0xf]
    %v525 = vld [vmem:[#allocation10 + $0x260] sm:$0xf]
    %v526 = vld [vmem:[#allocation10 + $0x264] sm:$0xf]
    %v527 = vld [vmem:[#allocation10 + $0x268] sm:$0xf]
    %v528 = vld [vmem:[#allocation10 + $0x26c] sm:$0xf]
    %v529 = vld [vmem:[#allocation10 + $0x270] sm:$0xf]
    %v530 = vld [vmem:[#allocation10 + $0x274] sm:$0xf]
    %v531 = vld [vmem:[#allocation10 + $0x278] sm:$0xf]
    %v532 = vld [vmem:[#allocation10 + $0x27c] sm:$0xf]
    %v533 = vld [vmem:[#allocation10 + $0x280] sm:$0xf]
    %v534 = vld [vmem:[#allocation10 + $0x284] sm:$0xf]
    %v535 = vld [vmem:[#allocation10 + $0x288] sm:$0xf]
    %v536 = vld [vmem:[#allocation10 + $0x28c] sm:$0xf]
    %v537 = vld [vmem:[#allocation10 + $0x290] sm:$0xf]
    %v538 = vld [vmem:[#allocation10 + $0x294] sm:$0xf]
    %v539 = vld [vmem:[#allocation10 + $0x298] sm:$0xf]
    %v540 = vld [vmem:[#allocation10 + $0x29c] sm:$0xf]
    %v541 = vld [vmem:[#allocation10 + $0x2a0] sm:$0xf]
    %v542 = vld [vmem:[#allocation10 + $0x2a4] sm:$0xf]
    %v543 = vld [vmem:[#allocation10 + $0x2a8] sm:$0xf]
    %v544 = vld [vmem:[#allocation10 + $0x2ac] sm:$0xf]
    %v545 = vld [vmem:[#allocation10 + $0x2b0] sm:$0xf]
    %v546 = vld [vmem:[#allocation10 + $0x2b4] sm:$0xf]
    %v547 = vld [vmem:[#allocation10 + $0x2b8] sm:$0xf]
    %v548 = vld [vmem:[#allocation10 + $0x2bc] sm:$0xf]
    %v549 = vld [vmem:[#allocation10 + $0x2c0] sm:$0xf]
    %v550 = vld [vmem:[#allocation10 + $0x2c4] sm:$0xf]
    %v551 = vld [vmem:[#allocation10 + $0x2c8] sm:$0xf]
    %v552 = vld [vmem:[#allocation10 + $0x2cc] sm:$0xf]
    %v553 = vld [vmem:[#allocation10 + $0x2d0] sm:$0xf]
    %v554 = vld [vmem:[#allocation10 + $0x2d4] sm:$0xf]
    %v555 = vld [vmem:[#allocation10 + $0x2d8] sm:$0xf]
    %v556 = vld [vmem:[#allocation10 + $0x2dc] sm:$0xf]
    %v557 = vld [vmem:[#allocation10 + $0x2e0] sm:$0xf]
    %v558 = vld [vmem:[#allocation10 + $0x2e4] sm:$0xf]
    %v559 = vld [vmem:[#allocation10 + $0x2e8] sm:$0xf]
    %v560 = vld [vmem:[#allocation10 + $0x2ec] sm:$0xf]
    %v561 = vld [vmem:[#allocation10 + $0x2f0] sm:$0xf]
    %v562 = vld [vmem:[#allocation10 + $0x2f4] sm:$0xf]
    %v563 = vld [vmem:[#allocation10 + $0x2f8] sm:$0xf]
    %v564 = vld [vmem:[#allocation10 + $0x2fc] sm:$0xf]
    %v565 = vld [vmem:[#allocation10 + $0x300] sm:$0xf]
    %v566 = vld [vmem:[#allocation10 + $0x304] sm:$0xf]
    %v567 = vld [vmem:[#allocation10 + $0x308] sm:$0xf]
    %v568 = vld [vmem:[#allocation10 + $0x30c] sm:$0xf]
    %v569 = vld [vmem:[#allocation10 + $0x310] sm:$0xf]
    %v570 = vld [vmem:[#allocation10 + $0x314] sm:$0xf]
    %v571 = vld [vmem:[#allocation10 + $0x318] sm:$0xf]
    %v572 = vld [vmem:[#allocation10 + $0x31c] sm:$0xf]
    %v573 = vld [vmem:[#allocation10 + $0x320] sm:$0xf]
    %v574 = vld [vmem:[#allocation10 + $0x324] sm:$0xf]
    %v575 = vld [vmem:[#allocation10 + $0x328] sm:$0xf]
    %v576 = vld [vmem:[#allocation10 + $0x32c] sm:$0xf]
    %v577 = vld [vmem:[#allocation10 + $0x330] sm:$0xf]
    %v578 = vld [vmem:[#allocation10 + $0x334] sm:$0xf]
    %v579 = vld [vmem:[#allocation10 + $0x338] sm:$0xf]
    %v580 = vld [vmem:[#allocation10 + $0x33c] sm:$0xf]
    %v581 = vld [vmem:[#allocation10 + $0x340] sm:$0xf]
    %v582 = vld [vmem:[#allocation10 + $0x344] sm:$0xf]
    %v583 = vld [vmem:[#allocation10 + $0x348] sm:$0xf]
    %v584 = vld [vmem:[#allocation10 + $0x34c] sm:$0xf]
    %v585 = vld [vmem:[#allocation10 + $0x350] sm:$0xf]
    %v586 = vld [vmem:[#allocation10 + $0x354] sm:$0xf]
    %v587 = vld [vmem:[#allocation10 + $0x358] sm:$0xf]
    %v588 = vld [vmem:[#allocation10 + $0x35c] sm:$0xf]
    %v589 = vld [vmem:[#allocation10 + $0x360] sm:$0xf]
    %v590 = vld [vmem:[#allocation10 + $0x364] sm:$0xf]
    %v591 = vld [vmem:[#allocation10 + $0x368] sm:$0xf]
    %v592 = vld [vmem:[#allocation10 + $0x36c] sm:$0xf]
    %v593 = vld [vmem:[#allocation10 + $0x370] sm:$0xf]
    %v594 = vld [vmem:[#allocation10 + $0x374] sm:$0xf]
    %v595 = vld [vmem:[#allocation10 + $0x378] sm:$0xf]
    %v596 = vld [vmem:[#allocation10 + $0x37c] sm:$0xf]
    %v597 = vld [vmem:[#allocation10 + $0x380] sm:$0xf]
    %v598 = vld [vmem:[#allocation10 + $0x384] sm:$0xf]
    %v599 = vld [vmem:[#allocation10 + $0x388] sm:$0xf]
    %v600 = vld [vmem:[#allocation10 + $0x38c] sm:$0xf]
    %v601 = vld [vmem:[#allocation10 + $0x390] sm:$0xf]
    %v602 = vld [vmem:[#allocation10 + $0x394] sm:$0xf]
    %v603 = vld [vmem:[#allocation10 + $0x398] sm:$0xf]
    %v604 = vld [vmem:[#allocation10 + $0x39c] sm:$0xf]
    %v605 = vld [vmem:[#allocation10 + $0x3a0] sm:$0xf]
    %v606 = vld [vmem:[#allocation10 + $0x3a4] sm:$0xf]
    %v607 = vld [vmem:[#allocation10 + $0x3a8] sm:$0xf]
    %v608 = vld [vmem:[#allocation10 + $0x3ac] sm:$0xf]
    %v609 = vld [vmem:[#allocation10 + $0x3b0] sm:$0xf]
    %v610 = vld [vmem:[#allocation10 + $0x3b4] sm:$0xf]
    %v611 = vld [vmem:[#allocation10 + $0x3b8] sm:$0xf]
    %v612 = vld [vmem:[#allocation10 + $0x3bc] sm:$0xf]
    %v613 = vld [vmem:[#allocation10 + $0x3c0] sm:$0xf]
    %v614 = vld [vmem:[#allocation10 + $0x3c4] sm:$0xf]
    %v615 = vld [vmem:[#allocation10 + $0x3c8] sm:$0xf]
    %v616 = vld [vmem:[#allocation10 + $0x3cc] sm:$0xf]
    %v617 = vld [vmem:[#allocation10 + $0x3d0] sm:$0xf]
    %v618 = vld [vmem:[#allocation10 + $0x3d4] sm:$0xf]
    %v619 = vld [vmem:[#allocation10 + $0x3d8] sm:$0xf]
    %v620 = vld [vmem:[#allocation10 + $0x3dc] sm:$0xf]
    %v621 = vld [vmem:[#allocation10 + $0x3e0] sm:$0xf]
    %v622 = vld [vmem:[#allocation10 + $0x3e4] sm:$0xf]
    %v623 = vld [vmem:[#allocation10 + $0x3e8] sm:$0xf]
    %v624 = vld [vmem:[#allocation10 + $0x3ec] sm:$0xf]
    %v625 = vld [vmem:[#allocation10 + $0x3f0] sm:$0xf]
    %v626 = vld [vmem:[#allocation10 + $0x3f4] sm:$0xf]
    %v627 = vld [vmem:[#allocation10 + $0x3f8] sm:$0xf]
    %v628 = vld [vmem:[#allocation10 + $0x3fc] sm:$0xf]
    %v629 = vld [vmem:[#allocation10 + $0x400] sm:$0xf]
    %v630 = vld [vmem:[#allocation10 + $0x404] sm:$0xf]
    %v631 = vld [vmem:[#allocation10 + $0x408] sm:$0xf]
    %v632 = vld [vmem:[#allocation10 + $0x40c] sm:$0xf]
    %v633 = vld [vmem:[#allocation10 + $0x410] sm:$0xf]
    %v634 = vld [vmem:[#allocation10 + $0x414] sm:$0xf]
    %v635 = vld [vmem:[#allocation10 + $0x418] sm:$0xf]
    %v636 = vld [vmem:[#allocation10 + $0x41c] sm:$0xf]
    %v637 = vld [vmem:[#allocation10 + $0x420] sm:$0xf]
    %v638 = vld [vmem:[#allocation10 + $0x424] sm:$0xf]
    %v639 = vld [vmem:[#allocation10 + $0x428] sm:$0xf]
    %v640 = vld [vmem:[#allocation10 + $0x42c] sm:$0xf]
    %v641 = vld [vmem:[#allocation10 + $0x430] sm:$0xf]
    %v642 = vld [vmem:[#allocation10 + $0x434] sm:$0xf]
    %v643 = vld [vmem:[#allocation10 + $0x438] sm:$0xf]
    %v644 = vld [vmem:[#allocation10 + $0x43c] sm:$0xf]
    %v645 = vld [vmem:[#allocation10 + $0x440] sm:$0xf]
    %v646 = vld [vmem:[#allocation10 + $0x444] sm:$0xf]
    %v647 = vld [vmem:[#allocation10 + $0x448] sm:$0xf]
    %v648 = vld [vmem:[#allocation10 + $0x44c] sm:$0xf]
    %v649 = vld [vmem:[#allocation10 + $0x450] sm:$0xf]
    %v650 = vld [vmem:[#allocation10 + $0x454] sm:$0xf]
    %v651 = vld [vmem:[#allocation10 + $0x458] sm:$0xf]
    %v652 = vld [vmem:[#allocation10 + $0x45c] sm:$0xf]
    %v653 = vld [vmem:[#allocation10 + $0x460] sm:$0xf]
    %v654 = vld [vmem:[#allocation10 + $0x464] sm:$0xf]
    %v655 = vld [vmem:[#allocation10 + $0x468] sm:$0xf]
    %v656 = vld [vmem:[#allocation10 + $0x46c] sm:$0xf]
    %v657 = vld [vmem:[#allocation10 + $0x470] sm:$0xf]
    %v658 = vld [vmem:[#allocation10 + $0x474] sm:$0xf]
    %v659 = vld [vmem:[#allocation10 + $0x478] sm:$0xf]
    %v660 = vld [vmem:[#allocation10 + $0x47c] sm:$0xf]
    %v661 = vld [vmem:[#allocation10 + $0x480] sm:$0xf]
    %v662 = vld [vmem:[#allocation10 + $0x484] sm:$0xf]
    %v663 = vld [vmem:[#allocation10 + $0x488] sm:$0xf]
    %v664 = vld [vmem:[#allocation10 + $0x48c] sm:$0xf]
    %v665 = vld [vmem:[#allocation10 + $0x490] sm:$0xf]
    %v666 = vld [vmem:[#allocation10 + $0x494] sm:$0xf]
    %v667 = vld [vmem:[#allocation10 + $0x498] sm:$0xf]
    %v668 = vld [vmem:[#allocation10 + $0x49c] sm:$0xf]
    %v669 = vld [vmem:[#allocation10 + $0x4a0] sm:$0xf]
    %v670 = vld [vmem:[#allocation10 + $0x4a4] sm:$0xf]
    %v671 = vld [vmem:[#allocation10 + $0x4a8] sm:$0xf]
    %v672 = vld [vmem:[#allocation10 + $0x4ac] sm:$0xf]
    %v673 = vld [vmem:[#allocation10 + $0x4b0] sm:$0xf]
    %v674 = vld [vmem:[#allocation10 + $0x4b4] sm:$0xf]
    %v675 = vld [vmem:[#allocation10 + $0x4b8] sm:$0xf]
    %v676 = vld [vmem:[#allocation10 + $0x4bc] sm:$0xf]
    %v677 = vld [vmem:[#allocation10 + $0x4c0] sm:$0xf]
    %v678 = vld [vmem:[#allocation10 + $0x4c4] sm:$0xf]
    %v679 = vld [vmem:[#allocation10 + $0x4c8] sm:$0xf]
    %v680 = vld [vmem:[#allocation10 + $0x4cc] sm:$0xf]
    %v681 = vld [vmem:[#allocation10 + $0x4d0] sm:$0xf]
    %v682 = vld [vmem:[#allocation10 + $0x4d4] sm:$0xf]
    %v683 = vld [vmem:[#allocation10 + $0x4d8] sm:$0xf]
    %v684 = vld [vmem:[#allocation10 + $0x4dc] sm:$0xf]
    %v685 = vld [vmem:[#allocation10 + $0x4e0] sm:$0xf]
    %v686 = vld [vmem:[#allocation10 + $0x4e4] sm:$0xf]
    %v687 = vld [vmem:[#allocation10 + $0x4e8] sm:$0xf]
    %v688 = vld [vmem:[#allocation10 + $0x4ec] sm:$0xf]
    %v689 = vld [vmem:[#allocation10 + $0x4f0] sm:$0xf]
    %v690 = vld [vmem:[#allocation10 + $0x4f4] sm:$0xf]
    %v691 = vld [vmem:[#allocation10 + $0x4f8] sm:$0xf]
    %v692 = vld [vmem:[#allocation10 + $0x4fc] sm:$0xf]
    %v693 = vld [vmem:[#allocation10 + $0x500] sm:$0xf]
    %v694 = vld [vmem:[#allocation10 + $0x504] sm:$0xf]
    %v695 = vld [vmem:[#allocation10 + $0x508] sm:$0xf]
    %v696 = vld [vmem:[#allocation10 + $0x50c] sm:$0xf]
    %v697 = vld [vmem:[#allocation10 + $0x510] sm:$0xf]
    %v698 = vld [vmem:[#allocation10 + $0x514] sm:$0xf]
    %v699 = vld [vmem:[#allocation10 + $0x518] sm:$0xf]
    %v700 = vld [vmem:[#allocation10 + $0x51c] sm:$0xf]
    %v701 = vld [vmem:[#allocation10 + $0x520] sm:$0xf]
    %v702 = vld [vmem:[#allocation10 + $0x524] sm:$0xf]
    %v703 = vld [vmem:[#allocation10 + $0x528] sm:$0xf]
    %v704 = vld [vmem:[#allocation10 + $0x52c] sm:$0xf]
    %v705 = vld [vmem:[#allocation10 + $0x530] sm:$0xf]
    %v706 = vld [vmem:[#allocation10 + $0x534] sm:$0xf]
    %v707 = vld [vmem:[#allocation10 + $0x538] sm:$0xf]
    %v708 = vld [vmem:[#allocation10 + $0x53c] sm:$0xf]
    %v709 = vld [vmem:[#allocation10 + $0x540] sm:$0xf]
    %v710 = vld [vmem:[#allocation10 + $0x544] sm:$0xf]
    %v711 = vld [vmem:[#allocation10 + $0x548] sm:$0xf]
    %v712 = vld [vmem:[#allocation10 + $0x54c] sm:$0xf]
    %v713 = vld [vmem:[#allocation10 + $0x550] sm:$0xf]
    %v714 = vld [vmem:[#allocation10 + $0x554] sm:$0xf]
    %v715 = vld [vmem:[#allocation10 + $0x558] sm:$0xf]
    %v716 = vld [vmem:[#allocation10 + $0x55c] sm:$0xf]
    %v717 = vld [vmem:[#allocation10 + $0x560] sm:$0xf]
    %v718 = vld [vmem:[#allocation10 + $0x564] sm:$0xf]
    %v719 = vld [vmem:[#allocation10 + $0x568] sm:$0xf]
    %v720 = vld [vmem:[#allocation10 + $0x56c] sm:$0xf]
    %v721 = vld [vmem:[#allocation10 + $0x570] sm:$0xf]
    %v722 = vld [vmem:[#allocation10 + $0x574] sm:$0xf]
    %v723 = vld [vmem:[#allocation10 + $0x578] sm:$0xf]
    %v724 = vld [vmem:[#allocation10 + $0x57c] sm:$0xf]
    %v725 = vld [vmem:[#allocation10 + $0x580] sm:$0xf]
    %v726 = vld [vmem:[#allocation10 + $0x584] sm:$0xf]
    %v727 = vld [vmem:[#allocation10 + $0x588] sm:$0xf]
    %v728 = vld [vmem:[#allocation10 + $0x58c] sm:$0xf]
    %v729 = vld [vmem:[#allocation10 + $0x590] sm:$0xf]
    %v730 = vld [vmem:[#allocation10 + $0x594] sm:$0xf]
    %v731 = vld [vmem:[#allocation10 + $0x598] sm:$0xf]
    %v732 = vld [vmem:[#allocation10 + $0x59c] sm:$0xf]
    %v733 = vld [vmem:[#allocation10 + $0x5a0] sm:$0xf]
    %v734 = vld [vmem:[#allocation10 + $0x5a4] sm:$0xf]
    %v735 = vld [vmem:[#allocation10 + $0x5a8] sm:$0xf]
    %v736 = vld [vmem:[#allocation10 + $0x5ac] sm:$0xf]
    %v737 = vld [vmem:[#allocation10 + $0x5b0] sm:$0xf]
    %v738 = vld [vmem:[#allocation10 + $0x5b4] sm:$0xf]
    %v739 = vld [vmem:[#allocation10 + $0x5b8] sm:$0xf]
    %v740 = vld [vmem:[#allocation10 + $0x5bc] sm:$0xf]
    %v741 = vld [vmem:[#allocation10 + $0x5c0] sm:$0xf]
    %v742 = vld [vmem:[#allocation10 + $0x5c4] sm:$0xf]
    %v743 = vld [vmem:[#allocation10 + $0x5c8] sm:$0xf]
    %v744 = vld [vmem:[#allocation10 + $0x5cc] sm:$0xf]
    %v745 = vld [vmem:[#allocation10 + $0x5d0] sm:$0xf]
    %v746 = vld [vmem:[#allocation10 + $0x5d4] sm:$0xf]
    %v747 = vld [vmem:[#allocation10 + $0x5d8] sm:$0xf]
    %v748 = vld [vmem:[#allocation10 + $0x5dc] sm:$0xf]
    %v749 = vld [vmem:[#allocation10 + $0x5e0] sm:$0xf]
    %v750 = vld [vmem:[#allocation10 + $0x5e4] sm:$0xf]
    %v751 = vld [vmem:[#allocation10 + $0x5e8] sm:$0xf]
    %v752 = vld [vmem:[#allocation10 + $0x5ec] sm:$0xf]
    %v753 = vld [vmem:[#allocation10 + $0x5f0] sm:$0xf]
    %v754 = vld [vmem:[#allocation10 + $0x5f4] sm:$0xf]
    %v755 = vld [vmem:[#allocation10 + $0x5f8] sm:$0xf]
    %v756 = vld [vmem:[#allocation10 + $0x5fc] sm:$0xf]
    %v757 = vld [vmem:[#allocation10 + $0x600] sm:$0xf]
    %v758 = vld [vmem:[#allocation10 + $0x604] sm:$0xf]
    %v759 = vld [vmem:[#allocation10 + $0x608] sm:$0xf]
    %v760 = vld [vmem:[#allocation10 + $0x60c] sm:$0xf]
    %v761 = vld [vmem:[#allocation10 + $0x610] sm:$0xf]
    %v762 = vld [vmem:[#allocation10 + $0x614] sm:$0xf]
    %v763 = vld [vmem:[#allocation10 + $0x618] sm:$0xf]
    %v764 = vld [vmem:[#allocation10 + $0x61c] sm:$0xf]
    %v765 = vld [vmem:[#allocation10 + $0x620] sm:$0xf]
    %v766 = vld [vmem:[#allocation10 + $0x624] sm:$0xf]
    %v767 = vld [vmem:[#allocation10 + $0x628] sm:$0xf]
    %v768 = vld [vmem:[#allocation10 + $0x62c] sm:$0xf]
    %v769 = vld [vmem:[#allocation10 + $0x630] sm:$0xf]
    %v770 = vld [vmem:[#allocation10 + $0x634] sm:$0xf]
    %v771 = vld [vmem:[#allocation10 + $0x638] sm:$0xf]
    %v772 = vld [vmem:[#allocation10 + $0x63c] sm:$0xf]
    %v773 = vld [vmem:[#allocation10 + $0x640] sm:$0xf]
    %v774 = vld [vmem:[#allocation10 + $0x644] sm:$0xf]
    %v775 = vld [vmem:[#allocation10 + $0x648] sm:$0xf]
    %v776 = vld [vmem:[#allocation10 + $0x64c] sm:$0xf]
    %v777 = vld [vmem:[#allocation10 + $0x650] sm:$0xf]
    %v778 = vld [vmem:[#allocation10 + $0x654] sm:$0xf]
    %v779 = vld [vmem:[#allocation10 + $0x658] sm:$0xf]
    %v780 = vld [vmem:[#allocation10 + $0x65c] sm:$0xf]
    %v781 = vld [vmem:[#allocation10 + $0x660] sm:$0xf]
    %v782 = vld [vmem:[#allocation10 + $0x664] sm:$0xf]
    %v783 = vld [vmem:[#allocation10 + $0x668] sm:$0xf]
    %v784 = vld [vmem:[#allocation10 + $0x66c] sm:$0xf]
    %v785 = vld [vmem:[#allocation10 + $0x670] sm:$0xf]
    %v786 = vld [vmem:[#allocation10 + $0x674] sm:$0xf]
    %v787 = vld [vmem:[#allocation10 + $0x678] sm:$0xf]
    %v788 = vld [vmem:[#allocation10 + $0x67c] sm:$0xf]
    %v789 = vld [vmem:[#allocation10 + $0x680] sm:$0xf]
    %v790 = vld [vmem:[#allocation10 + $0x684] sm:$0xf]
    %v791 = vld [vmem:[#allocation10 + $0x688] sm:$0xf]
    %v792 = vld [vmem:[#allocation10 + $0x68c] sm:$0xf]
    %v793 = vld [vmem:[#allocation10 + $0x690] sm:$0xf]
    %v794 = vld [vmem:[#allocation10 + $0x694] sm:$0xf]
    %v795 = vld [vmem:[#allocation10 + $0x698] sm:$0xf]
    %v796 = vld [vmem:[#allocation10 + $0x69c] sm:$0xf]
    %v797 = vld [vmem:[#allocation10 + $0x6a0] sm:$0xf]
    %v798 = vld [vmem:[#allocation10 + $0x6a4] sm:$0xf]
    %v799 = vld [vmem:[#allocation10 + $0x6a8] sm:$0xf]
    %v800 = vld [vmem:[#allocation10 + $0x6ac] sm:$0xf]
    %v801 = vld [vmem:[#allocation10 + $0x6b0] sm:$0xf]
    %v802 = vld [vmem:[#allocation10 + $0x6b4] sm:$0xf]
    %v803 = vld [vmem:[#allocation10 + $0x6b8] sm:$0xf]
    %v804 = vld [vmem:[#allocation10 + $0x6bc] sm:$0xf]
    %v805 = vld [vmem:[#allocation10 + $0x6c0] sm:$0xf]
    %v806 = vld [vmem:[#allocation10 + $0x6c4] sm:$0xf]
    %v807 = vld [vmem:[#allocation10 + $0x6c8] sm:$0xf]
    %v808 = vld [vmem:[#allocation10 + $0x6cc] sm:$0xf]
    %v809 = vld [vmem:[#allocation10 + $0x6d0] sm:$0xf]
    %v810 = vld [vmem:[#allocation10 + $0x6d4] sm:$0xf]
    %v811 = vld [vmem:[#allocation10 + $0x6d8] sm:$0xf]
    %v812 = vld [vmem:[#allocation10 + $0x6dc] sm:$0xf]
    %v813 = vld [vmem:[#allocation10 + $0x6e0] sm:$0xf]
    %v814 = vld [vmem:[#allocation10 + $0x6e4] sm:$0xf]
    %v815 = vld [vmem:[#allocation10 + $0x6e8] sm:$0xf]
    %v816 = vld [vmem:[#allocation10 + $0x6ec] sm:$0xf]
    %v817 = vld [vmem:[#allocation10 + $0x6f0] sm:$0xf]
    %v818 = vld [vmem:[#allocation10 + $0x6f4] sm:$0xf]
    %v819 = vld [vmem:[#allocation10 + $0x6f8] sm:$0xf]
    %v820 = vld [vmem:[#allocation10 + $0x6fc] sm:$0xf]
    %v821 = vld [vmem:[#allocation10 + $0x700] sm:$0xf]
    %v822 = vld [vmem:[#allocation10 + $0x704] sm:$0xf]
    %v823 = vld [vmem:[#allocation10 + $0x708] sm:$0xf]
    %v824 = vld [vmem:[#allocation10 + $0x70c] sm:$0xf]
    %v825 = vld [vmem:[#allocation10 + $0x710] sm:$0xf]
    %v826 = vld [vmem:[#allocation10 + $0x714] sm:$0xf]
    %v827 = vld [vmem:[#allocation10 + $0x718] sm:$0xf]
    %v828 = vld [vmem:[#allocation10 + $0x71c] sm:$0xf]
    %v829 = vld [vmem:[#allocation10 + $0x720] sm:$0xf]
    %v830 = vld [vmem:[#allocation10 + $0x724] sm:$0xf]
    %v831 = vld [vmem:[#allocation10 + $0x728] sm:$0xf]
    %v832 = vld [vmem:[#allocation10 + $0x72c] sm:$0xf]
    %v833 = vld [vmem:[#allocation10 + $0x730] sm:$0xf]
    %v834 = vld [vmem:[#allocation10 + $0x734] sm:$0xf]
    %v835 = vld [vmem:[#allocation10 + $0x738] sm:$0xf]
    %v836 = vld [vmem:[#allocation10 + $0x73c] sm:$0xf]
    %v837 = vld [vmem:[#allocation10 + $0x740] sm:$0xf]
    %v838 = vld [vmem:[#allocation10 + $0x744] sm:$0xf]
    %v839 = vld [vmem:[#allocation10 + $0x748] sm:$0xf]
    %v840 = vld [vmem:[#allocation10 + $0x74c] sm:$0xf]
    %v841 = vld [vmem:[#allocation10 + $0x750] sm:$0xf]
    %v842 = vld [vmem:[#allocation10 + $0x754] sm:$0xf]
    %v843 = vld [vmem:[#allocation10 + $0x758] sm:$0xf]
    %v844 = vld [vmem:[#allocation10 + $0x75c] sm:$0xf]
    %v845 = vld [vmem:[#allocation10 + $0x760] sm:$0xf]
    %v846 = vld [vmem:[#allocation10 + $0x764] sm:$0xf]
    %v847 = vld [vmem:[#allocation10 + $0x768] sm:$0xf]
    %v848 = vld [vmem:[#allocation10 + $0x76c] sm:$0xf]
    %v849 = vld [vmem:[#allocation10 + $0x770] sm:$0xf]
    %v850 = vld [vmem:[#allocation10 + $0x774] sm:$0xf]
    %v851 = vld [vmem:[#allocation10 + $0x778] sm:$0xf]
    %v852 = vld [vmem:[#allocation10 + $0x77c] sm:$0xf]
    %v853 = vld [vmem:[#allocation10 + $0x780] sm:$0xf]
    %v854 = vld [vmem:[#allocation10 + $0x784] sm:$0xf]
    %v855 = vld [vmem:[#allocation10 + $0x788] sm:$0xf]
    %v856 = vld [vmem:[#allocation10 + $0x78c] sm:$0xf]
    %v857 = vld [vmem:[#allocation10 + $0x790] sm:$0xf]
    %v858 = vld [vmem:[#allocation10 + $0x794] sm:$0xf]
    %v859 = vld [vmem:[#allocation10 + $0x798] sm:$0xf]
    %v860 = vld [vmem:[#allocation10 + $0x79c] sm:$0xf]
    %v861 = vld [vmem:[#allocation10 + $0x7a0] sm:$0xf]
    %v862 = vld [vmem:[#allocation10 + $0x7a4] sm:$0xf]
    %v863 = vld [vmem:[#allocation10 + $0x7a8] sm:$0xf]
    %v864 = vld [vmem:[#allocation10 + $0x7ac] sm:$0xf]
    %v865 = vld [vmem:[#allocation10 + $0x7b0] sm:$0xf]
    %v866 = vld [vmem:[#allocation10 + $0x7b4] sm:$0xf]
    %v867 = vld [vmem:[#allocation10 + $0x7b8] sm:$0xf]
    %v868 = vld [vmem:[#allocation10 + $0x7bc] sm:$0xf]
    %v869 = vld [vmem:[#allocation10 + $0x7c0] sm:$0xf]
    %v870 = vld [vmem:[#allocation10 + $0x7c4] sm:$0xf]
    %v871 = vld [vmem:[#allocation10 + $0x7c8] sm:$0xf]
    %v872 = vld [vmem:[#allocation10 + $0x7cc] sm:$0xf]
    %v873 = vld [vmem:[#allocation10 + $0x7d0] sm:$0xf]
    %v874 = vld [vmem:[#allocation10 + $0x7d4] sm:$0xf]
    %v875 = vld [vmem:[#allocation10 + $0x7d8] sm:$0xf]
    %v876 = vld [vmem:[#allocation10 + $0x7dc] sm:$0xf]
    %v877 = vld [vmem:[#allocation10 + $0x7e0] sm:$0xf]
    %v878 = vld [vmem:[#allocation10 + $0x7e4] sm:$0xf]
    %v879 = vld [vmem:[#allocation10 + $0x7e8] sm:$0xf]
    %v880 = vld [vmem:[#allocation10 + $0x7ec] sm:$0xf]
    %v881 = vld [vmem:[#allocation10 + $0x7f0] sm:$0xf]
    %v882 = vld [vmem:[#allocation10 + $0x7f4] sm:$0xf]
    %v883 = vld [vmem:[#allocation10 + $0x7f8] sm:$0xf]
    %v884 = vld [vmem:[#allocation10 + $0x7fc] sm:$0xf]
    %v885 = vld [vmem:[#allocation10 + $0x800] sm:$0xf]
    %v886 = vld [vmem:[#allocation10 + $0x804] sm:$0xf]
    %v887 = vld [vmem:[#allocation10 + $0x808] sm:$0xf]
    %v888 = vld [vmem:[#allocation10 + $0x80c] sm:$0xf]
    %v889 = vld [vmem:[#allocation10 + $0x810] sm:$0xf]
    %v890 = vld [vmem:[#allocation10 + $0x814] sm:$0xf]
    %v891 = vld [vmem:[#allocation10 + $0x818] sm:$0xf]
    %v892 = vld [vmem:[#allocation10 + $0x81c] sm:$0xf]
    %v893 = vld [vmem:[#allocation10 + $0x820] sm:$0xf]
    %v894 = vld [vmem:[#allocation10 + $0x824] sm:$0xf]
    %v895 = vld [vmem:[#allocation10 + $0x828] sm:$0xf]
    %v896 = vld [vmem:[#allocation10 + $0x82c] sm:$0xf]
    %v897 = vld [vmem:[#allocation10 + $0x830] sm:$0xf]
    %v898 = vld [vmem:[#allocation10 + $0x834] sm:$0xf]
    %v899 = vld [vmem:[#allocation10 + $0x838] sm:$0xf]
    %v900 = vld [vmem:[#allocation10 + $0x83c] sm:$0xf]
    %v901 = vld [vmem:[#allocation10 + $0x840] sm:$0xf]
    %v902 = vld [vmem:[#allocation10 + $0x844] sm:$0xf]
    %v903 = vld [vmem:[#allocation10 + $0x848] sm:$0xf]
    %v904 = vld [vmem:[#allocation10 + $0x84c] sm:$0xf]
    %v905 = vld [vmem:[#allocation10 + $0x850] sm:$0xf]
    %v906 = vld [vmem:[#allocation10 + $0x854] sm:$0xf]
    %v907 = vld [vmem:[#allocation10 + $0x858] sm:$0xf]
    %v908 = vld [vmem:[#allocation10 + $0x85c] sm:$0xf]
    %v909 = vld [vmem:[#allocation10 + $0x860] sm:$0xf]
    %v910 = vld [vmem:[#allocation10 + $0x864] sm:$0xf]
    %v911 = vld [vmem:[#allocation10 + $0x868] sm:$0xf]
    %v912 = vld [vmem:[#allocation10 + $0x86c] sm:$0xf]
    %v913 = vld [vmem:[#allocation10 + $0x870] sm:$0xf]
    %v914 = vld [vmem:[#allocation10 + $0x874] sm:$0xf]
    %v915 = vld [vmem:[#allocation10 + $0x878] sm:$0xf]
    %v916 = vld [vmem:[#allocation10 + $0x87c] sm:$0xf]
    %v917 = vld [vmem:[#allocation10 + $0x880] sm:$0xf]
    %v918 = vld [vmem:[#allocation10 + $0x884] sm:$0xf]
    %v919 = vld [vmem:[#allocation10 + $0x888] sm:$0xf]
    %v920 = vld [vmem:[#allocation10 + $0x88c] sm:$0xf]
    %v921 = vld [vmem:[#allocation10 + $0x890] sm:$0xf]
    %v922 = vld [vmem:[#allocation10 + $0x894] sm:$0xf]
    %v923 = vld [vmem:[#allocation10 + $0x898] sm:$0xf]
    %v924 = vld [vmem:[#allocation10 + $0x89c] sm:$0xf]
    %v925 = vld [vmem:[#allocation10 + $0x8a0] sm:$0xf]
    %v926 = vld [vmem:[#allocation10 + $0x8a4] sm:$0xf]
    %v927 = vld [vmem:[#allocation10 + $0x8a8] sm:$0xf]
    %v928 = vld [vmem:[#allocation10 + $0x8ac] sm:$0xf]
    %v929 = vld [vmem:[#allocation10 + $0x8b0] sm:$0xf]
    %v930 = vld [vmem:[#allocation10 + $0x8b4] sm:$0xf]
    %v931 = vld [vmem:[#allocation10 + $0x8b8] sm:$0xf]
    %v932 = vld [vmem:[#allocation10 + $0x8bc] sm:$0xf]
    %v933 = vld [vmem:[#allocation10 + $0x8c0] sm:$0xf]
    %v934 = vld [vmem:[#allocation10 + $0x8c4] sm:$0xf]
    %v935 = vld [vmem:[#allocation10 + $0x8c8] sm:$0xf]
    %v936 = vld [vmem:[#allocation10 + $0x8cc] sm:$0xf]
    %v937 = vld [vmem:[#allocation10 + $0x8d0] sm:$0xf]
    %v938 = vld [vmem:[#allocation10 + $0x8d4] sm:$0xf]
    %v939 = vld [vmem:[#allocation10 + $0x8d8] sm:$0xf]
    %v940 = vld [vmem:[#allocation10 + $0x8dc] sm:$0xf]
    %v941 = vld [vmem:[#allocation10 + $0x8e0] sm:$0xf]
    %v942 = vld [vmem:[#allocation10 + $0x8e4] sm:$0xf]
    %v943 = vld [vmem:[#allocation10 + $0x8e8] sm:$0xf]
    %v944 = vld [vmem:[#allocation10 + $0x8ec] sm:$0xf]
    %v945 = vld [vmem:[#allocation10 + $0x8f0] sm:$0xf]
    %v946 = vld [vmem:[#allocation10 + $0x8f4] sm:$0xf]
    %v947 = vld [vmem:[#allocation10 + $0x8f8] sm:$0xf]
    %v948 = vld [vmem:[#allocation10 + $0x8fc] sm:$0xf]
    %v949 = vld [vmem:[#allocation10 + $0x900] sm:$0xf]
    %v950 = vld [vmem:[#allocation10 + $0x904] sm:$0xf]
    %v951 = vld [vmem:[#allocation10 + $0x908] sm:$0xf]
    %v952 = vld [vmem:[#allocation10 + $0x90c] sm:$0xf]
    %v953 = vld [vmem:[#allocation10 + $0x910] sm:$0xf]
    %v954 = vld [vmem:[#allocation10 + $0x914] sm:$0xf]
    %v955 = vld [vmem:[#allocation10 + $0x918] sm:$0xf]
    %v956 = vld [vmem:[#allocation10 + $0x91c] sm:$0xf]
    %v957 = vld [vmem:[#allocation10 + $0x920] sm:$0xf]
    %v958 = vld [vmem:[#allocation10 + $0x924] sm:$0xf]
    %v959 = vld [vmem:[#allocation10 + $0x928] sm:$0xf]
    %v960 = vld [vmem:[#allocation10 + $0x92c] sm:$0xf]
    %v961 = vld [vmem:[#allocation10 + $0x930] sm:$0xf]
    %v962 = vld [vmem:[#allocation10 + $0x934] sm:$0xf]
    %v963 = vld [vmem:[#allocation10 + $0x938] sm:$0xf]
    %v964 = vld [vmem:[#allocation10 + $0x93c] sm:$0xf]
    %v965 = vld [vmem:[#allocation10 + $0x940] sm:$0xf]
    %v966 = vld [vmem:[#allocation10 + $0x944] sm:$0xf]
    %v967 = vld [vmem:[#allocation10 + $0x948] sm:$0xf]
    %v968 = vld [vmem:[#allocation10 + $0x94c] sm:$0xf]
    %v969 = vld [vmem:[#allocation10 + $0x950] sm:$0xf]
    %v970 = vld [vmem:[#allocation10 + $0x954] sm:$0xf]
    %v971 = vld [vmem:[#allocation10 + $0x958] sm:$0xf]
    %v972 = vld [vmem:[#allocation10 + $0x95c] sm:$0xf]
    %v973 = vld [vmem:[#allocation10 + $0x960] sm:$0xf]
    %v974 = vld [vmem:[#allocation10 + $0x964] sm:$0xf]
    %v975 = vld [vmem:[#allocation10 + $0x968] sm:$0xf]
    %v976 = vld [vmem:[#allocation10 + $0x96c] sm:$0xf]
    %v977 = vld [vmem:[#allocation10 + $0x970] sm:$0xf]
    %v978 = vld [vmem:[#allocation10 + $0x974] sm:$0xf]
    %v979 = vld [vmem:[#allocation10 + $0x978] sm:$0xf]
    %v980 = vld [vmem:[#allocation10 + $0x97c] sm:$0xf]
    %v981 = vld [vmem:[#allocation10 + $0x980] sm:$0xf]
    %v982 = vld [vmem:[#allocation10 + $0x984] sm:$0xf]
    %v983 = vld [vmem:[#allocation10 + $0x988] sm:$0xf]
    %v984 = vld [vmem:[#allocation10 + $0x98c] sm:$0xf]
    %v985 = vld [vmem:[#allocation10 + $0x990] sm:$0xf]
    %v986 = vld [vmem:[#allocation10 + $0x994] sm:$0xf]
    %v987 = vld [vmem:[#allocation10 + $0x998] sm:$0xf]
    %v988 = vld [vmem:[#allocation10 + $0x99c] sm:$0xf]
    %v989 = vld [vmem:[#allocation10 + $0x9a0] sm:$0xf]
    %v990 = vld [vmem:[#allocation10 + $0x9a4] sm:$0xf]
    %v991 = vld [vmem:[#allocation10 + $0x9a8] sm:$0xf]
    %v992 = vld [vmem:[#allocation10 + $0x9ac] sm:$0xf]
    %v993 = vld [vmem:[#allocation10 + $0x9b0] sm:$0xf]
    %v994 = vld [vmem:[#allocation10 + $0x9b4] sm:$0xf]
    %v995 = vld [vmem:[#allocation10 + $0x9b8] sm:$0xf]
    %v996 = vld [vmem:[#allocation10 + $0x9bc] sm:$0xf]
    %v997 = vld [vmem:[#allocation10 + $0x9c0] sm:$0xf]
    %v998 = vld [vmem:[#allocation10 + $0x9c4] sm:$0xf]
    %v999 = vld [vmem:[#allocation10 + $0x9c8] sm:$0xf]
    %v1000 = vld [vmem:[#allocation10 + $0x9cc] sm:$0xf]
    %v1001 = vld [vmem:[#allocation10 + $0x9d0] sm:$0xf]
    %v1002 = vld [vmem:[#allocation10 + $0x9d4] sm:$0xf]
    %v1003 = vld [vmem:[#allocation10 + $0x9d8] sm:$0xf]
    %v1004 = vld [vmem:[#allocation10 + $0x9dc] sm:$0xf]
    %v1005 = vld [vmem:[#allocation10 + $0x9e0] sm:$0xf]
    %v1006 = vld [vmem:[#allocation10 + $0x9e4] sm:$0xf]
    %v1007 = vld [vmem:[#allocation10 + $0x9e8] sm:$0xf]
    %v1008 = vld [vmem:[#allocation10 + $0x9ec] sm:$0xf]
    %v1009 = vld [vmem:[#allocation10 + $0x9f0] sm:$0xf]
    %v1010 = vld [vmem:[#allocation10 + $0x9f4] sm:$0xf]
    %v1011 = vld [vmem:[#allocation10 + $0x9f8] sm:$0xf]
    %v1012 = vld [vmem:[#allocation10 + $0x9fc] sm:$0xf]
    %v1013 = vld [vmem:[#allocation10 + $0xa00] sm:$0xf]
    %v1014 = vld [vmem:[#allocation10 + $0xa04] sm:$0xf]
    %v1015 = vld [vmem:[#allocation10 + $0xa08] sm:$0xf]
    %v1016 = vld [vmem:[#allocation10 + $0xa0c] sm:$0xf]
    %v1017 = vld [vmem:[#allocation10 + $0xa10] sm:$0xf]
    %v1018 = vld [vmem:[#allocation10 + $0xa14] sm:$0xf]
    %v1019 = vld [vmem:[#allocation10 + $0xa18] sm:$0xf]
    %v1020 = vld [vmem:[#allocation10 + $0xa1c] sm:$0xf]
    %v1021 = vld [vmem:[#allocation10 + $0xa20] sm:$0xf]
    %v1022 = vld [vmem:[#allocation10 + $0xa24] sm:$0xf]
    %v1023 = vld [vmem:[#allocation10 + $0xa28] sm:$0xf]
    %v1024 = vld [vmem:[#allocation10 + $0xa2c] sm:$0xf]
    %v1025 = vld [vmem:[#allocation10 + $0xa30] sm:$0xf]
    %v1026 = vld [vmem:[#allocation10 + $0xa34] sm:$0xf]
    %v1027 = vld [vmem:[#allocation10 + $0xa38] sm:$0xf]
    %v1028 = vld [vmem:[#allocation10 + $0xa3c] sm:$0xf]
    %v1029 = vld [vmem:[#allocation10 + $0xa40] sm:$0xf]
    %v1030 = vld [vmem:[#allocation10 + $0xa44] sm:$0xf]
    %v1031 = vld [vmem:[#allocation10 + $0xa48] sm:$0xf]
    %v1032 = vld [vmem:[#allocation10 + $0xa4c] sm:$0xf]
    %v1033 = vld [vmem:[#allocation10 + $0xa50] sm:$0xf]
    %v1034 = vld [vmem:[#allocation10 + $0xa54] sm:$0xf]
    %v1035 = vld [vmem:[#allocation10 + $0xa58] sm:$0xf]
    %v1036 = vld [vmem:[#allocation10 + $0xa5c] sm:$0xf]
    %v1037 = vld [vmem:[#allocation10 + $0xa60] sm:$0xf]
    %v1038 = vld [vmem:[#allocation10 + $0xa64] sm:$0xf]
    %v1039 = vld [vmem:[#allocation10 + $0xa68] sm:$0xf]
    %v1040 = vld [vmem:[#allocation10 + $0xa6c] sm:$0xf]
    %v1041 = vld [vmem:[#allocation10 + $0xa70] sm:$0xf]
    %v1042 = vld [vmem:[#allocation10 + $0xa74] sm:$0xf]
    %v1043 = vld [vmem:[#allocation10 + $0xa78] sm:$0xf]
    %v1044 = vld [vmem:[#allocation10 + $0xa7c] sm:$0xf]
    %v1045 = vld [vmem:[#allocation10 + $0xa80] sm:$0xf]
    %v1046 = vld [vmem:[#allocation10 + $0xa84] sm:$0xf]
    %v1047 = vld [vmem:[#allocation10 + $0xa88] sm:$0xf]
    %v1048 = vld [vmem:[#allocation10 + $0xa8c] sm:$0xf]
    %v1049 = vld [vmem:[#allocation10 + $0xa90] sm:$0xf]
    %v1050 = vld [vmem:[#allocation10 + $0xa94] sm:$0xf]
    %v1051 = vld [vmem:[#allocation10 + $0xa98] sm:$0xf]
    %v1052 = vld [vmem:[#allocation10 + $0xa9c] sm:$0xf]
    %v1053 = vld [vmem:[#allocation10 + $0xaa0] sm:$0xf]
    %v1054 = vld [vmem:[#allocation10 + $0xaa4] sm:$0xf]
    %v1055 = vld [vmem:[#allocation10 + $0xaa8] sm:$0xf]
    %v1056 = vld [vmem:[#allocation10 + $0xaac] sm:$0xf]
    %v1057 = vld [vmem:[#allocation10 + $0xab0] sm:$0xf]
    %v1058 = vld [vmem:[#allocation10 + $0xab4] sm:$0xf]
    %v1059 = vld [vmem:[#allocation10 + $0xab8] sm:$0xf]
    %v1060 = vld [vmem:[#allocation10 + $0xabc] sm:$0xf]
    %v1061 = vld [vmem:[#allocation10 + $0xac0] sm:$0xf]
    %v1062 = vld [vmem:[#allocation10 + $0xac4] sm:$0xf]
    %v1063 = vld [vmem:[#allocation10 + $0xac8] sm:$0xf]
    %v1064 = vld [vmem:[#allocation10 + $0xacc] sm:$0xf]
    %v1065 = vld [vmem:[#allocation10 + $0xad0] sm:$0xf]
    %v1066 = vld [vmem:[#allocation10 + $0xad4] sm:$0xf]
    %v1067 = vld [vmem:[#allocation10 + $0xad8] sm:$0xf]
    %v1068 = vld [vmem:[#allocation10 + $0xadc] sm:$0xf]
    %v1069 = vld [vmem:[#allocation10 + $0xae0] sm:$0xf]
    %v1070 = vld [vmem:[#allocation10 + $0xae4] sm:$0xf]
    %v1071 = vld [vmem:[#allocation10 + $0xae8] sm:$0xf]
    %v1072 = vld [vmem:[#allocation10 + $0xaec] sm:$0xf]
    %v1073 = vld [vmem:[#allocation10 + $0xaf0] sm:$0xf]
    %v1074 = vld [vmem:[#allocation10 + $0xaf4] sm:$0xf]
    %v1075 = vld [vmem:[#allocation10 + $0xaf8] sm:$0xf]
    %v1076 = vld [vmem:[#allocation10 + $0xafc] sm:$0xf]
    %v1077 = vld [vmem:[#allocation10 + $0xb00] sm:$0xf]
    %v1078 = vld [vmem:[#allocation10 + $0xb04] sm:$0xf]
    %v1079 = vld [vmem:[#allocation10 + $0xb08] sm:$0xf]
    %v1080 = vld [vmem:[#allocation10 + $0xb0c] sm:$0xf]
    %v1081 = vld [vmem:[#allocation10 + $0xb10] sm:$0xf]
    %v1082 = vld [vmem:[#allocation10 + $0xb14] sm:$0xf]
    %v1083 = vld [vmem:[#allocation10 + $0xb18] sm:$0xf]
    %v1084 = vld [vmem:[#allocation10 + $0xb1c] sm:$0xf]
    %v1085 = vld [vmem:[#allocation10 + $0xb20] sm:$0xf]
    %v1086 = vld [vmem:[#allocation10 + $0xb24] sm:$0xf]
    %v1087 = vld [vmem:[#allocation10 + $0xb28] sm:$0xf]
    %v1088 = vld [vmem:[#allocation10 + $0xb2c] sm:$0xf]
    %v1089 = vld [vmem:[#allocation10 + $0xb30] sm:$0xf]
    %v1090 = vld [vmem:[#allocation10 + $0xb34] sm:$0xf]
    %v1091 = vld [vmem:[#allocation10 + $0xb38] sm:$0xf]
    %v1092 = vld [vmem:[#allocation10 + $0xb3c] sm:$0xf]
    %v1093 = vld [vmem:[#allocation10 + $0xb40] sm:$0xf]
    %v1094 = vld [vmem:[#allocation10 + $0xb44] sm:$0xf]
    %v1095 = vld [vmem:[#allocation10 + $0xb48] sm:$0xf]
    %v1096 = vld [vmem:[#allocation10 + $0xb4c] sm:$0xf]
    %v1097 = vld [vmem:[#allocation10 + $0xb50] sm:$0xf]
    %v1098 = vld [vmem:[#allocation10 + $0xb54] sm:$0xf]
    %v1099 = vld [vmem:[#allocation10 + $0xb58] sm:$0xf]
    %v1100 = vld [vmem:[#allocation10 + $0xb5c] sm:$0xf]
    %v1101 = vld [vmem:[#allocation10 + $0xb60] sm:$0xf]
    %v1102 = vld [vmem:[#allocation10 + $0xb64] sm:$0xf]
    %v1103 = vld [vmem:[#allocation10 + $0xb68] sm:$0xf]
    %v1104 = vld [vmem:[#allocation10 + $0xb6c] sm:$0xf]
    %v1105 = vld [vmem:[#allocation10 + $0xb70] sm:$0xf]
    %v1106 = vld [vmem:[#allocation10 + $0xb74] sm:$0xf]
    %v1107 = vld [vmem:[#allocation10 + $0xb78] sm:$0xf]
    %v1108 = vld [vmem:[#allocation10 + $0xb7c] sm:$0xf]
    %v1109 = vld [vmem:[#allocation10 + $0xb80] sm:$0xf]
    %v1110 = vld [vmem:[#allocation10 + $0xb84] sm:$0xf]
    %v1111 = vld [vmem:[#allocation10 + $0xb88] sm:$0xf]
    %v1112 = vld [vmem:[#allocation10 + $0xb8c] sm:$0xf]
    %v1113 = vld [vmem:[#allocation10 + $0xb90] sm:$0xf]
    %v1114 = vld [vmem:[#allocation10 + $0xb94] sm:$0xf]
    %v1115 = vld [vmem:[#allocation10 + $0xb98] sm:$0xf]
    %v1116 = vld [vmem:[#allocation10 + $0xb9c] sm:$0xf]
    %v1117 = vld [vmem:[#allocation10 + $0xba0] sm:$0xf]
    %v1118 = vld [vmem:[#allocation10 + $0xba4] sm:$0xf]
    %v1119 = vld [vmem:[#allocation10 + $0xba8] sm:$0xf]
    %v1120 = vld [vmem:[#allocation10 + $0xbac] sm:$0xf]
    %v1121 = vld [vmem:[#allocation10 + $0xbb0] sm:$0xf]
    %v1122 = vld [vmem:[#allocation10 + $0xbb4] sm:$0xf]
    %v1123 = vld [vmem:[#allocation10 + $0xbb8] sm:$0xf]
    %v1124 = vld [vmem:[#allocation10 + $0xbbc] sm:$0xf]
    %v1125 = vld [vmem:[#allocation10 + $0xbc0] sm:$0xf]
    %v1126 = vld [vmem:[#allocation10 + $0xbc4] sm:$0xf]
    %v1127 = vld [vmem:[#allocation10 + $0xbc8] sm:$0xf]
    %v1128 = vld [vmem:[#allocation10 + $0xbcc] sm:$0xf]
    %v1129 = vld [vmem:[#allocation10 + $0xbd0] sm:$0xf]
    %v1130 = vld [vmem:[#allocation10 + $0xbd4] sm:$0xf]
    %v1131 = vld [vmem:[#allocation10 + $0xbd8] sm:$0xf]
    %v1132 = vld [vmem:[#allocation10 + $0xbdc] sm:$0xf]
    %v1133 = vld [vmem:[#allocation10 + $0xbe0] sm:$0xf]
    %v1134 = vld [vmem:[#allocation10 + $0xbe4] sm:$0xf]
    %v1135 = vld [vmem:[#allocation10 + $0xbe8] sm:$0xf]
    %v1136 = vld [vmem:[#allocation10 + $0xbec] sm:$0xf]
    %v1137 = vld [vmem:[#allocation10 + $0xbf0] sm:$0xf]
    %v1138 = vld [vmem:[#allocation10 + $0xbf4] sm:$0xf]
    %v1139 = vld [vmem:[#allocation10 + $0xbf8] sm:$0xf]
    %v1140 = vld [vmem:[#allocation10 + $0xbfc] sm:$0xf]
    %v1141 = vld [vmem:[#allocation10 + $0xc00] sm:$0xf]
    %v1142 = vld [vmem:[#allocation10 + $0xc04] sm:$0xf]
    %v1143 = vld [vmem:[#allocation10 + $0xc08] sm:$0xf]
    %v1144 = vld [vmem:[#allocation10 + $0xc0c] sm:$0xf]
    %v1145 = vld [vmem:[#allocation10 + $0xc10] sm:$0xf]
    %v1146 = vld [vmem:[#allocation10 + $0xc14] sm:$0xf]
    %v1147 = vld [vmem:[#allocation10 + $0xc18] sm:$0xf]
    %v1148 = vld [vmem:[#allocation10 + $0xc1c] sm:$0xf]
    %v1149 = vld [vmem:[#allocation10 + $0xc20] sm:$0xf]
    %v1150 = vld [vmem:[#allocation10 + $0xc24] sm:$0xf]
    %v1151 = vld [vmem:[#allocation10 + $0xc28] sm:$0xf]
    %v1152 = vld [vmem:[#allocation10 + $0xc2c] sm:$0xf]
    %v1153 = vld [vmem:[#allocation10 + $0xc30] sm:$0xf]
    %v1154 = vld [vmem:[#allocation10 + $0xc34] sm:$0xf]
    %v1155 = vld [vmem:[#allocation10 + $0xc38] sm:$0xf]
    %v1156 = vld [vmem:[#allocation10 + $0xc3c] sm:$0xf]
    %v1157 = vpack.c.bf16 %v365, %v365
    %v1158 = vld [vmem:[#allocation11] sm:$0xf]
    %v1159 = vld [vmem:[#allocation11 + $0x4] sm:$0xf]
    %v1160 = vld [vmem:[#allocation11 + $0x8] sm:$0xf]
    %v1161 = vld [vmem:[#allocation11 + $0xc] sm:$0xf]
    %v1166 = vunpack.c.l.b16 %v1158
    %v1167 = vunpack.c.l.b16 %v1159
    %v1168 = vunpack.c.l.b16 %v1160
    %v1169 = vunpack.c.l.b16 %v1161
    %v1170 = vpack.c.b16 %v1167, %v1166
    %v1171 = vpack.c.b16 %v1169, %v1168
    %vm1174 = vcmask 261120
    %v1176 = vsel %vm1174, %v1157, 0
    %1178 = vmatprep.subr.bf16.mxu0 0
    %1179 = vmatpush1.bf16.msra.mxu0 0
    %1180 = vmatprep.subr.bf16.mxu0 0
    %1181 = vmatpush1.bf16.msra.mxu0 0
    %1182 = vmatprep.subr.bf16.mxu0 0
    %1183 = vmatpush1.bf16.msra.mxu0 0
    %1184 = vmatprep.subr.bf16.mxu0 0
    %1185 = vmatpush1.bf16.msra.mxu0 0
    %1186 = vmatprep.subr.bf16.mxu0 0
    %1187 = vmatpush1.bf16.msra.mxu0 0
    %1188 = vmatprep.subr.bf16.mxu0 0
    %1189 = vmatpush1.bf16.msra.mxu0 0
    %1190 = vmatprep.subr.bf16.mxu0 0
    %1191 = vmatpush1.bf16.msra.mxu0 %v1171
    %1192 = vmatprep.subr.bf16.mxu0 0
    %1193 = vmatpush1.bf16.msra.mxu0 %v1170
    %1194 = vmatprep.subr.bf16.mxu0 0
    %1195 = vmatpush2.bf16.msra.mxu0 0
    %1196 = vmatprep.subr.bf16.mxu0 0
    %1197 = vmatpush2.bf16.msra.mxu0 0
    %1198 = vmatprep.subr.bf16.mxu0 0
    %1199 = vmatpush2.bf16.msra.mxu0 0
    %1200 = vmatprep.subr.bf16.mxu0 0
    %1201 = vmatpush2.bf16.msra.mxu0 0
    %1202 = vmatprep.subr.bf16.mxu0 0
    %1203 = vmatpush2.bf16.msra.mxu0 0
    %1204 = vmatprep.subr.bf16.mxu0 0
    %1205 = vmatpush2.bf16.msra.mxu0 0
    %1206 = vmatprep.subr.bf16.mxu0 0
    %1207 = vmatpush2.bf16.msra.mxu0 0
    %1208 = vmatprep.subr.bf16.mxu0 0
    %1209 = vmatpush2.bf16.msra.mxu0 0
    %1210 = vmatprep.mubr.bf16.mxu0 0
    %1211 = vmatmul.mubr.bf16.gmra.mxu0 %v1176
    %v1212 = vpop.f32.mrf.mxu0
    %v1213 = vadd.f32 0.0, %v1212
    %v1214 = vpop.f32.mrf.mxu0
    %v1215 = vpop.f32.mrf.mxu0
    %v1216 = vpop.f32.mrf.mxu0
    %1217 = vdwg.mxu0
    %v1225 = vcombine.high %v366, %v366
    %v1227 = vunpack.c.l.s4 1966171168
    %v1228 = vunpack.c.0.s8 %v1227
    %v1229 = vlaneseq
    %v1230 = vshrl.u32 %v1229, 7
    %v1231 = vsub.s32 %v1228, %v1230
    %v1232 = vrot.slane %v366, %v1231
    %v1234 = vunpack.c.l.s4 1966171168
    %v1235 = vunpack.c.0.s8 %v1234
    %v1236 = vlaneseq
    %v1237 = vshrl.u32 %v1236, 7
    %v1238 = vsub.s32 %v1235, %v1237
    %v1239 = vrot.slane %v1225, %v1238
    %v1240 = vcombine.high %v1232, %v1232
    %v1241 = vcombine.high %v1239, %v1239
    %v1243 = vunpack.c.l.s4 1966171168
    %v1244 = vunpack.c.0.s8 %v1243
    %v1245 = vlaneseq
    %v1246 = vshrl.u32 %v1245, 7
    %v1247 = vsub.s32 %v1244, %v1246
    %v1248 = vrot.slane %v1232, %v1247
    %v1250 = vunpack.c.l.s4 1966171168
    %v1251 = vunpack.c.0.s8 %v1250
    %v1252 = vlaneseq
    %v1253 = vshrl.u32 %v1252, 7
    %v1254 = vsub.s32 %v1251, %v1253
    %v1255 = vrot.slane %v1239, %v1254
    %v1257 = vunpack.c.l.s4 1966171168
    %v1258 = vunpack.c.0.s8 %v1257
    %v1259 = vlaneseq
    %v1260 = vshrl.u32 %v1259, 7
    %v1261 = vsub.s32 %v1258, %v1260
    %v1262 = vrot.slane %v1240, %v1261
    %v1264 = vunpack.c.l.s4 1966171168
    %v1265 = vunpack.c.0.s8 %v1264
    %v1266 = vlaneseq
    %v1267 = vshrl.u32 %v1266, 7
    %v1268 = vsub.s32 %v1265, %v1267
    %v1269 = vrot.slane %v1241, %v1268
    %v1270 = vcombine.high %v1248, %v1248
    %v1271 = vcombine.high %v1255, %v1255
    %v1272 = vcombine.high %v1262, %v1262
    %v1273 = vcombine.high %v1269, %v1269
    %v1274 = vcombine.high %v367, %v367
    %v1276 = vunpack.c.l.s4 1966171168
    %v1277 = vunpack.c.0.s8 %v1276
    %v1278 = vlaneseq
    %v1279 = vshrl.u32 %v1278, 7
    %v1280 = vsub.s32 %v1277, %v1279
    %v1281 = vrot.slane %v367, %v1280
    %v1283 = vunpack.c.l.s4 1966171168
    %v1284 = vunpack.c.0.s8 %v1283
    %v1285 = vlaneseq
    %v1286 = vshrl.u32 %v1285, 7
    %v1287 = vsub.s32 %v1284, %v1286
    %v1288 = vrot.slane %v1274, %v1287
    %v1289 = vcombine.high %v1281, %v1281
    %v1290 = vcombine.high %v1288, %v1288
    %v1292 = vunpack.c.l.s4 1966171168
    %v1293 = vunpack.c.0.s8 %v1292
    %v1294 = vlaneseq
    %v1295 = vshrl.u32 %v1294, 7
    %v1296 = vsub.s32 %v1293, %v1295
    %v1297 = vrot.slane %v1281, %v1296
    %v1299 = vunpack.c.l.s4 1966171168
    %v1300 = vunpack.c.0.s8 %v1299
    %v1301 = vlaneseq
    %v1302 = vshrl.u32 %v1301, 7
    %v1303 = vsub.s32 %v1300, %v1302
    %v1304 = vrot.slane %v1288, %v1303
    %v1306 = vunpack.c.l.s4 1966171168
    %v1307 = vunpack.c.0.s8 %v1306
    %v1308 = vlaneseq
    %v1309 = vshrl.u32 %v1308, 7
    %v1310 = vsub.s32 %v1307, %v1309
    %v1311 = vrot.slane %v1289, %v1310
    %v1313 = vunpack.c.l.s4 1966171168
    %v1314 = vunpack.c.0.s8 %v1313
    %v1315 = vlaneseq
    %v1316 = vshrl.u32 %v1315, 7
    %v1317 = vsub.s32 %v1314, %v1316
    %v1318 = vrot.slane %v1290, %v1317
    %v1319 = vcombine.high %v1297, %v1297
    %v1320 = vcombine.high %v1304, %v1304
    %v1321 = vcombine.high %v1311, %v1311
    %v1322 = vcombine.high %v1318, %v1318
    %v1323 = vcombine.high %v368, %v368
    %v1325 = vunpack.c.l.s4 1966171168
    %v1326 = vunpack.c.0.s8 %v1325
    %v1327 = vlaneseq
    %v1328 = vshrl.u32 %v1327, 7
    %v1329 = vsub.s32 %v1326, %v1328
    %v1330 = vrot.slane %v368, %v1329
    %v1332 = vunpack.c.l.s4 1966171168
    %v1333 = vunpack.c.0.s8 %v1332
    %v1334 = vlaneseq
    %v1335 = vshrl.u32 %v1334, 7
    %v1336 = vsub.s32 %v1333, %v1335
    %v1337 = vrot.slane %v1323, %v1336
    %v1338 = vcombine.high %v1330, %v1330
    %v1339 = vcombine.high %v1337, %v1337
    %v1341 = vunpack.c.l.s4 1966171168
    %v1342 = vunpack.c.0.s8 %v1341
    %v1343 = vlaneseq
    %v1344 = vshrl.u32 %v1343, 7
    %v1345 = vsub.s32 %v1342, %v1344
    %v1346 = vrot.slane %v1330, %v1345
    %v1348 = vunpack.c.l.s4 1966171168
    %v1349 = vunpack.c.0.s8 %v1348
    %v1350 = vlaneseq
    %v1351 = vshrl.u32 %v1350, 7
    %v1352 = vsub.s32 %v1349, %v1351
    %v1353 = vrot.slane %v1337, %v1352
    %v1355 = vunpack.c.l.s4 1966171168
    %v1356 = vunpack.c.0.s8 %v1355
    %v1357 = vlaneseq
    %v1358 = vshrl.u32 %v1357, 7
    %v1359 = vsub.s32 %v1356, %v1358
    %v1360 = vrot.slane %v1338, %v1359
    %v1362 = vunpack.c.l.s4 1966171168
    %v1363 = vunpack.c.0.s8 %v1362
    %v1364 = vlaneseq
    %v1365 = vshrl.u32 %v1364, 7
    %v1366 = vsub.s32 %v1363, %v1365
    %v1367 = vrot.slane %v1339, %v1366
    %v1368 = vcombine.high %v1346, %v1346
    %v1369 = vcombine.high %v1353, %v1353
    %v1370 = vcombine.high %v1360, %v1360
    %v1371 = vcombine.high %v1367, %v1367
    %v1372 = vcombine.high %v369, %v369
    %v1374 = vunpack.c.l.s4 1966171168
    %v1375 = vunpack.c.0.s8 %v1374
    %v1376 = vlaneseq
    %v1377 = vshrl.u32 %v1376, 7
    %v1378 = vsub.s32 %v1375, %v1377
    %v1379 = vrot.slane %v369, %v1378
    %v1381 = vunpack.c.l.s4 1966171168
    %v1382 = vunpack.c.0.s8 %v1381
    %v1383 = vlaneseq
    %v1384 = vshrl.u32 %v1383, 7
    %v1385 = vsub.s32 %v1382, %v1384
    %v1386 = vrot.slane %v1372, %v1385
    %v1387 = vcombine.high %v1379, %v1379
    %v1388 = vcombine.high %v1386, %v1386
    %v1390 = vunpack.c.l.s4 1966171168
    %v1391 = vunpack.c.0.s8 %v1390
    %v1392 = vlaneseq
    %v1393 = vshrl.u32 %v1392, 7
    %v1394 = vsub.s32 %v1391, %v1393
    %v1395 = vrot.slane %v1379, %v1394
    %v1397 = vunpack.c.l.s4 1966171168
    %v1398 = vunpack.c.0.s8 %v1397
    %v1399 = vlaneseq
    %v1400 = vshrl.u32 %v1399, 7
    %v1401 = vsub.s32 %v1398, %v1400
    %v1402 = vrot.slane %v1386, %v1401
    %v1404 = vunpack.c.l.s4 1966171168
    %v1405 = vunpack.c.0.s8 %v1404
    %v1406 = vlaneseq
    %v1407 = vshrl.u32 %v1406, 7
    %v1408 = vsub.s32 %v1405, %v1407
    %v1409 = vrot.slane %v1387, %v1408
    %v1411 = vunpack.c.l.s4 1966171168
    %v1412 = vunpack.c.0.s8 %v1411
    %v1413 = vlaneseq
    %v1414 = vshrl.u32 %v1413, 7
    %v1415 = vsub.s32 %v1412, %v1414
    %v1416 = vrot.slane %v1388, %v1415
    %v1417 = vcombine.high %v1395, %v1395
    %v1418 = vcombine.high %v1402, %v1402
    %v1419 = vcombine.high %v1409, %v1409
    %v1420 = vcombine.high %v1416, %v1416
    %v1421 = vcombine.high %v370, %v370
    %v1423 = vunpack.c.l.s4 1966171168
    %v1424 = vunpack.c.0.s8 %v1423
    %v1425 = vlaneseq
    %v1426 = vshrl.u32 %v1425, 7
    %v1427 = vsub.s32 %v1424, %v1426
    %v1428 = vrot.slane %v370, %v1427
    %v1430 = vunpack.c.l.s4 1966171168
    %v1431 = vunpack.c.0.s8 %v1430
    %v1432 = vlaneseq
    %v1433 = vshrl.u32 %v1432, 7
    %v1434 = vsub.s32 %v1431, %v1433
    %v1435 = vrot.slane %v1421, %v1434
    %v1436 = vcombine.high %v1428, %v1428
    %v1437 = vcombine.high %v1435, %v1435
    %v1439 = vunpack.c.l.s4 1966171168
    %v1440 = vunpack.c.0.s8 %v1439
    %v1441 = vlaneseq
    %v1442 = vshrl.u32 %v1441, 7
    %v1443 = vsub.s32 %v1440, %v1442
    %v1444 = vrot.slane %v1428, %v1443
    %v1446 = vunpack.c.l.s4 1966171168
    %v1447 = vunpack.c.0.s8 %v1446
    %v1448 = vlaneseq
    %v1449 = vshrl.u32 %v1448, 7
    %v1450 = vsub.s32 %v1447, %v1449
    %v1451 = vrot.slane %v1435, %v1450
    %v1453 = vunpack.c.l.s4 1966171168
    %v1454 = vunpack.c.0.s8 %v1453
    %v1455 = vlaneseq
    %v1456 = vshrl.u32 %v1455, 7
    %v1457 = vsub.s32 %v1454, %v1456
    %v1458 = vrot.slane %v1436, %v1457
    %v1460 = vunpack.c.l.s4 1966171168
    %v1461 = vunpack.c.0.s8 %v1460
    %v1462 = vlaneseq
    %v1463 = vshrl.u32 %v1462, 7
    %v1464 = vsub.s32 %v1461, %v1463
    %v1465 = vrot.slane %v1437, %v1464
    %v1466 = vcombine.high %v1444, %v1444
    %v1467 = vcombine.high %v1451, %v1451
    %v1468 = vcombine.high %v1458, %v1458
    %v1469 = vcombine.high %v1465, %v1465
    %v1470 = vcombine.high %v371, %v371
    %v1472 = vunpack.c.l.s4 1966171168
    %v1473 = vunpack.c.0.s8 %v1472
    %v1474 = vlaneseq
    %v1475 = vshrl.u32 %v1474, 7
    %v1476 = vsub.s32 %v1473, %v1475
    %v1477 = vrot.slane %v371, %v1476
    %v1479 = vunpack.c.l.s4 1966171168
    %v1480 = vunpack.c.0.s8 %v1479
    %v1481 = vlaneseq
    %v1482 = vshrl.u32 %v1481, 7
    %v1483 = vsub.s32 %v1480, %v1482
    %v1484 = vrot.slane %v1470, %v1483
    %v1485 = vcombine.high %v1477, %v1477
    %v1486 = vcombine.high %v1484, %v1484
    %v1488 = vunpack.c.l.s4 1966171168
    %v1489 = vunpack.c.0.s8 %v1488
    %v1490 = vlaneseq
    %v1491 = vshrl.u32 %v1490, 7
    %v1492 = vsub.s32 %v1489, %v1491
    %v1493 = vrot.slane %v1477, %v1492
    %v1495 = vunpack.c.l.s4 1966171168
    %v1496 = vunpack.c.0.s8 %v1495
    %v1497 = vlaneseq
    %v1498 = vshrl.u32 %v1497, 7
    %v1499 = vsub.s32 %v1496, %v1498
    %v1500 = vrot.slane %v1484, %v1499
    %v1502 = vunpack.c.l.s4 1966171168
    %v1503 = vunpack.c.0.s8 %v1502
    %v1504 = vlaneseq
    %v1505 = vshrl.u32 %v1504, 7
    %v1506 = vsub.s32 %v1503, %v1505
    %v1507 = vrot.slane %v1485, %v1506
    %v1509 = vunpack.c.l.s4 1966171168
    %v1510 = vunpack.c.0.s8 %v1509
    %v1511 = vlaneseq
    %v1512 = vshrl.u32 %v1511, 7
    %v1513 = vsub.s32 %v1510, %v1512
    %v1514 = vrot.slane %v1486, %v1513
    %v1515 = vcombine.high %v1493, %v1493
    %v1516 = vcombine.high %v1500, %v1500
    %v1517 = vcombine.high %v1507, %v1507
    %v1518 = vcombine.high %v1514, %v1514
    %v1520 = vunpack.c.l.s4 1966171168
    %v1521 = vunpack.c.0.s8 %v1520
    %v1522 = vlaneseq
    %v1523 = vshrl.u32 %v1522, 7
    %v1524 = vsub.s32 %v1521, %v1523
    %v1525 = vrot.slane %v372, %v1524
    %v1527 = vunpack.c.l.s4 1966171168
    %v1528 = vunpack.c.0.s8 %v1527
    %v1529 = vlaneseq
    %v1530 = vshrl.u32 %v1529, 7
    %v1531 = vsub.s32 %v1528, %v1530
    %v1532 = vrot.slane %v1525, %v1531
    %v2366 = vunpack.c.l.b16 %v373
    %v2367 = vunpack.c.l.b16 %v374
    %v2368 = vunpack.c.l.b16 %v375
    %v2369 = vunpack.c.l.b16 %v376
    %v2370 = vunpack.c.l.b16 %v377
    %v2371 = vunpack.c.l.b16 %v378
    %v2372 = vunpack.c.l.b16 %v379
    %v2373 = vunpack.c.l.b16 %v380
    %v2374 = vunpack.c.l.b16 %v381
    %v2375 = vunpack.c.l.b16 %v382
    %v2376 = vunpack.c.l.b16 %v383
    %v2377 = vunpack.c.l.b16 %v384
    %v2378 = vunpack.c.l.b16 %v385
    %v2379 = vunpack.c.l.b16 %v386
    %v2380 = vunpack.c.l.b16 %v387
    %v2381 = vunpack.c.l.b16 %v388
    %v2382 = vunpack.c.l.b16 %v389
    %v2383 = vunpack.c.l.b16 %v390
    %v2384 = vunpack.c.l.b16 %v391
    %v2385 = vunpack.c.l.b16 %v392
    %v2386 = vunpack.c.l.b16 %v393
    %v2387 = vunpack.c.l.b16 %v394
    %v2388 = vunpack.c.l.b16 %v395
    %v2389 = vunpack.c.l.b16 %v396
    %v2390 = vunpack.c.l.b16 %v397
    %v2391 = vunpack.c.l.b16 %v398
    %v2392 = vunpack.c.l.b16 %v399
    %v2393 = vunpack.c.l.b16 %v400
    %v2394 = vunpack.c.l.b16 %v401
    %v2395 = vunpack.c.l.b16 %v402
    %v2396 = vunpack.c.l.b16 %v403
    %v2397 = vunpack.c.l.b16 %v404
    %v2398 = vunpack.c.l.b16 %v405
    %v2399 = vunpack.c.l.b16 %v406
    %v2400 = vunpack.c.l.b16 %v407
    %v2401 = vunpack.c.l.b16 %v408
    %v2402 = vunpack.c.l.b16 %v409
    %v2403 = vunpack.c.l.b16 %v410
    %v2404 = vunpack.c.l.b16 %v411
    %v2405 = vunpack.c.l.b16 %v412
    %v2406 = vunpack.c.l.b16 %v413
    %v2407 = vunpack.c.l.b16 %v414
    %v2408 = vunpack.c.l.b16 %v415
    %v2409 = vunpack.c.l.b16 %v416
    %v2410 = vunpack.c.l.b16 %v417
    %v2411 = vunpack.c.l.b16 %v418
    %v2412 = vunpack.c.l.b16 %v419
    %v2413 = vunpack.c.l.b16 %v420
    %v2414 = vunpack.c.l.b16 %v421
    %v2415 = vunpack.c.l.b16 %v422
    %v2416 = vunpack.c.l.b16 %v423
    %v2417 = vunpack.c.l.b16 %v424
    %v2418 = vunpack.c.l.b16 %v425
    %v2419 = vunpack.c.l.b16 %v426
    %v2420 = vunpack.c.l.b16 %v427
    %v2421 = vunpack.c.l.b16 %v428
    %v2422 = vunpack.c.l.b16 %v429
    %v2423 = vunpack.c.l.b16 %v430
    %v2424 = vunpack.c.l.b16 %v431
    %v2425 = vunpack.c.l.b16 %v432
    %v2426 = vunpack.c.l.b16 %v433
    %v2427 = vunpack.c.l.b16 %v434
    %v2428 = vunpack.c.l.b16 %v435
    %v2429 = vunpack.c.l.b16 %v436
    %v2430 = vunpack.c.l.b16 %v437
    %v2431 = vunpack.c.l.b16 %v438
    %v2432 = vunpack.c.l.b16 %v439
    %v2433 = vunpack.c.l.b16 %v440
    %v2434 = vunpack.c.l.b16 %v441
    %v2435 = vunpack.c.l.b16 %v442
    %v2436 = vunpack.c.l.b16 %v443
    %v2437 = vunpack.c.l.b16 %v444
    %v2438 = vunpack.c.l.b16 %v445
    %v2439 = vunpack.c.l.b16 %v446
    %v2440 = vunpack.c.l.b16 %v447
    %v2441 = vunpack.c.l.b16 %v448
    %v2442 = vunpack.c.l.b16 %v449
    %v2443 = vunpack.c.l.b16 %v450
    %v2444 = vunpack.c.l.b16 %v451
    %v2445 = vunpack.c.l.b16 %v452
    %v2446 = vunpack.c.l.b16 %v453
    %v2447 = vunpack.c.l.b16 %v454
    %v2448 = vunpack.c.l.b16 %v455
    %v2449 = vunpack.c.l.b16 %v456
    %v2450 = vunpack.c.l.b16 %v457
    %v2451 = vunpack.c.l.b16 %v458
    %v2452 = vunpack.c.l.b16 %v459
    %v2453 = vunpack.c.l.b16 %v460
    %v2454 = vunpack.c.l.b16 %v461
    %v2455 = vunpack.c.l.b16 %v462
    %v2456 = vunpack.c.l.b16 %v463
    %v2457 = vunpack.c.l.b16 %v464
    %v2458 = vunpack.c.l.b16 %v465
    %v2459 = vunpack.c.l.b16 %v466
    %v2460 = vunpack.c.l.b16 %v467
    %v2461 = vunpack.c.l.b16 %v468
    %v2462 = vunpack.c.l.b16 %v469
    %v2463 = vunpack.c.l.b16 %v470
    %v2464 = vunpack.c.l.b16 %v471
    %v2465 = vunpack.c.l.b16 %v472
    %v2466 = vunpack.c.l.b16 %v473
    %v2467 = vunpack.c.l.b16 %v474
    %v2468 = vunpack.c.l.b16 %v475
    %v2469 = vunpack.c.l.b16 %v476
    %v2470 = vunpack.c.l.b16 %v477
    %v2471 = vunpack.c.l.b16 %v478
    %v2472 = vunpack.c.l.b16 %v479
    %v2473 = vunpack.c.l.b16 %v480
    %v2474 = vunpack.c.l.b16 %v481
    %v2475 = vunpack.c.l.b16 %v482
    %v2476 = vunpack.c.l.b16 %v483
    %v2477 = vunpack.c.l.b16 %v484
    %v2478 = vunpack.c.l.b16 %v485
    %v2479 = vunpack.c.l.b16 %v486
    %v2480 = vunpack.c.l.b16 %v487
    %v2481 = vunpack.c.l.b16 %v488
    %v2482 = vunpack.c.l.b16 %v489
    %v2483 = vunpack.c.l.b16 %v490
    %v2484 = vunpack.c.l.b16 %v491
    %v2485 = vunpack.c.l.b16 %v492
    %v2486 = vunpack.c.l.b16 %v493
    %v2487 = vunpack.c.l.b16 %v494
    %v2488 = vunpack.c.l.b16 %v495
    %v2489 = vunpack.c.l.b16 %v496
    %v2490 = vunpack.c.l.b16 %v497
    %v2491 = vunpack.c.l.b16 %v498
    %v2492 = vunpack.c.l.b16 %v499
    %v2493 = vunpack.c.l.b16 %v500
    %v2494 = vunpack.c.l.b16 %v501
    %v2495 = vunpack.c.l.b16 %v502
    %v2496 = vunpack.c.l.b16 %v503
    %v2497 = vunpack.c.l.b16 %v504
    %v2498 = vunpack.c.l.b16 %v505
    %v2499 = vunpack.c.l.b16 %v506
    %v2500 = vunpack.c.l.b16 %v507
    %v2501 = vunpack.c.l.b16 %v508
    %v2502 = vunpack.c.l.b16 %v509
    %v2503 = vunpack.c.l.b16 %v510
    %v2504 = vunpack.c.l.b16 %v511
    %v2505 = vunpack.c.l.b16 %v512
    %v2506 = vunpack.c.l.b16 %v513
    %v2507 = vunpack.c.l.b16 %v514
    %v2508 = vunpack.c.l.b16 %v515
    %v2509 = vunpack.c.l.b16 %v516
    %v2510 = vunpack.c.l.b16 %v517
    %v2511 = vunpack.c.l.b16 %v518
    %v2512 = vunpack.c.l.b16 %v519
    %v2513 = vunpack.c.l.b16 %v520
    %v2514 = vunpack.c.l.b16 %v521
    %v2515 = vunpack.c.l.b16 %v522
    %v2516 = vunpack.c.l.b16 %v523
    %v2517 = vunpack.c.l.b16 %v524
    %v2518 = vunpack.c.l.b16 %v525
    %v2519 = vunpack.c.l.b16 %v526
    %v2520 = vunpack.c.l.b16 %v527
    %v2521 = vunpack.c.l.b16 %v528
    %v2522 = vunpack.c.l.b16 %v529
    %v2523 = vunpack.c.l.b16 %v530
    %v2524 = vunpack.c.l.b16 %v531
    %v2525 = vunpack.c.l.b16 %v532
    %v2526 = vunpack.c.l.b16 %v533
    %v2527 = vunpack.c.l.b16 %v534
    %v2528 = vunpack.c.l.b16 %v535
    %v2529 = vunpack.c.l.b16 %v536
    %v2530 = vunpack.c.l.b16 %v537
    %v2531 = vunpack.c.l.b16 %v538
    %v2532 = vunpack.c.l.b16 %v539
    %v2533 = vunpack.c.l.b16 %v540
    %v2534 = vunpack.c.l.b16 %v541
    %v2535 = vunpack.c.l.b16 %v542
    %v2536 = vunpack.c.l.b16 %v543
    %v2537 = vunpack.c.l.b16 %v544
    %v2538 = vunpack.c.l.b16 %v545
    %v2539 = vunpack.c.l.b16 %v546
    %v2540 = vunpack.c.l.b16 %v547
    %v2541 = vunpack.c.l.b16 %v548
    %v2542 = vunpack.c.l.b16 %v549
    %v2543 = vunpack.c.l.b16 %v550
    %v2544 = vunpack.c.l.b16 %v551
    %v2545 = vunpack.c.l.b16 %v552
    %v2546 = vunpack.c.l.b16 %v553
    %v2547 = vunpack.c.l.b16 %v554
    %v2548 = vunpack.c.l.b16 %v555
    %v2549 = vunpack.c.l.b16 %v556
    %v2550 = vunpack.c.l.b16 %v557
    %v2551 = vunpack.c.l.b16 %v558
    %v2552 = vunpack.c.l.b16 %v559
    %v2553 = vunpack.c.l.b16 %v560
    %v2554 = vunpack.c.l.b16 %v561
    %v2555 = vunpack.c.l.b16 %v562
    %v2556 = vunpack.c.l.b16 %v563
    %v2557 = vunpack.c.l.b16 %v564
    %v2558 = vunpack.c.l.b16 %v565
    %v2559 = vunpack.c.l.b16 %v566
    %v2560 = vunpack.c.l.b16 %v567
    %v2561 = vunpack.c.l.b16 %v568
    %v2562 = vunpack.c.l.b16 %v569
    %v2563 = vunpack.c.l.b16 %v570
    %v2564 = vunpack.c.l.b16 %v571
    %v2565 = vunpack.c.l.b16 %v572
    %v2566 = vunpack.c.l.b16 %v573
    %v2567 = vunpack.c.l.b16 %v574
    %v2568 = vunpack.c.l.b16 %v575
    %v2569 = vunpack.c.l.b16 %v576
    %v2570 = vunpack.c.l.b16 %v577
    %v2571 = vunpack.c.l.b16 %v578
    %v2572 = vunpack.c.l.b16 %v579
    %v2573 = vunpack.c.l.b16 %v580
    %v2574 = vunpack.c.l.b16 %v581
    %v2575 = vunpack.c.l.b16 %v582
    %v2576 = vunpack.c.l.b16 %v583
    %v2577 = vunpack.c.l.b16 %v584
    %v2578 = vunpack.c.l.b16 %v585
    %v2579 = vunpack.c.l.b16 %v586
    %v2580 = vunpack.c.l.b16 %v587
    %v2581 = vunpack.c.l.b16 %v588
    %v2582 = vunpack.c.l.b16 %v589
    %v2583 = vunpack.c.l.b16 %v590
    %v2584 = vunpack.c.l.b16 %v591
    %v2585 = vunpack.c.l.b16 %v592
    %v2586 = vunpack.c.l.b16 %v593
    %v2587 = vunpack.c.l.b16 %v594
    %v2588 = vunpack.c.l.b16 %v595
    %v2589 = vunpack.c.l.b16 %v596
    %v2590 = vunpack.c.l.b16 %v597
    %v2591 = vunpack.c.l.b16 %v598
    %v2592 = vunpack.c.l.b16 %v599
    %v2593 = vunpack.c.l.b16 %v600
    %v2594 = vunpack.c.l.b16 %v601
    %v2595 = vunpack.c.l.b16 %v602
    %v2596 = vunpack.c.l.b16 %v603
    %v2597 = vunpack.c.l.b16 %v604
    %v2598 = vunpack.c.l.b16 %v605
    %v2599 = vunpack.c.l.b16 %v606
    %v2600 = vunpack.c.l.b16 %v607
    %v2601 = vunpack.c.l.b16 %v608
    %v2602 = vunpack.c.l.b16 %v609
    %v2603 = vunpack.c.l.b16 %v610
    %v2604 = vunpack.c.l.b16 %v611
    %v2605 = vunpack.c.l.b16 %v612
    %v2606 = vunpack.c.l.b16 %v613
    %v2607 = vunpack.c.l.b16 %v614
    %v2608 = vunpack.c.l.b16 %v615
    %v2609 = vunpack.c.l.b16 %v616
    %v2610 = vunpack.c.l.b16 %v617
    %v2611 = vunpack.c.l.b16 %v618
    %v2612 = vunpack.c.l.b16 %v619
    %v2613 = vunpack.c.l.b16 %v620
    %v2614 = vunpack.c.l.b16 %v621
    %v2615 = vunpack.c.l.b16 %v622
    %v2616 = vunpack.c.l.b16 %v623
    %v2617 = vunpack.c.l.b16 %v624
    %v2618 = vunpack.c.l.b16 %v625
    %v2619 = vunpack.c.l.b16 %v626
    %v2620 = vunpack.c.l.b16 %v627
    %v2621 = vunpack.c.l.b16 %v628
    %v2622 = vunpack.c.l.b16 %v629
    %v2623 = vunpack.c.l.b16 %v630
    %v2624 = vunpack.c.l.b16 %v631
    %v2625 = vunpack.c.l.b16 %v632
    %v2626 = vunpack.c.l.b16 %v633
    %v2627 = vunpack.c.l.b16 %v634
    %v2628 = vunpack.c.l.b16 %v635
    %v2629 = vunpack.c.l.b16 %v636
    %v2630 = vunpack.c.l.b16 %v637
    %v2631 = vunpack.c.l.b16 %v638
    %v2632 = vunpack.c.l.b16 %v639
    %v2633 = vunpack.c.l.b16 %v640
    %v2634 = vunpack.c.l.b16 %v641
    %v2635 = vunpack.c.l.b16 %v642
    %v2636 = vunpack.c.l.b16 %v643
    %v2637 = vunpack.c.l.b16 %v644
    %v2638 = vunpack.c.l.b16 %v645
    %v2639 = vunpack.c.l.b16 %v646
    %v2640 = vunpack.c.l.b16 %v647
    %v2641 = vunpack.c.l.b16 %v648
    %v2642 = vunpack.c.l.b16 %v649
    %v2643 = vunpack.c.l.b16 %v650
    %v2644 = vunpack.c.l.b16 %v651
    %v2645 = vunpack.c.l.b16 %v652
    %v2646 = vunpack.c.l.b16 %v653
    %v2647 = vunpack.c.l.b16 %v654
    %v2648 = vunpack.c.l.b16 %v655
    %v2649 = vunpack.c.l.b16 %v656
    %v2650 = vunpack.c.l.b16 %v657
    %v2651 = vunpack.c.l.b16 %v658
    %v2652 = vunpack.c.l.b16 %v659
    %v2653 = vunpack.c.l.b16 %v660
    %v2654 = vunpack.c.l.b16 %v661
    %v2655 = vunpack.c.l.b16 %v662
    %v2656 = vunpack.c.l.b16 %v663
    %v2657 = vunpack.c.l.b16 %v664
    %v2658 = vunpack.c.l.b16 %v665
    %v2659 = vunpack.c.l.b16 %v666
    %v2660 = vunpack.c.l.b16 %v667
    %v2661 = vunpack.c.l.b16 %v668
    %v2662 = vunpack.c.l.b16 %v669
    %v2663 = vunpack.c.l.b16 %v670
    %v2664 = vunpack.c.l.b16 %v671
    %v2665 = vunpack.c.l.b16 %v672
    %v2666 = vunpack.c.l.b16 %v673
    %v2667 = vunpack.c.l.b16 %v674
    %v2668 = vunpack.c.l.b16 %v675
    %v2669 = vunpack.c.l.b16 %v676
    %v2670 = vunpack.c.l.b16 %v677
    %v2671 = vunpack.c.l.b16 %v678
    %v2672 = vunpack.c.l.b16 %v679
    %v2673 = vunpack.c.l.b16 %v680
    %v2674 = vunpack.c.l.b16 %v681
    %v2675 = vunpack.c.l.b16 %v682
    %v2676 = vunpack.c.l.b16 %v683
    %v2677 = vunpack.c.l.b16 %v684
    %v2678 = vunpack.c.l.b16 %v685
    %v2679 = vunpack.c.l.b16 %v686
    %v2680 = vunpack.c.l.b16 %v687
    %v2681 = vunpack.c.l.b16 %v688
    %v2682 = vunpack.c.l.b16 %v689
    %v2683 = vunpack.c.l.b16 %v690
    %v2684 = vunpack.c.l.b16 %v691
    %v2685 = vunpack.c.l.b16 %v692
    %v2686 = vunpack.c.l.b16 %v693
    %v2687 = vunpack.c.l.b16 %v694
    %v2688 = vunpack.c.l.b16 %v695
    %v2689 = vunpack.c.l.b16 %v696
    %v2690 = vunpack.c.l.b16 %v697
    %v2691 = vunpack.c.l.b16 %v698
    %v2692 = vunpack.c.l.b16 %v699
    %v2693 = vunpack.c.l.b16 %v700
    %v2694 = vunpack.c.l.b16 %v701
    %v2695 = vunpack.c.l.b16 %v702
    %v2696 = vunpack.c.l.b16 %v703
    %v2697 = vunpack.c.l.b16 %v704
    %v2698 = vunpack.c.l.b16 %v705
    %v2699 = vunpack.c.l.b16 %v706
    %v2700 = vunpack.c.l.b16 %v707
    %v2701 = vunpack.c.l.b16 %v708
    %v2702 = vunpack.c.l.b16 %v709
    %v2703 = vunpack.c.l.b16 %v710
    %v2704 = vunpack.c.l.b16 %v711
    %v2705 = vunpack.c.l.b16 %v712
    %v2706 = vunpack.c.l.b16 %v713
    %v2707 = vunpack.c.l.b16 %v714
    %v2708 = vunpack.c.l.b16 %v715
    %v2709 = vunpack.c.l.b16 %v716
    %v2710 = vunpack.c.l.b16 %v717
    %v2711 = vunpack.c.l.b16 %v718
    %v2712 = vunpack.c.l.b16 %v719
    %v2713 = vunpack.c.l.b16 %v720
    %v2714 = vunpack.c.l.b16 %v721
    %v2715 = vunpack.c.l.b16 %v722
    %v2716 = vunpack.c.l.b16 %v723
    %v2717 = vunpack.c.l.b16 %v724
    %v2718 = vunpack.c.l.b16 %v725
    %v2719 = vunpack.c.l.b16 %v726
    %v2720 = vunpack.c.l.b16 %v727
    %v2721 = vunpack.c.l.b16 %v728
    %v2722 = vunpack.c.l.b16 %v729
    %v2723 = vunpack.c.l.b16 %v730
    %v2724 = vunpack.c.l.b16 %v731
    %v2725 = vunpack.c.l.b16 %v732
    %v2726 = vunpack.c.l.b16 %v733
    %v2727 = vunpack.c.l.b16 %v734
    %v2728 = vunpack.c.l.b16 %v735
    %v2729 = vunpack.c.l.b16 %v736
    %v2730 = vunpack.c.l.b16 %v737
    %v2731 = vunpack.c.l.b16 %v738
    %v2732 = vunpack.c.l.b16 %v739
    %v2733 = vunpack.c.l.b16 %v740
    %v2734 = vunpack.c.l.b16 %v741
    %v2735 = vunpack.c.l.b16 %v742
    %v2736 = vunpack.c.l.b16 %v743
    %v2737 = vunpack.c.l.b16 %v744
    %v2738 = vunpack.c.l.b16 %v745
    %v2739 = vunpack.c.l.b16 %v746
    %v2740 = vunpack.c.l.b16 %v747
    %v2741 = vunpack.c.l.b16 %v748
    %v2742 = vunpack.c.l.b16 %v749
    %v2743 = vunpack.c.l.b16 %v750
    %v2744 = vunpack.c.l.b16 %v751
    %v2745 = vunpack.c.l.b16 %v752
    %v2746 = vunpack.c.l.b16 %v753
    %v2747 = vunpack.c.l.b16 %v754
    %v2748 = vunpack.c.l.b16 %v755
    %v2749 = vunpack.c.l.b16 %v756
    %v2750 = vunpack.c.l.b16 %v757
    %v2751 = vunpack.c.l.b16 %v758
    %v2752 = vunpack.c.l.b16 %v759
    %v2753 = vunpack.c.l.b16 %v760
    %v2754 = vunpack.c.l.b16 %v761
    %v2755 = vunpack.c.l.b16 %v762
    %v2756 = vunpack.c.l.b16 %v763
    %v2757 = vunpack.c.l.b16 %v764
    %v2758 = vunpack.c.l.b16 %v765
    %v2759 = vunpack.c.l.b16 %v766
    %v2760 = vunpack.c.l.b16 %v767
    %v2761 = vunpack.c.l.b16 %v768
    %v2762 = vunpack.c.l.b16 %v769
    %v2763 = vunpack.c.l.b16 %v770
    %v2764 = vunpack.c.l.b16 %v771
    %v2765 = vunpack.c.l.b16 %v772
    %v2766 = vunpack.c.l.b16 %v773
    %v2767 = vunpack.c.l.b16 %v774
    %v2768 = vunpack.c.l.b16 %v775
    %v2769 = vunpack.c.l.b16 %v776
    %v2770 = vunpack.c.l.b16 %v777
    %v2771 = vunpack.c.l.b16 %v778
    %v2772 = vunpack.c.l.b16 %v779
    %v2773 = vunpack.c.l.b16 %v780
    %v2774 = vunpack.c.l.b16 %v781
    %v2775 = vunpack.c.l.b16 %v782
    %v2776 = vunpack.c.l.b16 %v783
    %v2777 = vunpack.c.l.b16 %v784
    %v2778 = vunpack.c.l.b16 %v785
    %v2779 = vunpack.c.l.b16 %v786
    %v2780 = vunpack.c.l.b16 %v787
    %v2781 = vunpack.c.l.b16 %v788
    %v2782 = vunpack.c.l.b16 %v789
    %v2783 = vunpack.c.l.b16 %v790
    %v2784 = vunpack.c.l.b16 %v791
    %v2785 = vunpack.c.l.b16 %v792
    %v2786 = vunpack.c.l.b16 %v793
    %v2787 = vunpack.c.l.b16 %v794
    %v2788 = vunpack.c.l.b16 %v795
    %v2789 = vunpack.c.l.b16 %v796
    %v2790 = vunpack.c.l.b16 %v797
    %v2791 = vunpack.c.l.b16 %v798
    %v2792 = vunpack.c.l.b16 %v799
    %v2793 = vunpack.c.l.b16 %v800
    %v2794 = vunpack.c.l.b16 %v801
    %v2795 = vunpack.c.l.b16 %v802
    %v2796 = vunpack.c.l.b16 %v803
    %v2797 = vunpack.c.l.b16 %v804
    %v2798 = vunpack.c.l.b16 %v805
    %v2799 = vunpack.c.l.b16 %v806
    %v2800 = vunpack.c.l.b16 %v807
    %v2801 = vunpack.c.l.b16 %v808
    %v2802 = vunpack.c.l.b16 %v809
    %v2803 = vunpack.c.l.b16 %v810
    %v2804 = vunpack.c.l.b16 %v811
    %v2805 = vunpack.c.l.b16 %v812
    %v2806 = vunpack.c.l.b16 %v813
    %v2807 = vunpack.c.l.b16 %v814
    %v2808 = vunpack.c.l.b16 %v815
    %v2809 = vunpack.c.l.b16 %v816
    %v2810 = vunpack.c.l.b16 %v817
    %v2811 = vunpack.c.l.b16 %v818
    %v2812 = vunpack.c.l.b16 %v819
    %v2813 = vunpack.c.l.b16 %v820
    %v2814 = vunpack.c.l.b16 %v821
    %v2815 = vunpack.c.l.b16 %v822
    %v2816 = vunpack.c.l.b16 %v823
    %v2817 = vunpack.c.l.b16 %v824
    %v2818 = vunpack.c.l.b16 %v825
    %v2819 = vunpack.c.l.b16 %v826
    %v2820 = vunpack.c.l.b16 %v827
    %v2821 = vunpack.c.l.b16 %v828
    %v2822 = vunpack.c.l.b16 %v829
    %v2823 = vunpack.c.l.b16 %v830
    %v2824 = vunpack.c.l.b16 %v831
    %v2825 = vunpack.c.l.b16 %v832
    %v2826 = vunpack.c.l.b16 %v833
    %v2827 = vunpack.c.l.b16 %v834
    %v2828 = vunpack.c.l.b16 %v835
    %v2829 = vunpack.c.l.b16 %v836
    %v2830 = vunpack.c.l.b16 %v837
    %v2831 = vunpack.c.l.b16 %v838
    %v2832 = vunpack.c.l.b16 %v839
    %v2833 = vunpack.c.l.b16 %v840
    %v2834 = vunpack.c.l.b16 %v841
    %v2835 = vunpack.c.l.b16 %v842
    %v2836 = vunpack.c.l.b16 %v843
    %v2837 = vunpack.c.l.b16 %v844
    %v2838 = vunpack.c.l.b16 %v845
    %v2839 = vunpack.c.l.b16 %v846
    %v2840 = vunpack.c.l.b16 %v847
    %v2841 = vunpack.c.l.b16 %v848
    %v2842 = vunpack.c.l.b16 %v849
    %v2843 = vunpack.c.l.b16 %v850
    %v2844 = vunpack.c.l.b16 %v851
    %v2845 = vunpack.c.l.b16 %v852
    %v2846 = vunpack.c.l.b16 %v853
    %v2847 = vunpack.c.l.b16 %v854
    %v2848 = vunpack.c.l.b16 %v855
    %v2849 = vunpack.c.l.b16 %v856
    %v2850 = vunpack.c.l.b16 %v857
    %v2851 = vunpack.c.l.b16 %v858
    %v2852 = vunpack.c.l.b16 %v859
    %v2853 = vunpack.c.l.b16 %v860
    %v2854 = vunpack.c.l.b16 %v861
    %v2855 = vunpack.c.l.b16 %v862
    %v2856 = vunpack.c.l.b16 %v863
    %v2857 = vunpack.c.l.b16 %v864
    %v2858 = vunpack.c.l.b16 %v865
    %v2859 = vunpack.c.l.b16 %v866
    %v2860 = vunpack.c.l.b16 %v867
    %v2861 = vunpack.c.l.b16 %v868
    %v2862 = vunpack.c.l.b16 %v869
    %v2863 = vunpack.c.l.b16 %v870
    %v2864 = vunpack.c.l.b16 %v871
    %v2865 = vunpack.c.l.b16 %v872
    %v2866 = vunpack.c.l.b16 %v873
    %v2867 = vunpack.c.l.b16 %v874
    %v2868 = vunpack.c.l.b16 %v875
    %v2869 = vunpack.c.l.b16 %v876
    %v2870 = vunpack.c.l.b16 %v877
    %v2871 = vunpack.c.l.b16 %v878
    %v2872 = vunpack.c.l.b16 %v879
    %v2873 = vunpack.c.l.b16 %v880
    %v2874 = vunpack.c.l.b16 %v881
    %v2875 = vunpack.c.l.b16 %v882
    %v2876 = vunpack.c.l.b16 %v883
    %v2877 = vunpack.c.l.b16 %v884
    %v2878 = vunpack.c.l.b16 %v885
    %v2879 = vunpack.c.l.b16 %v886
    %v2880 = vunpack.c.l.b16 %v887
    %v2881 = vunpack.c.l.b16 %v888
    %v2882 = vunpack.c.l.b16 %v889
    %v2883 = vunpack.c.l.b16 %v890
    %v2884 = vunpack.c.l.b16 %v891
    %v2885 = vunpack.c.l.b16 %v892
    %v2886 = vunpack.c.l.b16 %v893
    %v2887 = vunpack.c.l.b16 %v894
    %v2888 = vunpack.c.l.b16 %v895
    %v2889 = vunpack.c.l.b16 %v896
    %v2890 = vunpack.c.l.b16 %v897
    %v2891 = vunpack.c.l.b16 %v898
    %v2892 = vunpack.c.l.b16 %v899
    %v2893 = vunpack.c.l.b16 %v900
    %v2894 = vunpack.c.l.b16 %v901
    %v2895 = vunpack.c.l.b16 %v902
    %v2896 = vunpack.c.l.b16 %v903
    %v2897 = vunpack.c.l.b16 %v904
    %v2898 = vunpack.c.l.b16 %v905
    %v2899 = vunpack.c.l.b16 %v906
    %v2900 = vunpack.c.l.b16 %v907
    %v2901 = vunpack.c.l.b16 %v908
    %v2902 = vunpack.c.l.b16 %v909
    %v2903 = vunpack.c.l.b16 %v910
    %v2904 = vunpack.c.l.b16 %v911
    %v2905 = vunpack.c.l.b16 %v912
    %v2906 = vunpack.c.l.b16 %v913
    %v2907 = vunpack.c.l.b16 %v914
    %v2908 = vunpack.c.l.b16 %v915
    %v2909 = vunpack.c.l.b16 %v916
    %v2910 = vunpack.c.l.b16 %v917
    %v2911 = vunpack.c.l.b16 %v918
    %v2912 = vunpack.c.l.b16 %v919
    %v2913 = vunpack.c.l.b16 %v920
    %v2914 = vunpack.c.l.b16 %v921
    %v2915 = vunpack.c.l.b16 %v922
    %v2916 = vunpack.c.l.b16 %v923
    %v2917 = vunpack.c.l.b16 %v924
    %v2918 = vunpack.c.l.b16 %v925
    %v2919 = vunpack.c.l.b16 %v926
    %v2920 = vunpack.c.l.b16 %v927
    %v2921 = vunpack.c.l.b16 %v928
    %v2922 = vunpack.c.l.b16 %v929
    %v2923 = vunpack.c.l.b16 %v930
    %v2924 = vunpack.c.l.b16 %v931
    %v2925 = vunpack.c.l.b16 %v932
    %v2926 = vunpack.c.l.b16 %v933
    %v2927 = vunpack.c.l.b16 %v934
    %v2928 = vunpack.c.l.b16 %v935
    %v2929 = vunpack.c.l.b16 %v936
    %v2930 = vunpack.c.l.b16 %v937
    %v2931 = vunpack.c.l.b16 %v938
    %v2932 = vunpack.c.l.b16 %v939
    %v2933 = vunpack.c.l.b16 %v940
    %v2934 = vunpack.c.l.b16 %v941
    %v2935 = vunpack.c.l.b16 %v942
    %v2936 = vunpack.c.l.b16 %v943
    %v2937 = vunpack.c.l.b16 %v944
    %v2938 = vunpack.c.l.b16 %v945
    %v2939 = vunpack.c.l.b16 %v946
    %v2940 = vunpack.c.l.b16 %v947
    %v2941 = vunpack.c.l.b16 %v948
    %v2942 = vunpack.c.l.b16 %v949
    %v2943 = vunpack.c.l.b16 %v950
    %v2944 = vunpack.c.l.b16 %v951
    %v2945 = vunpack.c.l.b16 %v952
    %v2946 = vunpack.c.l.b16 %v953
    %v2947 = vunpack.c.l.b16 %v954
    %v2948 = vunpack.c.l.b16 %v955
    %v2949 = vunpack.c.l.b16 %v956
    %v2950 = vunpack.c.l.b16 %v957
    %v2951 = vunpack.c.l.b16 %v958
    %v2952 = vunpack.c.l.b16 %v959
    %v2953 = vunpack.c.l.b16 %v960
    %v2954 = vunpack.c.l.b16 %v961
    %v2955 = vunpack.c.l.b16 %v962
    %v2956 = vunpack.c.l.b16 %v963
    %v2957 = vunpack.c.l.b16 %v964
    %v2958 = vunpack.c.l.b16 %v965
    %v2959 = vunpack.c.l.b16 %v966
    %v2960 = vunpack.c.l.b16 %v967
    %v2961 = vunpack.c.l.b16 %v968
    %v2962 = vunpack.c.l.b16 %v969
    %v2963 = vunpack.c.l.b16 %v970
    %v2964 = vunpack.c.l.b16 %v971
    %v2965 = vunpack.c.l.b16 %v972
    %v2966 = vunpack.c.l.b16 %v973
    %v2967 = vunpack.c.l.b16 %v974
    %v2968 = vunpack.c.l.b16 %v975
    %v2969 = vunpack.c.l.b16 %v976
    %v2970 = vunpack.c.l.b16 %v977
    %v2971 = vunpack.c.l.b16 %v978
    %v2972 = vunpack.c.l.b16 %v979
    %v2973 = vunpack.c.l.b16 %v980
    %v2974 = vunpack.c.l.b16 %v981
    %v2975 = vunpack.c.l.b16 %v982
    %v2976 = vunpack.c.l.b16 %v983
    %v2977 = vunpack.c.l.b16 %v984
    %v2978 = vunpack.c.l.b16 %v985
    %v2979 = vunpack.c.l.b16 %v986
    %v2980 = vunpack.c.l.b16 %v987
    %v2981 = vunpack.c.l.b16 %v988
    %v2982 = vunpack.c.l.b16 %v989
    %v2983 = vunpack.c.l.b16 %v990
    %v2984 = vunpack.c.l.b16 %v991
    %v2985 = vunpack.c.l.b16 %v992
    %v2986 = vunpack.c.l.b16 %v993
    %v2987 = vunpack.c.l.b16 %v994
    %v2988 = vunpack.c.l.b16 %v995
    %v2989 = vunpack.c.l.b16 %v996
    %v2990 = vunpack.c.l.b16 %v997
    %v2991 = vunpack.c.l.b16 %v998
    %v2992 = vunpack.c.l.b16 %v999
    %v2993 = vunpack.c.l.b16 %v1000
    %v2994 = vunpack.c.l.b16 %v1001
    %v2995 = vunpack.c.l.b16 %v1002
    %v2996 = vunpack.c.l.b16 %v1003
    %v2997 = vunpack.c.l.b16 %v1004
    %v2998 = vunpack.c.l.b16 %v1005
    %v2999 = vunpack.c.l.b16 %v1006
    %v3000 = vunpack.c.l.b16 %v1007
    %v3001 = vunpack.c.l.b16 %v1008
    %v3002 = vunpack.c.l.b16 %v1009
    %v3003 = vunpack.c.l.b16 %v1010
    %v3004 = vunpack.c.l.b16 %v1011
    %v3005 = vunpack.c.l.b16 %v1012
    %v3006 = vunpack.c.l.b16 %v1013
    %v3007 = vunpack.c.l.b16 %v1014
    %v3008 = vunpack.c.l.b16 %v1015
    %v3009 = vunpack.c.l.b16 %v1016
    %v3010 = vunpack.c.l.b16 %v1017
    %v3011 = vunpack.c.l.b16 %v1018
    %v3012 = vunpack.c.l.b16 %v1019
    %v3013 = vunpack.c.l.b16 %v1020
    %v3014 = vunpack.c.l.b16 %v1021
    %v3015 = vunpack.c.l.b16 %v1022
    %v3016 = vunpack.c.l.b16 %v1023
    %v3017 = vunpack.c.l.b16 %v1024
    %v3018 = vunpack.c.l.b16 %v1025
    %v3019 = vunpack.c.l.b16 %v1026
    %v3020 = vunpack.c.l.b16 %v1027
    %v3021 = vunpack.c.l.b16 %v1028
    %v3022 = vunpack.c.l.b16 %v1029
    %v3023 = vunpack.c.l.b16 %v1030
    %v3024 = vunpack.c.l.b16 %v1031
    %v3025 = vunpack.c.l.b16 %v1032
    %v3026 = vunpack.c.l.b16 %v1033
    %v3027 = vunpack.c.l.b16 %v1034
    %v3028 = vunpack.c.l.b16 %v1035
    %v3029 = vunpack.c.l.b16 %v1036
    %v3030 = vunpack.c.l.b16 %v1037
    %v3031 = vunpack.c.l.b16 %v1038
    %v3032 = vunpack.c.l.b16 %v1039
    %v3033 = vunpack.c.l.b16 %v1040
    %v3034 = vunpack.c.l.b16 %v1041
    %v3035 = vunpack.c.l.b16 %v1042
    %v3036 = vunpack.c.l.b16 %v1043
    %v3037 = vunpack.c.l.b16 %v1044
    %v3038 = vunpack.c.l.b16 %v1045
    %v3039 = vunpack.c.l.b16 %v1046
    %v3040 = vunpack.c.l.b16 %v1047
    %v3041 = vunpack.c.l.b16 %v1048
    %v3042 = vunpack.c.l.b16 %v1049
    %v3043 = vunpack.c.l.b16 %v1050
    %v3044 = vunpack.c.l.b16 %v1051
    %v3045 = vunpack.c.l.b16 %v1052
    %v3046 = vunpack.c.l.b16 %v1053
    %v3047 = vunpack.c.l.b16 %v1054
    %v3048 = vunpack.c.l.b16 %v1055
    %v3049 = vunpack.c.l.b16 %v1056
    %v3050 = vunpack.c.l.b16 %v1057
    %v3051 = vunpack.c.l.b16 %v1058
    %v3052 = vunpack.c.l.b16 %v1059
    %v3053 = vunpack.c.l.b16 %v1060
    %v3054 = vunpack.c.l.b16 %v1061
    %v3055 = vunpack.c.l.b16 %v1062
    %v3056 = vunpack.c.l.b16 %v1063
    %v3057 = vunpack.c.l.b16 %v1064
    %v3058 = vunpack.c.l.b16 %v1065
    %v3059 = vunpack.c.l.b16 %v1066
    %v3060 = vunpack.c.l.b16 %v1067
    %v3061 = vunpack.c.l.b16 %v1068
    %v3062 = vunpack.c.l.b16 %v1069
    %v3063 = vunpack.c.l.b16 %v1070
    %v3064 = vunpack.c.l.b16 %v1071
    %v3065 = vunpack.c.l.b16 %v1072
    %v3066 = vunpack.c.l.b16 %v1073
    %v3067 = vunpack.c.l.b16 %v1074
    %v3068 = vunpack.c.l.b16 %v1075
    %v3069 = vunpack.c.l.b16 %v1076
    %v3070 = vunpack.c.l.b16 %v1077
    %v3071 = vunpack.c.l.b16 %v1078
    %v3072 = vunpack.c.l.b16 %v1079
    %v3073 = vunpack.c.l.b16 %v1080
    %v3074 = vunpack.c.l.b16 %v1081
    %v3075 = vunpack.c.l.b16 %v1082
    %v3076 = vunpack.c.l.b16 %v1083
    %v3077 = vunpack.c.l.b16 %v1084
    %v3078 = vunpack.c.l.b16 %v1085
    %v3079 = vunpack.c.l.b16 %v1086
    %v3080 = vunpack.c.l.b16 %v1087
    %v3081 = vunpack.c.l.b16 %v1088
    %v3082 = vunpack.c.l.b16 %v1089
    %v3083 = vunpack.c.l.b16 %v1090
    %v3084 = vunpack.c.l.b16 %v1091
    %v3085 = vunpack.c.l.b16 %v1092
    %v3086 = vunpack.c.l.b16 %v1093
    %v3087 = vunpack.c.l.b16 %v1094
    %v3088 = vunpack.c.l.b16 %v1095
    %v3089 = vunpack.c.l.b16 %v1096
    %v3090 = vunpack.c.l.b16 %v1097
    %v3091 = vunpack.c.l.b16 %v1098
    %v3092 = vunpack.c.l.b16 %v1099
    %v3093 = vunpack.c.l.b16 %v1100
    %v3094 = vunpack.c.l.b16 %v1101
    %v3095 = vunpack.c.l.b16 %v1102
    %v3096 = vunpack.c.l.b16 %v1103
    %v3097 = vunpack.c.l.b16 %v1104
    %v3098 = vunpack.c.l.b16 %v1105
    %v3099 = vunpack.c.l.b16 %v1106
    %v3100 = vunpack.c.l.b16 %v1107
    %v3101 = vunpack.c.l.b16 %v1108
    %v3102 = vunpack.c.l.b16 %v1109
    %v3103 = vunpack.c.l.b16 %v1110
    %v3104 = vunpack.c.l.b16 %v1111
    %v3105 = vunpack.c.l.b16 %v1112
    %v3106 = vunpack.c.l.b16 %v1113
    %v3107 = vunpack.c.l.b16 %v1114
    %v3108 = vunpack.c.l.b16 %v1115
    %v3109 = vunpack.c.l.b16 %v1116
    %v3110 = vunpack.c.l.b16 %v1117
    %v3111 = vunpack.c.l.b16 %v1118
    %v3112 = vunpack.c.l.b16 %v1119
    %v3113 = vunpack.c.l.b16 %v1120
    %v3114 = vunpack.c.l.b16 %v1121
    %v3115 = vunpack.c.l.b16 %v1122
    %v3116 = vunpack.c.l.b16 %v1123
    %v3117 = vunpack.c.l.b16 %v1124
    %v3118 = vunpack.c.l.b16 %v1125
    %v3119 = vunpack.c.l.b16 %v1126
    %v3120 = vunpack.c.l.b16 %v1127
    %v3121 = vunpack.c.l.b16 %v1128
    %v3122 = vunpack.c.l.b16 %v1129
    %v3123 = vunpack.c.l.b16 %v1130
    %v3124 = vunpack.c.l.b16 %v1131
    %v3125 = vunpack.c.l.b16 %v1132
    %v3126 = vunpack.c.l.b16 %v1133
    %v3127 = vunpack.c.l.b16 %v1134
    %v3128 = vunpack.c.l.b16 %v1135
    %v3129 = vunpack.c.l.b16 %v1136
    %v3130 = vunpack.c.l.b16 %v1137
    %v3131 = vunpack.c.l.b16 %v1138
    %v3132 = vunpack.c.l.b16 %v1139
    %v3133 = vunpack.c.l.b16 %v1140
    %v3134 = vunpack.c.l.b16 %v1141
    %v3135 = vunpack.c.l.b16 %v1142
    %v3136 = vunpack.c.l.b16 %v1143
    %v3137 = vunpack.c.l.b16 %v1144
    %v3138 = vunpack.c.l.b16 %v1145
    %v3139 = vunpack.c.l.b16 %v1146
    %v3140 = vunpack.c.l.b16 %v1147
    %v3141 = vunpack.c.l.b16 %v1148
    %v3142 = vunpack.c.l.b16 %v1149
    %v3143 = vunpack.c.l.b16 %v1150
    %v3144 = vunpack.c.l.b16 %v1151
    %v3145 = vunpack.c.l.b16 %v1152
    %v3146 = vunpack.c.l.b16 %v1153
    %v3147 = vunpack.c.l.b16 %v1154
    %v3148 = vunpack.c.l.b16 %v1155
    %v3149 = vunpack.c.l.b16 %v1156
    %v3150 = vpack.c.b16 %v2367, %v2366
    %v3151 = vpack.c.b16 %v2369, %v2368
    %v3152 = vpack.c.b16 %v2371, %v2370
    %v3153 = vpack.c.b16 %v2373, %v2372
    %v3154 = vpack.c.b16 %v2375, %v2374
    %v3155 = vpack.c.b16 %v2377, %v2376
    %v3156 = vpack.c.b16 %v2379, %v2378
    %v3157 = vpack.c.b16 %v2381, %v2380
    %v3158 = vpack.c.b16 %v2383, %v2382
    %v3159 = vpack.c.b16 %v2385, %v2384
    %v3160 = vpack.c.b16 %v2387, %v2386
    %v3161 = vpack.c.b16 %v2389, %v2388
    %v3162 = vpack.c.b16 %v2391, %v2390
    %v3163 = vpack.c.b16 %v2393, %v2392
    %v3164 = vpack.c.b16 %v2395, %v2394
    %v3165 = vpack.c.b16 %v2397, %v2396
    %v3166 = vpack.c.b16 %v2399, %v2398
    %v3167 = vpack.c.b16 %v2401, %v2400
    %v3168 = vpack.c.b16 %v2403, %v2402
    %v3169 = vpack.c.b16 %v2405, %v2404
    %v3170 = vpack.c.b16 %v2407, %v2406
    %v3171 = vpack.c.b16 %v2409, %v2408
    %v3172 = vpack.c.b16 %v2411, %v2410
    %v3173 = vpack.c.b16 %v2413, %v2412
    %v3174 = vpack.c.b16 %v2415, %v2414
    %v3175 = vpack.c.b16 %v2417, %v2416
    %v3176 = vpack.c.b16 %v2419, %v2418
    %v3177 = vpack.c.b16 %v2421, %v2420
    %v3178 = vpack.c.b16 %v2423, %v2422
    %v3179 = vpack.c.b16 %v2425, %v2424
    %v3180 = vpack.c.b16 %v2427, %v2426
    %v3181 = vpack.c.b16 %v2429, %v2428
    %v3182 = vpack.c.b16 %v2431, %v2430
    %v3183 = vpack.c.b16 %v2433, %v2432
    %v3184 = vpack.c.b16 %v2435, %v2434
    %v3185 = vpack.c.b16 %v2437, %v2436
    %v3186 = vpack.c.b16 %v2439, %v2438
    %v3187 = vpack.c.b16 %v2441, %v2440
    %v3188 = vpack.c.b16 %v2443, %v2442
    %v3189 = vpack.c.b16 %v2445, %v2444
    %v3190 = vpack.c.b16 %v2447, %v2446
    %v3191 = vpack.c.b16 %v2449, %v2448
    %v3192 = vpack.c.b16 %v2451, %v2450
    %v3193 = vpack.c.b16 %v2453, %v2452
    %v3194 = vpack.c.b16 %v2455, %v2454
    %v3195 = vpack.c.b16 %v2457, %v2456
    %v3196 = vpack.c.b16 %v2459, %v2458
    %v3197 = vpack.c.b16 %v2461, %v2460
    %v3198 = vpack.c.b16 %v2463, %v2462
    %v3199 = vpack.c.b16 %v2465, %v2464
    %v3200 = vpack.c.b16 %v2467, %v2466
    %v3201 = vpack.c.b16 %v2469, %v2468
    %v3202 = vpack.c.b16 %v2471, %v2470
    %v3203 = vpack.c.b16 %v2473, %v2472
    %v3204 = vpack.c.b16 %v2475, %v2474
    %v3205 = vpack.c.b16 %v2477, %v2476
    %v3206 = vpack.c.b16 %v2479, %v2478
    %v3207 = vpack.c.b16 %v2481, %v2480
    %v3208 = vpack.c.b16 %v2483, %v2482
    %v3209 = vpack.c.b16 %v2485, %v2484
    %v3210 = vpack.c.b16 %v2487, %v2486
    %v3211 = vpack.c.b16 %v2489, %v2488
    %v3212 = vpack.c.b16 %v2491, %v2490
    %v3213 = vpack.c.b16 %v2493, %v2492
    %v3214 = vpack.c.b16 %v2495, %v2494
    %v3215 = vpack.c.b16 %v2497, %v2496
    %v3216 = vpack.c.b16 %v2499, %v2498
    %v3217 = vpack.c.b16 %v2501, %v2500
    %v3218 = vpack.c.b16 %v2503, %v2502
    %v3219 = vpack.c.b16 %v2505, %v2504
    %v3220 = vpack.c.b16 %v2507, %v2506
    %v3221 = vpack.c.b16 %v2509, %v2508
    %v3222 = vpack.c.b16 %v2511, %v2510
    %v3223 = vpack.c.b16 %v2513, %v2512
    %v3224 = vpack.c.b16 %v2515, %v2514
    %v3225 = vpack.c.b16 %v2517, %v2516
    %v3226 = vpack.c.b16 %v2519, %v2518
    %v3227 = vpack.c.b16 %v2521, %v2520
    %v3228 = vpack.c.b16 %v2523, %v2522
    %v3229 = vpack.c.b16 %v2525, %v2524
    %v3230 = vpack.c.b16 %v2527, %v2526
    %v3231 = vpack.c.b16 %v2529, %v2528
    %v3232 = vpack.c.b16 %v2531, %v2530
    %v3233 = vpack.c.b16 %v2533, %v2532
    %v3234 = vpack.c.b16 %v2535, %v2534
    %v3235 = vpack.c.b16 %v2537, %v2536
    %v3236 = vpack.c.b16 %v2539, %v2538
    %v3237 = vpack.c.b16 %v2541, %v2540
    %v3238 = vpack.c.b16 %v2543, %v2542
    %v3239 = vpack.c.b16 %v2545, %v2544
    %v3240 = vpack.c.b16 %v2547, %v2546
    %v3241 = vpack.c.b16 %v2549, %v2548
    %v3242 = vpack.c.b16 %v2551, %v2550
    %v3243 = vpack.c.b16 %v2553, %v2552
    %v3244 = vpack.c.b16 %v2555, %v2554
    %v3245 = vpack.c.b16 %v2557, %v2556
    %v3246 = vpack.c.b16 %v2559, %v2558
    %v3247 = vpack.c.b16 %v2561, %v2560
    %v3248 = vpack.c.b16 %v2563, %v2562
    %v3249 = vpack.c.b16 %v2565, %v2564
    %v3250 = vpack.c.b16 %v2567, %v2566
    %v3251 = vpack.c.b16 %v2569, %v2568
    %v3252 = vpack.c.b16 %v2571, %v2570
    %v3253 = vpack.c.b16 %v2573, %v2572
    %v3254 = vpack.c.b16 %v2575, %v2574
    %v3255 = vpack.c.b16 %v2577, %v2576
    %v3256 = vpack.c.b16 %v2579, %v2578
    %v3257 = vpack.c.b16 %v2581, %v2580
    %v3258 = vpack.c.b16 %v2583, %v2582
    %v3259 = vpack.c.b16 %v2585, %v2584
    %v3260 = vpack.c.b16 %v2587, %v2586
    %v3261 = vpack.c.b16 %v2589, %v2588
    %v3262 = vpack.c.b16 %v2591, %v2590
    %v3263 = vpack.c.b16 %v2593, %v2592
    %v3264 = vpack.c.b16 %v2595, %v2594
    %v3265 = vpack.c.b16 %v2597, %v2596
    %v3266 = vpack.c.b16 %v2599, %v2598
    %v3267 = vpack.c.b16 %v2601, %v2600
    %v3268 = vpack.c.b16 %v2603, %v2602
    %v3269 = vpack.c.b16 %v2605, %v2604
    %v3270 = vpack.c.b16 %v2607, %v2606
    %v3271 = vpack.c.b16 %v2609, %v2608
    %v3272 = vpack.c.b16 %v2611, %v2610
    %v3273 = vpack.c.b16 %v2613, %v2612
    %v3274 = vpack.c.b16 %v2615, %v2614
    %v3275 = vpack.c.b16 %v2617, %v2616
    %v3276 = vpack.c.b16 %v2619, %v2618
    %v3277 = vpack.c.b16 %v2621, %v2620
    %v3278 = vpack.c.b16 %v2623, %v2622
    %v3279 = vpack.c.b16 %v2625, %v2624
    %v3280 = vpack.c.b16 %v2627, %v2626
    %v3281 = vpack.c.b16 %v2629, %v2628
    %v3282 = vpack.c.b16 %v2631, %v2630
    %v3283 = vpack.c.b16 %v2633, %v2632
    %v3284 = vpack.c.b16 %v2635, %v2634
    %v3285 = vpack.c.b16 %v2637, %v2636
    %v3286 = vpack.c.b16 %v2639, %v2638
    %v3287 = vpack.c.b16 %v2641, %v2640
    %v3288 = vpack.c.b16 %v2643, %v2642
    %v3289 = vpack.c.b16 %v2645, %v2644
    %v3290 = vpack.c.b16 %v2647, %v2646
    %v3291 = vpack.c.b16 %v2649, %v2648
    %v3292 = vpack.c.b16 %v2651, %v2650
    %v3293 = vpack.c.b16 %v2653, %v2652
    %v3294 = vpack.c.b16 %v2655, %v2654
    %v3295 = vpack.c.b16 %v2657, %v2656
    %v3296 = vpack.c.b16 %v2659, %v2658
    %v3297 = vpack.c.b16 %v2661, %v2660
    %v3298 = vpack.c.b16 %v2663, %v2662
    %v3299 = vpack.c.b16 %v2665, %v2664
    %v3300 = vpack.c.b16 %v2667, %v2666
    %v3301 = vpack.c.b16 %v2669, %v2668
    %v3302 = vpack.c.b16 %v2671, %v2670
    %v3303 = vpack.c.b16 %v2673, %v2672
    %v3304 = vpack.c.b16 %v2675, %v2674
    %v3305 = vpack.c.b16 %v2677, %v2676
    %v3306 = vpack.c.b16 %v2679, %v2678
    %v3307 = vpack.c.b16 %v2681, %v2680
    %v3308 = vpack.c.b16 %v2683, %v2682
    %v3309 = vpack.c.b16 %v2685, %v2684
    %v3310 = vpack.c.b16 %v2687, %v2686
    %v3311 = vpack.c.b16 %v2689, %v2688
    %v3312 = vpack.c.b16 %v2691, %v2690
    %v3313 = vpack.c.b16 %v2693, %v2692
    %v3314 = vpack.c.b16 %v2695, %v2694
    %v3315 = vpack.c.b16 %v2697, %v2696
    %v3316 = vpack.c.b16 %v2699, %v2698
    %v3317 = vpack.c.b16 %v2701, %v2700
    %v3318 = vpack.c.b16 %v2703, %v2702
    %v3319 = vpack.c.b16 %v2705, %v2704
    %v3320 = vpack.c.b16 %v2707, %v2706
    %v3321 = vpack.c.b16 %v2709, %v2708
    %v3322 = vpack.c.b16 %v2711, %v2710
    %v3323 = vpack.c.b16 %v2713, %v2712
    %v3324 = vpack.c.b16 %v2715, %v2714
    %v3325 = vpack.c.b16 %v2717, %v2716
    %v3326 = vpack.c.b16 %v2719, %v2718
    %v3327 = vpack.c.b16 %v2721, %v2720
    %v3328 = vpack.c.b16 %v2723, %v2722
    %v3329 = vpack.c.b16 %v2725, %v2724
    %v3330 = vpack.c.b16 %v2727, %v2726
    %v3331 = vpack.c.b16 %v2729, %v2728
    %v3332 = vpack.c.b16 %v2731, %v2730
    %v3333 = vpack.c.b16 %v2733, %v2732
    %v3334 = vpack.c.b16 %v2735, %v2734
    %v3335 = vpack.c.b16 %v2737, %v2736
    %v3336 = vpack.c.b16 %v2739, %v2738
    %v3337 = vpack.c.b16 %v2741, %v2740
    %v3338 = vpack.c.b16 %v2743, %v2742
    %v3339 = vpack.c.b16 %v2745, %v2744
    %v3340 = vpack.c.b16 %v2747, %v2746
    %v3341 = vpack.c.b16 %v2749, %v2748
    %v3342 = vpack.c.b16 %v2751, %v2750
    %v3343 = vpack.c.b16 %v2753, %v2752
    %v3344 = vpack.c.b16 %v2755, %v2754
    %v3345 = vpack.c.b16 %v2757, %v2756
    %v3346 = vpack.c.b16 %v2759, %v2758
    %v3347 = vpack.c.b16 %v2761, %v2760
    %v3348 = vpack.c.b16 %v2763, %v2762
    %v3349 = vpack.c.b16 %v2765, %v2764
    %v3350 = vpack.c.b16 %v2767, %v2766
    %v3351 = vpack.c.b16 %v2769, %v2768
    %v3352 = vpack.c.b16 %v2771, %v2770
    %v3353 = vpack.c.b16 %v2773, %v2772
    %v3354 = vpack.c.b16 %v2775, %v2774
    %v3355 = vpack.c.b16 %v2777, %v2776
    %v3356 = vpack.c.b16 %v2779, %v2778
    %v3357 = vpack.c.b16 %v2781, %v2780
    %v3358 = vpack.c.b16 %v2783, %v2782
    %v3359 = vpack.c.b16 %v2785, %v2784
    %v3360 = vpack.c.b16 %v2787, %v2786
    %v3361 = vpack.c.b16 %v2789, %v2788
    %v3362 = vpack.c.b16 %v2791, %v2790
    %v3363 = vpack.c.b16 %v2793, %v2792
    %v3364 = vpack.c.b16 %v2795, %v2794
    %v3365 = vpack.c.b16 %v2797, %v2796
    %v3366 = vpack.c.b16 %v2799, %v2798
    %v3367 = vpack.c.b16 %v2801, %v2800
    %v3368 = vpack.c.b16 %v2803, %v2802
    %v3369 = vpack.c.b16 %v2805, %v2804
    %v3370 = vpack.c.b16 %v2807, %v2806
    %v3371 = vpack.c.b16 %v2809, %v2808
    %v3372 = vpack.c.b16 %v2811, %v2810
    %v3373 = vpack.c.b16 %v2813, %v2812
    %v3374 = vpack.c.b16 %v2815, %v2814
    %v3375 = vpack.c.b16 %v2817, %v2816
    %v3376 = vpack.c.b16 %v2819, %v2818
    %v3377 = vpack.c.b16 %v2821, %v2820
    %v3378 = vpack.c.b16 %v2823, %v2822
    %v3379 = vpack.c.b16 %v2825, %v2824
    %v3380 = vpack.c.b16 %v2827, %v2826
    %v3381 = vpack.c.b16 %v2829, %v2828
    %v3382 = vpack.c.b16 %v2831, %v2830
    %v3383 = vpack.c.b16 %v2833, %v2832
    %v3384 = vpack.c.b16 %v2835, %v2834
    %v3385 = vpack.c.b16 %v2837, %v2836
    %v3386 = vpack.c.b16 %v2839, %v2838
    %v3387 = vpack.c.b16 %v2841, %v2840
    %v3388 = vpack.c.b16 %v2843, %v2842
    %v3389 = vpack.c.b16 %v2845, %v2844
    %v3390 = vpack.c.b16 %v2847, %v2846
    %v3391 = vpack.c.b16 %v2849, %v2848
    %v3392 = vpack.c.b16 %v2851, %v2850
    %v3393 = vpack.c.b16 %v2853, %v2852
    %v3394 = vpack.c.b16 %v2855, %v2854
    %v3395 = vpack.c.b16 %v2857, %v2856
    %v3396 = vpack.c.b16 %v2859, %v2858
    %v3397 = vpack.c.b16 %v2861, %v2860
    %v3398 = vpack.c.b16 %v2863, %v2862
    %v3399 = vpack.c.b16 %v2865, %v2864
    %v3400 = vpack.c.b16 %v2867, %v2866
    %v3401 = vpack.c.b16 %v2869, %v2868
    %v3402 = vpack.c.b16 %v2871, %v2870
    %v3403 = vpack.c.b16 %v2873, %v2872
    %v3404 = vpack.c.b16 %v2875, %v2874
    %v3405 = vpack.c.b16 %v2877, %v2876
    %v3406 = vpack.c.b16 %v2879, %v2878
    %v3407 = vpack.c.b16 %v2881, %v2880
    %v3408 = vpack.c.b16 %v2883, %v2882
    %v3409 = vpack.c.b16 %v2885, %v2884
    %v3410 = vpack.c.b16 %v2887, %v2886
    %v3411 = vpack.c.b16 %v2889, %v2888
    %v3412 = vpack.c.b16 %v2891, %v2890
    %v3413 = vpack.c.b16 %v2893, %v2892
    %v3414 = vpack.c.b16 %v2895, %v2894
    %v3415 = vpack.c.b16 %v2897, %v2896
    %v3416 = vpack.c.b16 %v2899, %v2898
    %v3417 = vpack.c.b16 %v2901, %v2900
    %v3418 = vpack.c.b16 %v2903, %v2902
    %v3419 = vpack.c.b16 %v2905, %v2904
    %v3420 = vpack.c.b16 %v2907, %v2906
    %v3421 = vpack.c.b16 %v2909, %v2908
    %v3422 = vpack.c.b16 %v2911, %v2910
    %v3423 = vpack.c.b16 %v2913, %v2912
    %v3424 = vpack.c.b16 %v2915, %v2914
    %v3425 = vpack.c.b16 %v2917, %v2916
    %v3426 = vpack.c.b16 %v2919, %v2918
    %v3427 = vpack.c.b16 %v2921, %v2920
    %v3428 = vpack.c.b16 %v2923, %v2922
    %v3429 = vpack.c.b16 %v2925, %v2924
    %v3430 = vpack.c.b16 %v2927, %v2926
    %v3431 = vpack.c.b16 %v2929, %v2928
    %v3432 = vpack.c.b16 %v2931, %v2930
    %v3433 = vpack.c.b16 %v2933, %v2932
    %v3434 = vpack.c.b16 %v2935, %v2934
    %v3435 = vpack.c.b16 %v2937, %v2936
    %v3436 = vpack.c.b16 %v2939, %v2938
    %v3437 = vpack.c.b16 %v2941, %v2940
    %v3438 = vpack.c.b16 %v2943, %v2942
    %v3439 = vpack.c.b16 %v2945, %v2944
    %v3440 = vpack.c.b16 %v2947, %v2946
    %v3441 = vpack.c.b16 %v2949, %v2948
    %v3442 = vpack.c.b16 %v2951, %v2950
    %v3443 = vpack.c.b16 %v2953, %v2952
    %v3444 = vpack.c.b16 %v2955, %v2954
    %v3445 = vpack.c.b16 %v2957, %v2956
    %v3446 = vpack.c.b16 %v2959, %v2958
    %v3447 = vpack.c.b16 %v2961, %v2960
    %v3448 = vpack.c.b16 %v2963, %v2962
    %v3449 = vpack.c.b16 %v2965, %v2964
    %v3450 = vpack.c.b16 %v2967, %v2966
    %v3451 = vpack.c.b16 %v2969, %v2968
    %v3452 = vpack.c.b16 %v2971, %v2970
    %v3453 = vpack.c.b16 %v2973, %v2972
    %v3454 = vpack.c.b16 %v2975, %v2974
    %v3455 = vpack.c.b16 %v2977, %v2976
    %v3456 = vpack.c.b16 %v2979, %v2978
    %v3457 = vpack.c.b16 %v2981, %v2980
    %v3458 = vpack.c.b16 %v2983, %v2982
    %v3459 = vpack.c.b16 %v2985, %v2984
    %v3460 = vpack.c.b16 %v2987, %v2986
    %v3461 = vpack.c.b16 %v2989, %v2988
    %v3462 = vpack.c.b16 %v2991, %v2990
    %v3463 = vpack.c.b16 %v2993, %v2992
    %v3464 = vpack.c.b16 %v2995, %v2994
    %v3465 = vpack.c.b16 %v2997, %v2996
    %v3466 = vpack.c.b16 %v2999, %v2998
    %v3467 = vpack.c.b16 %v3001, %v3000
    %v3468 = vpack.c.b16 %v3003, %v3002
    %v3469 = vpack.c.b16 %v3005, %v3004
    %v3470 = vpack.c.b16 %v3007, %v3006
    %v3471 = vpack.c.b16 %v3009, %v3008
    %v3472 = vpack.c.b16 %v3011, %v3010
    %v3473 = vpack.c.b16 %v3013, %v3012
    %v3474 = vpack.c.b16 %v3015, %v3014
    %v3475 = vpack.c.b16 %v3017, %v3016
    %v3476 = vpack.c.b16 %v3019, %v3018
    %v3477 = vpack.c.b16 %v3021, %v3020
    %v3478 = vpack.c.b16 %v3023, %v3022
    %v3479 = vpack.c.b16 %v3025, %v3024
    %v3480 = vpack.c.b16 %v3027, %v3026
    %v3481 = vpack.c.b16 %v3029, %v3028
    %v3482 = vpack.c.b16 %v3031, %v3030
    %v3483 = vpack.c.b16 %v3033, %v3032
    %v3484 = vpack.c.b16 %v3035, %v3034
    %v3485 = vpack.c.b16 %v3037, %v3036
    %v3486 = vpack.c.b16 %v3039, %v3038
    %v3487 = vpack.c.b16 %v3041, %v3040
    %v3488 = vpack.c.b16 %v3043, %v3042
    %v3489 = vpack.c.b16 %v3045, %v3044
    %v3490 = vpack.c.b16 %v3047, %v3046
    %v3491 = vpack.c.b16 %v3049, %v3048
    %v3492 = vpack.c.b16 %v3051, %v3050
    %v3493 = vpack.c.b16 %v3053, %v3052
    %v3494 = vpack.c.b16 %v3055, %v3054
    %v3495 = vpack.c.b16 %v3057, %v3056
    %v3496 = vpack.c.b16 %v3059, %v3058
    %v3497 = vpack.c.b16 %v3061, %v3060
    %v3498 = vpack.c.b16 %v3063, %v3062
    %v3499 = vpack.c.b16 %v3065, %v3064
    %v3500 = vpack.c.b16 %v3067, %v3066
    %v3501 = vpack.c.b16 %v3069, %v3068
    %v3502 = vpack.c.b16 %v3071, %v3070
    %v3503 = vpack.c.b16 %v3073, %v3072
    %v3504 = vpack.c.b16 %v3075, %v3074
    %v3505 = vpack.c.b16 %v3077, %v3076
    %v3506 = vpack.c.b16 %v3079, %v3078
    %v3507 = vpack.c.b16 %v3081, %v3080
    %v3508 = vpack.c.b16 %v3083, %v3082
    %v3509 = vpack.c.b16 %v3085, %v3084
    %v3510 = vpack.c.b16 %v3087, %v3086
    %v3511 = vpack.c.b16 %v3089, %v3088
    %v3512 = vpack.c.b16 %v3091, %v3090
    %v3513 = vpack.c.b16 %v3093, %v3092
    %v3514 = vpack.c.b16 %v3095, %v3094
    %v3515 = vpack.c.b16 %v3097, %v3096
    %v3516 = vpack.c.b16 %v3099, %v3098
    %v3517 = vpack.c.b16 %v3101, %v3100
    %v3518 = vpack.c.b16 %v3103, %v3102
    %v3519 = vpack.c.b16 %v3105, %v3104
    %v3520 = vpack.c.b16 %v3107, %v3106
    %v3521 = vpack.c.b16 %v3109, %v3108
    %v3522 = vpack.c.b16 %v3111, %v3110
    %v3523 = vpack.c.b16 %v3113, %v3112
    %v3524 = vpack.c.b16 %v3115, %v3114
    %v3525 = vpack.c.b16 %v3117, %v3116
    %v3526 = vpack.c.b16 %v3119, %v3118
    %v3527 = vpack.c.b16 %v3121, %v3120
    %v3528 = vpack.c.b16 %v3123, %v3122
    %v3529 = vpack.c.b16 %v3125, %v3124
    %v3530 = vpack.c.b16 %v3127, %v3126
    %v3531 = vpack.c.b16 %v3129, %v3128
    %v3532 = vpack.c.b16 %v3131, %v3130
    %v3533 = vpack.c.b16 %v3133, %v3132
    %v3534 = vpack.c.b16 %v3135, %v3134
    %v3535 = vpack.c.b16 %v3137, %v3136
    %v3536 = vpack.c.b16 %v3139, %v3138
    %v3537 = vpack.c.b16 %v3141, %v3140
    %v3538 = vpack.c.b16 %v3143, %v3142
    %v3539 = vpack.c.b16 %v3145, %v3144
    %v3540 = vpack.c.b16 %v3147, %v3146
    %v3541 = vpack.c.b16 %v3149, %v3148
    %3934 = vmatprep.subr.bf16.mxu0 0
    %3935 = vmatpush1.bf16.msra.mxu0 %v3157
    %3936 = vmatprep.subr.bf16.mxu0 0
    %3937 = vmatpush1.bf16.msra.mxu0 %v3156
    %3938 = vmatprep.subr.bf16.mxu0 0
    %3939 = vmatpush1.bf16.msra.mxu0 %v3155
    %3940 = vmatprep.subr.bf16.mxu0 0
    %3941 = vmatpush1.bf16.msra.mxu0 %v3154
    %3942 = vmatprep.subr.bf16.mxu0 0
    %3943 = vmatpush1.bf16.msra.mxu0 %v3153
    %3944 = vmatprep.subr.bf16.mxu0 0
    %3945 = vmatpush1.bf16.msra.mxu0 %v3152
    %3946 = vmatprep.subr.bf16.mxu0 0
    %3947 = vmatpush1.bf16.msra.mxu0 %v3151
    %3948 = vmatprep.subr.bf16.mxu0 0
    %3949 = vmatpush1.bf16.msra.mxu0 %v3150
    %3950 = vmatprep.subr.bf16.mxu0 0
    %3951 = vmatpush2.bf16.msra.mxu0 %v3165
    %3952 = vmatprep.subr.bf16.mxu0 0
    %3953 = vmatpush2.bf16.msra.mxu0 %v3164
    %3954 = vmatprep.subr.bf16.mxu0 0
    %3955 = vmatpush2.bf16.msra.mxu0 %v3163
    %3956 = vmatprep.subr.bf16.mxu0 0
    %3957 = vmatpush2.bf16.msra.mxu0 %v3162
    %3958 = vmatprep.subr.bf16.mxu0 0
    %3959 = vmatpush2.bf16.msra.mxu0 %v3161
    %3960 = vmatprep.subr.bf16.mxu0 0
    %3961 = vmatpush2.bf16.msra.mxu0 %v3160
    %3962 = vmatprep.subr.bf16.mxu0 0
    %3963 = vmatpush2.bf16.msra.mxu0 %v3159
    %3964 = vmatprep.subr.bf16.mxu0 0
    %3965 = vmatpush2.bf16.msra.mxu0 %v3158
    %3966 = vmatprep.mubr.bf16.mxu0 %v1262
    %3967 = vmatmul.mubr.bf16.gmra.mxu0 %v1248
    %v3968 = vpop.f32.mrf.mxu0
    %v3969 = vadd.f32 %v1213, %v3968
    %v3970 = vpop.f32.mrf.mxu0
    %v3971 = vpop.f32.mrf.mxu0
    %v3972 = vpop.f32.mrf.mxu0
    %3973 = vdwg.mxu0
    %3974 = vmatprep.subr.bf16.mxu0 0
    %3975 = vmatpush1.bf16.msra.mxu0 %v3173
    %3976 = vmatprep.subr.bf16.mxu0 0
    %3977 = vmatpush1.bf16.msra.mxu0 %v3172
    %3978 = vmatprep.subr.bf16.mxu0 0
    %3979 = vmatpush1.bf16.msra.mxu0 %v3171
    %3980 = vmatprep.subr.bf16.mxu0 0
    %3981 = vmatpush1.bf16.msra.mxu0 %v3170
    %3982 = vmatprep.subr.bf16.mxu0 0
    %3983 = vmatpush1.bf16.msra.mxu0 %v3169
    %3984 = vmatprep.subr.bf16.mxu0 0
    %3985 = vmatpush1.bf16.msra.mxu0 %v3168
    %3986 = vmatprep.subr.bf16.mxu0 0
    %3987 = vmatpush1.bf16.msra.mxu0 %v3167
    %3988 = vmatprep.subr.bf16.mxu0 0
    %3989 = vmatpush1.bf16.msra.mxu0 %v3166
    %3990 = vmatprep.subr.bf16.mxu0 0
    %3991 = vmatpush2.bf16.msra.mxu0 %v3181
    %3992 = vmatprep.subr.bf16.mxu0 0
    %3993 = vmatpush2.bf16.msra.mxu0 %v3180
    %3994 = vmatprep.subr.bf16.mxu0 0
    %3995 = vmatpush2.bf16.msra.mxu0 %v3179
    %3996 = vmatprep.subr.bf16.mxu0 0
    %3997 = vmatpush2.bf16.msra.mxu0 %v3178
    %3998 = vmatprep.subr.bf16.mxu0 0
    %3999 = vmatpush2.bf16.msra.mxu0 %v3177
    %4000 = vmatprep.subr.bf16.mxu0 0
    %4001 = vmatpush2.bf16.msra.mxu0 %v3176
    %4002 = vmatprep.subr.bf16.mxu0 0
    %4003 = vmatpush2.bf16.msra.mxu0 %v3175
    %4004 = vmatprep.subr.bf16.mxu0 0
    %4005 = vmatpush2.bf16.msra.mxu0 %v3174
    %4006 = vmatprep.mubr.bf16.mxu0 %v1272
    %4007 = vmatmul.mubr.bf16.gmra.mxu0 %v1270
    %v4008 = vpop.f32.mrf.mxu0
    %v4009 = vadd.f32 %v3969, %v4008
    %v4010 = vpop.f32.mrf.mxu0
    %v4011 = vpop.f32.mrf.mxu0
    %v4012 = vpop.f32.mrf.mxu0
    %4013 = vdwg.mxu0
    %4014 = vmatprep.subr.bf16.mxu0 0
    %4015 = vmatpush1.bf16.msra.mxu0 %v3189
    %4016 = vmatprep.subr.bf16.mxu0 0
    %4017 = vmatpush1.bf16.msra.mxu0 %v3188
    %4018 = vmatprep.subr.bf16.mxu0 0
    %4019 = vmatpush1.bf16.msra.mxu0 %v3187
    %4020 = vmatprep.subr.bf16.mxu0 0
    %4021 = vmatpush1.bf16.msra.mxu0 %v3186
    %4022 = vmatprep.subr.bf16.mxu0 0
    %4023 = vmatpush1.bf16.msra.mxu0 %v3185
    %4024 = vmatprep.subr.bf16.mxu0 0
    %4025 = vmatpush1.bf16.msra.mxu0 %v3184
    %4026 = vmatprep.subr.bf16.mxu0 0
    %4027 = vmatpush1.bf16.msra.mxu0 %v3183
    %4028 = vmatprep.subr.bf16.mxu0 0
    %4029 = vmatpush1.bf16.msra.mxu0 %v3182
    %4030 = vmatprep.subr.bf16.mxu0 0
    %4031 = vmatpush2.bf16.msra.mxu0 %v3197
    %4032 = vmatprep.subr.bf16.mxu0 0
    %4033 = vmatpush2.bf16.msra.mxu0 %v3196
    %4034 = vmatprep.subr.bf16.mxu0 0
    %4035 = vmatpush2.bf16.msra.mxu0 %v3195
    %4036 = vmatprep.subr.bf16.mxu0 0
    %4037 = vmatpush2.bf16.msra.mxu0 %v3194
    %4038 = vmatprep.subr.bf16.mxu0 0
    %4039 = vmatpush2.bf16.msra.mxu0 %v3193
    %4040 = vmatprep.subr.bf16.mxu0 0
    %4041 = vmatpush2.bf16.msra.mxu0 %v3192
    %4042 = vmatprep.subr.bf16.mxu0 0
    %4043 = vmatpush2.bf16.msra.mxu0 %v3191
    %4044 = vmatprep.subr.bf16.mxu0 0
    %4045 = vmatpush2.bf16.msra.mxu0 %v3190
    %4046 = vmatprep.mubr.bf16.mxu0 %v1269
    %4047 = vmatmul.mubr.bf16.gmra.mxu0 %v1255
    %v4048 = vpop.f32.mrf.mxu0
    %v4049 = vadd.f32 %v4009, %v4048
    %v4050 = vpop.f32.mrf.mxu0
    %v4051 = vpop.f32.mrf.mxu0
    %v4052 = vpop.f32.mrf.mxu0
    %4053 = vdwg.mxu0
    %4054 = vmatprep.subr.bf16.mxu0 0
    %4055 = vmatpush1.bf16.msra.mxu0 %v3205
    %4056 = vmatprep.subr.bf16.mxu0 0
    %4057 = vmatpush1.bf16.msra.mxu0 %v3204
    %4058 = vmatprep.subr.bf16.mxu0 0
    %4059 = vmatpush1.bf16.msra.mxu0 %v3203
    %4060 = vmatprep.subr.bf16.mxu0 0
    %4061 = vmatpush1.bf16.msra.mxu0 %v3202
    %4062 = vmatprep.subr.bf16.mxu0 0
    %4063 = vmatpush1.bf16.msra.mxu0 %v3201
    %4064 = vmatprep.subr.bf16.mxu0 0
    %4065 = vmatpush1.bf16.msra.mxu0 %v3200
    %4066 = vmatprep.subr.bf16.mxu0 0
    %4067 = vmatpush1.bf16.msra.mxu0 %v3199
    %4068 = vmatprep.subr.bf16.mxu0 0
    %4069 = vmatpush1.bf16.msra.mxu0 %v3198
    %4070 = vmatprep.subr.bf16.mxu0 0
    %4071 = vmatpush2.bf16.msra.mxu0 %v3213
    %4072 = vmatprep.subr.bf16.mxu0 0
    %4073 = vmatpush2.bf16.msra.mxu0 %v3212
    %4074 = vmatprep.subr.bf16.mxu0 0
    %4075 = vmatpush2.bf16.msra.mxu0 %v3211
    %4076 = vmatprep.subr.bf16.mxu0 0
    %4077 = vmatpush2.bf16.msra.mxu0 %v3210
    %4078 = vmatprep.subr.bf16.mxu0 0
    %4079 = vmatpush2.bf16.msra.mxu0 %v3209
    %4080 = vmatprep.subr.bf16.mxu0 0
    %4081 = vmatpush2.bf16.msra.mxu0 %v3208
    %4082 = vmatprep.subr.bf16.mxu0 0
    %4083 = vmatpush2.bf16.msra.mxu0 %v3207
    %4084 = vmatprep.subr.bf16.mxu0 0
    %4085 = vmatpush2.bf16.msra.mxu0 %v3206
    %4086 = vmatprep.mubr.bf16.mxu0 %v1273
    %4087 = vmatmul.mubr.bf16.gmra.mxu0 %v1271
    %v4088 = vpop.f32.mrf.mxu0
    %v4089 = vadd.f32 %v4049, %v4088
    %v4090 = vpop.f32.mrf.mxu0
    %v4091 = vpop.f32.mrf.mxu0
    %v4092 = vpop.f32.mrf.mxu0
    %4093 = vdwg.mxu0
    %4094 = vmatprep.subr.bf16.mxu0 0
    %4095 = vmatpush1.bf16.msra.mxu0 %v3221
    %4096 = vmatprep.subr.bf16.mxu0 0
    %4097 = vmatpush1.bf16.msra.mxu0 %v3220
    %4098 = vmatprep.subr.bf16.mxu0 0
    %4099 = vmatpush1.bf16.msra.mxu0 %v3219
    %4100 = vmatprep.subr.bf16.mxu0 0
    %4101 = vmatpush1.bf16.msra.mxu0 %v3218
    %4102 = vmatprep.subr.bf16.mxu0 0
    %4103 = vmatpush1.bf16.msra.mxu0 %v3217
    %4104 = vmatprep.subr.bf16.mxu0 0
    %4105 = vmatpush1.bf16.msra.mxu0 %v3216
    %4106 = vmatprep.subr.bf16.mxu0 0
    %4107 = vmatpush1.bf16.msra.mxu0 %v3215
    %4108 = vmatprep.subr.bf16.mxu0 0
    %4109 = vmatpush1.bf16.msra.mxu0 %v3214
    %4110 = vmatprep.subr.bf16.mxu0 0
    %4111 = vmatpush2.bf16.msra.mxu0 %v3229
    %4112 = vmatprep.subr.bf16.mxu0 0
    %4113 = vmatpush2.bf16.msra.mxu0 %v3228
    %4114 = vmatprep.subr.bf16.mxu0 0
    %4115 = vmatpush2.bf16.msra.mxu0 %v3227
    %4116 = vmatprep.subr.bf16.mxu0 0
    %4117 = vmatpush2.bf16.msra.mxu0 %v3226
    %4118 = vmatprep.subr.bf16.mxu0 0
    %4119 = vmatpush2.bf16.msra.mxu0 %v3225
    %4120 = vmatprep.subr.bf16.mxu0 0
    %4121 = vmatpush2.bf16.msra.mxu0 %v3224
    %4122 = vmatprep.subr.bf16.mxu0 0
    %4123 = vmatpush2.bf16.msra.mxu0 %v3223
    %4124 = vmatprep.subr.bf16.mxu0 0
    %4125 = vmatpush2.bf16.msra.mxu0 %v3222
    %4126 = vmatprep.mubr.bf16.mxu0 %v1311
    %4127 = vmatmul.mubr.bf16.gmra.mxu0 %v1297
    %v4128 = vpop.f32.mrf.mxu0
    %v4129 = vadd.f32 %v4089, %v4128
    %v4130 = vpop.f32.mrf.mxu0
    %v4131 = vpop.f32.mrf.mxu0
    %v4132 = vpop.f32.mrf.mxu0
    %4133 = vdwg.mxu0
    %4134 = vmatprep.subr.bf16.mxu0 0
    %4135 = vmatpush1.bf16.msra.mxu0 %v3237
    %4136 = vmatprep.subr.bf16.mxu0 0
    %4137 = vmatpush1.bf16.msra.mxu0 %v3236
    %4138 = vmatprep.subr.bf16.mxu0 0
    %4139 = vmatpush1.bf16.msra.mxu0 %v3235
    %4140 = vmatprep.subr.bf16.mxu0 0
    %4141 = vmatpush1.bf16.msra.mxu0 %v3234
    %4142 = vmatprep.subr.bf16.mxu0 0
    %4143 = vmatpush1.bf16.msra.mxu0 %v3233
    %4144 = vmatprep.subr.bf16.mxu0 0
    %4145 = vmatpush1.bf16.msra.mxu0 %v3232
    %4146 = vmatprep.subr.bf16.mxu0 0
    %4147 = vmatpush1.bf16.msra.mxu0 %v3231
    %4148 = vmatprep.subr.bf16.mxu0 0
    %4149 = vmatpush1.bf16.msra.mxu0 %v3230
    %4150 = vmatprep.subr.bf16.mxu0 0
    %4151 = vmatpush2.bf16.msra.mxu0 %v3245
    %4152 = vmatprep.subr.bf16.mxu0 0
    %4153 = vmatpush2.bf16.msra.mxu0 %v3244
    %4154 = vmatprep.subr.bf16.mxu0 0
    %4155 = vmatpush2.bf16.msra.mxu0 %v3243
    %4156 = vmatprep.subr.bf16.mxu0 0
    %4157 = vmatpush2.bf16.msra.mxu0 %v3242
    %4158 = vmatprep.subr.bf16.mxu0 0
    %4159 = vmatpush2.bf16.msra.mxu0 %v3241
    %4160 = vmatprep.subr.bf16.mxu0 0
    %4161 = vmatpush2.bf16.msra.mxu0 %v3240
    %4162 = vmatprep.subr.bf16.mxu0 0
    %4163 = vmatpush2.bf16.msra.mxu0 %v3239
    %4164 = vmatprep.subr.bf16.mxu0 0
    %4165 = vmatpush2.bf16.msra.mxu0 %v3238
    %4166 = vmatprep.mubr.bf16.mxu0 %v1321
    %4167 = vmatmul.mubr.bf16.gmra.mxu0 %v1319
    %v4168 = vpop.f32.mrf.mxu0
    %v4169 = vadd.f32 %v4129, %v4168
    %v4170 = vpop.f32.mrf.mxu0
    %v4171 = vpop.f32.mrf.mxu0
    %v4172 = vpop.f32.mrf.mxu0
    %4173 = vdwg.mxu0
    %4174 = vmatprep.subr.bf16.mxu0 0
    %4175 = vmatpush1.bf16.msra.mxu0 %v3253
    %4176 = vmatprep.subr.bf16.mxu0 0
    %4177 = vmatpush1.bf16.msra.mxu0 %v3252
    %4178 = vmatprep.subr.bf16.mxu0 0
    %4179 = vmatpush1.bf16.msra.mxu0 %v3251
    %4180 = vmatprep.subr.bf16.mxu0 0
    %4181 = vmatpush1.bf16.msra.mxu0 %v3250
    %4182 = vmatprep.subr.bf16.mxu0 0
    %4183 = vmatpush1.bf16.msra.mxu0 %v3249
    %4184 = vmatprep.subr.bf16.mxu0 0
    %4185 = vmatpush1.bf16.msra.mxu0 %v3248
    %4186 = vmatprep.subr.bf16.mxu0 0
    %4187 = vmatpush1.bf16.msra.mxu0 %v3247
    %4188 = vmatprep.subr.bf16.mxu0 0
    %4189 = vmatpush1.bf16.msra.mxu0 %v3246
    %4190 = vmatprep.subr.bf16.mxu0 0
    %4191 = vmatpush2.bf16.msra.mxu0 %v3261
    %4192 = vmatprep.subr.bf16.mxu0 0
    %4193 = vmatpush2.bf16.msra.mxu0 %v3260
    %4194 = vmatprep.subr.bf16.mxu0 0
    %4195 = vmatpush2.bf16.msra.mxu0 %v3259
    %4196 = vmatprep.subr.bf16.mxu0 0
    %4197 = vmatpush2.bf16.msra.mxu0 %v3258
    %4198 = vmatprep.subr.bf16.mxu0 0
    %4199 = vmatpush2.bf16.msra.mxu0 %v3257
    %4200 = vmatprep.subr.bf16.mxu0 0
    %4201 = vmatpush2.bf16.msra.mxu0 %v3256
    %4202 = vmatprep.subr.bf16.mxu0 0
    %4203 = vmatpush2.bf16.msra.mxu0 %v3255
    %4204 = vmatprep.subr.bf16.mxu0 0
    %4205 = vmatpush2.bf16.msra.mxu0 %v3254
    %4206 = vmatprep.mubr.bf16.mxu0 %v1318
    %4207 = vmatmul.mubr.bf16.gmra.mxu0 %v1304
    %v4208 = vpop.f32.mrf.mxu0
    %v4209 = vadd.f32 %v4169, %v4208
    %v4210 = vpop.f32.mrf.mxu0
    %v4211 = vpop.f32.mrf.mxu0
    %v4212 = vpop.f32.mrf.mxu0
    %4213 = vdwg.mxu0
    %4214 = vmatprep.subr.bf16.mxu0 0
    %4215 = vmatpush1.bf16.msra.mxu0 %v3269
    %4216 = vmatprep.subr.bf16.mxu0 0
    %4217 = vmatpush1.bf16.msra.mxu0 %v3268
    %4218 = vmatprep.subr.bf16.mxu0 0
    %4219 = vmatpush1.bf16.msra.mxu0 %v3267
    %4220 = vmatprep.subr.bf16.mxu0 0
    %4221 = vmatpush1.bf16.msra.mxu0 %v3266
    %4222 = vmatprep.subr.bf16.mxu0 0
    %4223 = vmatpush1.bf16.msra.mxu0 %v3265
    %4224 = vmatprep.subr.bf16.mxu0 0
    %4225 = vmatpush1.bf16.msra.mxu0 %v3264
    %4226 = vmatprep.subr.bf16.mxu0 0
    %4227 = vmatpush1.bf16.msra.mxu0 %v3263
    %4228 = vmatprep.subr.bf16.mxu0 0
    %4229 = vmatpush1.bf16.msra.mxu0 %v3262
    %4230 = vmatprep.subr.bf16.mxu0 0
    %4231 = vmatpush2.bf16.msra.mxu0 %v3277
    %4232 = vmatprep.subr.bf16.mxu0 0
    %4233 = vmatpush2.bf16.msra.mxu0 %v3276
    %4234 = vmatprep.subr.bf16.mxu0 0
    %4235 = vmatpush2.bf16.msra.mxu0 %v3275
    %4236 = vmatprep.subr.bf16.mxu0 0
    %4237 = vmatpush2.bf16.msra.mxu0 %v3274
    %4238 = vmatprep.subr.bf16.mxu0 0
    %4239 = vmatpush2.bf16.msra.mxu0 %v3273
    %4240 = vmatprep.subr.bf16.mxu0 0
    %4241 = vmatpush2.bf16.msra.mxu0 %v3272
    %4242 = vmatprep.subr.bf16.mxu0 0
    %4243 = vmatpush2.bf16.msra.mxu0 %v3271
    %4244 = vmatprep.subr.bf16.mxu0 0
    %4245 = vmatpush2.bf16.msra.mxu0 %v3270
    %4246 = vmatprep.mubr.bf16.mxu0 %v1322
    %4247 = vmatmul.mubr.bf16.gmra.mxu0 %v1320
    %v4248 = vpop.f32.mrf.mxu0
    %v4249 = vadd.f32 %v4209, %v4248
    %v4250 = vpop.f32.mrf.mxu0
    %v4251 = vpop.f32.mrf.mxu0
    %v4252 = vpop.f32.mrf.mxu0
    %4253 = vdwg.mxu0
    %4254 = vmatprep.subr.bf16.mxu0 0
    %4255 = vmatpush1.bf16.msra.mxu0 %v3285
    %4256 = vmatprep.subr.bf16.mxu0 0
    %4257 = vmatpush1.bf16.msra.mxu0 %v3284
    %4258 = vmatprep.subr.bf16.mxu0 0
    %4259 = vmatpush1.bf16.msra.mxu0 %v3283
    %4260 = vmatprep.subr.bf16.mxu0 0
    %4261 = vmatpush1.bf16.msra.mxu0 %v3282
    %4262 = vmatprep.subr.bf16.mxu0 0
    %4263 = vmatpush1.bf16.msra.mxu0 %v3281
    %4264 = vmatprep.subr.bf16.mxu0 0
    %4265 = vmatpush1.bf16.msra.mxu0 %v3280
    %4266 = vmatprep.subr.bf16.mxu0 0
    %4267 = vmatpush1.bf16.msra.mxu0 %v3279
    %4268 = vmatprep.subr.bf16.mxu0 0
    %4269 = vmatpush1.bf16.msra.mxu0 %v3278
    %4270 = vmatprep.subr.bf16.mxu0 0
    %4271 = vmatpush2.bf16.msra.mxu0 %v3293
    %4272 = vmatprep.subr.bf16.mxu0 0
    %4273 = vmatpush2.bf16.msra.mxu0 %v3292
    %4274 = vmatprep.subr.bf16.mxu0 0
    %4275 = vmatpush2.bf16.msra.mxu0 %v3291
    %4276 = vmatprep.subr.bf16.mxu0 0
    %4277 = vmatpush2.bf16.msra.mxu0 %v3290
    %4278 = vmatprep.subr.bf16.mxu0 0
    %4279 = vmatpush2.bf16.msra.mxu0 %v3289
    %4280 = vmatprep.subr.bf16.mxu0 0
    %4281 = vmatpush2.bf16.msra.mxu0 %v3288
    %4282 = vmatprep.subr.bf16.mxu0 0
    %4283 = vmatpush2.bf16.msra.mxu0 %v3287
    %4284 = vmatprep.subr.bf16.mxu0 0
    %4285 = vmatpush2.bf16.msra.mxu0 %v3286
    %4286 = vmatprep.mubr.bf16.mxu0 %v1360
    %4287 = vmatmul.mubr.bf16.gmra.mxu0 %v1346
    %v4288 = vpop.f32.mrf.mxu0
    %v4289 = vadd.f32 %v4249, %v4288
    %v4290 = vpop.f32.mrf.mxu0
    %v4291 = vpop.f32.mrf.mxu0
    %v4292 = vpop.f32.mrf.mxu0
    %4293 = vdwg.mxu0
    %4294 = vmatprep.subr.bf16.mxu0 0
    %4295 = vmatpush1.bf16.msra.mxu0 %v3301
    %4296 = vmatprep.subr.bf16.mxu0 0
    %4297 = vmatpush1.bf16.msra.mxu0 %v3300
    %4298 = vmatprep.subr.bf16.mxu0 0
    %4299 = vmatpush1.bf16.msra.mxu0 %v3299
    %4300 = vmatprep.subr.bf16.mxu0 0
    %4301 = vmatpush1.bf16.msra.mxu0 %v3298
    %4302 = vmatprep.subr.bf16.mxu0 0
    %4303 = vmatpush1.bf16.msra.mxu0 %v3297
    %4304 = vmatprep.subr.bf16.mxu0 0
    %4305 = vmatpush1.bf16.msra.mxu0 %v3296
    %4306 = vmatprep.subr.bf16.mxu0 0
    %4307 = vmatpush1.bf16.msra.mxu0 %v3295
    %4308 = vmatprep.subr.bf16.mxu0 0
    %4309 = vmatpush1.bf16.msra.mxu0 %v3294
    %4310 = vmatprep.subr.bf16.mxu0 0
    %4311 = vmatpush2.bf16.msra.mxu0 %v3309
    %4312 = vmatprep.subr.bf16.mxu0 0
    %4313 = vmatpush2.bf16.msra.mxu0 %v3308
    %4314 = vmatprep.subr.bf16.mxu0 0
    %4315 = vmatpush2.bf16.msra.mxu0 %v3307
    %4316 = vmatprep.subr.bf16.mxu0 0
    %4317 = vmatpush2.bf16.msra.mxu0 %v3306
    %4318 = vmatprep.subr.bf16.mxu0 0
    %4319 = vmatpush2.bf16.msra.mxu0 %v3305
    %4320 = vmatprep.subr.bf16.mxu0 0
    %4321 = vmatpush2.bf16.msra.mxu0 %v3304
    %4322 = vmatprep.subr.bf16.mxu0 0
    %4323 = vmatpush2.bf16.msra.mxu0 %v3303
    %4324 = vmatprep.subr.bf16.mxu0 0
    %4325 = vmatpush2.bf16.msra.mxu0 %v3302
    %4326 = vmatprep.mubr.bf16.mxu0 %v1370
    %4327 = vmatmul.mubr.bf16.gmra.mxu0 %v1368
    %v4328 = vpop.f32.mrf.mxu0
    %v4329 = vadd.f32 %v4289, %v4328
    %v4330 = vpop.f32.mrf.mxu0
    %v4331 = vpop.f32.mrf.mxu0
    %v4332 = vpop.f32.mrf.mxu0
    %4333 = vdwg.mxu0
    %4334 = vmatprep.subr.bf16.mxu0 0
    %4335 = vmatpush1.bf16.msra.mxu0 %v3317
    %4336 = vmatprep.subr.bf16.mxu0 0
    %4337 = vmatpush1.bf16.msra.mxu0 %v3316
    %4338 = vmatprep.subr.bf16.mxu0 0
    %4339 = vmatpush1.bf16.msra.mxu0 %v3315
    %4340 = vmatprep.subr.bf16.mxu0 0
    %4341 = vmatpush1.bf16.msra.mxu0 %v3314
    %4342 = vmatprep.subr.bf16.mxu0 0
    %4343 = vmatpush1.bf16.msra.mxu0 %v3313
    %4344 = vmatprep.subr.bf16.mxu0 0
    %4345 = vmatpush1.bf16.msra.mxu0 %v3312
    %4346 = vmatprep.subr.bf16.mxu0 0
    %4347 = vmatpush1.bf16.msra.mxu0 %v3311
    %4348 = vmatprep.subr.bf16.mxu0 0
    %4349 = vmatpush1.bf16.msra.mxu0 %v3310
    %4350 = vmatprep.subr.bf16.mxu0 0
    %4351 = vmatpush2.bf16.msra.mxu0 %v3325
    %4352 = vmatprep.subr.bf16.mxu0 0
    %4353 = vmatpush2.bf16.msra.mxu0 %v3324
    %4354 = vmatprep.subr.bf16.mxu0 0
    %4355 = vmatpush2.bf16.msra.mxu0 %v3323
    %4356 = vmatprep.subr.bf16.mxu0 0
    %4357 = vmatpush2.bf16.msra.mxu0 %v3322
    %4358 = vmatprep.subr.bf16.mxu0 0
    %4359 = vmatpush2.bf16.msra.mxu0 %v3321
    %4360 = vmatprep.subr.bf16.mxu0 0
    %4361 = vmatpush2.bf16.msra.mxu0 %v3320
    %4362 = vmatprep.subr.bf16.mxu0 0
    %4363 = vmatpush2.bf16.msra.mxu0 %v3319
    %4364 = vmatprep.subr.bf16.mxu0 0
    %4365 = vmatpush2.bf16.msra.mxu0 %v3318
    %4366 = vmatprep.mubr.bf16.mxu0 %v1367
    %4367 = vmatmul.mubr.bf16.gmra.mxu0 %v1353
    %v4368 = vpop.f32.mrf.mxu0
    %v4369 = vadd.f32 %v4329, %v4368
    %v4370 = vpop.f32.mrf.mxu0
    %v4371 = vpop.f32.mrf.mxu0
    %v4372 = vpop.f32.mrf.mxu0
    %4373 = vdwg.mxu0
    %4374 = vmatprep.subr.bf16.mxu0 0
    %4375 = vmatpush1.bf16.msra.mxu0 %v3333
    %4376 = vmatprep.subr.bf16.mxu0 0
    %4377 = vmatpush1.bf16.msra.mxu0 %v3332
    %4378 = vmatprep.subr.bf16.mxu0 0
    %4379 = vmatpush1.bf16.msra.mxu0 %v3331
    %4380 = vmatprep.subr.bf16.mxu0 0
    %4381 = vmatpush1.bf16.msra.mxu0 %v3330
    %4382 = vmatprep.subr.bf16.mxu0 0
    %4383 = vmatpush1.bf16.msra.mxu0 %v3329
    %4384 = vmatprep.subr.bf16.mxu0 0
    %4385 = vmatpush1.bf16.msra.mxu0 %v3328
    %4386 = vmatprep.subr.bf16.mxu0 0
    %4387 = vmatpush1.bf16.msra.mxu0 %v3327
    %4388 = vmatprep.subr.bf16.mxu0 0
    %4389 = vmatpush1.bf16.msra.mxu0 %v3326
    %4390 = vmatprep.subr.bf16.mxu0 0
    %4391 = vmatpush2.bf16.msra.mxu0 %v3341
    %4392 = vmatprep.subr.bf16.mxu0 0
    %4393 = vmatpush2.bf16.msra.mxu0 %v3340
    %4394 = vmatprep.subr.bf16.mxu0 0
    %4395 = vmatpush2.bf16.msra.mxu0 %v3339
    %4396 = vmatprep.subr.bf16.mxu0 0
    %4397 = vmatpush2.bf16.msra.mxu0 %v3338
    %4398 = vmatprep.subr.bf16.mxu0 0
    %4399 = vmatpush2.bf16.msra.mxu0 %v3337
    %4400 = vmatprep.subr.bf16.mxu0 0
    %4401 = vmatpush2.bf16.msra.mxu0 %v3336
    %4402 = vmatprep.subr.bf16.mxu0 0
    %4403 = vmatpush2.bf16.msra.mxu0 %v3335
    %4404 = vmatprep.subr.bf16.mxu0 0
    %4405 = vmatpush2.bf16.msra.mxu0 %v3334
    %4406 = vmatprep.mubr.bf16.mxu0 %v1371
    %4407 = vmatmul.mubr.bf16.gmra.mxu0 %v1369
    %v4408 = vpop.f32.mrf.mxu0
    %v4409 = vadd.f32 %v4369, %v4408
    %v4410 = vpop.f32.mrf.mxu0
    %v4411 = vpop.f32.mrf.mxu0
    %v4412 = vpop.f32.mrf.mxu0
    %4413 = vdwg.mxu0
    %4414 = vmatprep.subr.bf16.mxu0 0
    %4415 = vmatpush1.bf16.msra.mxu0 %v3349
    %4416 = vmatprep.subr.bf16.mxu0 0
    %4417 = vmatpush1.bf16.msra.mxu0 %v3348
    %4418 = vmatprep.subr.bf16.mxu0 0
    %4419 = vmatpush1.bf16.msra.mxu0 %v3347
    %4420 = vmatprep.subr.bf16.mxu0 0
    %4421 = vmatpush1.bf16.msra.mxu0 %v3346
    %4422 = vmatprep.subr.bf16.mxu0 0
    %4423 = vmatpush1.bf16.msra.mxu0 %v3345
    %4424 = vmatprep.subr.bf16.mxu0 0
    %4425 = vmatpush1.bf16.msra.mxu0 %v3344
    %4426 = vmatprep.subr.bf16.mxu0 0
    %4427 = vmatpush1.bf16.msra.mxu0 %v3343
    %4428 = vmatprep.subr.bf16.mxu0 0
    %4429 = vmatpush1.bf16.msra.mxu0 %v3342
    %4430 = vmatprep.subr.bf16.mxu0 0
    %4431 = vmatpush2.bf16.msra.mxu0 %v3357
    %4432 = vmatprep.subr.bf16.mxu0 0
    %4433 = vmatpush2.bf16.msra.mxu0 %v3356
    %4434 = vmatprep.subr.bf16.mxu0 0
    %4435 = vmatpush2.bf16.msra.mxu0 %v3355
    %4436 = vmatprep.subr.bf16.mxu0 0
    %4437 = vmatpush2.bf16.msra.mxu0 %v3354
    %4438 = vmatprep.subr.bf16.mxu0 0
    %4439 = vmatpush2.bf16.msra.mxu0 %v3353
    %4440 = vmatprep.subr.bf16.mxu0 0
    %4441 = vmatpush2.bf16.msra.mxu0 %v3352
    %4442 = vmatprep.subr.bf16.mxu0 0
    %4443 = vmatpush2.bf16.msra.mxu0 %v3351
    %4444 = vmatprep.subr.bf16.mxu0 0
    %4445 = vmatpush2.bf16.msra.mxu0 %v3350
    %4446 = vmatprep.mubr.bf16.mxu0 %v1409
    %4447 = vmatmul.mubr.bf16.gmra.mxu0 %v1395
    %v4448 = vpop.f32.mrf.mxu0
    %v4449 = vadd.f32 %v4409, %v4448
    %v4450 = vpop.f32.mrf.mxu0
    %v4451 = vpop.f32.mrf.mxu0
    %v4452 = vpop.f32.mrf.mxu0
    %4453 = vdwg.mxu0
    %4454 = vmatprep.subr.bf16.mxu0 0
    %4455 = vmatpush1.bf16.msra.mxu0 %v3365
    %4456 = vmatprep.subr.bf16.mxu0 0
    %4457 = vmatpush1.bf16.msra.mxu0 %v3364
    %4458 = vmatprep.subr.bf16.mxu0 0
    %4459 = vmatpush1.bf16.msra.mxu0 %v3363
    %4460 = vmatprep.subr.bf16.mxu0 0
    %4461 = vmatpush1.bf16.msra.mxu0 %v3362
    %4462 = vmatprep.subr.bf16.mxu0 0
    %4463 = vmatpush1.bf16.msra.mxu0 %v3361
    %4464 = vmatprep.subr.bf16.mxu0 0
    %4465 = vmatpush1.bf16.msra.mxu0 %v3360
    %4466 = vmatprep.subr.bf16.mxu0 0
    %4467 = vmatpush1.bf16.msra.mxu0 %v3359
    %4468 = vmatprep.subr.bf16.mxu0 0
    %4469 = vmatpush1.bf16.msra.mxu0 %v3358
    %4470 = vmatprep.subr.bf16.mxu0 0
    %4471 = vmatpush2.bf16.msra.mxu0 %v3373
    %4472 = vmatprep.subr.bf16.mxu0 0
    %4473 = vmatpush2.bf16.msra.mxu0 %v3372
    %4474 = vmatprep.subr.bf16.mxu0 0
    %4475 = vmatpush2.bf16.msra.mxu0 %v3371
    %4476 = vmatprep.subr.bf16.mxu0 0
    %4477 = vmatpush2.bf16.msra.mxu0 %v3370
    %4478 = vmatprep.subr.bf16.mxu0 0
    %4479 = vmatpush2.bf16.msra.mxu0 %v3369
    %4480 = vmatprep.subr.bf16.mxu0 0
    %4481 = vmatpush2.bf16.msra.mxu0 %v3368
    %4482 = vmatprep.subr.bf16.mxu0 0
    %4483 = vmatpush2.bf16.msra.mxu0 %v3367
    %4484 = vmatprep.subr.bf16.mxu0 0
    %4485 = vmatpush2.bf16.msra.mxu0 %v3366
    %4486 = vmatprep.mubr.bf16.mxu0 %v1419
    %4487 = vmatmul.mubr.bf16.gmra.mxu0 %v1417
    %v4488 = vpop.f32.mrf.mxu0
    %v4489 = vadd.f32 %v4449, %v4488
    %v4490 = vpop.f32.mrf.mxu0
    %v4491 = vpop.f32.mrf.mxu0
    %v4492 = vpop.f32.mrf.mxu0
    %4493 = vdwg.mxu0
    %4494 = vmatprep.subr.bf16.mxu0 0
    %4495 = vmatpush1.bf16.msra.mxu0 %v3381
    %4496 = vmatprep.subr.bf16.mxu0 0
    %4497 = vmatpush1.bf16.msra.mxu0 %v3380
    %4498 = vmatprep.subr.bf16.mxu0 0
    %4499 = vmatpush1.bf16.msra.mxu0 %v3379
    %4500 = vmatprep.subr.bf16.mxu0 0
    %4501 = vmatpush1.bf16.msra.mxu0 %v3378
    %4502 = vmatprep.subr.bf16.mxu0 0
    %4503 = vmatpush1.bf16.msra.mxu0 %v3377
    %4504 = vmatprep.subr.bf16.mxu0 0
    %4505 = vmatpush1.bf16.msra.mxu0 %v3376
    %4506 = vmatprep.subr.bf16.mxu0 0
    %4507 = vmatpush1.bf16.msra.mxu0 %v3375
    %4508 = vmatprep.subr.bf16.mxu0 0
    %4509 = vmatpush1.bf16.msra.mxu0 %v3374
    %4510 = vmatprep.subr.bf16.mxu0 0
    %4511 = vmatpush2.bf16.msra.mxu0 %v3389
    %4512 = vmatprep.subr.bf16.mxu0 0
    %4513 = vmatpush2.bf16.msra.mxu0 %v3388
    %4514 = vmatprep.subr.bf16.mxu0 0
    %4515 = vmatpush2.bf16.msra.mxu0 %v3387
    %4516 = vmatprep.subr.bf16.mxu0 0
    %4517 = vmatpush2.bf16.msra.mxu0 %v3386
    %4518 = vmatprep.subr.bf16.mxu0 0
    %4519 = vmatpush2.bf16.msra.mxu0 %v3385
    %4520 = vmatprep.subr.bf16.mxu0 0
    %4521 = vmatpush2.bf16.msra.mxu0 %v3384
    %4522 = vmatprep.subr.bf16.mxu0 0
    %4523 = vmatpush2.bf16.msra.mxu0 %v3383
    %4524 = vmatprep.subr.bf16.mxu0 0
    %4525 = vmatpush2.bf16.msra.mxu0 %v3382
    %4526 = vmatprep.mubr.bf16.mxu0 %v1416
    %4527 = vmatmul.mubr.bf16.gmra.mxu0 %v1402
    %v4528 = vpop.f32.mrf.mxu0
    %v4529 = vadd.f32 %v4489, %v4528
    %v4530 = vpop.f32.mrf.mxu0
    %v4531 = vpop.f32.mrf.mxu0
    %v4532 = vpop.f32.mrf.mxu0
    %4533 = vdwg.mxu0
    %4534 = vmatprep.subr.bf16.mxu0 0
    %4535 = vmatpush1.bf16.msra.mxu0 %v3397
    %4536 = vmatprep.subr.bf16.mxu0 0
    %4537 = vmatpush1.bf16.msra.mxu0 %v3396
    %4538 = vmatprep.subr.bf16.mxu0 0
    %4539 = vmatpush1.bf16.msra.mxu0 %v3395
    %4540 = vmatprep.subr.bf16.mxu0 0
    %4541 = vmatpush1.bf16.msra.mxu0 %v3394
    %4542 = vmatprep.subr.bf16.mxu0 0
    %4543 = vmatpush1.bf16.msra.mxu0 %v3393
    %4544 = vmatprep.subr.bf16.mxu0 0
    %4545 = vmatpush1.bf16.msra.mxu0 %v3392
    %4546 = vmatprep.subr.bf16.mxu0 0
    %4547 = vmatpush1.bf16.msra.mxu0 %v3391
    %4548 = vmatprep.subr.bf16.mxu0 0
    %4549 = vmatpush1.bf16.msra.mxu0 %v3390
    %4550 = vmatprep.subr.bf16.mxu0 0
    %4551 = vmatpush2.bf16.msra.mxu0 %v3405
    %4552 = vmatprep.subr.bf16.mxu0 0
    %4553 = vmatpush2.bf16.msra.mxu0 %v3404
    %4554 = vmatprep.subr.bf16.mxu0 0
    %4555 = vmatpush2.bf16.msra.mxu0 %v3403
    %4556 = vmatprep.subr.bf16.mxu0 0
    %4557 = vmatpush2.bf16.msra.mxu0 %v3402
    %4558 = vmatprep.subr.bf16.mxu0 0
    %4559 = vmatpush2.bf16.msra.mxu0 %v3401
    %4560 = vmatprep.subr.bf16.mxu0 0
    %4561 = vmatpush2.bf16.msra.mxu0 %v3400
    %4562 = vmatprep.subr.bf16.mxu0 0
    %4563 = vmatpush2.bf16.msra.mxu0 %v3399
    %4564 = vmatprep.subr.bf16.mxu0 0
    %4565 = vmatpush2.bf16.msra.mxu0 %v3398
    %4566 = vmatprep.mubr.bf16.mxu0 %v1420
    %4567 = vmatmul.mubr.bf16.gmra.mxu0 %v1418
    %v4568 = vpop.f32.mrf.mxu0
    %v4569 = vadd.f32 %v4529, %v4568
    %v4570 = vpop.f32.mrf.mxu0
    %v4571 = vpop.f32.mrf.mxu0
    %v4572 = vpop.f32.mrf.mxu0
    %4573 = vdwg.mxu0
    %4574 = vmatprep.subr.bf16.mxu0 0
    %4575 = vmatpush1.bf16.msra.mxu0 %v3413
    %4576 = vmatprep.subr.bf16.mxu0 0
    %4577 = vmatpush1.bf16.msra.mxu0 %v3412
    %4578 = vmatprep.subr.bf16.mxu0 0
    %4579 = vmatpush1.bf16.msra.mxu0 %v3411
    %4580 = vmatprep.subr.bf16.mxu0 0
    %4581 = vmatpush1.bf16.msra.mxu0 %v3410
    %4582 = vmatprep.subr.bf16.mxu0 0
    %4583 = vmatpush1.bf16.msra.mxu0 %v3409
    %4584 = vmatprep.subr.bf16.mxu0 0
    %4585 = vmatpush1.bf16.msra.mxu0 %v3408
    %4586 = vmatprep.subr.bf16.mxu0 0
    %4587 = vmatpush1.bf16.msra.mxu0 %v3407
    %4588 = vmatprep.subr.bf16.mxu0 0
    %4589 = vmatpush1.bf16.msra.mxu0 %v3406
    %4590 = vmatprep.subr.bf16.mxu0 0
    %4591 = vmatpush2.bf16.msra.mxu0 %v3421
    %4592 = vmatprep.subr.bf16.mxu0 0
    %4593 = vmatpush2.bf16.msra.mxu0 %v3420
    %4594 = vmatprep.subr.bf16.mxu0 0
    %4595 = vmatpush2.bf16.msra.mxu0 %v3419
    %4596 = vmatprep.subr.bf16.mxu0 0
    %4597 = vmatpush2.bf16.msra.mxu0 %v3418
    %4598 = vmatprep.subr.bf16.mxu0 0
    %4599 = vmatpush2.bf16.msra.mxu0 %v3417
    %4600 = vmatprep.subr.bf16.mxu0 0
    %4601 = vmatpush2.bf16.msra.mxu0 %v3416
    %4602 = vmatprep.subr.bf16.mxu0 0
    %4603 = vmatpush2.bf16.msra.mxu0 %v3415
    %4604 = vmatprep.subr.bf16.mxu0 0
    %4605 = vmatpush2.bf16.msra.mxu0 %v3414
    %4606 = vmatprep.mubr.bf16.mxu0 %v1458
    %4607 = vmatmul.mubr.bf16.gmra.mxu0 %v1444
    %v4608 = vpop.f32.mrf.mxu0
    %v4609 = vadd.f32 %v4569, %v4608
    %v4610 = vpop.f32.mrf.mxu0
    %v4611 = vpop.f32.mrf.mxu0
    %v4612 = vpop.f32.mrf.mxu0
    %4613 = vdwg.mxu0
    %4614 = vmatprep.subr.bf16.mxu0 0
    %4615 = vmatpush1.bf16.msra.mxu0 %v3429
    %4616 = vmatprep.subr.bf16.mxu0 0
    %4617 = vmatpush1.bf16.msra.mxu0 %v3428
    %4618 = vmatprep.subr.bf16.mxu0 0
    %4619 = vmatpush1.bf16.msra.mxu0 %v3427
    %4620 = vmatprep.subr.bf16.mxu0 0
    %4621 = vmatpush1.bf16.msra.mxu0 %v3426
    %4622 = vmatprep.subr.bf16.mxu0 0
    %4623 = vmatpush1.bf16.msra.mxu0 %v3425
    %4624 = vmatprep.subr.bf16.mxu0 0
    %4625 = vmatpush1.bf16.msra.mxu0 %v3424
    %4626 = vmatprep.subr.bf16.mxu0 0
    %4627 = vmatpush1.bf16.msra.mxu0 %v3423
    %4628 = vmatprep.subr.bf16.mxu0 0
    %4629 = vmatpush1.bf16.msra.mxu0 %v3422
    %4630 = vmatprep.subr.bf16.mxu0 0
    %4631 = vmatpush2.bf16.msra.mxu0 %v3437
    %4632 = vmatprep.subr.bf16.mxu0 0
    %4633 = vmatpush2.bf16.msra.mxu0 %v3436
    %4634 = vmatprep.subr.bf16.mxu0 0
    %4635 = vmatpush2.bf16.msra.mxu0 %v3435
    %4636 = vmatprep.subr.bf16.mxu0 0
    %4637 = vmatpush2.bf16.msra.mxu0 %v3434
    %4638 = vmatprep.subr.bf16.mxu0 0
    %4639 = vmatpush2.bf16.msra.mxu0 %v3433
    %4640 = vmatprep.subr.bf16.mxu0 0
    %4641 = vmatpush2.bf16.msra.mxu0 %v3432
    %4642 = vmatprep.subr.bf16.mxu0 0
    %4643 = vmatpush2.bf16.msra.mxu0 %v3431
    %4644 = vmatprep.subr.bf16.mxu0 0
    %4645 = vmatpush2.bf16.msra.mxu0 %v3430
    %4646 = vmatprep.mubr.bf16.mxu0 %v1468
    %4647 = vmatmul.mubr.bf16.gmra.mxu0 %v1466
    %v4648 = vpop.f32.mrf.mxu0
    %v4649 = vadd.f32 %v4609, %v4648
    %v4650 = vpop.f32.mrf.mxu0
    %v4651 = vpop.f32.mrf.mxu0
    %v4652 = vpop.f32.mrf.mxu0
    %4653 = vdwg.mxu0
    %4654 = vmatprep.subr.bf16.mxu0 0
    %4655 = vmatpush1.bf16.msra.mxu0 %v3445
    %4656 = vmatprep.subr.bf16.mxu0 0
    %4657 = vmatpush1.bf16.msra.mxu0 %v3444
    %4658 = vmatprep.subr.bf16.mxu0 0
    %4659 = vmatpush1.bf16.msra.mxu0 %v3443
    %4660 = vmatprep.subr.bf16.mxu0 0
    %4661 = vmatpush1.bf16.msra.mxu0 %v3442
    %4662 = vmatprep.subr.bf16.mxu0 0
    %4663 = vmatpush1.bf16.msra.mxu0 %v3441
    %4664 = vmatprep.subr.bf16.mxu0 0
    %4665 = vmatpush1.bf16.msra.mxu0 %v3440
    %4666 = vmatprep.subr.bf16.mxu0 0
    %4667 = vmatpush1.bf16.msra.mxu0 %v3439
    %4668 = vmatprep.subr.bf16.mxu0 0
    %4669 = vmatpush1.bf16.msra.mxu0 %v3438
    %4670 = vmatprep.subr.bf16.mxu0 0
    %4671 = vmatpush2.bf16.msra.mxu0 %v3453
    %4672 = vmatprep.subr.bf16.mxu0 0
    %4673 = vmatpush2.bf16.msra.mxu0 %v3452
    %4674 = vmatprep.subr.bf16.mxu0 0
    %4675 = vmatpush2.bf16.msra.mxu0 %v3451
    %4676 = vmatprep.subr.bf16.mxu0 0
    %4677 = vmatpush2.bf16.msra.mxu0 %v3450
    %4678 = vmatprep.subr.bf16.mxu0 0
    %4679 = vmatpush2.bf16.msra.mxu0 %v3449
    %4680 = vmatprep.subr.bf16.mxu0 0
    %4681 = vmatpush2.bf16.msra.mxu0 %v3448
    %4682 = vmatprep.subr.bf16.mxu0 0
    %4683 = vmatpush2.bf16.msra.mxu0 %v3447
    %4684 = vmatprep.subr.bf16.mxu0 0
    %4685 = vmatpush2.bf16.msra.mxu0 %v3446
    %4686 = vmatprep.mubr.bf16.mxu0 %v1465
    %4687 = vmatmul.mubr.bf16.gmra.mxu0 %v1451
    %v4688 = vpop.f32.mrf.mxu0
    %v4689 = vadd.f32 %v4649, %v4688
    %v4690 = vpop.f32.mrf.mxu0
    %v4691 = vpop.f32.mrf.mxu0
    %v4692 = vpop.f32.mrf.mxu0
    %4693 = vdwg.mxu0
    %4694 = vmatprep.subr.bf16.mxu0 0
    %4695 = vmatpush1.bf16.msra.mxu0 %v3461
    %4696 = vmatprep.subr.bf16.mxu0 0
    %4697 = vmatpush1.bf16.msra.mxu0 %v3460
    %4698 = vmatprep.subr.bf16.mxu0 0
    %4699 = vmatpush1.bf16.msra.mxu0 %v3459
    %4700 = vmatprep.subr.bf16.mxu0 0
    %4701 = vmatpush1.bf16.msra.mxu0 %v3458
    %4702 = vmatprep.subr.bf16.mxu0 0
    %4703 = vmatpush1.bf16.msra.mxu0 %v3457
    %4704 = vmatprep.subr.bf16.mxu0 0
    %4705 = vmatpush1.bf16.msra.mxu0 %v3456
    %4706 = vmatprep.subr.bf16.mxu0 0
    %4707 = vmatpush1.bf16.msra.mxu0 %v3455
    %4708 = vmatprep.subr.bf16.mxu0 0
    %4709 = vmatpush1.bf16.msra.mxu0 %v3454
    %4710 = vmatprep.subr.bf16.mxu0 0
    %4711 = vmatpush2.bf16.msra.mxu0 %v3469
    %4712 = vmatprep.subr.bf16.mxu0 0
    %4713 = vmatpush2.bf16.msra.mxu0 %v3468
    %4714 = vmatprep.subr.bf16.mxu0 0
    %4715 = vmatpush2.bf16.msra.mxu0 %v3467
    %4716 = vmatprep.subr.bf16.mxu0 0
    %4717 = vmatpush2.bf16.msra.mxu0 %v3466
    %4718 = vmatprep.subr.bf16.mxu0 0
    %4719 = vmatpush2.bf16.msra.mxu0 %v3465
    %4720 = vmatprep.subr.bf16.mxu0 0
    %4721 = vmatpush2.bf16.msra.mxu0 %v3464
    %4722 = vmatprep.subr.bf16.mxu0 0
    %4723 = vmatpush2.bf16.msra.mxu0 %v3463
    %4724 = vmatprep.subr.bf16.mxu0 0
    %4725 = vmatpush2.bf16.msra.mxu0 %v3462
    %4726 = vmatprep.mubr.bf16.mxu0 %v1469
    %4727 = vmatmul.mubr.bf16.gmra.mxu0 %v1467
    %v4728 = vpop.f32.mrf.mxu0
    %v4729 = vadd.f32 %v4689, %v4728
    %v4730 = vpop.f32.mrf.mxu0
    %v4731 = vpop.f32.mrf.mxu0
    %v4732 = vpop.f32.mrf.mxu0
    %4733 = vdwg.mxu0
    %4734 = vmatprep.subr.bf16.mxu0 0
    %4735 = vmatpush1.bf16.msra.mxu0 %v3477
    %4736 = vmatprep.subr.bf16.mxu0 0
    %4737 = vmatpush1.bf16.msra.mxu0 %v3476
    %4738 = vmatprep.subr.bf16.mxu0 0
    %4739 = vmatpush1.bf16.msra.mxu0 %v3475
    %4740 = vmatprep.subr.bf16.mxu0 0
    %4741 = vmatpush1.bf16.msra.mxu0 %v3474
    %4742 = vmatprep.subr.bf16.mxu0 0
    %4743 = vmatpush1.bf16.msra.mxu0 %v3473
    %4744 = vmatprep.subr.bf16.mxu0 0
    %4745 = vmatpush1.bf16.msra.mxu0 %v3472
    %4746 = vmatprep.subr.bf16.mxu0 0
    %4747 = vmatpush1.bf16.msra.mxu0 %v3471
    %4748 = vmatprep.subr.bf16.mxu0 0
    %4749 = vmatpush1.bf16.msra.mxu0 %v3470
    %4750 = vmatprep.subr.bf16.mxu0 0
    %4751 = vmatpush2.bf16.msra.mxu0 %v3485
    %4752 = vmatprep.subr.bf16.mxu0 0
    %4753 = vmatpush2.bf16.msra.mxu0 %v3484
    %4754 = vmatprep.subr.bf16.mxu0 0
    %4755 = vmatpush2.bf16.msra.mxu0 %v3483
    %4756 = vmatprep.subr.bf16.mxu0 0
    %4757 = vmatpush2.bf16.msra.mxu0 %v3482
    %4758 = vmatprep.subr.bf16.mxu0 0
    %4759 = vmatpush2.bf16.msra.mxu0 %v3481
    %4760 = vmatprep.subr.bf16.mxu0 0
    %4761 = vmatpush2.bf16.msra.mxu0 %v3480
    %4762 = vmatprep.subr.bf16.mxu0 0
    %4763 = vmatpush2.bf16.msra.mxu0 %v3479
    %4764 = vmatprep.subr.bf16.mxu0 0
    %4765 = vmatpush2.bf16.msra.mxu0 %v3478
    %4766 = vmatprep.mubr.bf16.mxu0 %v1507
    %4767 = vmatmul.mubr.bf16.gmra.mxu0 %v1493
    %v4768 = vpop.f32.mrf.mxu0
    %v4769 = vadd.f32 %v4729, %v4768
    %v4770 = vpop.f32.mrf.mxu0
    %v4771 = vpop.f32.mrf.mxu0
    %v4772 = vpop.f32.mrf.mxu0
    %4773 = vdwg.mxu0
    %4774 = vmatprep.subr.bf16.mxu0 0
    %4775 = vmatpush1.bf16.msra.mxu0 %v3493
    %4776 = vmatprep.subr.bf16.mxu0 0
    %4777 = vmatpush1.bf16.msra.mxu0 %v3492
    %4778 = vmatprep.subr.bf16.mxu0 0
    %4779 = vmatpush1.bf16.msra.mxu0 %v3491
    %4780 = vmatprep.subr.bf16.mxu0 0
    %4781 = vmatpush1.bf16.msra.mxu0 %v3490
    %4782 = vmatprep.subr.bf16.mxu0 0
    %4783 = vmatpush1.bf16.msra.mxu0 %v3489
    %4784 = vmatprep.subr.bf16.mxu0 0
    %4785 = vmatpush1.bf16.msra.mxu0 %v3488
    %4786 = vmatprep.subr.bf16.mxu0 0
    %4787 = vmatpush1.bf16.msra.mxu0 %v3487
    %4788 = vmatprep.subr.bf16.mxu0 0
    %4789 = vmatpush1.bf16.msra.mxu0 %v3486
    %4790 = vmatprep.subr.bf16.mxu0 0
    %4791 = vmatpush2.bf16.msra.mxu0 %v3501
    %4792 = vmatprep.subr.bf16.mxu0 0
    %4793 = vmatpush2.bf16.msra.mxu0 %v3500
    %4794 = vmatprep.subr.bf16.mxu0 0
    %4795 = vmatpush2.bf16.msra.mxu0 %v3499
    %4796 = vmatprep.subr.bf16.mxu0 0
    %4797 = vmatpush2.bf16.msra.mxu0 %v3498
    %4798 = vmatprep.subr.bf16.mxu0 0
    %4799 = vmatpush2.bf16.msra.mxu0 %v3497
    %4800 = vmatprep.subr.bf16.mxu0 0
    %4801 = vmatpush2.bf16.msra.mxu0 %v3496
    %4802 = vmatprep.subr.bf16.mxu0 0
    %4803 = vmatpush2.bf16.msra.mxu0 %v3495
    %4804 = vmatprep.subr.bf16.mxu0 0
    %4805 = vmatpush2.bf16.msra.mxu0 %v3494
    %4806 = vmatprep.mubr.bf16.mxu0 %v1517
    %4807 = vmatmul.mubr.bf16.gmra.mxu0 %v1515
    %v4808 = vpop.f32.mrf.mxu0
    %v4809 = vadd.f32 %v4769, %v4808
    %v4810 = vpop.f32.mrf.mxu0
    %v4811 = vpop.f32.mrf.mxu0
    %v4812 = vpop.f32.mrf.mxu0
    %4813 = vdwg.mxu0
    %4814 = vmatprep.subr.bf16.mxu0 0
    %4815 = vmatpush1.bf16.msra.mxu0 %v3509
    %4816 = vmatprep.subr.bf16.mxu0 0
    %4817 = vmatpush1.bf16.msra.mxu0 %v3508
    %4818 = vmatprep.subr.bf16.mxu0 0
    %4819 = vmatpush1.bf16.msra.mxu0 %v3507
    %4820 = vmatprep.subr.bf16.mxu0 0
    %4821 = vmatpush1.bf16.msra.mxu0 %v3506
    %4822 = vmatprep.subr.bf16.mxu0 0
    %4823 = vmatpush1.bf16.msra.mxu0 %v3505
    %4824 = vmatprep.subr.bf16.mxu0 0
    %4825 = vmatpush1.bf16.msra.mxu0 %v3504
    %4826 = vmatprep.subr.bf16.mxu0 0
    %4827 = vmatpush1.bf16.msra.mxu0 %v3503
    %4828 = vmatprep.subr.bf16.mxu0 0
    %4829 = vmatpush1.bf16.msra.mxu0 %v3502
    %4830 = vmatprep.subr.bf16.mxu0 0
    %4831 = vmatpush2.bf16.msra.mxu0 %v3517
    %4832 = vmatprep.subr.bf16.mxu0 0
    %4833 = vmatpush2.bf16.msra.mxu0 %v3516
    %4834 = vmatprep.subr.bf16.mxu0 0
    %4835 = vmatpush2.bf16.msra.mxu0 %v3515
    %4836 = vmatprep.subr.bf16.mxu0 0
    %4837 = vmatpush2.bf16.msra.mxu0 %v3514
    %4838 = vmatprep.subr.bf16.mxu0 0
    %4839 = vmatpush2.bf16.msra.mxu0 %v3513
    %4840 = vmatprep.subr.bf16.mxu0 0
    %4841 = vmatpush2.bf16.msra.mxu0 %v3512
    %4842 = vmatprep.subr.bf16.mxu0 0
    %4843 = vmatpush2.bf16.msra.mxu0 %v3511
    %4844 = vmatprep.subr.bf16.mxu0 0
    %4845 = vmatpush2.bf16.msra.mxu0 %v3510
    %4846 = vmatprep.mubr.bf16.mxu0 %v1514
    %4847 = vmatmul.mubr.bf16.gmra.mxu0 %v1500
    %v4848 = vpop.f32.mrf.mxu0
    %v4849 = vadd.f32 %v4809, %v4848
    %v4850 = vpop.f32.mrf.mxu0
    %v4851 = vpop.f32.mrf.mxu0
    %v4852 = vpop.f32.mrf.mxu0
    %4853 = vdwg.mxu0
    %4854 = vmatprep.subr.bf16.mxu0 0
    %4855 = vmatpush1.bf16.msra.mxu0 %v3525
    %4856 = vmatprep.subr.bf16.mxu0 0
    %4857 = vmatpush1.bf16.msra.mxu0 %v3524
    %4858 = vmatprep.subr.bf16.mxu0 0
    %4859 = vmatpush1.bf16.msra.mxu0 %v3523
    %4860 = vmatprep.subr.bf16.mxu0 0
    %4861 = vmatpush1.bf16.msra.mxu0 %v3522
    %4862 = vmatprep.subr.bf16.mxu0 0
    %4863 = vmatpush1.bf16.msra.mxu0 %v3521
    %4864 = vmatprep.subr.bf16.mxu0 0
    %4865 = vmatpush1.bf16.msra.mxu0 %v3520
    %4866 = vmatprep.subr.bf16.mxu0 0
    %4867 = vmatpush1.bf16.msra.mxu0 %v3519
    %4868 = vmatprep.subr.bf16.mxu0 0
    %4869 = vmatpush1.bf16.msra.mxu0 %v3518
    %4870 = vmatprep.subr.bf16.mxu0 0
    %4871 = vmatpush2.bf16.msra.mxu0 %v3533
    %4872 = vmatprep.subr.bf16.mxu0 0
    %4873 = vmatpush2.bf16.msra.mxu0 %v3532
    %4874 = vmatprep.subr.bf16.mxu0 0
    %4875 = vmatpush2.bf16.msra.mxu0 %v3531
    %4876 = vmatprep.subr.bf16.mxu0 0
    %4877 = vmatpush2.bf16.msra.mxu0 %v3530
    %4878 = vmatprep.subr.bf16.mxu0 0
    %4879 = vmatpush2.bf16.msra.mxu0 %v3529
    %4880 = vmatprep.subr.bf16.mxu0 0
    %4881 = vmatpush2.bf16.msra.mxu0 %v3528
    %4882 = vmatprep.subr.bf16.mxu0 0
    %4883 = vmatpush2.bf16.msra.mxu0 %v3527
    %4884 = vmatprep.subr.bf16.mxu0 0
    %4885 = vmatpush2.bf16.msra.mxu0 %v3526
    %4886 = vmatprep.mubr.bf16.mxu0 %v1518
    %4887 = vmatmul.mubr.bf16.gmra.mxu0 %v1516
    %v4888 = vpop.f32.mrf.mxu0
    %v4889 = vadd.f32 %v4849, %v4888
    %v4890 = vpop.f32.mrf.mxu0
    %v4891 = vpop.f32.mrf.mxu0
    %v4892 = vpop.f32.mrf.mxu0
    %4893 = vdwg.mxu0
    %4894 = vmatprep.subr.bf16.mxu0 0
    %4895 = vmatpush1.bf16.msra.mxu0 %v3541
    %4896 = vmatprep.subr.bf16.mxu0 0
    %4897 = vmatpush1.bf16.msra.mxu0 %v3540
    %4898 = vmatprep.subr.bf16.mxu0 0
    %4899 = vmatpush1.bf16.msra.mxu0 %v3539
    %4900 = vmatprep.subr.bf16.mxu0 0
    %4901 = vmatpush1.bf16.msra.mxu0 %v3538
    %4902 = vmatprep.subr.bf16.mxu0 0
    %4903 = vmatpush1.bf16.msra.mxu0 %v3537
    %4904 = vmatprep.subr.bf16.mxu0 0
    %4905 = vmatpush1.bf16.msra.mxu0 %v3536
    %4906 = vmatprep.subr.bf16.mxu0 0
    %4907 = vmatpush1.bf16.msra.mxu0 %v3535
    %4908 = vmatprep.subr.bf16.mxu0 0
    %4909 = vmatpush1.bf16.msra.mxu0 %v3534
    %4910 = vmatprep.subr.bf16.mxu0 0
    %4911 = vmatpush2.bf16.msra.mxu0 0
    %4912 = vmatprep.subr.bf16.mxu0 0
    %4913 = vmatpush2.bf16.msra.mxu0 0
    %4914 = vmatprep.subr.bf16.mxu0 0
    %4915 = vmatpush2.bf16.msra.mxu0 0
    %4916 = vmatprep.subr.bf16.mxu0 0
    %4917 = vmatpush2.bf16.msra.mxu0 0
    %4918 = vmatprep.subr.bf16.mxu0 0
    %4919 = vmatpush2.bf16.msra.mxu0 0
    %4920 = vmatprep.subr.bf16.mxu0 0
    %4921 = vmatpush2.bf16.msra.mxu0 0
    %4922 = vmatprep.subr.bf16.mxu0 0
    %4923 = vmatpush2.bf16.msra.mxu0 0
    %4924 = vmatprep.subr.bf16.mxu0 0
    %4925 = vmatpush2.bf16.msra.mxu0 0
    %4926 = vmatprep.mubr.bf16.mxu0 0
    %4927 = vmatmul.mubr.bf16.gmra.mxu0 %v1532
    %v4928 = vpop.f32.mrf.mxu0
    %v4929 = vadd.f32 %v4889, %v4928
    %v4930 = vpop.f32.mrf.mxu0
    %v4931 = vpop.f32.mrf.mxu0
    %v4932 = vpop.f32.mrf.mxu0
    %4933 = vdwg.mxu0
    %v4934 = vld [vmem:[#allocation13] sm:$0x1]
    %v4936 = vlaneseq
    %v4937 = vshrl.u32 %v4936, 7
    %v4938 = vsub.s32 0, %v4937
    %v4939 = vrot.slane %v4934, %v4938
    %v4941 = vadd.f32 %v4929, %v4939
    %v4942 = vmax.f32 %v4941, 0.0
    %v4943 = vpack.c.bf16 %v4942, %v4942
    %v4944 = vld [vmem:[%s9] sm:$0xf]
    %v4945 = vld [vmem:[%s9 + $0x4] sm:$0xf]
    %v4946 = vld [vmem:[%s9 + $0x8] sm:$0xf]
    %v4947 = vld [vmem:[%s9 + $0xc] sm:$0xf]
    %v4948 = vld [vmem:[%s9 + $0x10] sm:$0xf]
    %v4949 = vld [vmem:[%s9 + $0x14] sm:$0xf]
    %v4950 = vld [vmem:[%s9 + $0x18] sm:$0xf]
    %v4951 = vld [vmem:[%s9 + $0x1c] sm:$0xf]
    %v4952 = vld [vmem:[%s9 + $0x20] sm:$0xf]
    %v4953 = vld [vmem:[%s9 + $0x24] sm:$0xf]
    %v4954 = vld [vmem:[%s9 + $0x28] sm:$0xf]
    %v4955 = vld [vmem:[%s9 + $0x2c] sm:$0xf]
    %v4956 = vld [vmem:[%s9 + $0x30] sm:$0xf]
    %v4957 = vld [vmem:[%s9 + $0x34] sm:$0xf]
    %v4958 = vld [vmem:[%s9 + $0x38] sm:$0xf]
    %v4959 = vld [vmem:[%s9 + $0x3c] sm:$0xf]
    %v4960 = vld [vmem:[#allocation14] sm:$0x1]
    %v4962 = vlaneseq
    %v4963 = vshrl.u32 %v4962, 7
    %v4964 = vsub.s32 0, %v4963
    %v4965 = vrot.slane %v4960, %v4964
    %v4983 = vunpack.c.l.b16 %v4944
    %v4984 = vunpack.c.l.b16 %v4945
    %v4985 = vunpack.c.l.b16 %v4946
    %v4986 = vunpack.c.l.b16 %v4947
    %v4987 = vunpack.c.l.b16 %v4948
    %v4988 = vunpack.c.l.b16 %v4949
    %v4989 = vunpack.c.l.b16 %v4950
    %v4990 = vunpack.c.l.b16 %v4951
    %v4991 = vunpack.c.l.b16 %v4952
    %v4992 = vunpack.c.l.b16 %v4953
    %v4993 = vunpack.c.l.b16 %v4954
    %v4994 = vunpack.c.l.b16 %v4955
    %v4995 = vunpack.c.l.b16 %v4956
    %v4996 = vunpack.c.l.b16 %v4957
    %v4997 = vunpack.c.l.b16 %v4958
    %v4998 = vunpack.c.l.b16 %v4959
    %v4999 = vpack.c.b16 %v4984, %v4983
    %v5000 = vpack.c.b16 %v4986, %v4985
    %v5001 = vpack.c.b16 %v4988, %v4987
    %v5002 = vpack.c.b16 %v4990, %v4989
    %v5003 = vpack.c.b16 %v4992, %v4991
    %v5004 = vpack.c.b16 %v4994, %v4993
    %v5005 = vpack.c.b16 %v4996, %v4995
    %v5006 = vpack.c.b16 %v4998, %v4997
    %5015 = vmatprep.subr.bf16.mxu0 0
    %5016 = vmatpush1.bf16.msra.mxu0 %v5006
    %5017 = vmatprep.subr.bf16.mxu0 0
    %5018 = vmatpush1.bf16.msra.mxu0 %v5005
    %5019 = vmatprep.subr.bf16.mxu0 0
    %5020 = vmatpush1.bf16.msra.mxu0 %v5004
    %5021 = vmatprep.subr.bf16.mxu0 0
    %5022 = vmatpush1.bf16.msra.mxu0 %v5003
    %5023 = vmatprep.subr.bf16.mxu0 0
    %5024 = vmatpush1.bf16.msra.mxu0 %v5002
    %5025 = vmatprep.subr.bf16.mxu0 0
    %5026 = vmatpush1.bf16.msra.mxu0 %v5001
    %5027 = vmatprep.subr.bf16.mxu0 0
    %5028 = vmatpush1.bf16.msra.mxu0 %v5000
    %5029 = vmatprep.subr.bf16.mxu0 0
    %5030 = vmatpush1.bf16.msra.mxu0 %v4999
    %5031 = vmatprep.subr.bf16.mxu0 0
    %5032 = vmatpush2.bf16.msra.mxu0 0
    %5033 = vmatprep.subr.bf16.mxu0 0
    %5034 = vmatpush2.bf16.msra.mxu0 0
    %5035 = vmatprep.subr.bf16.mxu0 0
    %5036 = vmatpush2.bf16.msra.mxu0 0
    %5037 = vmatprep.subr.bf16.mxu0 0
    %5038 = vmatpush2.bf16.msra.mxu0 0
    %5039 = vmatprep.subr.bf16.mxu0 0
    %5040 = vmatpush2.bf16.msra.mxu0 0
    %5041 = vmatprep.subr.bf16.mxu0 0
    %5042 = vmatpush2.bf16.msra.mxu0 0
    %5043 = vmatprep.subr.bf16.mxu0 0
    %5044 = vmatpush2.bf16.msra.mxu0 0
    %5045 = vmatprep.subr.bf16.mxu0 0
    %5046 = vmatpush2.bf16.msra.mxu0 0
    %5047 = vmatprep.mubr.bf16.mxu0 0
    %5048 = vmatmul.mubr.bf16.gmra.mxu0 %v4943
    %v5049 = vpop.f32.mrf.mxu0
    %v5050 = vadd.f32 %v4965, %v5049
    %v5051 = vpop.f32.mrf.mxu0
    %v5052 = vpop.f32.mrf.mxu0
    %v5053 = vpop.f32.mrf.mxu0
    %5054 = vdwg.mxu0
    %vm5055 = vcmask 17408
    %v5056 = vsel %vm5055, %v5050, -inf
    %5057 = vmax.xlane.f32.xlu0 %v5056
    %v5058 = vpop.xlane.xlu0 %5057
    %v5059 = vsub.f32 %v5050, %v5058
    %v5060 = vmul.f32 %v5059, 1.442695
    %v5061 = vpow.pop %v5060
    %v5062 = vsel %vm5055, %v5061, 0.0
    %5063 = vadd.xlane.f32.xlu0 %v5062
    %v5064 = vpop.xlane.xlu0 %5063
    %v5065 = vrcp.pop %v5064
    %v5066 = vmul.f32 %v5061, %v5065
    %5067 = vst.msk [vmem:[#allocation16] sm:$0x3] %vm5055, %v5066
    // Predicated region
    $region78: #{qnet_forward.3} parent=1 // pred_check
      _
    $region79: #{qnet_forward.3} parent=1 // pred_check_branch
      %5069 = sbr.rel (0) target = $region81
    $region80: #{qnet_forward.3} parent=1 // pred_region
      %s5071 = ssub.s32 32, 32
      %5072 = vsyncadd [#allocation4], %s5071
      %s5074 = sshll.u32 [#allocation16], 4
      %s5075 = int_to_ptr.vmem [resolvable:$true] %s5074
      %5077 = dma.vmem_to_hbm [thread:$0]  %s5075, 32, %s11, [#allocation4]
    $region81: #{qnet_forward.3} parent=1 // pred_fallthru
      _
    // Predicated region
    $region82: #{qnet_forward.3} parent=1 // pred_check
      _
    $region83: #{qnet_forward.3} parent=1 // pred_check_branch
      %5079 = sbr.rel (0) target = $region85
    $region84: #{qnet_forward.3} parent=1 // pred_region
      %5080 = dma.done [#allocation4], 32
    $region85: #{qnet_forward.3} parent=1 // pred_fallthru
      _
    %5081 = vsyncpa [#allocation3], 1
    %5082 = vsyncpa [#allocation6], 1
    %5083 = vsyncpa [#allocation9], 1
    %5084 = vsyncpa [#allocation12], 1
    %5085 = vsyncpa [#allocation15], 1
    %5086 = vsyncpa [#allocation4], 1

</llo_original>
